<compile_context>
chip_gen: v7x
topology: tpu7x:2x2x1
jax: 0.10.0
libtpu: 0.0.40
codegen_flags: <defaults>
</compile_context>

<pallas_src>
import numpy as np

import jax
import jax.numpy as jnp
from jax.experimental import pallas as pl
from jax.experimental.pallas import tpu as pltpu

# ----------------------------- configuration -------------------------------
INPUT_DIM = [16, 16, 1]          # (H, W, C)
LATENT = 4
ENC_F = [8, 16, 16, 16]
ENC_K = [3, 3, 3, 3]
ENC_S = [1, 2, 2, 1]
ENC_P = [1, 1, 1, 1]
DEC_F = [16, 16, 8, 1]
DEC_K = [3, 3, 3, 3]
DEC_S = [1, 2, 2, 1]
DEC_P = [1, 0, 0, 1]

NEG_SLOPE = 0.01                 # F.leaky_relu default negative_slope

SUB, LANE = 8, 128               # TPU sublane / lane granularity


def _ceil(x, m):
    return -(-x // m) * m


# ------------------------------ raw parameters ------------------------------
def _uniform(key, shape, fan_in):
    bound = 1.0 / (fan_in ** 0.5)
    return jax.random.uniform(key, shape, jnp.float32, -bound, bound)


def init_params(key):
    """Raw parameters in PyTorch layouts (Conv2d (Cout,Cin,K,K), ConvT (Cin,Cout,K,K),
    Linear (out,in))."""
    keys = iter(jax.random.split(key, 64))
    p = {}

    enc_w, enc_b = [], []
    cin = INPUT_DIM[-1]
    h, w = INPUT_DIM[0], INPUT_DIM[1]
    for i in range(len(ENC_F)):
        cout, k, s, pad = ENC_F[i], ENC_K[i], ENC_S[i], ENC_P[i]
        fan_in = cin * k * k
        enc_w.append(_uniform(next(keys), (cout, cin, k, k), fan_in))
        enc_b.append(_uniform(next(keys), (cout,), fan_in))
        h = (h + 2 * pad - k) // s + 1
        w = (w + 2 * pad - k) // s + 1
        cin = cout
    p["enc_w"], p["enc_b"] = enc_w, enc_b

    conv_out = h * w * ENC_F[-1]
    p["wmu"] = _uniform(next(keys), (LATENT, conv_out), conv_out)
    p["bmu"] = _uniform(next(keys), (LATENT,), conv_out)
    p["wlv"] = _uniform(next(keys), (LATENT, conv_out), conv_out)
    p["blv"] = _uniform(next(keys), (LATENT,), conv_out)

    conv_in = h * w * DEC_F[0]
    p["dec_dense_w"] = _uniform(next(keys), (conv_in, LATENT), LATENT)
    p["dec_dense_b"] = _uniform(next(keys), (conv_in,), LATENT)

    dec_w, dec_b = [], []
    cin = DEC_F[0]
    for i in range(len(DEC_F)):
        cout, k = DEC_F[i], DEC_K[i]
        fan_in = cout * k * k        # ConvTranspose2d fan_in uses weight.size(1)*k*k
        dec_w.append(_uniform(next(keys), (cin, cout, k, k), fan_in))
        dec_b.append(_uniform(next(keys), (cout,), fan_in))
        cin = cout
    p["dec_w"], p["dec_b"] = dec_w, dec_b
    return p


# ------------------ init-time weight pre-transformation ---------------------
# Each stage of the fused kernel is:  out = act( sum_t <R[t], X, M[t]> + Bias )
# with X the activation kept as a lane/sublane-dense (rows_pad, cols_pad) slab:
#   rows_pad = ceil8(B*H), cols_pad = ceil128(W*C).
# R[t] (rows_out_pad, rows_in_pad) is a 0/1 row-stencil matrix (stride/pad/convT
# zero-dilation folded in); M[t] (cols_in_pad, cols_out_pad) folds the column
# stencil with the conv weights.  Padded regions are zero, so padded rows/cols
# of every activation stay exactly zero through the whole network.

def _conv_plan(w, b, Hin, Win, Cin, Hout, Wout, Cout, k, s, p, B):
    """nn.Conv2d (weight (Cout,Cin,k,k)) -> per-kernel-row (R, M) + full Bias."""
    w = np.asarray(w, np.float32)
    b = np.asarray(b, np.float32)
    ri, ro = _ceil(B * Hin, SUB), _ceil(B * Hout, SUB)
    ci, co = _ceil(Win * Cin, LANE), _ceil(Wout * Cout, LANE)
    M = np.zeros((k, ci, co), np.float32)
    for ki in range(k):
        for wo in range(Wout):
            for kj in range(k):
                wi = wo * s + kj - p
                if 0 <= wi < Win:
                    M[ki, wi * Cin:(wi + 1) * Cin,
                      wo * Cout:(wo + 1) * Cout] = w[:, :, ki, kj].T
    R = np.zeros((k, ro, ri), np.float32)
    for ki in range(k):
        for bb in range(B):
            for ho in range(Hout):
                hi = ho * s + ki - p
                if 0 <= hi < Hin:
                    R[ki, bb * Hout + ho, bb * Hin + hi] = 1.0
    bias = np.zeros((ro, co), np.float32)
    bias[:B * Hout, :Wout * Cout] = np.tile(
        b.reshape(1, 1, Cout), (B * Hout, Wout, 1)).reshape(B * Hout, Wout * Cout)
    return R, M, bias


def _convT_plan(w, b, Hin, Win, Cin, Hout, Wout, Cout, k, s, p, B):
    """nn.ConvTranspose2d (weight (Cin,Cout,k,k)); stride / zero-dilation / padding
    folded into R (rows) and M (cols).  out[ho] gets in[hi] iff ho = hi*s - p + ki."""
    w = np.asarray(w, np.float32)
    b = np.asarray(b, np.float32)
    ri, ro = _ceil(B * Hin, SUB), _ceil(B * Hout, SUB)
    ci, co = _ceil(Win * Cin, LANE), _ceil(Wout * Cout, LANE)
    M = np.zeros((k, ci, co), np.float32)
    for ki in range(k):
        for wo in range(Wout):
            for wi in range(Win):
                kj = wo + p - wi * s
                if 0 <= kj < k:
                    M[ki, wi * Cin:(wi + 1) * Cin,
                      wo * Cout:(wo + 1) * Cout] = w[:, :, ki, kj]
    R = np.zeros((k, ro, ri), np.float32)
    for ki in range(k):
        for bb in range(B):
            for hi in range(Hin):
                ho = hi * s - p + ki
                if 0 <= ho < Hout:
                    R[ki, bb * Hout + ho, bb * Hin + hi] = 1.0
    bias = np.zeros((ro, co), np.float32)
    bias[:B * Hout, :Wout * Cout] = np.tile(
        b.reshape(1, 1, Cout), (B * Hout, Wout, 1)).reshape(B * Hout, Wout * Cout)
    return R, M, bias


def _head_plan(wmu, bmu, wlv, blv, Hl, Wl, Cf, L, B):
    """torch .flatten(start_dim=1) on NCHW + merged mu/log_var Linear heads.
    Output columns are split into two 128-lane groups: mu in [0:L), log_var in
    [LANE:LANE+L), so the in-kernel mu/lv split is lane-group aligned."""
    wmu = np.asarray(wmu, np.float32)
    wlv = np.asarray(wlv, np.float32)
    ri, ro = _ceil(B * Hl, SUB), _ceil(B, SUB)
    ci, co = _ceil(Wl * Cf, LANE), 2 * LANE
    M = np.zeros((Hl, ci, co), np.float32)
    for h in range(Hl):
        for w in range(Wl):
            for c in range(Cf):
                f = c * Hl * Wl + h * Wl + w          # NCHW flatten index
                M[h, w * Cf + c, 0:L] = wmu[:, f]
                M[h, w * Cf + c, LANE:LANE + L] = wlv[:, f]
    R = np.zeros((Hl, ro, ri), np.float32)
    for h in range(Hl):
        for bb in range(B):
            R[h, bb, bb * Hl + h] = 1.0
    bias = np.zeros((ro, co), np.float32)
    bias[:B, 0:L] = np.asarray(bmu, np.float32)
    bias[:B, LANE:LANE + L] = np.asarray(blv, np.float32)
    return R, M, bias


def _dense_plan(wd, bd, Hl, Wl, Cd, L, B):
    """Decoder Linear(latent -> C*H*W) + .view(-1, C, H, W), emitted directly in
    the kernel's padded (B*H, W*C) activation layout."""
    wd = np.asarray(wd, np.float32)
    bd = np.asarray(bd, np.float32)
    ri, ro = _ceil(B, SUB), _ceil(B * Hl, SUB)
    ci, co = LANE, _ceil(Wl * Cd, LANE)
    M = np.zeros((Hl, ci, co), np.float32)
    bias = np.zeros((ro, co), np.float32)
    R = np.zeros((Hl, ro, ri), np.float32)
    for h in range(Hl):
        for w in range(Wl):
            for c in range(Cd):
                f = c * Hl * Wl + h * Wl + w          # torch .view (C,H,W) order
                M[h, 0:L, w * Cd + c] = wd[f, :]
                for bb in range(B):
                    bias[bb * Hl + h, w * Cd + c] = bd[f]
        for bb in range(B):
            R[h, bb * Hl + h, bb] = 1.0
    return R, M, bias


def _pick_assoc(R, M):
    """Choose (R@X)@M vs R@(X@M) per stage from approximate MXU tile counts."""
    _, ro, ri = R.shape
    _, ci, co = M.shape
    def tiles(m, k, n):
        return (-(-m // SUB)) * (-(-k // LANE)) * (-(-n // LANE))
    cost_rx_m = tiles(ro, ri, ci) + tiles(ro, ci, co)
    cost_xm_r = tiles(ri, ci, co) + tiles(ro, ri, co)
    return "RX_M" if cost_rx_m <= cost_xm_r else "XM_R"


def build_plan(params, B):
    """Pre-transform all weights into the fused kernel's padded (R, M, Bias) stages."""
    stages, acts = [], []

    H, W, Cin = INPUT_DIM[0], INPUT_DIM[1], INPUT_DIM[2]
    for i in range(len(ENC_F)):
        Cout, k, s, p = ENC_F[i], ENC_K[i], ENC_S[i], ENC_P[i]
        Hout = (H + 2 * p - k) // s + 1
        Wout = (W + 2 * p - k) // s + 1
        stages.append(_conv_plan(params["enc_w"][i], params["enc_b"][i],
                                 H, W, Cin, Hout, Wout, Cout, k, s, p, B))
        acts.append("leaky_relu")
        H, W, Cin = Hout, Wout, Cout

    # flatten + merged mu / log_var heads (reparameterization happens in-kernel)
    stages.append(_head_plan(params["wmu"], params["bmu"],
                             params["wlv"], params["blv"], H, W, Cin, LATENT, B))
    acts.append("head")

    # decoder dense + view(-1, C, img, img); img == torch's int(sqrt(conv_in/init_dim))
    Cd = DEC_F[0]
    img = int(round((H * W) ** 0.5))
    stages.append(_dense_plan(params["dec_dense_w"], params["dec_dense_b"],
                              img, img, Cd, LATENT, B))
    acts.append("none")
    H, W, Cin = img, img, Cd

    n = len(DEC_F)
    for i in range(n):
        Cout, k, s, p = DEC_F[i], DEC_K[i], DEC_S[i], DEC_P[i]
        Hout = (H - 1) * s - 2 * p + k
        Wout = (W - 1) * s - 2 * p + k
        stages.append(_convT_plan(params["dec_w"][i], params["dec_b"][i],
                                  H, W, Cin, Hout, Wout, Cout, k, s, p, B))
        # PyTorch reference: leaky_relu after every convT, sigmoid after the loop
        acts.append("leaky_sigmoid" if i == n - 1 else "leaky_relu")
        H, W, Cin = Hout, Wout, Cout

    assoc = tuple(_pick_assoc(R, M) for (R, M, _) in stages)

    # bf16 MXU operands (R is exact 0/1 in bf16); bias stays f32.
    arrays = []
    for (R, M, Bias) in stages:
        arrays.append(jnp.asarray(R, jnp.bfloat16))
        arrays.append(jnp.asarray(M, jnp.bfloat16))
        arrays.append(jnp.asarray(Bias, jnp.float32))

    dims = dict(
        in_rows=stages[0][0].shape[2],          # padded B*H of input slab
        in_cols=stages[0][1].shape[1],          # padded W*C of input slab
        head_rows=stages[len(ENC_F)][0].shape[1],
        out_rows=stages[-1][0].shape[1],
        out_cols=stages[-1][1].shape[2],
        final=(H, W, Cin),
    )
    return arrays, tuple(acts), assoc, dims


# ------------------------------ fused kernel --------------------------------
def _tree_sum(vals):
    vals = list(vals)
    while len(vals) > 1:
        nxt = [vals[i] + vals[i + 1] for i in range(0, len(vals) - 1, 2)]
        if len(vals) % 2:
            nxt.append(vals[-1])
        vals = nxt
    return vals[0]


def _make_vae_kernel(n_stage, acts, assoc):
    n_in = 2 + 3 * n_stage          # x2d, eps, then (R, M, Bias) per stage

    def kernel(*refs):
        x_ref, eps_ref = refs[0], refs[1]
        stage_refs = refs[2:n_in]
        recon_ref, head_ref = refs[n_in], refs[n_in + 1]

        x = x_ref[...]                                   # padded (rows, cols) f32
        for si in range(n_stage):
            r_ref = stage_refs[3 * si]                   # bf16 (T, ro, ri)
            m_ref = stage_refs[3 * si + 1]               # bf16 (T, ci, co)
            b_ref = stage_refs[3 * si + 2]               # f32  (ro, co)
            xb = x.astype(jnp.bfloat16)
            parts = [b_ref[...]]                         # independent partials
            for t in range(r_ref.shape[0]):              # static unroll over taps
                if assoc[si] == "RX_M":                  # (R@X)@M  (columns grow)
                    rows = jnp.dot(r_ref[t], xb,
                                   preferred_element_type=jnp.float32)
                    parts.append(jnp.dot(rows.astype(jnp.bfloat16), m_ref[t],
                                         preferred_element_type=jnp.float32))
                else:                                    # R@(X@M)  (columns shrink)
                    cols = jnp.dot(xb, m_ref[t],
                                   preferred_element_type=jnp.float32)
                    parts.append(jnp.dot(r_ref[t], cols.astype(jnp.bfloat16),
                                         preferred_element_type=jnp.float32))
            acc = _tree_sum(parts)                       # bias + tap partials (ILP)

            act = acts[si]
            if act == "head":
                head_ref[...] = acc                      # [mu | pad | lv | pad]
                mu = acc[:, :LANE]                       # lane-group aligned slices
                lv = acc[:, LANE:]
                # z = mu + eps * exp(log_var / 2); padded eps/lv regions are zero,
                # so padded z stays zero.
                x = mu + eps_ref[...] * jnp.exp(lv * 0.5)
            elif act == "leaky_relu":
                x = jnp.where(acc >= 0, acc, NEG_SLOPE * acc)
            elif act == "leaky_sigmoid":                 # last convT: lrelu then sigmoid
                y = jnp.where(acc >= 0, acc, NEG_SLOPE * acc)
                # sigmoid = 1/(1+exp(-y)): exp on EUP, divide via approx reciprocal.
                # (unstable form: exp overflows to inf for very negative y but still
                #  yields the correct 0 limit; approx recip has ~1e-3 rel error.)
                x = pl.reciprocal(1.0 + jnp.exp(-y), approx=True)
            else:                                        # "none" (decoder dense)
                x = acc
        recon_ref[...] = x                               # padded (ro_last, co_last)

    return kernel


def build_forward(params, B):
    arrays, acts, assoc, dims = build_plan(params, B)
    n_stage = len(acts)
    n_in = 2 + len(arrays)
    kernel = _make_vae_kernel(n_stage, acts, assoc)
    Ho, Wo, Co = dims["final"]

    call = pl.pallas_call(
        kernel,
        out_shape=(jax.ShapeDtypeStruct((dims["out_rows"], dims["out_cols"]),
                                        jnp.float32),                 # padded recon
                   jax.ShapeDtypeStruct((dims["head_rows"], 2 * LANE),
                                        jnp.float32)),                # padded [mu|lv]
        in_specs=[pl.BlockSpec(memory_space=pltpu.MemorySpace.VMEM)] * n_in,
        out_specs=(pl.BlockSpec(memory_space=pltpu.MemorySpace.VMEM),) * 2,
    )

    H, W, C = INPUT_DIM

    def forward(x_nchw, eps):
        # NCHW -> (B*H, W*C); with C == 1 the transpose is a pure reshape.
        x2d = jnp.transpose(x_nchw.astype(jnp.float32), (0, 2, 3, 1)).reshape(B * H, W * C)
        x_pad = jnp.zeros((dims["in_rows"], dims["in_cols"]),
                          jnp.float32).at[:B * H, :W * C].set(x2d)
        eps_pad = jnp.zeros((dims["head_rows"], LANE),
                            jnp.float32).at[:B, :LATENT].set(eps.astype(jnp.float32))
        recon_pad, head_pad = call(x_pad, eps_pad, *arrays)
        mu = head_pad[:B, :LATENT]
        log_var = head_pad[:B, LANE:LANE + LATENT]
        recon2d = recon_pad[:B * Ho, :Wo * Co]
        x_recon = jnp.transpose(recon2d.reshape(B, Ho, Wo, Co), (0, 3, 1, 2))
        return x_recon, mu, log_var

    return jax.jit(forward)


# -------------------- float64 numpy reference (test only) -------------------
def _np_leaky(x):
    return np.where(x >= 0, x, NEG_SLOPE * x)


def _np_conv2d(x, w, b, s, p):           # x NHWC, w (Cout,Cin,k,k)
    B, H, W, _ = x.shape
    Cout, _, k, _ = w.shape
    Ho = (H + 2 * p - k) // s + 1
    Wo = (W + 2 * p - k) // s + 1
    xp = np.pad(x, ((0, 0), (p, p), (p, p), (0, 0)))
    out = np.zeros((B, Ho, Wo, Cout))
    for ki in range(k):
        for kj in range(k):
            patch = xp[:, ki:ki + s * Ho:s, kj:kj + s * Wo:s, :]
            out += patch @ w[:, :, ki, kj].T
    return out + b.reshape(1, 1, 1, Cout)


def _np_convT2d(x, w, b, s, p):          # x NHWC, w (Cin,Cout,k,k)
    B, H, W, _ = x.shape
    _, Cout, k, _ = w.shape
    Ho = (H - 1) * s - 2 * p + k
    Wo = (W - 1) * s - 2 * p + k
    full = np.zeros((B, Ho + 2 * p, Wo + 2 * p, Cout))
    for ki in range(k):
        for kj in range(k):
            full[:, ki:ki + (H - 1) * s + 1:s,
                 kj:kj + (W - 1) * s + 1:s, :] += x @ w[:, :, ki, kj]
    return full[:, p:p + Ho, p:p + Wo, :] + b.reshape(1, 1, 1, Cout)


def reference_forward(params, x_nchw, eps):
    g = lambda a: np.asarray(a, np.float64)
    x = np.transpose(g(x_nchw), (0, 2, 3, 1))
    for i in range(len(ENC_F)):
        x = _np_leaky(_np_conv2d(x, g(params["enc_w"][i]), g(params["enc_b"][i]),
                                 ENC_S[i], ENC_P[i]))
    B = x.shape[0]
    flat = np.transpose(x, (0, 3, 1, 2)).reshape(B, -1)
    mu = flat @ g(params["wmu"]).T + g(params["bmu"])
    lv = flat @ g(params["wlv"]).T + g(params["blv"])
    z = mu + g(eps) * np.exp(lv / 2.0)
    h = z @ g(params["dec_dense_w"]).T + g(params["dec_dense_b"])
    img = int(round((h.shape[1] / DEC_F[0]) ** 0.5))
    h = np.transpose(h.reshape(B, DEC_F[0], img, img), (0, 2, 3, 1))
    for i in range(len(DEC_F)):
        h = _np_leaky(_np_convT2d(h, g(params["dec_w"][i]), g(params["dec_b"][i]),
                                  DEC_S[i], DEC_P[i]))
    h = 1.0 / (1.0 + np.exp(-h))
    return np.transpose(h, (0, 3, 1, 2)), mu, lv


# ----------------------------------- main ------------------------------------
if __name__ == "__main__":
    key = jax.random.PRNGKey(0)
    k_param, k_x, k_eps = jax.random.split(key, 3)

    params = init_params(k_param)

    B = 2
    x = jax.random.normal(
        k_x, (B, INPUT_DIM[2], INPUT_DIM[0], INPUT_DIM[1]), jnp.float32)
    # torch.randn_like(std) inside reparameterization -> explicit deterministic eps
    eps = jax.random.normal(k_eps, (B, LATENT), jnp.float32)

    fwd = build_forward(params, B)
    x_recon, mu, log_var = fwd(x, eps)
    jax.block_until_ready((x_recon, mu, log_var))

    # shape / sanity checks (ConvT sizes: 4 -> 4 -> 9 -> 19 -> 19, one channel)
    assert x_recon.shape == (B, 1, 19, 19), x_recon.shape
    assert mu.shape == (B, LATENT) and log_var.shape == (B, LATENT)
    assert bool(jnp.all(jnp.isfinite(x_recon)))
    # sigmoid output; allow ~1e-3 slack for the approx-reciprocal path
    assert bool(jnp.all((x_recon >= -1e-3) & (x_recon <= 1.0 + 1e-3)))

    # numeric cross-check against an independent float64 numpy reference
    ref_recon, ref_mu, ref_lv = reference_forward(params, x, eps)

    def _relerr(a, b):
        a = np.asarray(a, np.float64)
        b = np.asarray(b, np.float64)
        return np.linalg.norm(a - b) / max(np.linalg.norm(b), 1e-12)

    assert _relerr(x_recon, ref_recon) < 5e-2, _relerr(x_recon, ref_recon)
    assert _relerr(mu, ref_mu) < 5e-2, _relerr(mu, ref_mu)
    assert _relerr(log_var, ref_lv) < 5e-2, _relerr(log_var, ref_lv)

    print("KERNEL_OK")
</pallas_src>

<mosaic_0001>
module attributes {stable_mosaic.version = 11 : i64} {
  func.func @kernel(%arg0: memref<32x128xf32, #tpu.memory_space<vmem>>, %arg1: memref<8x128xf32, #tpu.memory_space<vmem>>, %arg2: memref<3x32x32xbf16, #tpu.memory_space<vmem>>, %arg3: memref<3x128x128xbf16, #tpu.memory_space<vmem>>, %arg4: memref<32x128xf32, #tpu.memory_space<vmem>>, %arg5: memref<3x16x32xbf16, #tpu.memory_space<vmem>>, %arg6: memref<3x128x128xbf16, #tpu.memory_space<vmem>>, %arg7: memref<16x128xf32, #tpu.memory_space<vmem>>, %arg8: memref<3x8x16xbf16, #tpu.memory_space<vmem>>, %arg9: memref<3x128x128xbf16, #tpu.memory_space<vmem>>, %arg10: memref<8x128xf32, #tpu.memory_space<vmem>>, %arg11: memref<3x8x8xbf16, #tpu.memory_space<vmem>>, %arg12: memref<3x128x128xbf16, #tpu.memory_space<vmem>>, %arg13: memref<8x128xf32, #tpu.memory_space<vmem>>, %arg14: memref<4x8x8xbf16, #tpu.memory_space<vmem>>, %arg15: memref<4x128x256xbf16, #tpu.memory_space<vmem>>, %arg16: memref<8x256xf32, #tpu.memory_space<vmem>>, %arg17: memref<4x8x8xbf16, #tpu.memory_space<vmem>>, %arg18: memref<4x128x128xbf16, #tpu.memory_space<vmem>>, %arg19: memref<8x128xf32, #tpu.memory_space<vmem>>, %arg20: memref<3x8x8xbf16, #tpu.memory_space<vmem>>, %arg21: memref<3x128x128xbf16, #tpu.memory_space<vmem>>, %arg22: memref<8x128xf32, #tpu.memory_space<vmem>>, %arg23: memref<3x24x8xbf16, #tpu.memory_space<vmem>>, %arg24: memref<3x128x256xbf16, #tpu.memory_space<vmem>>, %arg25: memref<24x256xf32, #tpu.memory_space<vmem>>, %arg26: memref<3x40x24xbf16, #tpu.memory_space<vmem>>, %arg27: memref<3x256x256xbf16, #tpu.memory_space<vmem>>, %arg28: memref<40x256xf32, #tpu.memory_space<vmem>>, %arg29: memref<3x40x40xbf16, #tpu.memory_space<vmem>>, %arg30: memref<3x256x128xbf16, #tpu.memory_space<vmem>>, %arg31: memref<40x128xf32, #tpu.memory_space<vmem>>, %arg32: memref<40x128xf32, #tpu.memory_space<vmem>>, %arg33: memref<8x256xf32, #tpu.memory_space<vmem>>) attributes {dimension_semantics = [], scalar_prefetch = 0 : i64, scratch_operands = 0 : i64, tpu.core_type = #tpu.core_type<tc>} {
    %c0 = arith.constant 0 : index
    %c0_0 = arith.constant 0 : index
    %0 = vector.load %arg0[%c0, %c0_0] : memref<32x128xf32, #tpu.memory_space<vmem>>, vector<32x128xf32>
    %1 = arith.truncf %0 : vector<32x128xf32> to vector<32x128xbf16>
    %c0_1 = arith.constant 0 : index
    %c0_2 = arith.constant 0 : index
    %2 = vector.load %arg4[%c0_1, %c0_2] : memref<32x128xf32, #tpu.memory_space<vmem>>, vector<32x128xf32>
    %c0_3 = arith.constant 0 : index
    %c0_4 = arith.constant 0 : index
    %c0_5 = arith.constant 0 : index
    %3 = vector.load %arg2[%c0_3, %c0_4, %c0_5] : memref<3x32x32xbf16, #tpu.memory_space<vmem>>, vector<1x32x32xbf16>
    %4 = vector.shape_cast %3 : vector<1x32x32xbf16> to vector<32x32xbf16>
    %cst = arith.constant dense<0.000000e+00> : vector<32x128xf32>
    %5 = tpu.matmul %4, %1, %cst {dimension_numbers = #tpu.dot_dimension_numbers<[1], [0], [0], [1], [0, 0, 1, 1], [], []>} : vector<32x32xbf16>, vector<32x128xbf16>, vector<32x128xf32> -> vector<32x128xf32>
    %6 = arith.truncf %5 : vector<32x128xf32> to vector<32x128xbf16>
    %c0_6 = arith.constant 0 : index
    %c0_7 = arith.constant 0 : index
    %c0_8 = arith.constant 0 : index
    %7 = vector.load %arg3[%c0_6, %c0_7, %c0_8] : memref<3x128x128xbf16, #tpu.memory_space<vmem>>, vector<1x128x128xbf16>
    %8 = vector.shape_cast %7 : vector<1x128x128xbf16> to vector<128x128xbf16>
    %cst_9 = arith.constant dense<0.000000e+00> : vector<32x128xf32>
    %9 = tpu.matmul %6, %8, %cst_9 {dimension_numbers = #tpu.dot_dimension_numbers<[1], [0], [0], [1], [0, 0, 1, 1], [], []>} : vector<32x128xbf16>, vector<128x128xbf16>, vector<32x128xf32> -> vector<32x128xf32>
    %c1 = arith.constant 1 : index
    %c0_10 = arith.constant 0 : index
    %c0_11 = arith.constant 0 : index
    %10 = vector.load %arg2[%c1, %c0_10, %c0_11] : memref<3x32x32xbf16, #tpu.memory_space<vmem>>, vector<1x32x32xbf16>
    %11 = vector.shape_cast %10 : vector<1x32x32xbf16> to vector<32x32xbf16>
    %cst_12 = arith.constant dense<0.000000e+00> : vector<32x128xf32>
    %12 = tpu.matmul %11, %1, %cst_12 {dimension_numbers = #tpu.dot_dimension_numbers<[1], [0], [0], [1], [0, 0, 1, 1], [], []>} : vector<32x32xbf16>, vector<32x128xbf16>, vector<32x128xf32> -> vector<32x128xf32>
    %13 = arith.truncf %12 : vector<32x128xf32> to vector<32x128xbf16>
    %c1_13 = arith.constant 1 : index
    %c0_14 = arith.constant 0 : index
    %c0_15 = arith.constant 0 : index
    %14 = vector.load %arg3[%c1_13, %c0_14, %c0_15] : memref<3x128x128xbf16, #tpu.memory_space<vmem>>, vector<1x128x128xbf16>
    %15 = vector.shape_cast %14 : vector<1x128x128xbf16> to vector<128x128xbf16>
    %cst_16 = arith.constant dense<0.000000e+00> : vector<32x128xf32>
    %16 = tpu.matmul %13, %15, %cst_16 {dimension_numbers = #tpu.dot_dimension_numbers<[1], [0], [0], [1], [0, 0, 1, 1], [], []>} : vector<32x128xbf16>, vector<128x128xbf16>, vector<32x128xf32> -> vector<32x128xf32>
    %c2 = arith.constant 2 : index
    %c0_17 = arith.constant 0 : index
    %c0_18 = arith.constant 0 : index
    %17 = vector.load %arg2[%c2, %c0_17, %c0_18] : memref<3x32x32xbf16, #tpu.memory_space<vmem>>, vector<1x32x32xbf16>
    %18 = vector.shape_cast %17 : vector<1x32x32xbf16> to vector<32x32xbf16>
    %cst_19 = arith.constant dense<0.000000e+00> : vector<32x128xf32>
    %19 = tpu.matmul %18, %1, %cst_19 {dimension_numbers = #tpu.dot_dimension_numbers<[1], [0], [0], [1], [0, 0, 1, 1], [], []>} : vector<32x32xbf16>, vector<32x128xbf16>, vector<32x128xf32> -> vector<32x128xf32>
    %20 = arith.truncf %19 : vector<32x128xf32> to vector<32x128xbf16>
    %c2_20 = arith.constant 2 : index
    %c0_21 = arith.constant 0 : index
    %c0_22 = arith.constant 0 : index
    %21 = vector.load %arg3[%c2_20, %c0_21, %c0_22] : memref<3x128x128xbf16, #tpu.memory_space<vmem>>, vector<1x128x128xbf16>
    %22 = vector.shape_cast %21 : vector<1x128x128xbf16> to vector<128x128xbf16>
    %cst_23 = arith.constant dense<0.000000e+00> : vector<32x128xf32>
    %23 = tpu.matmul %20, %22, %cst_23 {dimension_numbers = #tpu.dot_dimension_numbers<[1], [0], [0], [1], [0, 0, 1, 1], [], []>} : vector<32x128xbf16>, vector<128x128xbf16>, vector<32x128xf32> -> vector<32x128xf32>
    %24 = arith.addf %2, %9 : vector<32x128xf32>
    %25 = arith.addf %16, %23 : vector<32x128xf32>
    %26 = arith.addf %24, %25 : vector<32x128xf32>
    %cst_24 = arith.constant 0.000000e+00 : f32
    %27 = vector.broadcast %cst_24 : f32 to vector<32x128xf32>
    %28 = arith.cmpf oge, %26, %27 : vector<32x128xf32>
    %cst_25 = arith.constant 0.00999999977 : f32
    %29 = vector.broadcast %cst_25 : f32 to vector<32x128xf32>
    %30 = arith.mulf %29, %26 : vector<32x128xf32>
    %31 = arith.select %28, %26, %30 : vector<32x128xi1>, vector<32x128xf32>
    %32 = arith.truncf %31 : vector<32x128xf32> to vector<32x128xbf16>
    %c0_26 = arith.constant 0 : index
    %c0_27 = arith.constant 0 : index
    %33 = vector.load %arg7[%c0_26, %c0_27] : memref<16x128xf32, #tpu.memory_space<vmem>>, vector<16x128xf32>
    %c0_28 = arith.constant 0 : index
    %c0_29 = arith.constant 0 : index
    %c0_30 = arith.constant 0 : index
    %34 = vector.load %arg5[%c0_28, %c0_29, %c0_30] : memref<3x16x32xbf16, #tpu.memory_space<vmem>>, vector<1x16x32xbf16>
    %35 = vector.shape_cast %34 : vector<1x16x32xbf16> to vector<16x32xbf16>
    %cst_31 = arith.constant dense<0.000000e+00> : vector<16x128xf32>
    %36 = tpu.matmul %35, %32, %cst_31 {dimension_numbers = #tpu.dot_dimension_numbers<[1], [0], [0], [1], [0, 0, 1, 1], [], []>} : vector<16x32xbf16>, vector<32x128xbf16>, vector<16x128xf32> -> vector<16x128xf32>
    %37 = arith.truncf %36 : vector<16x128xf32> to vector<16x128xbf16>
    %c0_32 = arith.constant 0 : index
    %c0_33 = arith.constant 0 : index
    %c0_34 = arith.constant 0 : index
    %38 = vector.load %arg6[%c0_32, %c0_33, %c0_34] : memref<3x128x128xbf16, #tpu.memory_space<vmem>>, vector<1x128x128xbf16>
    %39 = vector.shape_cast %38 : vector<1x128x128xbf16> to vector<128x128xbf16>
    %cst_35 = arith.constant dense<0.000000e+00> : vector<16x128xf32>
    %40 = tpu.matmul %37, %39, %cst_35 {dimension_numbers = #tpu.dot_dimension_numbers<[1], [0], [0], [1], [0, 0, 1, 1], [], []>} : vector<16x128xbf16>, vector<128x128xbf16>, vector<16x128xf32> -> vector<16x128xf32>
    %c1_36 = arith.constant 1 : index
    %c0_37 = arith.constant 0 : index
    %c0_38 = arith.constant 0 : index
    %41 = vector.load %arg5[%c1_36, %c0_37, %c0_38] : memref<3x16x32xbf16, #tpu.memory_space<vmem>>, vector<1x16x32xbf16>
    %42 = vector.shape_cast %41 : vector<1x16x32xbf16> to vector<16x32xbf16>
    %cst_39 = arith.constant dense<0.000000e+00> : vector<16x128xf32>
    %43 = tpu.matmul %42, %32, %cst_39 {dimension_numbers = #tpu.dot_dimension_numbers<[1], [0], [0], [1], [0, 0, 1, 1], [], []>} : vector<16x32xbf16>, vector<32x128xbf16>, vector<16x128xf32> -> vector<16x128xf32>
    %44 = arith.truncf %43 : vector<16x128xf32> to vector<16x128xbf16>
    %c1_40 = arith.constant 1 : index
    %c0_41 = arith.constant 0 : index
    %c0_42 = arith.constant 0 : index
    %45 = vector.load %arg6[%c1_40, %c0_41, %c0_42] : memref<3x128x128xbf16, #tpu.memory_space<vmem>>, vector<1x128x128xbf16>
    %46 = vector.shape_cast %45 : vector<1x128x128xbf16> to vector<128x128xbf16>
    %cst_43 = arith.constant dense<0.000000e+00> : vector<16x128xf32>
    %47 = tpu.matmul %44, %46, %cst_43 {dimension_numbers = #tpu.dot_dimension_numbers<[1], [0], [0], [1], [0, 0, 1, 1], [], []>} : vector<16x128xbf16>, vector<128x128xbf16>, vector<16x128xf32> -> vector<16x128xf32>
    %c2_44 = arith.constant 2 : index
    %c0_45 = arith.constant 0 : index
    %c0_46 = arith.constant 0 : index
    %48 = vector.load %arg5[%c2_44, %c0_45, %c0_46] : memref<3x16x32xbf16, #tpu.memory_space<vmem>>, vector<1x16x32xbf16>
    %49 = vector.shape_cast %48 : vector<1x16x32xbf16> to vector<16x32xbf16>
    %cst_47 = arith.constant dense<0.000000e+00> : vector<16x128xf32>
    %50 = tpu.matmul %49, %32, %cst_47 {dimension_numbers = #tpu.dot_dimension_numbers<[1], [0], [0], [1], [0, 0, 1, 1], [], []>} : vector<16x32xbf16>, vector<32x128xbf16>, vector<16x128xf32> -> vector<16x128xf32>
    %51 = arith.truncf %50 : vector<16x128xf32> to vector<16x128xbf16>
    %c2_48 = arith.constant 2 : index
    %c0_49 = arith.constant 0 : index
    %c0_50 = arith.constant 0 : index
    %52 = vector.load %arg6[%c2_48, %c0_49, %c0_50] : memref<3x128x128xbf16, #tpu.memory_space<vmem>>, vector<1x128x128xbf16>
    %53 = vector.shape_cast %52 : vector<1x128x128xbf16> to vector<128x128xbf16>
    %cst_51 = arith.constant dense<0.000000e+00> : vector<16x128xf32>
    %54 = tpu.matmul %51, %53, %cst_51 {dimension_numbers = #tpu.dot_dimension_numbers<[1], [0], [0], [1], [0, 0, 1, 1], [], []>} : vector<16x128xbf16>, vector<128x128xbf16>, vector<16x128xf32> -> vector<16x128xf32>
    %55 = arith.addf %33, %40 : vector<16x128xf32>
    %56 = arith.addf %47, %54 : vector<16x128xf32>
    %57 = arith.addf %55, %56 : vector<16x128xf32>
    %cst_52 = arith.constant 0.000000e+00 : f32
    %58 = vector.broadcast %cst_52 : f32 to vector<16x128xf32>
    %59 = arith.cmpf oge, %57, %58 : vector<16x128xf32>
    %cst_53 = arith.constant 0.00999999977 : f32
    %60 = vector.broadcast %cst_53 : f32 to vector<16x128xf32>
    %61 = arith.mulf %60, %57 : vector<16x128xf32>
    %62 = arith.select %59, %57, %61 : vector<16x128xi1>, vector<16x128xf32>
    %63 = arith.truncf %62 : vector<16x128xf32> to vector<16x128xbf16>
    %c0_54 = arith.constant 0 : index
    %c0_55 = arith.constant 0 : index
    %64 = vector.load %arg10[%c0_54, %c0_55] : memref<8x128xf32, #tpu.memory_space<vmem>>, vector<8x128xf32>
    %c0_56 = arith.constant 0 : index
    %c0_57 = arith.constant 0 : index
    %c0_58 = arith.constant 0 : index
    %65 = vector.load %arg8[%c0_56, %c0_57, %c0_58] : memref<3x8x16xbf16, #tpu.memory_space<vmem>>, vector<1x8x16xbf16>
    %66 = vector.shape_cast %65 : vector<1x8x16xbf16> to vector<8x16xbf16>
    %cst_59 = arith.constant dense<0.000000e+00> : vector<8x128xf32>
    %67 = tpu.matmul %66, %63, %cst_59 {dimension_numbers = #tpu.dot_dimension_numbers<[1], [0], [0], [1], [0, 0, 1, 1], [], []>} : vector<8x16xbf16>, vector<16x128xbf16>, vector<8x128xf32> -> vector<8x128xf32>
    %68 = arith.truncf %67 : vector<8x128xf32> to vector<8x128xbf16>
    %c0_60 = arith.constant 0 : index
    %c0_61 = arith.constant 0 : index
    %c0_62 = arith.constant 0 : index
    %69 = vector.load %arg9[%c0_60, %c0_61, %c0_62] : memref<3x128x128xbf16, #tpu.memory_space<vmem>>, vector<1x128x128xbf16>
    %70 = vector.shape_cast %69 : vector<1x128x128xbf16> to vector<128x128xbf16>
    %cst_63 = arith.constant dense<0.000000e+00> : vector<8x128xf32>
    %71 = tpu.matmul %68, %70, %cst_63 {dimension_numbers = #tpu.dot_dimension_numbers<[1], [0], [0], [1], [0, 0, 1, 1], [], []>} : vector<8x128xbf16>, vector<128x128xbf16>, vector<8x128xf32> -> vector<8x128xf32>
    %c1_64 = arith.constant 1 : index
    %c0_65 = arith.constant 0 : index
    %c0_66 = arith.constant 0 : index
    %72 = vector.load %arg8[%c1_64, %c0_65, %c0_66] : memref<3x8x16xbf16, #tpu.memory_space<vmem>>, vector<1x8x16xbf16>
    %73 = vector.shape_cast %72 : vector<1x8x16xbf16> to vector<8x16xbf16>
    %cst_67 = arith.constant dense<0.000000e+00> : vector<8x128xf32>
    %74 = tpu.matmul %73, %63, %cst_67 {dimension_numbers = #tpu.dot_dimension_numbers<[1], [0], [0], [1], [0, 0, 1, 1], [], []>} : vector<8x16xbf16>, vector<16x128xbf16>, vector<8x128xf32> -> vector<8x128xf32>
    %75 = arith.truncf %74 : vector<8x128xf32> to vector<8x128xbf16>
    %c1_68 = arith.constant 1 : index
    %c0_69 = arith.constant 0 : index
    %c0_70 = arith.constant 0 : index
    %76 = vector.load %arg9[%c1_68, %c0_69, %c0_70] : memref<3x128x128xbf16, #tpu.memory_space<vmem>>, vector<1x128x128xbf16>
    %77 = vector.shape_cast %76 : vector<1x128x128xbf16> to vector<128x128xbf16>
    %cst_71 = arith.constant dense<0.000000e+00> : vector<8x128xf32>
    %78 = tpu.matmul %75, %77, %cst_71 {dimension_numbers = #tpu.dot_dimension_numbers<[1], [0], [0], [1], [0, 0, 1, 1], [], []>} : vector<8x128xbf16>, vector<128x128xbf16>, vector<8x128xf32> -> vector<8x128xf32>
    %c2_72 = arith.constant 2 : index
    %c0_73 = arith.constant 0 : index
    %c0_74 = arith.constant 0 : index
    %79 = vector.load %arg8[%c2_72, %c0_73, %c0_74] : memref<3x8x16xbf16, #tpu.memory_space<vmem>>, vector<1x8x16xbf16>
    %80 = vector.shape_cast %79 : vector<1x8x16xbf16> to vector<8x16xbf16>
    %cst_75 = arith.constant dense<0.000000e+00> : vector<8x128xf32>
    %81 = tpu.matmul %80, %63, %cst_75 {dimension_numbers = #tpu.dot_dimension_numbers<[1], [0], [0], [1], [0, 0, 1, 1], [], []>} : vector<8x16xbf16>, vector<16x128xbf16>, vector<8x128xf32> -> vector<8x128xf32>
    %82 = arith.truncf %81 : vector<8x128xf32> to vector<8x128xbf16>
    %c2_76 = arith.constant 2 : index
    %c0_77 = arith.constant 0 : index
    %c0_78 = arith.constant 0 : index
    %83 = vector.load %arg9[%c2_76, %c0_77, %c0_78] : memref<3x128x128xbf16, #tpu.memory_space<vmem>>, vector<1x128x128xbf16>
    %84 = vector.shape_cast %83 : vector<1x128x128xbf16> to vector<128x128xbf16>
    %cst_79 = arith.constant dense<0.000000e+00> : vector<8x128xf32>
    %85 = tpu.matmul %82, %84, %cst_79 {dimension_numbers = #tpu.dot_dimension_numbers<[1], [0], [0], [1], [0, 0, 1, 1], [], []>} : vector<8x128xbf16>, vector<128x128xbf16>, vector<8x128xf32> -> vector<8x128xf32>
    %86 = arith.addf %64, %71 : vector<8x128xf32>
    %87 = arith.addf %78, %85 : vector<8x128xf32>
    %88 = arith.addf %86, %87 : vector<8x128xf32>
    %cst_80 = arith.constant 0.000000e+00 : f32
    %89 = vector.broadcast %cst_80 : f32 to vector<8x128xf32>
    %90 = arith.cmpf oge, %88, %89 : vector<8x128xf32>
    %cst_81 = arith.constant 0.00999999977 : f32
    %91 = vector.broadcast %cst_81 : f32 to vector<8x128xf32>
    %92 = arith.mulf %91, %88 : vector<8x128xf32>
    %93 = arith.select %90, %88, %92 : vector<8x128xi1>, vector<8x128xf32>
    %94 = arith.truncf %93 : vector<8x128xf32> to vector<8x128xbf16>
    %c0_82 = arith.constant 0 : index
    %c0_83 = arith.constant 0 : index
    %95 = vector.load %arg13[%c0_82, %c0_83] : memref<8x128xf32, #tpu.memory_space<vmem>>, vector<8x128xf32>
    %c0_84 = arith.constant 0 : index
    %c0_85 = arith.constant 0 : index
    %c0_86 = arith.constant 0 : index
    %96 = vector.load %arg11[%c0_84, %c0_85, %c0_86] : memref<3x8x8xbf16, #tpu.memory_space<vmem>>, vector<1x8x8xbf16>
    %97 = vector.shape_cast %96 : vector<1x8x8xbf16> to vector<8x8xbf16>
    %cst_87 = arith.constant dense<0.000000e+00> : vector<8x128xf32>
    %98 = tpu.matmul %97, %94, %cst_87 {dimension_numbers = #tpu.dot_dimension_numbers<[1], [0], [0], [1], [0, 0, 1, 1], [], []>} : vector<8x8xbf16>, vector<8x128xbf16>, vector<8x128xf32> -> vector<8x128xf32>
    %99 = arith.truncf %98 : vector<8x128xf32> to vector<8x128xbf16>
    %c0_88 = arith.constant 0 : index
    %c0_89 = arith.constant 0 : index
    %c0_90 = arith.constant 0 : index
    %100 = vector.load %arg12[%c0_88, %c0_89, %c0_90] : memref<3x128x128xbf16, #tpu.memory_space<vmem>>, vector<1x128x128xbf16>
    %101 = vector.shape_cast %100 : vector<1x128x128xbf16> to vector<128x128xbf16>
    %cst_91 = arith.constant dense<0.000000e+00> : vector<8x128xf32>
    %102 = tpu.matmul %99, %101, %cst_91 {dimension_numbers = #tpu.dot_dimension_numbers<[1], [0], [0], [1], [0, 0, 1, 1], [], []>} : vector<8x128xbf16>, vector<128x128xbf16>, vector<8x128xf32> -> vector<8x128xf32>
    %c1_92 = arith.constant 1 : index
    %c0_93 = arith.constant 0 : index
    %c0_94 = arith.constant 0 : index
    %103 = vector.load %arg11[%c1_92, %c0_93, %c0_94] : memref<3x8x8xbf16, #tpu.memory_space<vmem>>, vector<1x8x8xbf16>
    %104 = vector.shape_cast %103 : vector<1x8x8xbf16> to vector<8x8xbf16>
    %cst_95 = arith.constant dense<0.000000e+00> : vector<8x128xf32>
    %105 = tpu.matmul %104, %94, %cst_95 {dimension_numbers = #tpu.dot_dimension_numbers<[1], [0], [0], [1], [0, 0, 1, 1], [], []>} : vector<8x8xbf16>, vector<8x128xbf16>, vector<8x128xf32> -> vector<8x128xf32>
    %106 = arith.truncf %105 : vector<8x128xf32> to vector<8x128xbf16>
    %c1_96 = arith.constant 1 : index
    %c0_97 = arith.constant 0 : index
    %c0_98 = arith.constant 0 : index
    %107 = vector.load %arg12[%c1_96, %c0_97, %c0_98] : memref<3x128x128xbf16, #tpu.memory_space<vmem>>, vector<1x128x128xbf16>
    %108 = vector.shape_cast %107 : vector<1x128x128xbf16> to vector<128x128xbf16>
    %cst_99 = arith.constant dense<0.000000e+00> : vector<8x128xf32>
    %109 = tpu.matmul %106, %108, %cst_99 {dimension_numbers = #tpu.dot_dimension_numbers<[1], [0], [0], [1], [0, 0, 1, 1], [], []>} : vector<8x128xbf16>, vector<128x128xbf16>, vector<8x128xf32> -> vector<8x128xf32>
    %c2_100 = arith.constant 2 : index
    %c0_101 = arith.constant 0 : index
    %c0_102 = arith.constant 0 : index
    %110 = vector.load %arg11[%c2_100, %c0_101, %c0_102] : memref<3x8x8xbf16, #tpu.memory_space<vmem>>, vector<1x8x8xbf16>
    %111 = vector.shape_cast %110 : vector<1x8x8xbf16> to vector<8x8xbf16>
    %cst_103 = arith.constant dense<0.000000e+00> : vector<8x128xf32>
    %112 = tpu.matmul %111, %94, %cst_103 {dimension_numbers = #tpu.dot_dimension_numbers<[1], [0], [0], [1], [0, 0, 1, 1], [], []>} : vector<8x8xbf16>, vector<8x128xbf16>, vector<8x128xf32> -> vector<8x128xf32>
    %113 = arith.truncf %112 : vector<8x128xf32> to vector<8x128xbf16>
    %c2_104 = arith.constant 2 : index
    %c0_105 = arith.constant 0 : index
    %c0_106 = arith.constant 0 : index
    %114 = vector.load %arg12[%c2_104, %c0_105, %c0_106] : memref<3x128x128xbf16, #tpu.memory_space<vmem>>, vector<1x128x128xbf16>
    %115 = vector.shape_cast %114 : vector<1x128x128xbf16> to vector<128x128xbf16>
    %cst_107 = arith.constant dense<0.000000e+00> : vector<8x128xf32>
    %116 = tpu.matmul %113, %115, %cst_107 {dimension_numbers = #tpu.dot_dimension_numbers<[1], [0], [0], [1], [0, 0, 1, 1], [], []>} : vector<8x128xbf16>, vector<128x128xbf16>, vector<8x128xf32> -> vector<8x128xf32>
    %117 = arith.addf %95, %102 : vector<8x128xf32>
    %118 = arith.addf %109, %116 : vector<8x128xf32>
    %119 = arith.addf %117, %118 : vector<8x128xf32>
    %cst_108 = arith.constant 0.000000e+00 : f32
    %120 = vector.broadcast %cst_108 : f32 to vector<8x128xf32>
    %121 = arith.cmpf oge, %119, %120 : vector<8x128xf32>
    %cst_109 = arith.constant 0.00999999977 : f32
    %122 = vector.broadcast %cst_109 : f32 to vector<8x128xf32>
    %123 = arith.mulf %122, %119 : vector<8x128xf32>
    %124 = arith.select %121, %119, %123 : vector<8x128xi1>, vector<8x128xf32>
    %125 = arith.truncf %124 : vector<8x128xf32> to vector<8x128xbf16>
    %c0_110 = arith.constant 0 : index
    %c0_111 = arith.constant 0 : index
    %126 = vector.load %arg16[%c0_110, %c0_111] : memref<8x256xf32, #tpu.memory_space<vmem>>, vector<8x256xf32>
    %c0_112 = arith.constant 0 : index
    %c0_113 = arith.constant 0 : index
    %c0_114 = arith.constant 0 : index
    %127 = vector.load %arg14[%c0_112, %c0_113, %c0_114] : memref<4x8x8xbf16, #tpu.memory_space<vmem>>, vector<1x8x8xbf16>
    %128 = vector.shape_cast %127 : vector<1x8x8xbf16> to vector<8x8xbf16>
    %cst_115 = arith.constant dense<0.000000e+00> : vector<8x128xf32>
    %129 = tpu.matmul %128, %125, %cst_115 {dimension_numbers = #tpu.dot_dimension_numbers<[1], [0], [0], [1], [0, 0, 1, 1], [], []>} : vector<8x8xbf16>, vector<8x128xbf16>, vector<8x128xf32> -> vector<8x128xf32>
    %130 = arith.truncf %129 : vector<8x128xf32> to vector<8x128xbf16>
    %c0_116 = arith.constant 0 : index
    %c0_117 = arith.constant 0 : index
    %c0_118 = arith.constant 0 : index
    %131 = vector.load %arg15[%c0_116, %c0_117, %c0_118] : memref<4x128x256xbf16, #tpu.memory_space<vmem>>, vector<1x128x256xbf16>
    %132 = vector.shape_cast %131 : vector<1x128x256xbf16> to vector<128x256xbf16>
    %cst_119 = arith.constant dense<0.000000e+00> : vector<8x256xf32>
    %133 = tpu.matmul %130, %132, %cst_119 {dimension_numbers = #tpu.dot_dimension_numbers<[1], [0], [0], [1], [0, 0, 1, 1], [], []>} : vector<8x128xbf16>, vector<128x256xbf16>, vector<8x256xf32> -> vector<8x256xf32>
    %c1_120 = arith.constant 1 : index
    %c0_121 = arith.constant 0 : index
    %c0_122 = arith.constant 0 : index
    %134 = vector.load %arg14[%c1_120, %c0_121, %c0_122] : memref<4x8x8xbf16, #tpu.memory_space<vmem>>, vector<1x8x8xbf16>
    %135 = vector.shape_cast %134 : vector<1x8x8xbf16> to vector<8x8xbf16>
    %cst_123 = arith.constant dense<0.000000e+00> : vector<8x128xf32>
    %136 = tpu.matmul %135, %125, %cst_123 {dimension_numbers = #tpu.dot_dimension_numbers<[1], [0], [0], [1], [0, 0, 1, 1], [], []>} : vector<8x8xbf16>, vector<8x128xbf16>, vector<8x128xf32> -> vector<8x128xf32>
    %137 = arith.truncf %136 : vector<8x128xf32> to vector<8x128xbf16>
    %c1_124 = arith.constant 1 : index
    %c0_125 = arith.constant 0 : index
    %c0_126 = arith.constant 0 : index
    %138 = vector.load %arg15[%c1_124, %c0_125, %c0_126] : memref<4x128x256xbf16, #tpu.memory_space<vmem>>, vector<1x128x256xbf16>
    %139 = vector.shape_cast %138 : vector<1x128x256xbf16> to vector<128x256xbf16>
    %cst_127 = arith.constant dense<0.000000e+00> : vector<8x256xf32>
    %140 = tpu.matmul %137, %139, %cst_127 {dimension_numbers = #tpu.dot_dimension_numbers<[1], [0], [0], [1], [0, 0, 1, 1], [], []>} : vector<8x128xbf16>, vector<128x256xbf16>, vector<8x256xf32> -> vector<8x256xf32>
    %c2_128 = arith.constant 2 : index
    %c0_129 = arith.constant 0 : index
    %c0_130 = arith.constant 0 : index
    %141 = vector.load %arg14[%c2_128, %c0_129, %c0_130] : memref<4x8x8xbf16, #tpu.memory_space<vmem>>, vector<1x8x8xbf16>
    %142 = vector.shape_cast %141 : vector<1x8x8xbf16> to vector<8x8xbf16>
    %cst_131 = arith.constant dense<0.000000e+00> : vector<8x128xf32>
    %143 = tpu.matmul %142, %125, %cst_131 {dimension_numbers = #tpu.dot_dimension_numbers<[1], [0], [0], [1], [0, 0, 1, 1], [], []>} : vector<8x8xbf16>, vector<8x128xbf16>, vector<8x128xf32> -> vector<8x128xf32>
    %144 = arith.truncf %143 : vector<8x128xf32> to vector<8x128xbf16>
    %c2_132 = arith.constant 2 : index
    %c0_133 = arith.constant 0 : index
    %c0_134 = arith.constant 0 : index
    %145 = vector.load %arg15[%c2_132, %c0_133, %c0_134] : memref<4x128x256xbf16, #tpu.memory_space<vmem>>, vector<1x128x256xbf16>
    %146 = vector.shape_cast %145 : vector<1x128x256xbf16> to vector<128x256xbf16>
    %cst_135 = arith.constant dense<0.000000e+00> : vector<8x256xf32>
    %147 = tpu.matmul %144, %146, %cst_135 {dimension_numbers = #tpu.dot_dimension_numbers<[1], [0], [0], [1], [0, 0, 1, 1], [], []>} : vector<8x128xbf16>, vector<128x256xbf16>, vector<8x256xf32> -> vector<8x256xf32>
    %c3 = arith.constant 3 : index
    %c0_136 = arith.constant 0 : index
    %c0_137 = arith.constant 0 : index
    %148 = vector.load %arg14[%c3, %c0_136, %c0_137] : memref<4x8x8xbf16, #tpu.memory_space<vmem>>, vector<1x8x8xbf16>
    %149 = vector.shape_cast %148 : vector<1x8x8xbf16> to vector<8x8xbf16>
    %cst_138 = arith.constant dense<0.000000e+00> : vector<8x128xf32>
    %150 = tpu.matmul %149, %125, %cst_138 {dimension_numbers = #tpu.dot_dimension_numbers<[1], [0], [0], [1], [0, 0, 1, 1], [], []>} : vector<8x8xbf16>, vector<8x128xbf16>, vector<8x128xf32> -> vector<8x128xf32>
    %151 = arith.truncf %150 : vector<8x128xf32> to vector<8x128xbf16>
    %c3_139 = arith.constant 3 : index
    %c0_140 = arith.constant 0 : index
    %c0_141 = arith.constant 0 : index
    %152 = vector.load %arg15[%c3_139, %c0_140, %c0_141] : memref<4x128x256xbf16, #tpu.memory_space<vmem>>, vector<1x128x256xbf16>
    %153 = vector.shape_cast %152 : vector<1x128x256xbf16> to vector<128x256xbf16>
    %cst_142 = arith.constant dense<0.000000e+00> : vector<8x256xf32>
    %154 = tpu.matmul %151, %153, %cst_142 {dimension_numbers = #tpu.dot_dimension_numbers<[1], [0], [0], [1], [0, 0, 1, 1], [], []>} : vector<8x128xbf16>, vector<128x256xbf16>, vector<8x256xf32> -> vector<8x256xf32>
    %155 = arith.addf %126, %133 : vector<8x256xf32>
    %156 = arith.addf %140, %147 : vector<8x256xf32>
    %157 = arith.addf %155, %156 : vector<8x256xf32>
    %158 = arith.addf %157, %154 : vector<8x256xf32>
    %c0_143 = arith.constant 0 : index
    %c0_144 = arith.constant 0 : index
    %159 = vector.load %arg33[%c0_143, %c0_144] : memref<8x256xf32, #tpu.memory_space<vmem>>, vector<8x256xf32>
    tpu.vector_store %arg33[%c0_143, %c0_144], %158 {strides = array<i32>} : memref<8x256xf32, #tpu.memory_space<vmem>>, vector<8x256xf32>,
    %160 = vector.extract_strided_slice %158 {offsets = [0, 0], sizes = [8, 128], strides = [1, 1]} : vector<8x256xf32> to vector<8x128xf32>
    %161 = vector.extract_strided_slice %158 {offsets = [0, 128], sizes = [8, 128], strides = [1, 1]} : vector<8x256xf32> to vector<8x128xf32>
    %c0_145 = arith.constant 0 : index
    %c0_146 = arith.constant 0 : index
    %162 = vector.load %arg1[%c0_145, %c0_146] : memref<8x128xf32, #tpu.memory_space<vmem>>, vector<8x128xf32>
    %cst_147 = arith.constant 5.000000e-01 : f32
    %163 = vector.broadcast %cst_147 : f32 to vector<8x128xf32>
    %164 = arith.mulf %161, %163 : vector<8x128xf32>
    %165 = math.exp %164 : vector<8x128xf32>
    %166 = arith.mulf %162, %165 : vector<8x128xf32>
    %167 = arith.addf %160, %166 : vector<8x128xf32>
    %168 = arith.truncf %167 : vector<8x128xf32> to vector<8x128xbf16>
    %c0_148 = arith.constant 0 : index
    %c0_149 = arith.constant 0 : index
    %169 = vector.load %arg19[%c0_148, %c0_149] : memref<8x128xf32, #tpu.memory_space<vmem>>, vector<8x128xf32>
    %c0_150 = arith.constant 0 : index
    %c0_151 = arith.constant 0 : index
    %c0_152 = arith.constant 0 : index
    %170 = vector.load %arg17[%c0_150, %c0_151, %c0_152] : memref<4x8x8xbf16, #tpu.memory_space<vmem>>, vector<1x8x8xbf16>
    %171 = vector.shape_cast %170 : vector<1x8x8xbf16> to vector<8x8xbf16>
    %cst_153 = arith.constant dense<0.000000e+00> : vector<8x128xf32>
    %172 = tpu.matmul %171, %168, %cst_153 {dimension_numbers = #tpu.dot_dimension_numbers<[1], [0], [0], [1], [0, 0, 1, 1], [], []>} : vector<8x8xbf16>, vector<8x128xbf16>, vector<8x128xf32> -> vector<8x128xf32>
    %173 = arith.truncf %172 : vector<8x128xf32> to vector<8x128xbf16>
    %c0_154 = arith.constant 0 : index
    %c0_155 = arith.constant 0 : index
    %c0_156 = arith.constant 0 : index
    %174 = vector.load %arg18[%c0_154, %c0_155, %c0_156] : memref<4x128x128xbf16, #tpu.memory_space<vmem>>, vector<1x128x128xbf16>
    %175 = vector.shape_cast %174 : vector<1x128x128xbf16> to vector<128x128xbf16>
    %cst_157 = arith.constant dense<0.000000e+00> : vector<8x128xf32>
    %176 = tpu.matmul %173, %175, %cst_157 {dimension_numbers = #tpu.dot_dimension_numbers<[1], [0], [0], [1], [0, 0, 1, 1], [], []>} : vector<8x128xbf16>, vector<128x128xbf16>, vector<8x128xf32> -> vector<8x128xf32>
    %c1_158 = arith.constant 1 : index
    %c0_159 = arith.constant 0 : index
    %c0_160 = arith.constant 0 : index
    %177 = vector.load %arg17[%c1_158, %c0_159, %c0_160] : memref<4x8x8xbf16, #tpu.memory_space<vmem>>, vector<1x8x8xbf16>
    %178 = vector.shape_cast %177 : vector<1x8x8xbf16> to vector<8x8xbf16>
    %cst_161 = arith.constant dense<0.000000e+00> : vector<8x128xf32>
    %179 = tpu.matmul %178, %168, %cst_161 {dimension_numbers = #tpu.dot_dimension_numbers<[1], [0], [0], [1], [0, 0, 1, 1], [], []>} : vector<8x8xbf16>, vector<8x128xbf16>, vector<8x128xf32> -> vector<8x128xf32>
    %180 = arith.truncf %179 : vector<8x128xf32> to vector<8x128xbf16>
    %c1_162 = arith.constant 1 : index
    %c0_163 = arith.constant 0 : index
    %c0_164 = arith.constant 0 : index
    %181 = vector.load %arg18[%c1_162, %c0_163, %c0_164] : memref<4x128x128xbf16, #tpu.memory_space<vmem>>, vector<1x128x128xbf16>
    %182 = vector.shape_cast %181 : vector<1x128x128xbf16> to vector<128x128xbf16>
    %cst_165 = arith.constant dense<0.000000e+00> : vector<8x128xf32>
    %183 = tpu.matmul %180, %182, %cst_165 {dimension_numbers = #tpu.dot_dimension_numbers<[1], [0], [0], [1], [0, 0, 1, 1], [], []>} : vector<8x128xbf16>, vector<128x128xbf16>, vector<8x128xf32> -> vector<8x128xf32>
    %c2_166 = arith.constant 2 : index
    %c0_167 = arith.constant 0 : index
    %c0_168 = arith.constant 0 : index
    %184 = vector.load %arg17[%c2_166, %c0_167, %c0_168] : memref<4x8x8xbf16, #tpu.memory_space<vmem>>, vector<1x8x8xbf16>
    %185 = vector.shape_cast %184 : vector<1x8x8xbf16> to vector<8x8xbf16>
    %cst_169 = arith.constant dense<0.000000e+00> : vector<8x128xf32>
    %186 = tpu.matmul %185, %168, %cst_169 {dimension_numbers = #tpu.dot_dimension_numbers<[1], [0], [0], [1], [0, 0, 1, 1], [], []>} : vector<8x8xbf16>, vector<8x128xbf16>, vector<8x128xf32> -> vector<8x128xf32>
    %187 = arith.truncf %186 : vector<8x128xf32> to vector<8x128xbf16>
    %c2_170 = arith.constant 2 : index
    %c0_171 = arith.constant 0 : index
    %c0_172 = arith.constant 0 : index
    %188 = vector.load %arg18[%c2_170, %c0_171, %c0_172] : memref<4x128x128xbf16, #tpu.memory_space<vmem>>, vector<1x128x128xbf16>
    %189 = vector.shape_cast %188 : vector<1x128x128xbf16> to vector<128x128xbf16>
    %cst_173 = arith.constant dense<0.000000e+00> : vector<8x128xf32>
    %190 = tpu.matmul %187, %189, %cst_173 {dimension_numbers = #tpu.dot_dimension_numbers<[1], [0], [0], [1], [0, 0, 1, 1], [], []>} : vector<8x128xbf16>, vector<128x128xbf16>, vector<8x128xf32> -> vector<8x128xf32>
    %c3_174 = arith.constant 3 : index
    %c0_175 = arith.constant 0 : index
    %c0_176 = arith.constant 0 : index
    %191 = vector.load %arg17[%c3_174, %c0_175, %c0_176] : memref<4x8x8xbf16, #tpu.memory_space<vmem>>, vector<1x8x8xbf16>
    %192 = vector.shape_cast %191 : vector<1x8x8xbf16> to vector<8x8xbf16>
    %cst_177 = arith.constant dense<0.000000e+00> : vector<8x128xf32>
    %193 = tpu.matmul %192, %168, %cst_177 {dimension_numbers = #tpu.dot_dimension_numbers<[1], [0], [0], [1], [0, 0, 1, 1], [], []>} : vector<8x8xbf16>, vector<8x128xbf16>, vector<8x128xf32> -> vector<8x128xf32>
    %194 = arith.truncf %193 : vector<8x128xf32> to vector<8x128xbf16>
    %c3_178 = arith.constant 3 : index
    %c0_179 = arith.constant 0 : index
    %c0_180 = arith.constant 0 : index
    %195 = vector.load %arg18[%c3_178, %c0_179, %c0_180] : memref<4x128x128xbf16, #tpu.memory_space<vmem>>, vector<1x128x128xbf16>
    %196 = vector.shape_cast %195 : vector<1x128x128xbf16> to vector<128x128xbf16>
    %cst_181 = arith.constant dense<0.000000e+00> : vector<8x128xf32>
    %197 = tpu.matmul %194, %196, %cst_181 {dimension_numbers = #tpu.dot_dimension_numbers<[1], [0], [0], [1], [0, 0, 1, 1], [], []>} : vector<8x128xbf16>, vector<128x128xbf16>, vector<8x128xf32> -> vector<8x128xf32>
    %198 = arith.addf %169, %176 : vector<8x128xf32>
    %199 = arith.addf %183, %190 : vector<8x128xf32>
    %200 = arith.addf %198, %199 : vector<8x128xf32>
    %201 = arith.addf %200, %197 : vector<8x128xf32>
    %202 = arith.truncf %201 : vector<8x128xf32> to vector<8x128xbf16>
    %c0_182 = arith.constant 0 : index
    %c0_183 = arith.constant 0 : index
    %203 = vector.load %arg22[%c0_182, %c0_183] : memref<8x128xf32, #tpu.memory_space<vmem>>, vector<8x128xf32>
    %c0_184 = arith.constant 0 : index
    %c0_185 = arith.constant 0 : index
    %c0_186 = arith.constant 0 : index
    %204 = vector.load %arg20[%c0_184, %c0_185, %c0_186] : memref<3x8x8xbf16, #tpu.memory_space<vmem>>, vector<1x8x8xbf16>
    %205 = vector.shape_cast %204 : vector<1x8x8xbf16> to vector<8x8xbf16>
    %cst_187 = arith.constant dense<0.000000e+00> : vector<8x128xf32>
    %206 = tpu.matmul %205, %202, %cst_187 {dimension_numbers = #tpu.dot_dimension_numbers<[1], [0], [0], [1], [0, 0, 1, 1], [], []>} : vector<8x8xbf16>, vector<8x128xbf16>, vector<8x128xf32> -> vector<8x128xf32>
    %207 = arith.truncf %206 : vector<8x128xf32> to vector<8x128xbf16>
    %c0_188 = arith.constant 0 : index
    %c0_189 = arith.constant 0 : index
    %c0_190 = arith.constant 0 : index
    %208 = vector.load %arg21[%c0_188, %c0_189, %c0_190] : memref<3x128x128xbf16, #tpu.memory_space<vmem>>, vector<1x128x128xbf16>
    %209 = vector.shape_cast %208 : vector<1x128x128xbf16> to vector<128x128xbf16>
    %cst_191 = arith.constant dense<0.000000e+00> : vector<8x128xf32>
    %210 = tpu.matmul %207, %209, %cst_191 {dimension_numbers = #tpu.dot_dimension_numbers<[1], [0], [0], [1], [0, 0, 1, 1], [], []>} : vector<8x128xbf16>, vector<128x128xbf16>, vector<8x128xf32> -> vector<8x128xf32>
    %c1_192 = arith.constant 1 : index
    %c0_193 = arith.constant 0 : index
    %c0_194 = arith.constant 0 : index
    %211 = vector.load %arg20[%c1_192, %c0_193, %c0_194] : memref<3x8x8xbf16, #tpu.memory_space<vmem>>, vector<1x8x8xbf16>
    %212 = vector.shape_cast %211 : vector<1x8x8xbf16> to vector<8x8xbf16>
    %cst_195 = arith.constant dense<0.000000e+00> : vector<8x128xf32>
    %213 = tpu.matmul %212, %202, %cst_195 {dimension_numbers = #tpu.dot_dimension_numbers<[1], [0], [0], [1], [0, 0, 1, 1], [], []>} : vector<8x8xbf16>, vector<8x128xbf16>, vector<8x128xf32> -> vector<8x128xf32>
    %214 = arith.truncf %213 : vector<8x128xf32> to vector<8x128xbf16>
    %c1_196 = arith.constant 1 : index
    %c0_197 = arith.constant 0 : index
    %c0_198 = arith.constant 0 : index
    %215 = vector.load %arg21[%c1_196, %c0_197, %c0_198] : memref<3x128x128xbf16, #tpu.memory_space<vmem>>, vector<1x128x128xbf16>
    %216 = vector.shape_cast %215 : vector<1x128x128xbf16> to vector<128x128xbf16>
    %cst_199 = arith.constant dense<0.000000e+00> : vector<8x128xf32>
    %217 = tpu.matmul %214, %216, %cst_199 {dimension_numbers = #tpu.dot_dimension_numbers<[1], [0], [0], [1], [0, 0, 1, 1], [], []>} : vector<8x128xbf16>, vector<128x128xbf16>, vector<8x128xf32> -> vector<8x128xf32>
    %c2_200 = arith.constant 2 : index
    %c0_201 = arith.constant 0 : index
    %c0_202 = arith.constant 0 : index
    %218 = vector.load %arg20[%c2_200, %c0_201, %c0_202] : memref<3x8x8xbf16, #tpu.memory_space<vmem>>, vector<1x8x8xbf16>
    %219 = vector.shape_cast %218 : vector<1x8x8xbf16> to vector<8x8xbf16>
    %cst_203 = arith.constant dense<0.000000e+00> : vector<8x128xf32>
    %220 = tpu.matmul %219, %202, %cst_203 {dimension_numbers = #tpu.dot_dimension_numbers<[1], [0], [0], [1], [0, 0, 1, 1], [], []>} : vector<8x8xbf16>, vector<8x128xbf16>, vector<8x128xf32> -> vector<8x128xf32>
    %221 = arith.truncf %220 : vector<8x128xf32> to vector<8x128xbf16>
    %c2_204 = arith.constant 2 : index
    %c0_205 = arith.constant 0 : index
    %c0_206 = arith.constant 0 : index
    %222 = vector.load %arg21[%c2_204, %c0_205, %c0_206] : memref<3x128x128xbf16, #tpu.memory_space<vmem>>, vector<1x128x128xbf16>
    %223 = vector.shape_cast %222 : vector<1x128x128xbf16> to vector<128x128xbf16>
    %cst_207 = arith.constant dense<0.000000e+00> : vector<8x128xf32>
    %224 = tpu.matmul %221, %223, %cst_207 {dimension_numbers = #tpu.dot_dimension_numbers<[1], [0], [0], [1], [0, 0, 1, 1], [], []>} : vector<8x128xbf16>, vector<128x128xbf16>, vector<8x128xf32> -> vector<8x128xf32>
    %225 = arith.addf %203, %210 : vector<8x128xf32>
    %226 = arith.addf %217, %224 : vector<8x128xf32>
    %227 = arith.addf %225, %226 : vector<8x128xf32>
    %cst_208 = arith.constant 0.000000e+00 : f32
    %228 = vector.broadcast %cst_208 : f32 to vector<8x128xf32>
    %229 = arith.cmpf oge, %227, %228 : vector<8x128xf32>
    %cst_209 = arith.constant 0.00999999977 : f32
    %230 = vector.broadcast %cst_209 : f32 to vector<8x128xf32>
    %231 = arith.mulf %230, %227 : vector<8x128xf32>
    %232 = arith.select %229, %227, %231 : vector<8x128xi1>, vector<8x128xf32>
    %233 = arith.truncf %232 : vector<8x128xf32> to vector<8x128xbf16>
    %c0_210 = arith.constant 0 : index
    %c0_211 = arith.constant 0 : index
    %234 = vector.load %arg25[%c0_210, %c0_211] : memref<24x256xf32, #tpu.memory_space<vmem>>, vector<24x256xf32>
    %c0_212 = arith.constant 0 : index
    %c0_213 = arith.constant 0 : index
    %c0_214 = arith.constant 0 : index
    %235 = vector.load %arg24[%c0_212, %c0_213, %c0_214] : memref<3x128x256xbf16, #tpu.memory_space<vmem>>, vector<1x128x256xbf16>
    %236 = vector.shape_cast %235 : vector<1x128x256xbf16> to vector<128x256xbf16>
    %cst_215 = arith.constant dense<0.000000e+00> : vector<8x256xf32>
    %237 = tpu.matmul %233, %236, %cst_215 {dimension_numbers = #tpu.dot_dimension_numbers<[1], [0], [0], [1], [0, 0, 1, 1], [], []>} : vector<8x128xbf16>, vector<128x256xbf16>, vector<8x256xf32> -> vector<8x256xf32>
    %c0_216 = arith.constant 0 : index
    %c0_217 = arith.constant 0 : index
    %c0_218 = arith.constant 0 : index
    %238 = vector.load %arg23[%c0_216, %c0_217, %c0_218] : memref<3x24x8xbf16, #tpu.memory_space<vmem>>, vector<1x24x8xbf16>
    %239 = vector.shape_cast %238 : vector<1x24x8xbf16> to vector<24x8xbf16>
    %240 = arith.truncf %237 : vector<8x256xf32> to vector<8x256xbf16>
    %cst_219 = arith.constant dense<0.000000e+00> : vector<24x256xf32>
    %241 = tpu.matmul %239, %240, %cst_219 {dimension_numbers = #tpu.dot_dimension_numbers<[1], [0], [0], [1], [0, 0, 1, 1], [], []>} : vector<24x8xbf16>, vector<8x256xbf16>, vector<24x256xf32> -> vector<24x256xf32>
    %c1_220 = arith.constant 1 : index
    %c0_221 = arith.constant 0 : index
    %c0_222 = arith.constant 0 : index
    %242 = vector.load %arg24[%c1_220, %c0_221, %c0_222] : memref<3x128x256xbf16, #tpu.memory_space<vmem>>, vector<1x128x256xbf16>
    %243 = vector.shape_cast %242 : vector<1x128x256xbf16> to vector<128x256xbf16>
    %cst_223 = arith.constant dense<0.000000e+00> : vector<8x256xf32>
    %244 = tpu.matmul %233, %243, %cst_223 {dimension_numbers = #tpu.dot_dimension_numbers<[1], [0], [0], [1], [0, 0, 1, 1], [], []>} : vector<8x128xbf16>, vector<128x256xbf16>, vector<8x256xf32> -> vector<8x256xf32>
    %c1_224 = arith.constant 1 : index
    %c0_225 = arith.constant 0 : index
    %c0_226 = arith.constant 0 : index
    %245 = vector.load %arg23[%c1_224, %c0_225, %c0_226] : memref<3x24x8xbf16, #tpu.memory_space<vmem>>, vector<1x24x8xbf16>
    %246 = vector.shape_cast %245 : vector<1x24x8xbf16> to vector<24x8xbf16>
    %247 = arith.truncf %244 : vector<8x256xf32> to vector<8x256xbf16>
    %cst_227 = arith.constant dense<0.000000e+00> : vector<24x256xf32>
    %248 = tpu.matmul %246, %247, %cst_227 {dimension_numbers = #tpu.dot_dimension_numbers<[1], [0], [0], [1], [0, 0, 1, 1], [], []>} : vector<24x8xbf16>, vector<8x256xbf16>, vector<24x256xf32> -> vector<24x256xf32>
    %c2_228 = arith.constant 2 : index
    %c0_229 = arith.constant 0 : index
    %c0_230 = arith.constant 0 : index
    %249 = vector.load %arg24[%c2_228, %c0_229, %c0_230] : memref<3x128x256xbf16, #tpu.memory_space<vmem>>, vector<1x128x256xbf16>
    %250 = vector.shape_cast %249 : vector<1x128x256xbf16> to vector<128x256xbf16>
    %cst_231 = arith.constant dense<0.000000e+00> : vector<8x256xf32>
    %251 = tpu.matmul %233, %250, %cst_231 {dimension_numbers = #tpu.dot_dimension_numbers<[1], [0], [0], [1], [0, 0, 1, 1], [], []>} : vector<8x128xbf16>, vector<128x256xbf16>, vector<8x256xf32> -> vector<8x256xf32>
    %c2_232 = arith.constant 2 : index
    %c0_233 = arith.constant 0 : index
    %c0_234 = arith.constant 0 : index
    %252 = vector.load %arg23[%c2_232, %c0_233, %c0_234] : memref<3x24x8xbf16, #tpu.memory_space<vmem>>, vector<1x24x8xbf16>
    %253 = vector.shape_cast %252 : vector<1x24x8xbf16> to vector<24x8xbf16>
    %254 = arith.truncf %251 : vector<8x256xf32> to vector<8x256xbf16>
    %cst_235 = arith.constant dense<0.000000e+00> : vector<24x256xf32>
    %255 = tpu.matmul %253, %254, %cst_235 {dimension_numbers = #tpu.dot_dimension_numbers<[1], [0], [0], [1], [0, 0, 1, 1], [], []>} : vector<24x8xbf16>, vector<8x256xbf16>, vector<24x256xf32> -> vector<24x256xf32>
    %256 = arith.addf %234, %241 : vector<24x256xf32>
    %257 = arith.addf %248, %255 : vector<24x256xf32>
    %258 = arith.addf %256, %257 : vector<24x256xf32>
    %cst_236 = arith.constant 0.000000e+00 : f32
    %259 = vector.broadcast %cst_236 : f32 to vector<24x256xf32>
    %260 = arith.cmpf oge, %258, %259 : vector<24x256xf32>
    %cst_237 = arith.constant 0.00999999977 : f32
    %261 = vector.broadcast %cst_237 : f32 to vector<24x256xf32>
    %262 = arith.mulf %261, %258 : vector<24x256xf32>
    %263 = arith.select %260, %258, %262 : vector<24x256xi1>, vector<24x256xf32>
    %264 = arith.truncf %263 : vector<24x256xf32> to vector<24x256xbf16>
    %c0_238 = arith.constant 0 : index
    %c0_239 = arith.constant 0 : index
    %265 = vector.load %arg28[%c0_238, %c0_239] : memref<40x256xf32, #tpu.memory_space<vmem>>, vector<40x256xf32>
    %c0_240 = arith.constant 0 : index
    %c0_241 = arith.constant 0 : index
    %c0_242 = arith.constant 0 : index
    %266 = vector.load %arg27[%c0_240, %c0_241, %c0_242] : memref<3x256x256xbf16, #tpu.memory_space<vmem>>, vector<1x256x256xbf16>
    %267 = vector.shape_cast %266 : vector<1x256x256xbf16> to vector<256x256xbf16>
    %cst_243 = arith.constant dense<0.000000e+00> : vector<24x256xf32>
    %268 = tpu.matmul %264, %267, %cst_243 {dimension_numbers = #tpu.dot_dimension_numbers<[1], [0], [0], [1], [0, 0, 1, 1], [], []>} : vector<24x256xbf16>, vector<256x256xbf16>, vector<24x256xf32> -> vector<24x256xf32>
    %c0_244 = arith.constant 0 : index
    %c0_245 = arith.constant 0 : index
    %c0_246 = arith.constant 0 : index
    %269 = vector.load %arg26[%c0_244, %c0_245, %c0_246] : memref<3x40x24xbf16, #tpu.memory_space<vmem>>, vector<1x40x24xbf16>
    %270 = vector.shape_cast %269 : vector<1x40x24xbf16> to vector<40x24xbf16>
    %271 = arith.truncf %268 : vector<24x256xf32> to vector<24x256xbf16>
    %cst_247 = arith.constant dense<0.000000e+00> : vector<40x256xf32>
    %272 = tpu.matmul %270, %271, %cst_247 {dimension_numbers = #tpu.dot_dimension_numbers<[1], [0], [0], [1], [0, 0, 1, 1], [], []>} : vector<40x24xbf16>, vector<24x256xbf16>, vector<40x256xf32> -> vector<40x256xf32>
    %c1_248 = arith.constant 1 : index
    %c0_249 = arith.constant 0 : index
    %c0_250 = arith.constant 0 : index
    %273 = vector.load %arg27[%c1_248, %c0_249, %c0_250] : memref<3x256x256xbf16, #tpu.memory_space<vmem>>, vector<1x256x256xbf16>
    %274 = vector.shape_cast %273 : vector<1x256x256xbf16> to vector<256x256xbf16>
    %cst_251 = arith.constant dense<0.000000e+00> : vector<24x256xf32>
    %275 = tpu.matmul %264, %274, %cst_251 {dimension_numbers = #tpu.dot_dimension_numbers<[1], [0], [0], [1], [0, 0, 1, 1], [], []>} : vector<24x256xbf16>, vector<256x256xbf16>, vector<24x256xf32> -> vector<24x256xf32>
    %c1_252 = arith.constant 1 : index
    %c0_253 = arith.constant 0 : index
    %c0_254 = arith.constant 0 : index
    %276 = vector.load %arg26[%c1_252, %c0_253, %c0_254] : memref<3x40x24xbf16, #tpu.memory_space<vmem>>, vector<1x40x24xbf16>
    %277 = vector.shape_cast %276 : vector<1x40x24xbf16> to vector<40x24xbf16>
    %278 = arith.truncf %275 : vector<24x256xf32> to vector<24x256xbf16>
    %cst_255 = arith.constant dense<0.000000e+00> : vector<40x256xf32>
    %279 = tpu.matmul %277, %278, %cst_255 {dimension_numbers = #tpu.dot_dimension_numbers<[1], [0], [0], [1], [0, 0, 1, 1], [], []>} : vector<40x24xbf16>, vector<24x256xbf16>, vector<40x256xf32> -> vector<40x256xf32>
    %c2_256 = arith.constant 2 : index
    %c0_257 = arith.constant 0 : index
    %c0_258 = arith.constant 0 : index
    %280 = vector.load %arg27[%c2_256, %c0_257, %c0_258] : memref<3x256x256xbf16, #tpu.memory_space<vmem>>, vector<1x256x256xbf16>
    %281 = vector.shape_cast %280 : vector<1x256x256xbf16> to vector<256x256xbf16>
    %cst_259 = arith.constant dense<0.000000e+00> : vector<24x256xf32>
    %282 = tpu.matmul %264, %281, %cst_259 {dimension_numbers = #tpu.dot_dimension_numbers<[1], [0], [0], [1], [0, 0, 1, 1], [], []>} : vector<24x256xbf16>, vector<256x256xbf16>, vector<24x256xf32> -> vector<24x256xf32>
    %c2_260 = arith.constant 2 : index
    %c0_261 = arith.constant 0 : index
    %c0_262 = arith.constant 0 : index
    %283 = vector.load %arg26[%c2_260, %c0_261, %c0_262] : memref<3x40x24xbf16, #tpu.memory_space<vmem>>, vector<1x40x24xbf16>
    %284 = vector.shape_cast %283 : vector<1x40x24xbf16> to vector<40x24xbf16>
    %285 = arith.truncf %282 : vector<24x256xf32> to vector<24x256xbf16>
    %cst_263 = arith.constant dense<0.000000e+00> : vector<40x256xf32>
    %286 = tpu.matmul %284, %285, %cst_263 {dimension_numbers = #tpu.dot_dimension_numbers<[1], [0], [0], [1], [0, 0, 1, 1], [], []>} : vector<40x24xbf16>, vector<24x256xbf16>, vector<40x256xf32> -> vector<40x256xf32>
    %287 = arith.addf %265, %272 : vector<40x256xf32>
    %288 = arith.addf %279, %286 : vector<40x256xf32>
    %289 = arith.addf %287, %288 : vector<40x256xf32>
    %cst_264 = arith.constant 0.000000e+00 : f32
    %290 = vector.broadcast %cst_264 : f32 to vector<40x256xf32>
    %291 = arith.cmpf oge, %289, %290 : vector<40x256xf32>
    %cst_265 = arith.constant 0.00999999977 : f32
    %292 = vector.broadcast %cst_265 : f32 to vector<40x256xf32>
    %293 = arith.mulf %292, %289 : vector<40x256xf32>
    %294 = arith.select %291, %289, %293 : vector<40x256xi1>, vector<40x256xf32>
    %295 = arith.truncf %294 : vector<40x256xf32> to vector<40x256xbf16>
    %c0_266 = arith.constant 0 : index
    %c0_267 = arith.constant 0 : index
    %296 = vector.load %arg31[%c0_266, %c0_267] : memref<40x128xf32, #tpu.memory_space<vmem>>, vector<40x128xf32>
    %c0_268 = arith.constant 0 : index
    %c0_269 = arith.constant 0 : index
    %c0_270 = arith.constant 0 : index
    %297 = vector.load %arg30[%c0_268, %c0_269, %c0_270] : memref<3x256x128xbf16, #tpu.memory_space<vmem>>, vector<1x256x128xbf16>
    %298 = vector.shape_cast %297 : vector<1x256x128xbf16> to vector<256x128xbf16>
    %cst_271 = arith.constant dense<0.000000e+00> : vector<40x128xf32>
    %299 = tpu.matmul %295, %298, %cst_271 {dimension_numbers = #tpu.dot_dimension_numbers<[1], [0], [0], [1], [0, 0, 1, 1], [], []>} : vector<40x256xbf16>, vector<256x128xbf16>, vector<40x128xf32> -> vector<40x128xf32>
    %c0_272 = arith.constant 0 : index
    %c0_273 = arith.constant 0 : index
    %c0_274 = arith.constant 0 : index
    %300 = vector.load %arg29[%c0_272, %c0_273, %c0_274] : memref<3x40x40xbf16, #tpu.memory_space<vmem>>, vector<1x40x40xbf16>
    %301 = vector.shape_cast %300 : vector<1x40x40xbf16> to vector<40x40xbf16>
    %302 = arith.truncf %299 : vector<40x128xf32> to vector<40x128xbf16>
    %cst_275 = arith.constant dense<0.000000e+00> : vector<40x128xf32>
    %303 = tpu.matmul %301, %302, %cst_275 {dimension_numbers = #tpu.dot_dimension_numbers<[1], [0], [0], [1], [0, 0, 1, 1], [], []>} : vector<40x40xbf16>, vector<40x128xbf16>, vector<40x128xf32> -> vector<40x128xf32>
    %c1_276 = arith.constant 1 : index
    %c0_277 = arith.constant 0 : index
    %c0_278 = arith.constant 0 : index
    %304 = vector.load %arg30[%c1_276, %c0_277, %c0_278] : memref<3x256x128xbf16, #tpu.memory_space<vmem>>, vector<1x256x128xbf16>
    %305 = vector.shape_cast %304 : vector<1x256x128xbf16> to vector<256x128xbf16>
    %cst_279 = arith.constant dense<0.000000e+00> : vector<40x128xf32>
    %306 = tpu.matmul %295, %305, %cst_279 {dimension_numbers = #tpu.dot_dimension_numbers<[1], [0], [0], [1], [0, 0, 1, 1], [], []>} : vector<40x256xbf16>, vector<256x128xbf16>, vector<40x128xf32> -> vector<40x128xf32>
    %c1_280 = arith.constant 1 : index
    %c0_281 = arith.constant 0 : index
    %c0_282 = arith.constant 0 : index
    %307 = vector.load %arg29[%c1_280, %c0_281, %c0_282] : memref<3x40x40xbf16, #tpu.memory_space<vmem>>, vector<1x40x40xbf16>
    %308 = vector.shape_cast %307 : vector<1x40x40xbf16> to vector<40x40xbf16>
    %309 = arith.truncf %306 : vector<40x128xf32> to vector<40x128xbf16>
    %cst_283 = arith.constant dense<0.000000e+00> : vector<40x128xf32>
    %310 = tpu.matmul %308, %309, %cst_283 {dimension_numbers = #tpu.dot_dimension_numbers<[1], [0], [0], [1], [0, 0, 1, 1], [], []>} : vector<40x40xbf16>, vector<40x128xbf16>, vector<40x128xf32> -> vector<40x128xf32>
    %c2_284 = arith.constant 2 : index
    %c0_285 = arith.constant 0 : index
    %c0_286 = arith.constant 0 : index
    %311 = vector.load %arg30[%c2_284, %c0_285, %c0_286] : memref<3x256x128xbf16, #tpu.memory_space<vmem>>, vector<1x256x128xbf16>
    %312 = vector.shape_cast %311 : vector<1x256x128xbf16> to vector<256x128xbf16>
    %cst_287 = arith.constant dense<0.000000e+00> : vector<40x128xf32>
    %313 = tpu.matmul %295, %312, %cst_287 {dimension_numbers = #tpu.dot_dimension_numbers<[1], [0], [0], [1], [0, 0, 1, 1], [], []>} : vector<40x256xbf16>, vector<256x128xbf16>, vector<40x128xf32> -> vector<40x128xf32>
    %c2_288 = arith.constant 2 : index
    %c0_289 = arith.constant 0 : index
    %c0_290 = arith.constant 0 : index
    %314 = vector.load %arg29[%c2_288, %c0_289, %c0_290] : memref<3x40x40xbf16, #tpu.memory_space<vmem>>, vector<1x40x40xbf16>
    %315 = vector.shape_cast %314 : vector<1x40x40xbf16> to vector<40x40xbf16>
    %316 = arith.truncf %313 : vector<40x128xf32> to vector<40x128xbf16>
    %cst_291 = arith.constant dense<0.000000e+00> : vector<40x128xf32>
    %317 = tpu.matmul %315, %316, %cst_291 {dimension_numbers = #tpu.dot_dimension_numbers<[1], [0], [0], [1], [0, 0, 1, 1], [], []>} : vector<40x40xbf16>, vector<40x128xbf16>, vector<40x128xf32> -> vector<40x128xf32>
    %318 = arith.addf %296, %303 : vector<40x128xf32>
    %319 = arith.addf %310, %317 : vector<40x128xf32>
    %320 = arith.addf %318, %319 : vector<40x128xf32>
    %cst_292 = arith.constant 0.000000e+00 : f32
    %321 = vector.broadcast %cst_292 : f32 to vector<40x128xf32>
    %322 = arith.cmpf oge, %320, %321 : vector<40x128xf32>
    %cst_293 = arith.constant 0.00999999977 : f32
    %323 = vector.broadcast %cst_293 : f32 to vector<40x128xf32>
    %324 = arith.mulf %323, %320 : vector<40x128xf32>
    %325 = arith.select %322, %320, %324 : vector<40x128xi1>, vector<40x128xf32>
    %cst_294 = arith.constant 0.000000e+00 : f32
    %326 = vector.broadcast %cst_294 : f32 to vector<40x128xf32>
    %327 = arith.subf %326, %325 : vector<40x128xf32>
    %328 = math.exp %327 : vector<40x128xf32>
    %cst_295 = arith.constant 1.000000e+00 : f32
    %329 = vector.broadcast %cst_295 : f32 to vector<40x128xf32>
    %330 = arith.addf %329, %328 : vector<40x128xf32>
    %331 = tpu.reciprocal %330 {approx = true} : vector<40x128xf32> -> vector<40x128xf32>
    %c0_296 = arith.constant 0 : index
    %c0_297 = arith.constant 0 : index
    %332 = vector.load %arg32[%c0_296, %c0_297] : memref<40x128xf32, #tpu.memory_space<vmem>>, vector<40x128xf32>
    tpu.vector_store %arg32[%c0_296, %c0_297], %331 {strides = array<i32>} : memref<40x128xf32, #tpu.memory_space<vmem>>, vector<40x128xf32>,
    return
  }
}

</mosaic_0001>

<llo_original>
// kernel: forward.1
$region0: #{forward.1}
  #allocation0 [shape = 'u32[]', space=smem, size = 0x4, offset = 0x4, fixed_abs, tag = 'smem constant byte address 0x4 - core index']
  #allocation1 [shape = 'u32[144,128]{1,0:T(1,128)}', space=vmem, size = 0x12000, scoped, tag = 'internal scratch']
  %s0 = inlined_call_operand.smem [shape: u32[34], index: -1, kind: input, shape index: {}]
  %s1 = sld [smem:[%s0]]
  %s2 = scalar_lea.smem %s0, 1
  %s3 = sld [smem:[%s2]]
  %s4 = scalar_lea.smem %s0, 2
  %s5 = sld [smem:[%s4]]
  %s6 = scalar_lea.smem %s0, 3
  %s7 = sld [smem:[%s6]]
  %s8 = scalar_lea.smem %s0, 4
  %s9 = sld [smem:[%s8]]
  %s10 = scalar_lea.smem %s0, 5
  %s11 = sld [smem:[%s10]]
  %s12 = scalar_lea.smem %s0, 6
  %s13 = sld [smem:[%s12]]
  %s14 = scalar_lea.smem %s0, 7
  %s15 = sld [smem:[%s14]]
  %s16 = scalar_lea.smem %s0, 8
  %s17 = sld [smem:[%s16]]
  %s18 = scalar_lea.smem %s0, 9
  %s19 = sld [smem:[%s18]]
  %s20 = scalar_lea.smem %s0, 10
  %s21 = sld [smem:[%s20]]
  %s22 = scalar_lea.smem %s0, 11
  %s23 = sld [smem:[%s22]]
  %s24 = scalar_lea.smem %s0, 12
  %s25 = sld [smem:[%s24]]
  %s26 = scalar_lea.smem %s0, 13
  %s27 = sld [smem:[%s26]]
  %s28 = scalar_lea.smem %s0, 14
  %s29 = sld [smem:[%s28]]
  %s30 = scalar_lea.smem %s0, 15
  %s31 = sld [smem:[%s30]]
  %s32 = scalar_lea.smem %s0, 16
  %s33 = sld [smem:[%s32]]
  %s34 = scalar_lea.smem %s0, 17
  %s35 = sld [smem:[%s34]]
  %s36 = scalar_lea.smem %s0, 18
  %s37 = sld [smem:[%s36]]
  %s38 = scalar_lea.smem %s0, 19
  %s39 = sld [smem:[%s38]]
  %s40 = scalar_lea.smem %s0, 20
  %s41 = sld [smem:[%s40]]
  %s42 = scalar_lea.smem %s0, 21
  %s43 = sld [smem:[%s42]]
  %s44 = scalar_lea.smem %s0, 22
  %s45 = sld [smem:[%s44]]
  %s46 = scalar_lea.smem %s0, 23
  %s47 = sld [smem:[%s46]]
  %s48 = scalar_lea.smem %s0, 24
  %s49 = sld [smem:[%s48]]
  %s50 = scalar_lea.smem %s0, 25
  %s51 = sld [smem:[%s50]]
  %s52 = scalar_lea.smem %s0, 26
  %s53 = sld [smem:[%s52]]
  %s54 = scalar_lea.smem %s0, 27
  %s55 = sld [smem:[%s54]]
  %s56 = scalar_lea.smem %s0, 28
  %s57 = sld [smem:[%s56]]
  %s58 = scalar_lea.smem %s0, 29
  %s59 = sld [smem:[%s58]]
  %s60 = scalar_lea.smem %s0, 30
  %s61 = sld [smem:[%s60]]
  %s62 = scalar_lea.smem %s0, 31
  %s63 = sld [smem:[%s62]]
  %s64 = scalar_lea.smem %s0, 32
  %s65 = sld [smem:[%s64]]
  %s66 = scalar_lea.smem %s0, 33
  %s67 = sld [smem:[%s66]]
  %68 = xla_tuple %s65, %s67
  %s69 = sld [smem:[#allocation0]]
  $region146: #{forward.1} parent=0
    _
  %s71 = ssub.s32 1, %s69
  %s72 = scalar_select 0, %s71, %s69
  // Predicated region
  $region2: #{forward.1} parent=0 // pred_check
    _
  $region3: #{forward.1} parent=0 // pred_check_branch
    %74 = sbr.rel (0) target = $region5
  $region4: #{forward.1} parent=0 // pred_region
    _
  $region5: #{forward.1} parent=0 // pred_fallthru
    _
  // Predicated region
  $region6: #{forward.1} parent=0 // pred_check
    _
  $region7: #{forward.1} parent=0 // pred_check_branch
    %76 = sbr.rel (0) target = $region9
  $region8: #{forward.1} parent=0 // pred_region
    _
  $region9: #{forward.1} parent=0 // pred_fallthru
    _
  // Predicated region
  $region10: #{forward.1} parent=0 // pred_check
    _
  $region11: #{forward.1} parent=0 // pred_check_branch
    %78 = sbr.rel (0) target = $region13
  $region12: #{forward.1} parent=0 // pred_region
    _
  $region13: #{forward.1} parent=0 // pred_fallthru
    _
  // Predicated region
  $region14: #{forward.1} parent=0 // pred_check
    _
  $region15: #{forward.1} parent=0 // pred_check_branch
    %80 = sbr.rel (0) target = $region17
  $region16: #{forward.1} parent=0 // pred_region
    _
  $region17: #{forward.1} parent=0 // pred_fallthru
    _
  // Predicated region
  $region18: #{forward.1} parent=0 // pred_check
    _
  $region19: #{forward.1} parent=0 // pred_check_branch
    %82 = sbr.rel (0) target = $region21
  $region20: #{forward.1} parent=0 // pred_region
    _
  $region21: #{forward.1} parent=0 // pred_fallthru
    _
  // Predicated region
  $region22: #{forward.1} parent=0 // pred_check
    _
  $region23: #{forward.1} parent=0 // pred_check_branch
    %84 = sbr.rel (0) target = $region25
  $region24: #{forward.1} parent=0 // pred_region
    _
  $region25: #{forward.1} parent=0 // pred_fallthru
    _
  // Predicated region
  $region26: #{forward.1} parent=0 // pred_check
    _
  $region27: #{forward.1} parent=0 // pred_check_branch
    %86 = sbr.rel (0) target = $region29
  $region28: #{forward.1} parent=0 // pred_region
    _
  $region29: #{forward.1} parent=0 // pred_fallthru
    _
  // Predicated region
  $region30: #{forward.1} parent=0 // pred_check
    _
  $region31: #{forward.1} parent=0 // pred_check_branch
    %88 = sbr.rel (0) target = $region33
  $region32: #{forward.1} parent=0 // pred_region
    _
  $region33: #{forward.1} parent=0 // pred_fallthru
    _
  // Predicated region
  $region34: #{forward.1} parent=0 // pred_check
    _
  $region35: #{forward.1} parent=0 // pred_check_branch
    %90 = sbr.rel (0) target = $region37
  $region36: #{forward.1} parent=0 // pred_region
    _
  $region37: #{forward.1} parent=0 // pred_fallthru
    _
  // Predicated region
  $region38: #{forward.1} parent=0 // pred_check
    _
  $region39: #{forward.1} parent=0 // pred_check_branch
    %92 = sbr.rel (0) target = $region41
  $region40: #{forward.1} parent=0 // pred_region
    _
  $region41: #{forward.1} parent=0 // pred_fallthru
    _
  // Predicated region
  $region42: #{forward.1} parent=0 // pred_check
    _
  $region43: #{forward.1} parent=0 // pred_check_branch
    %94 = sbr.rel (0) target = $region45
  $region44: #{forward.1} parent=0 // pred_region
    _
  $region45: #{forward.1} parent=0 // pred_fallthru
    _
  // Predicated region
  $region46: #{forward.1} parent=0 // pred_check
    _
  $region47: #{forward.1} parent=0 // pred_check_branch
    %96 = sbr.rel (0) target = $region49
  $region48: #{forward.1} parent=0 // pred_region
    _
  $region49: #{forward.1} parent=0 // pred_fallthru
    _
  // Predicated region
  $region50: #{forward.1} parent=0 // pred_check
    _
  $region51: #{forward.1} parent=0 // pred_check_branch
    %98 = sbr.rel (0) target = $region53
  $region52: #{forward.1} parent=0 // pred_region
    _
  $region53: #{forward.1} parent=0 // pred_fallthru
    _
  // Predicated region
  $region54: #{forward.1} parent=0 // pred_check
    _
  $region55: #{forward.1} parent=0 // pred_check_branch
    %100 = sbr.rel (0) target = $region57
  $region56: #{forward.1} parent=0 // pred_region
    _
  $region57: #{forward.1} parent=0 // pred_fallthru
    _
  // Predicated region
  $region58: #{forward.1} parent=0 // pred_check
    _
  $region59: #{forward.1} parent=0 // pred_check_branch
    %102 = sbr.rel (0) target = $region61
  $region60: #{forward.1} parent=0 // pred_region
    _
  $region61: #{forward.1} parent=0 // pred_fallthru
    _
  // Predicated region
  $region62: #{forward.1} parent=0 // pred_check
    _
  $region63: #{forward.1} parent=0 // pred_check_branch
    %104 = sbr.rel (0) target = $region65
  $region64: #{forward.1} parent=0 // pred_region
    _
  $region65: #{forward.1} parent=0 // pred_fallthru
    _
  // Predicated region
  $region66: #{forward.1} parent=0 // pred_check
    _
  $region67: #{forward.1} parent=0 // pred_check_branch
    %106 = sbr.rel (0) target = $region69
  $region68: #{forward.1} parent=0 // pred_region
    _
  $region69: #{forward.1} parent=0 // pred_fallthru
    _
  // Predicated region
  $region70: #{forward.1} parent=0 // pred_check
    _
  $region71: #{forward.1} parent=0 // pred_check_branch
    %108 = sbr.rel (0) target = $region73
  $region72: #{forward.1} parent=0 // pred_region
    _
  $region73: #{forward.1} parent=0 // pred_fallthru
    _
  // Predicated region
  $region74: #{forward.1} parent=0 // pred_check
    _
  $region75: #{forward.1} parent=0 // pred_check_branch
    %110 = sbr.rel (0) target = $region77
  $region76: #{forward.1} parent=0 // pred_region
    _
  $region77: #{forward.1} parent=0 // pred_fallthru
    _
  // Predicated region
  $region78: #{forward.1} parent=0 // pred_check
    _
  $region79: #{forward.1} parent=0 // pred_check_branch
    %112 = sbr.rel (0) target = $region81
  $region80: #{forward.1} parent=0 // pred_region
    _
  $region81: #{forward.1} parent=0 // pred_fallthru
    _
  // Predicated region
  $region82: #{forward.1} parent=0 // pred_check
    _
  $region83: #{forward.1} parent=0 // pred_check_branch
    %114 = sbr.rel (0) target = $region85
  $region84: #{forward.1} parent=0 // pred_region
    _
  $region85: #{forward.1} parent=0 // pred_fallthru
    _
  // Predicated region
  $region86: #{forward.1} parent=0 // pred_check
    _
  $region87: #{forward.1} parent=0 // pred_check_branch
    %116 = sbr.rel (0) target = $region89
  $region88: #{forward.1} parent=0 // pred_region
    _
  $region89: #{forward.1} parent=0 // pred_fallthru
    _
  // Predicated region
  $region90: #{forward.1} parent=0 // pred_check
    _
  $region91: #{forward.1} parent=0 // pred_check_branch
    %118 = sbr.rel (0) target = $region93
  $region92: #{forward.1} parent=0 // pred_region
    _
  $region93: #{forward.1} parent=0 // pred_fallthru
    _
  // Predicated region
  $region94: #{forward.1} parent=0 // pred_check
    _
  $region95: #{forward.1} parent=0 // pred_check_branch
    %120 = sbr.rel (0) target = $region97
  $region96: #{forward.1} parent=0 // pred_region
    _
  $region97: #{forward.1} parent=0 // pred_fallthru
    _
  // Predicated region
  $region98: #{forward.1} parent=0 // pred_check
    _
  $region99: #{forward.1} parent=0 // pred_check_branch
    %122 = sbr.rel (0) target = $region101
  $region100: #{forward.1} parent=0 // pred_region
    _
  $region101: #{forward.1} parent=0 // pred_fallthru
    _
  // Predicated region
  $region102: #{forward.1} parent=0 // pred_check
    _
  $region103: #{forward.1} parent=0 // pred_check_branch
    %124 = sbr.rel (0) target = $region105
  $region104: #{forward.1} parent=0 // pred_region
    _
  $region105: #{forward.1} parent=0 // pred_fallthru
    _
  // Predicated region
  $region106: #{forward.1} parent=0 // pred_check
    _
  $region107: #{forward.1} parent=0 // pred_check_branch
    %126 = sbr.rel (0) target = $region109
  $region108: #{forward.1} parent=0 // pred_region
    _
  $region109: #{forward.1} parent=0 // pred_fallthru
    _
  // Predicated region
  $region110: #{forward.1} parent=0 // pred_check
    _
  $region111: #{forward.1} parent=0 // pred_check_branch
    %128 = sbr.rel (0) target = $region113
  $region112: #{forward.1} parent=0 // pred_region
    _
  $region113: #{forward.1} parent=0 // pred_fallthru
    _
  // Predicated region
  $region114: #{forward.1} parent=0 // pred_check
    _
  $region115: #{forward.1} parent=0 // pred_check_branch
    %130 = sbr.rel (0) target = $region117
  $region116: #{forward.1} parent=0 // pred_region
    _
  $region117: #{forward.1} parent=0 // pred_fallthru
    _
  // Predicated region
  $region118: #{forward.1} parent=0 // pred_check
    _
  $region119: #{forward.1} parent=0 // pred_check_branch
    %132 = sbr.rel (0) target = $region121
  $region120: #{forward.1} parent=0 // pred_region
    _
  $region121: #{forward.1} parent=0 // pred_fallthru
    _
  // Predicated region
  $region122: #{forward.1} parent=0 // pred_check
    _
  $region123: #{forward.1} parent=0 // pred_check_branch
    %134 = sbr.rel (0) target = $region125
  $region124: #{forward.1} parent=0 // pred_region
    _
  $region125: #{forward.1} parent=0 // pred_fallthru
    _
  // Predicated region
  $region126: #{forward.1} parent=0 // pred_check
    _
  $region127: #{forward.1} parent=0 // pred_check_branch
    %136 = sbr.rel (0) target = $region129
  $region128: #{forward.1} parent=0 // pred_region
    _
  $region129: #{forward.1} parent=0 // pred_fallthru
    _
  %v138 = vld [vmem:[%s1] sm:$0xff]
  %v139 = vld [vmem:[%s1 + $0x8] sm:$0xff]
  %v140 = vld [vmem:[%s1 + $0x10] sm:$0xff]
  %v141 = vld [vmem:[%s1 + $0x18] sm:$0xff]
  %v142 = vpack.c.bf16 %v139, %v138
  %v143 = vpack.c.bf16 %v141, %v140
  %v144 = vld [vmem:[%s9] sm:$0xff]
  %v145 = vld [vmem:[%s9 + $0x8] sm:$0xff]
  %v146 = vld [vmem:[%s9 + $0x10] sm:$0xff]
  %v147 = vld [vmem:[%s9 + $0x18] sm:$0xff]
  %v148 = vld [vmem:[%s5] sm:$0xf]
  %v149 = vld [vmem:[%s5 + $0x4] sm:$0xf]
  %v150 = vld [vmem:[%s5 + $0x8] sm:$0xf]
  %v151 = vld [vmem:[%s5 + $0xc] sm:$0xf]
  %v156 = vunpack.c.l.b16 %v148
  %v157 = vunpack.c.l.b16 %v149
  %v158 = vunpack.c.l.b16 %v150
  %v159 = vunpack.c.l.b16 %v151
  %v160 = vpack.c.b16 %v157, %v156
  %v161 = vpack.c.b16 %v159, %v158
  %vm162 = vcmask 261120
  %v164 = vsel %vm162, %v160, 0
  %v167 = vsel %vm162, %v161, 0
  %169 = vmatprep.subr.bf16.mxu0 0
  %170 = vmatpush1.bf16.msra.mxu0 %v142
  %171 = vmatprep.subr.bf16.mxu0 0
  %172 = vmatpush1.bf16.msra.mxu0 %v143
  %173 = vmatprep.subr.bf16.mxu0 0
  %174 = vmatpush1.bf16.msra.mxu0 0
  %175 = vmatprep.subr.bf16.mxu0 0
  %176 = vmatpush1.bf16.msra.mxu0 0
  %177 = vmatprep.subr.bf16.mxu0 0
  %178 = vmatpush1.bf16.msra.mxu0 0
  %179 = vmatprep.subr.bf16.mxu0 0
  %180 = vmatpush1.bf16.msra.mxu0 0
  %181 = vmatprep.subr.bf16.mxu0 0
  %182 = vmatpush1.bf16.msra.mxu0 0
  %183 = vmatprep.subr.bf16.mxu0 0
  %184 = vmatpush1.bf16.msra.mxu0 0
  %185 = vmatprep.subr.bf16.mxu0 0
  %186 = vmatpush1.bf16.msra.mxu0 0
  %187 = vmatprep.subr.bf16.mxu0 0
  %188 = vmatpush1.bf16.msra.mxu0 0
  %189 = vmatprep.subr.bf16.mxu0 0
  %190 = vmatpush1.bf16.msra.mxu0 0
  %191 = vmatprep.subr.bf16.mxu0 0
  %192 = vmatpush1.bf16.msra.mxu0 0
  %193 = vmatprep.subr.bf16.mxu0 0
  %194 = vmatpush1.bf16.msra.mxu0 0
  %195 = vmatprep.subr.bf16.mxu0 0
  %196 = vmatpush1.bf16.msra.mxu0 0
  %197 = vmatprep.subr.bf16.mxu0 0
  %198 = vmatpush1.bf16.msra.mxu0 0
  %199 = vmatprep.subr.bf16.mxu0 0
  %200 = vmatpush1.bf16.msra.mxu0 0
  %201 = vmatprep.mubr.bf16.mxu0 0
  %202 = vmatmul.mubr.bf16.gmra.mrb[0].mxu0 %v164
  %v203 = vpop.f32.mrb[0].mxu0
  %v204 = vadd.f32 0.0, %v203
  %v205 = vpop.f32.mrb[0].mxu0
  %v206 = vpop.f32.mrb[0].mxu0
  %v207 = vadd.f32 0.0, %v206
  %v208 = vpop.f32.mrb[0].mxu0
  %209 = vmatprep.mubr.bf16.mxu0 0
  %210 = vmatmul.mubr.bf16.gmra.mrb[0].mxu0 %v167
  %v211 = vpop.f32.mrb[0].mxu0
  %v212 = vadd.f32 0.0, %v211
  %v213 = vpop.f32.mrb[0].mxu0
  %v214 = vpop.f32.mrb[0].mxu0
  %v215 = vadd.f32 0.0, %v214
  %v216 = vpop.f32.mrb[0].mxu0
  %217 = vdwg.mxu0
  %v218 = vpack.c.bf16 %v207, %v204
  %v219 = vpack.c.bf16 %v215, %v212
  %v220 = vld [vmem:[%s7] sm:$0xf]
  %v221 = vld [vmem:[%s7 + $0x4] sm:$0xf]
  %v222 = vld [vmem:[%s7 + $0x8] sm:$0xf]
  %v223 = vld [vmem:[%s7 + $0xc] sm:$0xf]
  %v224 = vld [vmem:[%s7 + $0x10] sm:$0xf]
  %v225 = vld [vmem:[%s7 + $0x14] sm:$0xf]
  %v226 = vld [vmem:[%s7 + $0x18] sm:$0xf]
  %v227 = vld [vmem:[%s7 + $0x1c] sm:$0xf]
  %v228 = vld [vmem:[%s7 + $0x20] sm:$0xf]
  %v229 = vld [vmem:[%s7 + $0x24] sm:$0xf]
  %v230 = vld [vmem:[%s7 + $0x28] sm:$0xf]
  %v231 = vld [vmem:[%s7 + $0x2c] sm:$0xf]
  %v232 = vld [vmem:[%s7 + $0x30] sm:$0xf]
  %v233 = vld [vmem:[%s7 + $0x34] sm:$0xf]
  %v234 = vld [vmem:[%s7 + $0x38] sm:$0xf]
  %v235 = vld [vmem:[%s7 + $0x3c] sm:$0xf]
  %v252 = vunpack.c.l.b16 %v220
  %v253 = vunpack.c.l.b16 %v221
  %v254 = vunpack.c.l.b16 %v222
  %v255 = vunpack.c.l.b16 %v223
  %v256 = vunpack.c.l.b16 %v224
  %v257 = vunpack.c.l.b16 %v225
  %v258 = vunpack.c.l.b16 %v226
  %v259 = vunpack.c.l.b16 %v227
  %v260 = vunpack.c.l.b16 %v228
  %v261 = vunpack.c.l.b16 %v229
  %v262 = vunpack.c.l.b16 %v230
  %v263 = vunpack.c.l.b16 %v231
  %v264 = vunpack.c.l.b16 %v232
  %v265 = vunpack.c.l.b16 %v233
  %v266 = vunpack.c.l.b16 %v234
  %v267 = vunpack.c.l.b16 %v235
  %v268 = vpack.c.b16 %v253, %v252
  %v269 = vpack.c.b16 %v255, %v254
  %v270 = vpack.c.b16 %v257, %v256
  %v271 = vpack.c.b16 %v259, %v258
  %v272 = vpack.c.b16 %v261, %v260
  %v273 = vpack.c.b16 %v263, %v262
  %v274 = vpack.c.b16 %v265, %v264
  %v275 = vpack.c.b16 %v267, %v266
  %284 = vmatprep.subr.bf16.mxu0 0
  %285 = vmatpush1.bf16.msra.mxu0 %v268
  %286 = vmatprep.subr.bf16.mxu0 0
  %287 = vmatpush1.bf16.msra.mxu0 %v269
  %288 = vmatprep.subr.bf16.mxu0 0
  %289 = vmatpush1.bf16.msra.mxu0 %v270
  %290 = vmatprep.subr.bf16.mxu0 0
  %291 = vmatpush1.bf16.msra.mxu0 %v271
  %292 = vmatprep.subr.bf16.mxu0 0
  %293 = vmatpush1.bf16.msra.mxu0 %v272
  %294 = vmatprep.subr.bf16.mxu0 0
  %295 = vmatpush1.bf16.msra.mxu0 %v273
  %296 = vmatprep.subr.bf16.mxu0 0
  %297 = vmatpush1.bf16.msra.mxu0 %v274
  %298 = vmatprep.subr.bf16.mxu0 0
  %299 = vmatpush1.bf16.msra.mxu0 %v275
  %300 = vmatprep.subr.bf16.mxu0 0
  %301 = vmatpush1.bf16.msra.mxu0 0
  %302 = vmatprep.subr.bf16.mxu0 0
  %303 = vmatpush1.bf16.msra.mxu0 0
  %304 = vmatprep.subr.bf16.mxu0 0
  %305 = vmatpush1.bf16.msra.mxu0 0
  %306 = vmatprep.subr.bf16.mxu0 0
  %307 = vmatpush1.bf16.msra.mxu0 0
  %308 = vmatprep.subr.bf16.mxu0 0
  %309 = vmatpush1.bf16.msra.mxu0 0
  %310 = vmatprep.subr.bf16.mxu0 0
  %311 = vmatpush1.bf16.msra.mxu0 0
  %312 = vmatprep.subr.bf16.mxu0 0
  %313 = vmatpush1.bf16.msra.mxu0 0
  %314 = vmatprep.subr.bf16.mxu0 0
  %315 = vmatpush1.bf16.msra.mxu0 0
  %316 = vmatprep.mubr.bf16.mxu0 0
  %317 = vmatmul.mubr.bf16.gmra.mrb[0].mxu0 %v218
  %v318 = vpop.f32.mrb[0].mxu0
  %v319 = vadd.f32 0.0, %v318
  %v320 = vpop.f32.mrb[0].mxu0
  %v321 = vpop.f32.mrb[0].mxu0
  %v322 = vadd.f32 0.0, %v321
  %v323 = vpop.f32.mrb[0].mxu0
  %324 = vmatprep.mubr.bf16.mxu0 0
  %325 = vmatmul.mubr.bf16.gmra.mrb[0].mxu0 %v219
  %v326 = vpop.f32.mrb[0].mxu0
  %v327 = vadd.f32 0.0, %v326
  %v328 = vpop.f32.mrb[0].mxu0
  %v329 = vpop.f32.mrb[0].mxu0
  %v330 = vadd.f32 0.0, %v329
  %v331 = vpop.f32.mrb[0].mxu0
  %332 = vdwg.mxu0
  %s333 = scalar_lea.vmem %s5, 16
  %v334 = vld [vmem:[%s333] sm:$0xf]
  %v335 = vld [vmem:[%s333 + $0x4] sm:$0xf]
  %v336 = vld [vmem:[%s333 + $0x8] sm:$0xf]
  %v337 = vld [vmem:[%s333 + $0xc] sm:$0xf]
  %v342 = vunpack.c.l.b16 %v334
  %v343 = vunpack.c.l.b16 %v335
  %v344 = vunpack.c.l.b16 %v336
  %v345 = vunpack.c.l.b16 %v337
  %v346 = vpack.c.b16 %v343, %v342
  %v347 = vpack.c.b16 %v345, %v344
  %v349 = vsel %vm162, %v346, 0
  %v352 = vsel %vm162, %v347, 0
  %354 = vmatprep.subr.bf16.mxu0 0
  %355 = vmatpush1.bf16.msra.mxu0 %v142
  %356 = vmatprep.subr.bf16.mxu0 0
  %357 = vmatpush1.bf16.msra.mxu0 %v143
  %358 = vmatprep.subr.bf16.mxu0 0
  %359 = vmatpush1.bf16.msra.mxu0 0
  %360 = vmatprep.subr.bf16.mxu0 0
  %361 = vmatpush1.bf16.msra.mxu0 0
  %362 = vmatprep.subr.bf16.mxu0 0
  %363 = vmatpush1.bf16.msra.mxu0 0
  %364 = vmatprep.subr.bf16.mxu0 0
  %365 = vmatpush1.bf16.msra.mxu0 0
  %366 = vmatprep.subr.bf16.mxu0 0
  %367 = vmatpush1.bf16.msra.mxu0 0
  %368 = vmatprep.subr.bf16.mxu0 0
  %369 = vmatpush1.bf16.msra.mxu0 0
  %370 = vmatprep.subr.bf16.mxu0 0
  %371 = vmatpush1.bf16.msra.mxu0 0
  %372 = vmatprep.subr.bf16.mxu0 0
  %373 = vmatpush1.bf16.msra.mxu0 0
  %374 = vmatprep.subr.bf16.mxu0 0
  %375 = vmatpush1.bf16.msra.mxu0 0
  %376 = vmatprep.subr.bf16.mxu0 0
  %377 = vmatpush1.bf16.msra.mxu0 0
  %378 = vmatprep.subr.bf16.mxu0 0
  %379 = vmatpush1.bf16.msra.mxu0 0
  %380 = vmatprep.subr.bf16.mxu0 0
  %381 = vmatpush1.bf16.msra.mxu0 0
  %382 = vmatprep.subr.bf16.mxu0 0
  %383 = vmatpush1.bf16.msra.mxu0 0
  %384 = vmatprep.subr.bf16.mxu0 0
  %385 = vmatpush1.bf16.msra.mxu0 0
  %386 = vmatprep.mubr.bf16.mxu0 0
  %387 = vmatmul.mubr.bf16.gmra.mrb[0].mxu0 %v349
  %v388 = vpop.f32.mrb[0].mxu0
  %v389 = vadd.f32 0.0, %v388
  %v390 = vpop.f32.mrb[0].mxu0
  %v391 = vpop.f32.mrb[0].mxu0
  %v392 = vadd.f32 0.0, %v391
  %v393 = vpop.f32.mrb[0].mxu0
  %394 = vmatprep.mubr.bf16.mxu0 0
  %395 = vmatmul.mubr.bf16.gmra.mrb[0].mxu0 %v352
  %v396 = vpop.f32.mrb[0].mxu0
  %v397 = vadd.f32 0.0, %v396
  %v398 = vpop.f32.mrb[0].mxu0
  %v399 = vpop.f32.mrb[0].mxu0
  %v400 = vadd.f32 0.0, %v399
  %v401 = vpop.f32.mrb[0].mxu0
  %402 = vdwg.mxu0
  %v403 = vpack.c.bf16 %v392, %v389
  %v404 = vpack.c.bf16 %v400, %v397
  %s405 = scalar_lea.vmem %s7, 64
  %v406 = vld [vmem:[%s405] sm:$0xf]
  %v407 = vld [vmem:[%s405 + $0x4] sm:$0xf]
  %v408 = vld [vmem:[%s405 + $0x8] sm:$0xf]
  %v409 = vld [vmem:[%s405 + $0xc] sm:$0xf]
  %v410 = vld [vmem:[%s405 + $0x10] sm:$0xf]
  %v411 = vld [vmem:[%s405 + $0x14] sm:$0xf]
  %v412 = vld [vmem:[%s405 + $0x18] sm:$0xf]
  %v413 = vld [vmem:[%s405 + $0x1c] sm:$0xf]
  %v414 = vld [vmem:[%s405 + $0x20] sm:$0xf]
  %v415 = vld [vmem:[%s405 + $0x24] sm:$0xf]
  %v416 = vld [vmem:[%s405 + $0x28] sm:$0xf]
  %v417 = vld [vmem:[%s405 + $0x2c] sm:$0xf]
  %v418 = vld [vmem:[%s405 + $0x30] sm:$0xf]
  %v419 = vld [vmem:[%s405 + $0x34] sm:$0xf]
  %v420 = vld [vmem:[%s405 + $0x38] sm:$0xf]
  %v421 = vld [vmem:[%s405 + $0x3c] sm:$0xf]
  %s422 = scalar_lea.vmem %s5, 32
  %v423 = vld [vmem:[%s422] sm:$0xf]
  %v424 = vld [vmem:[%s422 + $0x4] sm:$0xf]
  %v425 = vld [vmem:[%s422 + $0x8] sm:$0xf]
  %v426 = vld [vmem:[%s422 + $0xc] sm:$0xf]
  %v431 = vunpack.c.l.b16 %v423
  %v432 = vunpack.c.l.b16 %v424
  %v433 = vunpack.c.l.b16 %v425
  %v434 = vunpack.c.l.b16 %v426
  %v435 = vpack.c.b16 %v432, %v431
  %v436 = vpack.c.b16 %v434, %v433
  %v438 = vsel %vm162, %v435, 0
  %v441 = vsel %vm162, %v436, 0
  %443 = vmatprep.subr.bf16.mxu0 0
  %444 = vmatpush1.bf16.msra.mxu0 %v142
  %445 = vmatprep.subr.bf16.mxu0 0
  %446 = vmatpush1.bf16.msra.mxu0 %v143
  %447 = vmatprep.subr.bf16.mxu0 0
  %448 = vmatpush1.bf16.msra.mxu0 0
  %449 = vmatprep.subr.bf16.mxu0 0
  %450 = vmatpush1.bf16.msra.mxu0 0
  %451 = vmatprep.subr.bf16.mxu0 0
  %452 = vmatpush1.bf16.msra.mxu0 0
  %453 = vmatprep.subr.bf16.mxu0 0
  %454 = vmatpush1.bf16.msra.mxu0 0
  %455 = vmatprep.subr.bf16.mxu0 0
  %456 = vmatpush1.bf16.msra.mxu0 0
  %457 = vmatprep.subr.bf16.mxu0 0
  %458 = vmatpush1.bf16.msra.mxu0 0
  %459 = vmatprep.subr.bf16.mxu0 0
  %460 = vmatpush1.bf16.msra.mxu0 0
  %461 = vmatprep.subr.bf16.mxu0 0
  %462 = vmatpush1.bf16.msra.mxu0 0
  %463 = vmatprep.subr.bf16.mxu0 0
  %464 = vmatpush1.bf16.msra.mxu0 0
  %465 = vmatprep.subr.bf16.mxu0 0
  %466 = vmatpush1.bf16.msra.mxu0 0
  %467 = vmatprep.subr.bf16.mxu0 0
  %468 = vmatpush1.bf16.msra.mxu0 0
  %469 = vmatprep.subr.bf16.mxu0 0
  %470 = vmatpush1.bf16.msra.mxu0 0
  %471 = vmatprep.subr.bf16.mxu0 0
  %472 = vmatpush1.bf16.msra.mxu0 0
  %473 = vmatprep.subr.bf16.mxu0 0
  %474 = vmatpush1.bf16.msra.mxu0 0
  %475 = vmatprep.mubr.bf16.mxu0 0
  %476 = vmatmul.mubr.bf16.gmra.mrb[0].mxu0 %v438
  %v477 = vpop.f32.mrb[0].mxu0
  %v478 = vadd.f32 0.0, %v477
  %v479 = vpop.f32.mrb[0].mxu0
  %v480 = vpop.f32.mrb[0].mxu0
  %v481 = vadd.f32 0.0, %v480
  %v482 = vpop.f32.mrb[0].mxu0
  %483 = vmatprep.mubr.bf16.mxu0 0
  %484 = vmatmul.mubr.bf16.gmra.mrb[0].mxu0 %v441
  %v485 = vpop.f32.mrb[0].mxu0
  %v486 = vadd.f32 0.0, %v485
  %v487 = vpop.f32.mrb[0].mxu0
  %v488 = vpop.f32.mrb[0].mxu0
  %v489 = vadd.f32 0.0, %v488
  %v490 = vpop.f32.mrb[0].mxu0
  %491 = vdwg.mxu0
  %v492 = vpack.c.bf16 %v481, %v478
  %v493 = vpack.c.bf16 %v489, %v486
  %s494 = scalar_lea.vmem %s7, 128
  %v495 = vld [vmem:[%s494] sm:$0xf]
  %v496 = vld [vmem:[%s494 + $0x4] sm:$0xf]
  %v497 = vld [vmem:[%s494 + $0x8] sm:$0xf]
  %v498 = vld [vmem:[%s494 + $0xc] sm:$0xf]
  %v499 = vld [vmem:[%s494 + $0x10] sm:$0xf]
  %v500 = vld [vmem:[%s494 + $0x14] sm:$0xf]
  %v501 = vld [vmem:[%s494 + $0x18] sm:$0xf]
  %v502 = vld [vmem:[%s494 + $0x1c] sm:$0xf]
  %v503 = vld [vmem:[%s494 + $0x20] sm:$0xf]
  %v504 = vld [vmem:[%s494 + $0x24] sm:$0xf]
  %v505 = vld [vmem:[%s494 + $0x28] sm:$0xf]
  %v506 = vld [vmem:[%s494 + $0x2c] sm:$0xf]
  %v507 = vld [vmem:[%s494 + $0x30] sm:$0xf]
  %v508 = vld [vmem:[%s494 + $0x34] sm:$0xf]
  %v509 = vld [vmem:[%s494 + $0x38] sm:$0xf]
  %v510 = vld [vmem:[%s494 + $0x3c] sm:$0xf]
  %v527 = vunpack.c.l.b16 %v495
  %v528 = vunpack.c.l.b16 %v496
  %v529 = vunpack.c.l.b16 %v497
  %v530 = vunpack.c.l.b16 %v498
  %v531 = vunpack.c.l.b16 %v499
  %v532 = vunpack.c.l.b16 %v500
  %v533 = vunpack.c.l.b16 %v501
  %v534 = vunpack.c.l.b16 %v502
  %v535 = vunpack.c.l.b16 %v503
  %v536 = vunpack.c.l.b16 %v504
  %v537 = vunpack.c.l.b16 %v505
  %v538 = vunpack.c.l.b16 %v506
  %v539 = vunpack.c.l.b16 %v507
  %v540 = vunpack.c.l.b16 %v508
  %v541 = vunpack.c.l.b16 %v509
  %v542 = vunpack.c.l.b16 %v510
  %v543 = vpack.c.b16 %v528, %v527
  %v544 = vpack.c.b16 %v530, %v529
  %v545 = vpack.c.b16 %v532, %v531
  %v546 = vpack.c.b16 %v534, %v533
  %v547 = vpack.c.b16 %v536, %v535
  %v548 = vpack.c.b16 %v538, %v537
  %v549 = vpack.c.b16 %v540, %v539
  %v550 = vpack.c.b16 %v542, %v541
  %559 = vmatprep.subr.bf16.mxu0 0
  %560 = vmatpush1.bf16.msra.mxu0 %v543
  %561 = vmatprep.subr.bf16.mxu0 0
  %562 = vmatpush1.bf16.msra.mxu0 %v544
  %563 = vmatprep.subr.bf16.mxu0 0
  %564 = vmatpush1.bf16.msra.mxu0 %v545
  %565 = vmatprep.subr.bf16.mxu0 0
  %566 = vmatpush1.bf16.msra.mxu0 %v546
  %567 = vmatprep.subr.bf16.mxu0 0
  %568 = vmatpush1.bf16.msra.mxu0 %v547
  %569 = vmatprep.subr.bf16.mxu0 0
  %570 = vmatpush1.bf16.msra.mxu0 %v548
  %571 = vmatprep.subr.bf16.mxu0 0
  %572 = vmatpush1.bf16.msra.mxu0 %v549
  %573 = vmatprep.subr.bf16.mxu0 0
  %574 = vmatpush1.bf16.msra.mxu0 %v550
  %575 = vmatprep.subr.bf16.mxu0 0
  %576 = vmatpush1.bf16.msra.mxu0 0
  %577 = vmatprep.subr.bf16.mxu0 0
  %578 = vmatpush1.bf16.msra.mxu0 0
  %579 = vmatprep.subr.bf16.mxu0 0
  %580 = vmatpush1.bf16.msra.mxu0 0
  %581 = vmatprep.subr.bf16.mxu0 0
  %582 = vmatpush1.bf16.msra.mxu0 0
  %583 = vmatprep.subr.bf16.mxu0 0
  %584 = vmatpush1.bf16.msra.mxu0 0
  %585 = vmatprep.subr.bf16.mxu0 0
  %586 = vmatpush1.bf16.msra.mxu0 0
  %587 = vmatprep.subr.bf16.mxu0 0
  %588 = vmatpush1.bf16.msra.mxu0 0
  %589 = vmatprep.subr.bf16.mxu0 0
  %590 = vmatpush1.bf16.msra.mxu0 0
  %591 = vmatprep.mubr.bf16.mxu0 0
  %592 = vmatmul.mubr.bf16.gmra.mrb[0].mxu0 %v492
  %v593 = vpop.f32.mrb[0].mxu0
  %v594 = vadd.f32 0.0, %v593
  %v595 = vpop.f32.mrb[0].mxu0
  %v596 = vpop.f32.mrb[0].mxu0
  %v597 = vadd.f32 0.0, %v596
  %v598 = vpop.f32.mrb[0].mxu0
  %599 = vmatprep.mubr.bf16.mxu0 0
  %600 = vmatmul.mubr.bf16.gmra.mrb[0].mxu0 %v493
  %v601 = vpop.f32.mrb[0].mxu0
  %v602 = vadd.f32 0.0, %v601
  %v603 = vpop.f32.mrb[0].mxu0
  %v604 = vpop.f32.mrb[0].mxu0
  %v605 = vadd.f32 0.0, %v604
  %v606 = vpop.f32.mrb[0].mxu0
  %607 = vdwg.mxu0
  %v608 = vadd.f32 %v144, %v319
  %v609 = vadd.f32 %v145, %v322
  %v610 = vadd.f32 %v146, %v327
  %v611 = vadd.f32 %v147, %v330
  %v628 = vunpack.c.l.b16 %v406
  %v629 = vunpack.c.l.b16 %v407
  %v630 = vunpack.c.l.b16 %v408
  %v631 = vunpack.c.l.b16 %v409
  %v632 = vunpack.c.l.b16 %v410
  %v633 = vunpack.c.l.b16 %v411
  %v634 = vunpack.c.l.b16 %v412
  %v635 = vunpack.c.l.b16 %v413
  %v636 = vunpack.c.l.b16 %v414
  %v637 = vunpack.c.l.b16 %v415
  %v638 = vunpack.c.l.b16 %v416
  %v639 = vunpack.c.l.b16 %v417
  %v640 = vunpack.c.l.b16 %v418
  %v641 = vunpack.c.l.b16 %v419
  %v642 = vunpack.c.l.b16 %v420
  %v643 = vunpack.c.l.b16 %v421
  %v644 = vpack.c.b16 %v629, %v628
  %v645 = vpack.c.b16 %v631, %v630
  %v646 = vpack.c.b16 %v633, %v632
  %v647 = vpack.c.b16 %v635, %v634
  %v648 = vpack.c.b16 %v637, %v636
  %v649 = vpack.c.b16 %v639, %v638
  %v650 = vpack.c.b16 %v641, %v640
  %v651 = vpack.c.b16 %v643, %v642
  %660 = vmatprep.subr.bf16.mxu0 0
  %661 = vmatpush1.bf16.msra.mxu0 %v644
  %662 = vmatprep.subr.bf16.mxu0 0
  %663 = vmatpush1.bf16.msra.mxu0 %v645
  %664 = vmatprep.subr.bf16.mxu0 0
  %665 = vmatpush1.bf16.msra.mxu0 %v646
  %666 = vmatprep.subr.bf16.mxu0 0
  %667 = vmatpush1.bf16.msra.mxu0 %v647
  %668 = vmatprep.subr.bf16.mxu0 0
  %669 = vmatpush1.bf16.msra.mxu0 %v648
  %670 = vmatprep.subr.bf16.mxu0 0
  %671 = vmatpush1.bf16.msra.mxu0 %v649
  %672 = vmatprep.subr.bf16.mxu0 0
  %673 = vmatpush1.bf16.msra.mxu0 %v650
  %674 = vmatprep.subr.bf16.mxu0 0
  %675 = vmatpush1.bf16.msra.mxu0 %v651
  %676 = vmatprep.subr.bf16.mxu0 0
  %677 = vmatpush1.bf16.msra.mxu0 0
  %678 = vmatprep.subr.bf16.mxu0 0
  %679 = vmatpush1.bf16.msra.mxu0 0
  %680 = vmatprep.subr.bf16.mxu0 0
  %681 = vmatpush1.bf16.msra.mxu0 0
  %682 = vmatprep.subr.bf16.mxu0 0
  %683 = vmatpush1.bf16.msra.mxu0 0
  %684 = vmatprep.subr.bf16.mxu0 0
  %685 = vmatpush1.bf16.msra.mxu0 0
  %686 = vmatprep.subr.bf16.mxu0 0
  %687 = vmatpush1.bf16.msra.mxu0 0
  %688 = vmatprep.subr.bf16.mxu0 0
  %689 = vmatpush1.bf16.msra.mxu0 0
  %690 = vmatprep.subr.bf16.mxu0 0
  %691 = vmatpush1.bf16.msra.mxu0 0
  %692 = vmatprep.mubr.bf16.mxu0 0
  %693 = vmatmul.mubr.bf16.gmra.mrb[0].mxu0 %v403
  %v694 = vpop.f32.mrb[0].mxu0
  %v695 = vadd.f32 %v594, %v694
  %v696 = vpop.f32.mrb[0].mxu0
  %v697 = vpop.f32.mrb[0].mxu0
  %v698 = vadd.f32 %v597, %v697
  %v699 = vpop.f32.mrb[0].mxu0
  %700 = vmatprep.mubr.bf16.mxu0 0
  %701 = vmatmul.mubr.bf16.gmra.mrb[0].mxu0 %v404
  %v702 = vpop.f32.mrb[0].mxu0
  %v703 = vadd.f32 %v602, %v702
  %v704 = vpop.f32.mrb[0].mxu0
  %v705 = vpop.f32.mrb[0].mxu0
  %v706 = vadd.f32 %v605, %v705
  %v707 = vpop.f32.mrb[0].mxu0
  %708 = vdwg.mxu0
  %v709 = vadd.f32 %v608, %v695
  %v710 = vadd.f32 %v609, %v698
  %v711 = vadd.f32 %v610, %v703
  %v712 = vadd.f32 %v611, %v706
  %vm713 = vcmp.ge.f32.partialorder %v709, 0.0
  %vm714 = vcmp.ge.f32.partialorder %v710, 0.0
  %vm715 = vcmp.ge.f32.partialorder %v711, 0.0
  %vm716 = vcmp.ge.f32.partialorder %v712, 0.0
  %v717 = vmul.f32 %v709, 0.01
  %v718 = vmul.f32 %v710, 0.01
  %v719 = vmul.f32 %v711, 0.01
  %v720 = vmul.f32 %v712, 0.01
  %v721 = vsel %vm713, %v709, %v717
  %v722 = vsel %vm714, %v710, %v718
  %v723 = vsel %vm715, %v711, %v719
  %v724 = vsel %vm716, %v712, %v720
  %v725 = vpack.c.bf16 %v722, %v721
  %v726 = vpack.c.bf16 %v724, %v723
  %v727 = vld [vmem:[%s15] sm:$0xff]
  %v728 = vld [vmem:[%s15 + $0x8] sm:$0xff]
  %v729 = vld [vmem:[%s11] sm:$0xf]
  %v730 = vld [vmem:[%s11 + $0x4] sm:$0xf]
  %v733 = vunpack.c.l.b16 %v729
  %v734 = vunpack.c.l.b16 %v730
  %v735 = vpack.c.b16 %v734, %v733
  %v737 = vsel %vm162, %v735, 0
  %739 = vmatprep.subr.bf16.mxu0 0
  %740 = vmatpush1.bf16.msra.mxu0 %v725
  %741 = vmatprep.subr.bf16.mxu0 0
  %742 = vmatpush1.bf16.msra.mxu0 %v726
  %743 = vmatprep.subr.bf16.mxu0 0
  %744 = vmatpush1.bf16.msra.mxu0 0
  %745 = vmatprep.subr.bf16.mxu0 0
  %746 = vmatpush1.bf16.msra.mxu0 0
  %747 = vmatprep.subr.bf16.mxu0 0
  %748 = vmatpush1.bf16.msra.mxu0 0
  %749 = vmatprep.subr.bf16.mxu0 0
  %750 = vmatpush1.bf16.msra.mxu0 0
  %751 = vmatprep.subr.bf16.mxu0 0
  %752 = vmatpush1.bf16.msra.mxu0 0
  %753 = vmatprep.subr.bf16.mxu0 0
  %754 = vmatpush1.bf16.msra.mxu0 0
  %755 = vmatprep.subr.bf16.mxu0 0
  %756 = vmatpush1.bf16.msra.mxu0 0
  %757 = vmatprep.subr.bf16.mxu0 0
  %758 = vmatpush1.bf16.msra.mxu0 0
  %759 = vmatprep.subr.bf16.mxu0 0
  %760 = vmatpush1.bf16.msra.mxu0 0
  %761 = vmatprep.subr.bf16.mxu0 0
  %762 = vmatpush1.bf16.msra.mxu0 0
  %763 = vmatprep.subr.bf16.mxu0 0
  %764 = vmatpush1.bf16.msra.mxu0 0
  %765 = vmatprep.subr.bf16.mxu0 0
  %766 = vmatpush1.bf16.msra.mxu0 0
  %767 = vmatprep.subr.bf16.mxu0 0
  %768 = vmatpush1.bf16.msra.mxu0 0
  %769 = vmatprep.subr.bf16.mxu0 0
  %770 = vmatpush1.bf16.msra.mxu0 0
  %771 = vmatprep.mubr.bf16.mxu0 0
  %772 = vmatmul.mubr.bf16.gmra.mrb[0].mxu0 %v737
  %v773 = vpop.f32.mrb[0].mxu0
  %v774 = vadd.f32 0.0, %v773
  %v775 = vpop.f32.mrb[0].mxu0
  %v776 = vpop.f32.mrb[0].mxu0
  %v777 = vadd.f32 0.0, %v776
  %v778 = vpop.f32.mrb[0].mxu0
  %779 = vdwg.mxu0
  %v780 = vpack.c.bf16 %v777, %v774
  %v781 = vld [vmem:[%s13] sm:$0xf]
  %v782 = vld [vmem:[%s13 + $0x4] sm:$0xf]
  %v783 = vld [vmem:[%s13 + $0x8] sm:$0xf]
  %v784 = vld [vmem:[%s13 + $0xc] sm:$0xf]
  %v785 = vld [vmem:[%s13 + $0x10] sm:$0xf]
  %v786 = vld [vmem:[%s13 + $0x14] sm:$0xf]
  %v787 = vld [vmem:[%s13 + $0x18] sm:$0xf]
  %v788 = vld [vmem:[%s13 + $0x1c] sm:$0xf]
  %v789 = vld [vmem:[%s13 + $0x20] sm:$0xf]
  %v790 = vld [vmem:[%s13 + $0x24] sm:$0xf]
  %v791 = vld [vmem:[%s13 + $0x28] sm:$0xf]
  %v792 = vld [vmem:[%s13 + $0x2c] sm:$0xf]
  %v793 = vld [vmem:[%s13 + $0x30] sm:$0xf]
  %v794 = vld [vmem:[%s13 + $0x34] sm:$0xf]
  %v795 = vld [vmem:[%s13 + $0x38] sm:$0xf]
  %v796 = vld [vmem:[%s13 + $0x3c] sm:$0xf]
  %v813 = vunpack.c.l.b16 %v781
  %v814 = vunpack.c.l.b16 %v782
  %v815 = vunpack.c.l.b16 %v783
  %v816 = vunpack.c.l.b16 %v784
  %v817 = vunpack.c.l.b16 %v785
  %v818 = vunpack.c.l.b16 %v786
  %v819 = vunpack.c.l.b16 %v787
  %v820 = vunpack.c.l.b16 %v788
  %v821 = vunpack.c.l.b16 %v789
  %v822 = vunpack.c.l.b16 %v790
  %v823 = vunpack.c.l.b16 %v791
  %v824 = vunpack.c.l.b16 %v792
  %v825 = vunpack.c.l.b16 %v793
  %v826 = vunpack.c.l.b16 %v794
  %v827 = vunpack.c.l.b16 %v795
  %v828 = vunpack.c.l.b16 %v796
  %v829 = vpack.c.b16 %v814, %v813
  %v830 = vpack.c.b16 %v816, %v815
  %v831 = vpack.c.b16 %v818, %v817
  %v832 = vpack.c.b16 %v820, %v819
  %v833 = vpack.c.b16 %v822, %v821
  %v834 = vpack.c.b16 %v824, %v823
  %v835 = vpack.c.b16 %v826, %v825
  %v836 = vpack.c.b16 %v828, %v827
  %845 = vmatprep.subr.bf16.mxu0 0
  %846 = vmatpush1.bf16.msra.mxu0 %v829
  %847 = vmatprep.subr.bf16.mxu0 0
  %848 = vmatpush1.bf16.msra.mxu0 %v830
  %849 = vmatprep.subr.bf16.mxu0 0
  %850 = vmatpush1.bf16.msra.mxu0 %v831
  %851 = vmatprep.subr.bf16.mxu0 0
  %852 = vmatpush1.bf16.msra.mxu0 %v832
  %853 = vmatprep.subr.bf16.mxu0 0
  %854 = vmatpush1.bf16.msra.mxu0 %v833
  %855 = vmatprep.subr.bf16.mxu0 0
  %856 = vmatpush1.bf16.msra.mxu0 %v834
  %857 = vmatprep.subr.bf16.mxu0 0
  %858 = vmatpush1.bf16.msra.mxu0 %v835
  %859 = vmatprep.subr.bf16.mxu0 0
  %860 = vmatpush1.bf16.msra.mxu0 %v836
  %861 = vmatprep.subr.bf16.mxu0 0
  %862 = vmatpush1.bf16.msra.mxu0 0
  %863 = vmatprep.subr.bf16.mxu0 0
  %864 = vmatpush1.bf16.msra.mxu0 0
  %865 = vmatprep.subr.bf16.mxu0 0
  %866 = vmatpush1.bf16.msra.mxu0 0
  %867 = vmatprep.subr.bf16.mxu0 0
  %868 = vmatpush1.bf16.msra.mxu0 0
  %869 = vmatprep.subr.bf16.mxu0 0
  %870 = vmatpush1.bf16.msra.mxu0 0
  %871 = vmatprep.subr.bf16.mxu0 0
  %872 = vmatpush1.bf16.msra.mxu0 0
  %873 = vmatprep.subr.bf16.mxu0 0
  %874 = vmatpush1.bf16.msra.mxu0 0
  %875 = vmatprep.subr.bf16.mxu0 0
  %876 = vmatpush1.bf16.msra.mxu0 0
  %877 = vmatprep.mubr.bf16.mxu0 0
  %878 = vmatmul.mubr.bf16.gmra.mrb[0].mxu0 %v780
  %v879 = vpop.f32.mrb[0].mxu0
  %v880 = vadd.f32 0.0, %v879
  %v881 = vpop.f32.mrb[0].mxu0
  %v882 = vpop.f32.mrb[0].mxu0
  %v883 = vadd.f32 0.0, %v882
  %v884 = vpop.f32.mrb[0].mxu0
  %885 = vdwg.mxu0
  %s886 = scalar_lea.vmem %s11, 8
  %v887 = vld [vmem:[%s886] sm:$0xf]
  %v888 = vld [vmem:[%s886 + $0x4] sm:$0xf]
  %v891 = vunpack.c.l.b16 %v887
  %v892 = vunpack.c.l.b16 %v888
  %v893 = vpack.c.b16 %v892, %v891
  %v895 = vsel %vm162, %v893, 0
  %897 = vmatprep.subr.bf16.mxu0 0
  %898 = vmatpush1.bf16.msra.mxu0 %v725
  %899 = vmatprep.subr.bf16.mxu0 0
  %900 = vmatpush1.bf16.msra.mxu0 %v726
  %901 = vmatprep.subr.bf16.mxu0 0
  %902 = vmatpush1.bf16.msra.mxu0 0
  %903 = vmatprep.subr.bf16.mxu0 0
  %904 = vmatpush1.bf16.msra.mxu0 0
  %905 = vmatprep.subr.bf16.mxu0 0
  %906 = vmatpush1.bf16.msra.mxu0 0
  %907 = vmatprep.subr.bf16.mxu0 0
  %908 = vmatpush1.bf16.msra.mxu0 0
  %909 = vmatprep.subr.bf16.mxu0 0
  %910 = vmatpush1.bf16.msra.mxu0 0
  %911 = vmatprep.subr.bf16.mxu0 0
  %912 = vmatpush1.bf16.msra.mxu0 0
  %913 = vmatprep.subr.bf16.mxu0 0
  %914 = vmatpush1.bf16.msra.mxu0 0
  %915 = vmatprep.subr.bf16.mxu0 0
  %916 = vmatpush1.bf16.msra.mxu0 0
  %917 = vmatprep.subr.bf16.mxu0 0
  %918 = vmatpush1.bf16.msra.mxu0 0
  %919 = vmatprep.subr.bf16.mxu0 0
  %920 = vmatpush1.bf16.msra.mxu0 0
  %921 = vmatprep.subr.bf16.mxu0 0
  %922 = vmatpush1.bf16.msra.mxu0 0
  %923 = vmatprep.subr.bf16.mxu0 0
  %924 = vmatpush1.bf16.msra.mxu0 0
  %925 = vmatprep.subr.bf16.mxu0 0
  %926 = vmatpush1.bf16.msra.mxu0 0
  %927 = vmatprep.subr.bf16.mxu0 0
  %928 = vmatpush1.bf16.msra.mxu0 0
  %929 = vmatprep.mubr.bf16.mxu0 0
  %930 = vmatmul.mubr.bf16.gmra.mrb[0].mxu0 %v895
  %v931 = vpop.f32.mrb[0].mxu0
  %v932 = vadd.f32 0.0, %v931
  %v933 = vpop.f32.mrb[0].mxu0
  %v934 = vpop.f32.mrb[0].mxu0
  %v935 = vadd.f32 0.0, %v934
  %v936 = vpop.f32.mrb[0].mxu0
  %937 = vdwg.mxu0
  %v938 = vpack.c.bf16 %v935, %v932
  %s939 = scalar_lea.vmem %s13, 64
  %v940 = vld [vmem:[%s939] sm:$0xf]
  %v941 = vld [vmem:[%s939 + $0x4] sm:$0xf]
  %v942 = vld [vmem:[%s939 + $0x8] sm:$0xf]
  %v943 = vld [vmem:[%s939 + $0xc] sm:$0xf]
  %v944 = vld [vmem:[%s939 + $0x10] sm:$0xf]
  %v945 = vld [vmem:[%s939 + $0x14] sm:$0xf]
  %v946 = vld [vmem:[%s939 + $0x18] sm:$0xf]
  %v947 = vld [vmem:[%s939 + $0x1c] sm:$0xf]
  %v948 = vld [vmem:[%s939 + $0x20] sm:$0xf]
  %v949 = vld [vmem:[%s939 + $0x24] sm:$0xf]
  %v950 = vld [vmem:[%s939 + $0x28] sm:$0xf]
  %v951 = vld [vmem:[%s939 + $0x2c] sm:$0xf]
  %v952 = vld [vmem:[%s939 + $0x30] sm:$0xf]
  %v953 = vld [vmem:[%s939 + $0x34] sm:$0xf]
  %v954 = vld [vmem:[%s939 + $0x38] sm:$0xf]
  %v955 = vld [vmem:[%s939 + $0x3c] sm:$0xf]
  %s956 = scalar_lea.vmem %s11, 16
  %v957 = vld [vmem:[%s956] sm:$0xf]
  %v958 = vld [vmem:[%s956 + $0x4] sm:$0xf]
  %v961 = vunpack.c.l.b16 %v957
  %v962 = vunpack.c.l.b16 %v958
  %v963 = vpack.c.b16 %v962, %v961
  %v965 = vsel %vm162, %v963, 0
  %967 = vmatprep.subr.bf16.mxu0 0
  %968 = vmatpush1.bf16.msra.mxu0 %v725
  %969 = vmatprep.subr.bf16.mxu0 0
  %970 = vmatpush1.bf16.msra.mxu0 %v726
  %971 = vmatprep.subr.bf16.mxu0 0
  %972 = vmatpush1.bf16.msra.mxu0 0
  %973 = vmatprep.subr.bf16.mxu0 0
  %974 = vmatpush1.bf16.msra.mxu0 0
  %975 = vmatprep.subr.bf16.mxu0 0
  %976 = vmatpush1.bf16.msra.mxu0 0
  %977 = vmatprep.subr.bf16.mxu0 0
  %978 = vmatpush1.bf16.msra.mxu0 0
  %979 = vmatprep.subr.bf16.mxu0 0
  %980 = vmatpush1.bf16.msra.mxu0 0
  %981 = vmatprep.subr.bf16.mxu0 0
  %982 = vmatpush1.bf16.msra.mxu0 0
  %983 = vmatprep.subr.bf16.mxu0 0
  %984 = vmatpush1.bf16.msra.mxu0 0
  %985 = vmatprep.subr.bf16.mxu0 0
  %986 = vmatpush1.bf16.msra.mxu0 0
  %987 = vmatprep.subr.bf16.mxu0 0
  %988 = vmatpush1.bf16.msra.mxu0 0
  %989 = vmatprep.subr.bf16.mxu0 0
  %990 = vmatpush1.bf16.msra.mxu0 0
  %991 = vmatprep.subr.bf16.mxu0 0
  %992 = vmatpush1.bf16.msra.mxu0 0
  %993 = vmatprep.subr.bf16.mxu0 0
  %994 = vmatpush1.bf16.msra.mxu0 0
  %995 = vmatprep.subr.bf16.mxu0 0
  %996 = vmatpush1.bf16.msra.mxu0 0
  %997 = vmatprep.subr.bf16.mxu0 0
  %998 = vmatpush1.bf16.msra.mxu0 0
  %999 = vmatprep.mubr.bf16.mxu0 0
  %1000 = vmatmul.mubr.bf16.gmra.mrb[0].mxu0 %v965
  %v1001 = vpop.f32.mrb[0].mxu0
  %v1002 = vadd.f32 0.0, %v1001
  %v1003 = vpop.f32.mrb[0].mxu0
  %v1004 = vpop.f32.mrb[0].mxu0
  %v1005 = vadd.f32 0.0, %v1004
  %v1006 = vpop.f32.mrb[0].mxu0
  %1007 = vdwg.mxu0
  %v1008 = vpack.c.bf16 %v1005, %v1002
  %s1009 = scalar_lea.vmem %s13, 128
  %v1010 = vld [vmem:[%s1009] sm:$0xf]
  %v1011 = vld [vmem:[%s1009 + $0x4] sm:$0xf]
  %v1012 = vld [vmem:[%s1009 + $0x8] sm:$0xf]
  %v1013 = vld [vmem:[%s1009 + $0xc] sm:$0xf]
  %v1014 = vld [vmem:[%s1009 + $0x10] sm:$0xf]
  %v1015 = vld [vmem:[%s1009 + $0x14] sm:$0xf]
  %v1016 = vld [vmem:[%s1009 + $0x18] sm:$0xf]
  %v1017 = vld [vmem:[%s1009 + $0x1c] sm:$0xf]
  %v1018 = vld [vmem:[%s1009 + $0x20] sm:$0xf]
  %v1019 = vld [vmem:[%s1009 + $0x24] sm:$0xf]
  %v1020 = vld [vmem:[%s1009 + $0x28] sm:$0xf]
  %v1021 = vld [vmem:[%s1009 + $0x2c] sm:$0xf]
  %v1022 = vld [vmem:[%s1009 + $0x30] sm:$0xf]
  %v1023 = vld [vmem:[%s1009 + $0x34] sm:$0xf]
  %v1024 = vld [vmem:[%s1009 + $0x38] sm:$0xf]
  %v1025 = vld [vmem:[%s1009 + $0x3c] sm:$0xf]
  %v1042 = vunpack.c.l.b16 %v1010
  %v1043 = vunpack.c.l.b16 %v1011
  %v1044 = vunpack.c.l.b16 %v1012
  %v1045 = vunpack.c.l.b16 %v1013
  %v1046 = vunpack.c.l.b16 %v1014
  %v1047 = vunpack.c.l.b16 %v1015
  %v1048 = vunpack.c.l.b16 %v1016
  %v1049 = vunpack.c.l.b16 %v1017
  %v1050 = vunpack.c.l.b16 %v1018
  %v1051 = vunpack.c.l.b16 %v1019
  %v1052 = vunpack.c.l.b16 %v1020
  %v1053 = vunpack.c.l.b16 %v1021
  %v1054 = vunpack.c.l.b16 %v1022
  %v1055 = vunpack.c.l.b16 %v1023
  %v1056 = vunpack.c.l.b16 %v1024
  %v1057 = vunpack.c.l.b16 %v1025
  %v1058 = vpack.c.b16 %v1043, %v1042
  %v1059 = vpack.c.b16 %v1045, %v1044
  %v1060 = vpack.c.b16 %v1047, %v1046
  %v1061 = vpack.c.b16 %v1049, %v1048
  %v1062 = vpack.c.b16 %v1051, %v1050
  %v1063 = vpack.c.b16 %v1053, %v1052
  %v1064 = vpack.c.b16 %v1055, %v1054
  %v1065 = vpack.c.b16 %v1057, %v1056
  %1074 = vmatprep.subr.bf16.mxu0 0
  %1075 = vmatpush1.bf16.msra.mxu0 %v1058
  %1076 = vmatprep.subr.bf16.mxu0 0
  %1077 = vmatpush1.bf16.msra.mxu0 %v1059
  %1078 = vmatprep.subr.bf16.mxu0 0
  %1079 = vmatpush1.bf16.msra.mxu0 %v1060
  %1080 = vmatprep.subr.bf16.mxu0 0
  %1081 = vmatpush1.bf16.msra.mxu0 %v1061
  %1082 = vmatprep.subr.bf16.mxu0 0
  %1083 = vmatpush1.bf16.msra.mxu0 %v1062
  %1084 = vmatprep.subr.bf16.mxu0 0
  %1085 = vmatpush1.bf16.msra.mxu0 %v1063
  %1086 = vmatprep.subr.bf16.mxu0 0
  %1087 = vmatpush1.bf16.msra.mxu0 %v1064
  %1088 = vmatprep.subr.bf16.mxu0 0
  %1089 = vmatpush1.bf16.msra.mxu0 %v1065
  %1090 = vmatprep.subr.bf16.mxu0 0
  %1091 = vmatpush1.bf16.msra.mxu0 0
  %1092 = vmatprep.subr.bf16.mxu0 0
  %1093 = vmatpush1.bf16.msra.mxu0 0
  %1094 = vmatprep.subr.bf16.mxu0 0
  %1095 = vmatpush1.bf16.msra.mxu0 0
  %1096 = vmatprep.subr.bf16.mxu0 0
  %1097 = vmatpush1.bf16.msra.mxu0 0
  %1098 = vmatprep.subr.bf16.mxu0 0
  %1099 = vmatpush1.bf16.msra.mxu0 0
  %1100 = vmatprep.subr.bf16.mxu0 0
  %1101 = vmatpush1.bf16.msra.mxu0 0
  %1102 = vmatprep.subr.bf16.mxu0 0
  %1103 = vmatpush1.bf16.msra.mxu0 0
  %1104 = vmatprep.subr.bf16.mxu0 0
  %1105 = vmatpush1.bf16.msra.mxu0 0
  %1106 = vmatprep.mubr.bf16.mxu0 0
  %1107 = vmatmul.mubr.bf16.gmra.mrb[0].mxu0 %v1008
  %v1108 = vpop.f32.mrb[0].mxu0
  %v1109 = vadd.f32 0.0, %v1108
  %v1110 = vpop.f32.mrb[0].mxu0
  %v1111 = vpop.f32.mrb[0].mxu0
  %v1112 = vadd.f32 0.0, %v1111
  %v1113 = vpop.f32.mrb[0].mxu0
  %1114 = vdwg.mxu0
  %v1115 = vadd.f32 %v727, %v880
  %v1116 = vadd.f32 %v728, %v883
  %v1133 = vunpack.c.l.b16 %v940
  %v1134 = vunpack.c.l.b16 %v941
  %v1135 = vunpack.c.l.b16 %v942
  %v1136 = vunpack.c.l.b16 %v943
  %v1137 = vunpack.c.l.b16 %v944
  %v1138 = vunpack.c.l.b16 %v945
  %v1139 = vunpack.c.l.b16 %v946
  %v1140 = vunpack.c.l.b16 %v947
  %v1141 = vunpack.c.l.b16 %v948
  %v1142 = vunpack.c.l.b16 %v949
  %v1143 = vunpack.c.l.b16 %v950
  %v1144 = vunpack.c.l.b16 %v951
  %v1145 = vunpack.c.l.b16 %v952
  %v1146 = vunpack.c.l.b16 %v953
  %v1147 = vunpack.c.l.b16 %v954
  %v1148 = vunpack.c.l.b16 %v955
  %v1149 = vpack.c.b16 %v1134, %v1133
  %v1150 = vpack.c.b16 %v1136, %v1135
  %v1151 = vpack.c.b16 %v1138, %v1137
  %v1152 = vpack.c.b16 %v1140, %v1139
  %v1153 = vpack.c.b16 %v1142, %v1141
  %v1154 = vpack.c.b16 %v1144, %v1143
  %v1155 = vpack.c.b16 %v1146, %v1145
  %v1156 = vpack.c.b16 %v1148, %v1147
  %1165 = vmatprep.subr.bf16.mxu0 0
  %1166 = vmatpush1.bf16.msra.mxu0 %v1149
  %1167 = vmatprep.subr.bf16.mxu0 0
  %1168 = vmatpush1.bf16.msra.mxu0 %v1150
  %1169 = vmatprep.subr.bf16.mxu0 0
  %1170 = vmatpush1.bf16.msra.mxu0 %v1151
  %1171 = vmatprep.subr.bf16.mxu0 0
  %1172 = vmatpush1.bf16.msra.mxu0 %v1152
  %1173 = vmatprep.subr.bf16.mxu0 0
  %1174 = vmatpush1.bf16.msra.mxu0 %v1153
  %1175 = vmatprep.subr.bf16.mxu0 0
  %1176 = vmatpush1.bf16.msra.mxu0 %v1154
  %1177 = vmatprep.subr.bf16.mxu0 0
  %1178 = vmatpush1.bf16.msra.mxu0 %v1155
  %1179 = vmatprep.subr.bf16.mxu0 0
  %1180 = vmatpush1.bf16.msra.mxu0 %v1156
  %1181 = vmatprep.subr.bf16.mxu0 0
  %1182 = vmatpush1.bf16.msra.mxu0 0
  %1183 = vmatprep.subr.bf16.mxu0 0
  %1184 = vmatpush1.bf16.msra.mxu0 0
  %1185 = vmatprep.subr.bf16.mxu0 0
  %1186 = vmatpush1.bf16.msra.mxu0 0
  %1187 = vmatprep.subr.bf16.mxu0 0
  %1188 = vmatpush1.bf16.msra.mxu0 0
  %1189 = vmatprep.subr.bf16.mxu0 0
  %1190 = vmatpush1.bf16.msra.mxu0 0
  %1191 = vmatprep.subr.bf16.mxu0 0
  %1192 = vmatpush1.bf16.msra.mxu0 0
  %1193 = vmatprep.subr.bf16.mxu0 0
  %1194 = vmatpush1.bf16.msra.mxu0 0
  %1195 = vmatprep.subr.bf16.mxu0 0
  %1196 = vmatpush1.bf16.msra.mxu0 0
  %1197 = vmatprep.mubr.bf16.mxu0 0
  %1198 = vmatmul.mubr.bf16.gmra.mrb[0].mxu0 %v938
  %v1199 = vpop.f32.mrb[0].mxu0
  %v1200 = vadd.f32 %v1109, %v1199
  %v1201 = vpop.f32.mrb[0].mxu0
  %v1202 = vpop.f32.mrb[0].mxu0
  %v1203 = vadd.f32 %v1112, %v1202
  %v1204 = vpop.f32.mrb[0].mxu0
  %1205 = vdwg.mxu0
  %v1206 = vadd.f32 %v1115, %v1200
  %v1207 = vadd.f32 %v1116, %v1203
  %vm1208 = vcmp.ge.f32.partialorder %v1206, 0.0
  %vm1209 = vcmp.ge.f32.partialorder %v1207, 0.0
  %v1210 = vmul.f32 %v1206, 0.01
  %v1211 = vmul.f32 %v1207, 0.01
  %v1212 = vsel %vm1208, %v1206, %v1210
  %v1213 = vsel %vm1209, %v1207, %v1211
  %v1214 = vpack.c.bf16 %v1213, %v1212
  %v1215 = vld [vmem:[%s21] sm:$0xff]
  %v1216 = vld [vmem:[%s17] sm:$0xf]
  %vm1217 = vcmask 130048
  %v1219 = vsel %vm1217, %v1216, 0
  %1221 = vmatprep.subr.bf16.mxu0 0
  %1222 = vmatpush1.bf16.msra.mxu0 %v1214
  %1223 = vmatprep.subr.bf16.mxu0 0
  %1224 = vmatpush1.bf16.msra.mxu0 0
  %1225 = vmatprep.subr.bf16.mxu0 0
  %1226 = vmatpush1.bf16.msra.mxu0 0
  %1227 = vmatprep.subr.bf16.mxu0 0
  %1228 = vmatpush1.bf16.msra.mxu0 0
  %1229 = vmatprep.subr.bf16.mxu0 0
  %1230 = vmatpush1.bf16.msra.mxu0 0
  %1231 = vmatprep.subr.bf16.mxu0 0
  %1232 = vmatpush1.bf16.msra.mxu0 0
  %1233 = vmatprep.subr.bf16.mxu0 0
  %1234 = vmatpush1.bf16.msra.mxu0 0
  %1235 = vmatprep.subr.bf16.mxu0 0
  %1236 = vmatpush1.bf16.msra.mxu0 0
  %1237 = vmatprep.subr.bf16.mxu0 0
  %1238 = vmatpush1.bf16.msra.mxu0 0
  %1239 = vmatprep.subr.bf16.mxu0 0
  %1240 = vmatpush1.bf16.msra.mxu0 0
  %1241 = vmatprep.subr.bf16.mxu0 0
  %1242 = vmatpush1.bf16.msra.mxu0 0
  %1243 = vmatprep.subr.bf16.mxu0 0
  %1244 = vmatpush1.bf16.msra.mxu0 0
  %1245 = vmatprep.subr.bf16.mxu0 0
  %1246 = vmatpush1.bf16.msra.mxu0 0
  %1247 = vmatprep.subr.bf16.mxu0 0
  %1248 = vmatpush1.bf16.msra.mxu0 0
  %1249 = vmatprep.subr.bf16.mxu0 0
  %1250 = vmatpush1.bf16.msra.mxu0 0
  %1251 = vmatprep.subr.bf16.mxu0 0
  %1252 = vmatpush1.bf16.msra.mxu0 0
  %1253 = vmatprep.mubr.bf16.mxu0 0
  %1254 = vmatmul.mubr.bf16.gmra.mrb[0].mxu0 %v1219
  %v1255 = vpop.f32.mrb[0].mxu0
  %v1256 = vadd.f32 0.0, %v1255
  %v1257 = vpop.f32.mrb[0].mxu0
  %v1258 = vpop.f32.mrb[0].mxu0
  %v1259 = vpop.f32.mrb[0].mxu0
  %1260 = vdwg.mxu0
  %v1261 = vpack.c.bf16 %v1256, %v1256
  %v1262 = vld [vmem:[%s19] sm:$0xf]
  %v1263 = vld [vmem:[%s19 + $0x4] sm:$0xf]
  %v1264 = vld [vmem:[%s19 + $0x8] sm:$0xf]
  %v1265 = vld [vmem:[%s19 + $0xc] sm:$0xf]
  %v1266 = vld [vmem:[%s19 + $0x10] sm:$0xf]
  %v1267 = vld [vmem:[%s19 + $0x14] sm:$0xf]
  %v1268 = vld [vmem:[%s19 + $0x18] sm:$0xf]
  %v1269 = vld [vmem:[%s19 + $0x1c] sm:$0xf]
  %v1270 = vld [vmem:[%s19 + $0x20] sm:$0xf]
  %v1271 = vld [vmem:[%s19 + $0x24] sm:$0xf]
  %v1272 = vld [vmem:[%s19 + $0x28] sm:$0xf]
  %v1273 = vld [vmem:[%s19 + $0x2c] sm:$0xf]
  %v1274 = vld [vmem:[%s19 + $0x30] sm:$0xf]
  %v1275 = vld [vmem:[%s19 + $0x34] sm:$0xf]
  %v1276 = vld [vmem:[%s19 + $0x38] sm:$0xf]
  %v1277 = vld [vmem:[%s19 + $0x3c] sm:$0xf]
  %v1294 = vunpack.c.l.b16 %v1262
  %v1295 = vunpack.c.l.b16 %v1263
  %v1296 = vunpack.c.l.b16 %v1264
  %v1297 = vunpack.c.l.b16 %v1265
  %v1298 = vunpack.c.l.b16 %v1266
  %v1299 = vunpack.c.l.b16 %v1267
  %v1300 = vunpack.c.l.b16 %v1268
  %v1301 = vunpack.c.l.b16 %v1269
  %v1302 = vunpack.c.l.b16 %v1270
  %v1303 = vunpack.c.l.b16 %v1271
  %v1304 = vunpack.c.l.b16 %v1272
  %v1305 = vunpack.c.l.b16 %v1273
  %v1306 = vunpack.c.l.b16 %v1274
  %v1307 = vunpack.c.l.b16 %v1275
  %v1308 = vunpack.c.l.b16 %v1276
  %v1309 = vunpack.c.l.b16 %v1277
  %v1310 = vpack.c.b16 %v1295, %v1294
  %v1311 = vpack.c.b16 %v1297, %v1296
  %v1312 = vpack.c.b16 %v1299, %v1298
  %v1313 = vpack.c.b16 %v1301, %v1300
  %v1314 = vpack.c.b16 %v1303, %v1302
  %v1315 = vpack.c.b16 %v1305, %v1304
  %v1316 = vpack.c.b16 %v1307, %v1306
  %v1317 = vpack.c.b16 %v1309, %v1308
  %1326 = vmatprep.subr.bf16.mxu0 0
  %1327 = vmatpush1.bf16.msra.mxu0 %v1310
  %1328 = vmatprep.subr.bf16.mxu0 0
  %1329 = vmatpush1.bf16.msra.mxu0 %v1311
  %1330 = vmatprep.subr.bf16.mxu0 0
  %1331 = vmatpush1.bf16.msra.mxu0 %v1312
  %1332 = vmatprep.subr.bf16.mxu0 0
  %1333 = vmatpush1.bf16.msra.mxu0 %v1313
  %1334 = vmatprep.subr.bf16.mxu0 0
  %1335 = vmatpush1.bf16.msra.mxu0 %v1314
  %1336 = vmatprep.subr.bf16.mxu0 0
  %1337 = vmatpush1.bf16.msra.mxu0 %v1315
  %1338 = vmatprep.subr.bf16.mxu0 0
  %1339 = vmatpush1.bf16.msra.mxu0 %v1316
  %1340 = vmatprep.subr.bf16.mxu0 0
  %1341 = vmatpush1.bf16.msra.mxu0 %v1317
  %1342 = vmatprep.subr.bf16.mxu0 0
  %1343 = vmatpush1.bf16.msra.mxu0 0
  %1344 = vmatprep.subr.bf16.mxu0 0
  %1345 = vmatpush1.bf16.msra.mxu0 0
  %1346 = vmatprep.subr.bf16.mxu0 0
  %1347 = vmatpush1.bf16.msra.mxu0 0
  %1348 = vmatprep.subr.bf16.mxu0 0
  %1349 = vmatpush1.bf16.msra.mxu0 0
  %1350 = vmatprep.subr.bf16.mxu0 0
  %1351 = vmatpush1.bf16.msra.mxu0 0
  %1352 = vmatprep.subr.bf16.mxu0 0
  %1353 = vmatpush1.bf16.msra.mxu0 0
  %1354 = vmatprep.subr.bf16.mxu0 0
  %1355 = vmatpush1.bf16.msra.mxu0 0
  %1356 = vmatprep.subr.bf16.mxu0 0
  %1357 = vmatpush1.bf16.msra.mxu0 0
  %1358 = vmatprep.mubr.bf16.mxu0 0
  %1359 = vmatmul.mubr.bf16.gmra.mrb[0].mxu0 %v1261
  %v1360 = vpop.f32.mrb[0].mxu0
  %v1361 = vadd.f32 0.0, %v1360
  %v1362 = vpop.f32.mrb[0].mxu0
  %v1363 = vpop.f32.mrb[0].mxu0
  %v1364 = vpop.f32.mrb[0].mxu0
  %1365 = vdwg.mxu0
  %s1366 = scalar_lea.vmem %s17, 4
  %v1367 = vld [vmem:[%s1366] sm:$0xf]
  %v1369 = vsel %vm1217, %v1367, 0
  %1371 = vmatprep.subr.bf16.mxu0 0
  %1372 = vmatpush1.bf16.msra.mxu0 %v1214
  %1373 = vmatprep.subr.bf16.mxu0 0
  %1374 = vmatpush1.bf16.msra.mxu0 0
  %1375 = vmatprep.subr.bf16.mxu0 0
  %1376 = vmatpush1.bf16.msra.mxu0 0
  %1377 = vmatprep.subr.bf16.mxu0 0
  %1378 = vmatpush1.bf16.msra.mxu0 0
  %1379 = vmatprep.subr.bf16.mxu0 0
  %1380 = vmatpush1.bf16.msra.mxu0 0
  %1381 = vmatprep.subr.bf16.mxu0 0
  %1382 = vmatpush1.bf16.msra.mxu0 0
  %1383 = vmatprep.subr.bf16.mxu0 0
  %1384 = vmatpush1.bf16.msra.mxu0 0
  %1385 = vmatprep.subr.bf16.mxu0 0
  %1386 = vmatpush1.bf16.msra.mxu0 0
  %1387 = vmatprep.subr.bf16.mxu0 0
  %1388 = vmatpush1.bf16.msra.mxu0 0
  %1389 = vmatprep.subr.bf16.mxu0 0
  %1390 = vmatpush1.bf16.msra.mxu0 0
  %1391 = vmatprep.subr.bf16.mxu0 0
  %1392 = vmatpush1.bf16.msra.mxu0 0
  %1393 = vmatprep.subr.bf16.mxu0 0
  %1394 = vmatpush1.bf16.msra.mxu0 0
  %1395 = vmatprep.subr.bf16.mxu0 0
  %1396 = vmatpush1.bf16.msra.mxu0 0
  %1397 = vmatprep.subr.bf16.mxu0 0
  %1398 = vmatpush1.bf16.msra.mxu0 0
  %1399 = vmatprep.subr.bf16.mxu0 0
  %1400 = vmatpush1.bf16.msra.mxu0 0
  %1401 = vmatprep.subr.bf16.mxu0 0
  %1402 = vmatpush1.bf16.msra.mxu0 0
  %1403 = vmatprep.mubr.bf16.mxu0 0
  %1404 = vmatmul.mubr.bf16.gmra.mrb[0].mxu0 %v1369
  %v1405 = vpop.f32.mrb[0].mxu0
  %v1406 = vadd.f32 0.0, %v1405
  %v1407 = vpop.f32.mrb[0].mxu0
  %v1408 = vpop.f32.mrb[0].mxu0
  %v1409 = vpop.f32.mrb[0].mxu0
  %1410 = vdwg.mxu0
  %v1411 = vpack.c.bf16 %v1406, %v1406
  %s1412 = scalar_lea.vmem %s19, 64
  %v1413 = vld [vmem:[%s1412] sm:$0xf]
  %v1414 = vld [vmem:[%s1412 + $0x4] sm:$0xf]
  %v1415 = vld [vmem:[%s1412 + $0x8] sm:$0xf]
  %v1416 = vld [vmem:[%s1412 + $0xc] sm:$0xf]
  %v1417 = vld [vmem:[%s1412 + $0x10] sm:$0xf]
  %v1418 = vld [vmem:[%s1412 + $0x14] sm:$0xf]
  %v1419 = vld [vmem:[%s1412 + $0x18] sm:$0xf]
  %v1420 = vld [vmem:[%s1412 + $0x1c] sm:$0xf]
  %v1421 = vld [vmem:[%s1412 + $0x20] sm:$0xf]
  %v1422 = vld [vmem:[%s1412 + $0x24] sm:$0xf]
  %v1423 = vld [vmem:[%s1412 + $0x28] sm:$0xf]
  %v1424 = vld [vmem:[%s1412 + $0x2c] sm:$0xf]
  %v1425 = vld [vmem:[%s1412 + $0x30] sm:$0xf]
  %v1426 = vld [vmem:[%s1412 + $0x34] sm:$0xf]
  %v1427 = vld [vmem:[%s1412 + $0x38] sm:$0xf]
  %v1428 = vld [vmem:[%s1412 + $0x3c] sm:$0xf]
  %s1429 = scalar_lea.vmem %s17, 8
  %v1430 = vld [vmem:[%s1429] sm:$0xf]
  %v1432 = vsel %vm1217, %v1430, 0
  %1434 = vmatprep.subr.bf16.mxu0 0
  %1435 = vmatpush1.bf16.msra.mxu0 %v1214
  %1436 = vmatprep.subr.bf16.mxu0 0
  %1437 = vmatpush1.bf16.msra.mxu0 0
  %1438 = vmatprep.subr.bf16.mxu0 0
  %1439 = vmatpush1.bf16.msra.mxu0 0
  %1440 = vmatprep.subr.bf16.mxu0 0
  %1441 = vmatpush1.bf16.msra.mxu0 0
  %1442 = vmatprep.subr.bf16.mxu0 0
  %1443 = vmatpush1.bf16.msra.mxu0 0
  %1444 = vmatprep.subr.bf16.mxu0 0
  %1445 = vmatpush1.bf16.msra.mxu0 0
  %1446 = vmatprep.subr.bf16.mxu0 0
  %1447 = vmatpush1.bf16.msra.mxu0 0
  %1448 = vmatprep.subr.bf16.mxu0 0
  %1449 = vmatpush1.bf16.msra.mxu0 0
  %1450 = vmatprep.subr.bf16.mxu0 0
  %1451 = vmatpush1.bf16.msra.mxu0 0
  %1452 = vmatprep.subr.bf16.mxu0 0
  %1453 = vmatpush1.bf16.msra.mxu0 0
  %1454 = vmatprep.subr.bf16.mxu0 0
  %1455 = vmatpush1.bf16.msra.mxu0 0
  %1456 = vmatprep.subr.bf16.mxu0 0
  %1457 = vmatpush1.bf16.msra.mxu0 0
  %1458 = vmatprep.subr.bf16.mxu0 0
  %1459 = vmatpush1.bf16.msra.mxu0 0
  %1460 = vmatprep.subr.bf16.mxu0 0
  %1461 = vmatpush1.bf16.msra.mxu0 0
  %1462 = vmatprep.subr.bf16.mxu0 0
  %1463 = vmatpush1.bf16.msra.mxu0 0
  %1464 = vmatprep.subr.bf16.mxu0 0
  %1465 = vmatpush1.bf16.msra.mxu0 0
  %1466 = vmatprep.mubr.bf16.mxu0 0
  %1467 = vmatmul.mubr.bf16.gmra.mrb[0].mxu0 %v1432
  %v1468 = vpop.f32.mrb[0].mxu0
  %v1469 = vadd.f32 0.0, %v1468
  %v1470 = vpop.f32.mrb[0].mxu0
  %v1471 = vpop.f32.mrb[0].mxu0
  %v1472 = vpop.f32.mrb[0].mxu0
  %1473 = vdwg.mxu0
  %v1474 = vpack.c.bf16 %v1469, %v1469
  %s1475 = scalar_lea.vmem %s19, 128
  %v1476 = vld [vmem:[%s1475] sm:$0xf]
  %v1477 = vld [vmem:[%s1475 + $0x4] sm:$0xf]
  %v1478 = vld [vmem:[%s1475 + $0x8] sm:$0xf]
  %v1479 = vld [vmem:[%s1475 + $0xc] sm:$0xf]
  %v1480 = vld [vmem:[%s1475 + $0x10] sm:$0xf]
  %v1481 = vld [vmem:[%s1475 + $0x14] sm:$0xf]
  %v1482 = vld [vmem:[%s1475 + $0x18] sm:$0xf]
  %v1483 = vld [vmem:[%s1475 + $0x1c] sm:$0xf]
  %v1484 = vld [vmem:[%s1475 + $0x20] sm:$0xf]
  %v1485 = vld [vmem:[%s1475 + $0x24] sm:$0xf]
  %v1486 = vld [vmem:[%s1475 + $0x28] sm:$0xf]
  %v1487 = vld [vmem:[%s1475 + $0x2c] sm:$0xf]
  %v1488 = vld [vmem:[%s1475 + $0x30] sm:$0xf]
  %v1489 = vld [vmem:[%s1475 + $0x34] sm:$0xf]
  %v1490 = vld [vmem:[%s1475 + $0x38] sm:$0xf]
  %v1491 = vld [vmem:[%s1475 + $0x3c] sm:$0xf]
  %v1508 = vunpack.c.l.b16 %v1476
  %v1509 = vunpack.c.l.b16 %v1477
  %v1510 = vunpack.c.l.b16 %v1478
  %v1511 = vunpack.c.l.b16 %v1479
  %v1512 = vunpack.c.l.b16 %v1480
  %v1513 = vunpack.c.l.b16 %v1481
  %v1514 = vunpack.c.l.b16 %v1482
  %v1515 = vunpack.c.l.b16 %v1483
  %v1516 = vunpack.c.l.b16 %v1484
  %v1517 = vunpack.c.l.b16 %v1485
  %v1518 = vunpack.c.l.b16 %v1486
  %v1519 = vunpack.c.l.b16 %v1487
  %v1520 = vunpack.c.l.b16 %v1488
  %v1521 = vunpack.c.l.b16 %v1489
  %v1522 = vunpack.c.l.b16 %v1490
  %v1523 = vunpack.c.l.b16 %v1491
  %v1524 = vpack.c.b16 %v1509, %v1508
  %v1525 = vpack.c.b16 %v1511, %v1510
  %v1526 = vpack.c.b16 %v1513, %v1512
  %v1527 = vpack.c.b16 %v1515, %v1514
  %v1528 = vpack.c.b16 %v1517, %v1516
  %v1529 = vpack.c.b16 %v1519, %v1518
  %v1530 = vpack.c.b16 %v1521, %v1520
  %v1531 = vpack.c.b16 %v1523, %v1522
  %1540 = vmatprep.subr.bf16.mxu0 0
  %1541 = vmatpush1.bf16.msra.mxu0 %v1524
  %1542 = vmatprep.subr.bf16.mxu0 0
  %1543 = vmatpush1.bf16.msra.mxu0 %v1525
  %1544 = vmatprep.subr.bf16.mxu0 0
  %1545 = vmatpush1.bf16.msra.mxu0 %v1526
  %1546 = vmatprep.subr.bf16.mxu0 0
  %1547 = vmatpush1.bf16.msra.mxu0 %v1527
  %1548 = vmatprep.subr.bf16.mxu0 0
  %1549 = vmatpush1.bf16.msra.mxu0 %v1528
  %1550 = vmatprep.subr.bf16.mxu0 0
  %1551 = vmatpush1.bf16.msra.mxu0 %v1529
  %1552 = vmatprep.subr.bf16.mxu0 0
  %1553 = vmatpush1.bf16.msra.mxu0 %v1530
  %1554 = vmatprep.subr.bf16.mxu0 0
  %1555 = vmatpush1.bf16.msra.mxu0 %v1531
  %1556 = vmatprep.subr.bf16.mxu0 0
  %1557 = vmatpush1.bf16.msra.mxu0 0
  %1558 = vmatprep.subr.bf16.mxu0 0
  %1559 = vmatpush1.bf16.msra.mxu0 0
  %1560 = vmatprep.subr.bf16.mxu0 0
  %1561 = vmatpush1.bf16.msra.mxu0 0
  %1562 = vmatprep.subr.bf16.mxu0 0
  %1563 = vmatpush1.bf16.msra.mxu0 0
  %1564 = vmatprep.subr.bf16.mxu0 0
  %1565 = vmatpush1.bf16.msra.mxu0 0
  %1566 = vmatprep.subr.bf16.mxu0 0
  %1567 = vmatpush1.bf16.msra.mxu0 0
  %1568 = vmatprep.subr.bf16.mxu0 0
  %1569 = vmatpush1.bf16.msra.mxu0 0
  %1570 = vmatprep.subr.bf16.mxu0 0
  %1571 = vmatpush1.bf16.msra.mxu0 0
  %1572 = vmatprep.mubr.bf16.mxu0 0
  %1573 = vmatmul.mubr.bf16.gmra.mrb[0].mxu0 %v1474
  %v1574 = vpop.f32.mrb[0].mxu0
  %v1575 = vadd.f32 0.0, %v1574
  %v1576 = vpop.f32.mrb[0].mxu0
  %v1577 = vpop.f32.mrb[0].mxu0
  %v1578 = vpop.f32.mrb[0].mxu0
  %1579 = vdwg.mxu0
  %v1580 = vadd.f32 %v1215, %v1361
  %v1597 = vunpack.c.l.b16 %v1413
  %v1598 = vunpack.c.l.b16 %v1414
  %v1599 = vunpack.c.l.b16 %v1415
  %v1600 = vunpack.c.l.b16 %v1416
  %v1601 = vunpack.c.l.b16 %v1417
  %v1602 = vunpack.c.l.b16 %v1418
  %v1603 = vunpack.c.l.b16 %v1419
  %v1604 = vunpack.c.l.b16 %v1420
  %v1605 = vunpack.c.l.b16 %v1421
  %v1606 = vunpack.c.l.b16 %v1422
  %v1607 = vunpack.c.l.b16 %v1423
  %v1608 = vunpack.c.l.b16 %v1424
  %v1609 = vunpack.c.l.b16 %v1425
  %v1610 = vunpack.c.l.b16 %v1426
  %v1611 = vunpack.c.l.b16 %v1427
  %v1612 = vunpack.c.l.b16 %v1428
  %v1613 = vpack.c.b16 %v1598, %v1597
  %v1614 = vpack.c.b16 %v1600, %v1599
  %v1615 = vpack.c.b16 %v1602, %v1601
  %v1616 = vpack.c.b16 %v1604, %v1603
  %v1617 = vpack.c.b16 %v1606, %v1605
  %v1618 = vpack.c.b16 %v1608, %v1607
  %v1619 = vpack.c.b16 %v1610, %v1609
  %v1620 = vpack.c.b16 %v1612, %v1611
  %1629 = vmatprep.subr.bf16.mxu0 0
  %1630 = vmatpush1.bf16.msra.mxu0 %v1613
  %1631 = vmatprep.subr.bf16.mxu0 0
  %1632 = vmatpush1.bf16.msra.mxu0 %v1614
  %1633 = vmatprep.subr.bf16.mxu0 0
  %1634 = vmatpush1.bf16.msra.mxu0 %v1615
  %1635 = vmatprep.subr.bf16.mxu0 0
  %1636 = vmatpush1.bf16.msra.mxu0 %v1616
  %1637 = vmatprep.subr.bf16.mxu0 0
  %1638 = vmatpush1.bf16.msra.mxu0 %v1617
  %1639 = vmatprep.subr.bf16.mxu0 0
  %1640 = vmatpush1.bf16.msra.mxu0 %v1618
  %1641 = vmatprep.subr.bf16.mxu0 0
  %1642 = vmatpush1.bf16.msra.mxu0 %v1619
  %1643 = vmatprep.subr.bf16.mxu0 0
  %1644 = vmatpush1.bf16.msra.mxu0 %v1620
  %1645 = vmatprep.subr.bf16.mxu0 0
  %1646 = vmatpush1.bf16.msra.mxu0 0
  %1647 = vmatprep.subr.bf16.mxu0 0
  %1648 = vmatpush1.bf16.msra.mxu0 0
  %1649 = vmatprep.subr.bf16.mxu0 0
  %1650 = vmatpush1.bf16.msra.mxu0 0
  %1651 = vmatprep.subr.bf16.mxu0 0
  %1652 = vmatpush1.bf16.msra.mxu0 0
  %1653 = vmatprep.subr.bf16.mxu0 0
  %1654 = vmatpush1.bf16.msra.mxu0 0
  %1655 = vmatprep.subr.bf16.mxu0 0
  %1656 = vmatpush1.bf16.msra.mxu0 0
  %1657 = vmatprep.subr.bf16.mxu0 0
  %1658 = vmatpush1.bf16.msra.mxu0 0
  %1659 = vmatprep.subr.bf16.mxu0 0
  %1660 = vmatpush1.bf16.msra.mxu0 0
  %1661 = vmatprep.mubr.bf16.mxu0 0
  %1662 = vmatmul.mubr.bf16.gmra.mrb[0].mxu0 %v1411
  %v1663 = vpop.f32.mrb[0].mxu0
  %v1664 = vadd.f32 %v1575, %v1663
  %v1665 = vpop.f32.mrb[0].mxu0
  %v1666 = vpop.f32.mrb[0].mxu0
  %v1667 = vpop.f32.mrb[0].mxu0
  %1668 = vdwg.mxu0
  %v1669 = vadd.f32 %v1580, %v1664
  %vm1670 = vcmp.ge.f32.partialorder %v1669, 0.0
  %v1671 = vmul.f32 %v1669, 0.01
  %v1672 = vsel %vm1670, %v1669, %v1671
  %v1673 = vpack.c.bf16 %v1672, %v1672
  %v1674 = vld [vmem:[%s27] sm:$0xff]
  %v1675 = vld [vmem:[%s23] sm:$0xf]
  %vm1676 = vcmask 64512
  %v1678 = vsel %vm1676, %v1675, 0
  %vm1680 = vcmask 1043456
  %v1682 = vsel %vm1680, %v1673, 0
  %1684 = vmatprep.subr.bf16.mxu0 0
  %1685 = vmatpush1.bf16.msra.mxu0 %v1682
  %1686 = vmatprep.subr.bf16.mxu0 0
  %1687 = vmatpush1.bf16.msra.mxu0 0
  %1688 = vmatprep.subr.bf16.mxu0 0
  %1689 = vmatpush1.bf16.msra.mxu0 0
  %1690 = vmatprep.subr.bf16.mxu0 0
  %1691 = vmatpush1.bf16.msra.mxu0 0
  %1692 = vmatprep.subr.bf16.mxu0 0
  %1693 = vmatpush1.bf16.msra.mxu0 0
  %1694 = vmatprep.subr.bf16.mxu0 0
  %1695 = vmatpush1.bf16.msra.mxu0 0
  %1696 = vmatprep.subr.bf16.mxu0 0
  %1697 = vmatpush1.bf16.msra.mxu0 0
  %1698 = vmatprep.subr.bf16.mxu0 0
  %1699 = vmatpush1.bf16.msra.mxu0 0
  %1700 = vmatprep.subr.bf16.mxu0 0
  %1701 = vmatpush1.bf16.msra.mxu0 0
  %1702 = vmatprep.subr.bf16.mxu0 0
  %1703 = vmatpush1.bf16.msra.mxu0 0
  %1704 = vmatprep.subr.bf16.mxu0 0
  %1705 = vmatpush1.bf16.msra.mxu0 0
  %1706 = vmatprep.subr.bf16.mxu0 0
  %1707 = vmatpush1.bf16.msra.mxu0 0
  %1708 = vmatprep.subr.bf16.mxu0 0
  %1709 = vmatpush1.bf16.msra.mxu0 0
  %1710 = vmatprep.subr.bf16.mxu0 0
  %1711 = vmatpush1.bf16.msra.mxu0 0
  %1712 = vmatprep.subr.bf16.mxu0 0
  %1713 = vmatpush1.bf16.msra.mxu0 0
  %1714 = vmatprep.subr.bf16.mxu0 0
  %1715 = vmatpush1.bf16.msra.mxu0 0
  %1716 = vmatprep.mubr.bf16.mxu0 0
  %1717 = vmatmul.mubr.bf16.gmra.mrb[0].mxu0 %v1678
  %v1718 = vpop.f32.mrb[0].mxu0
  %v1719 = vadd.f32 0.0, %v1718
  %v1720 = vpop.f32.mrb[0].mxu0
  %v1721 = vpop.f32.mrb[0].mxu0
  %v1722 = vpop.f32.mrb[0].mxu0
  %1723 = vdwg.mxu0
  %v1724 = vpack.c.bf16 %v1719, %v1719
  %v1725 = vld [vmem:[%s25] sm:$0xf]
  %v1726 = vld [vmem:[%s25 + $0x4] sm:$0xf]
  %v1727 = vld [vmem:[%s25 + $0x8] sm:$0xf]
  %v1728 = vld [vmem:[%s25 + $0xc] sm:$0xf]
  %v1729 = vld [vmem:[%s25 + $0x10] sm:$0xf]
  %v1730 = vld [vmem:[%s25 + $0x14] sm:$0xf]
  %v1731 = vld [vmem:[%s25 + $0x18] sm:$0xf]
  %v1732 = vld [vmem:[%s25 + $0x1c] sm:$0xf]
  %v1733 = vld [vmem:[%s25 + $0x20] sm:$0xf]
  %v1734 = vld [vmem:[%s25 + $0x24] sm:$0xf]
  %v1735 = vld [vmem:[%s25 + $0x28] sm:$0xf]
  %v1736 = vld [vmem:[%s25 + $0x2c] sm:$0xf]
  %v1737 = vld [vmem:[%s25 + $0x30] sm:$0xf]
  %v1738 = vld [vmem:[%s25 + $0x34] sm:$0xf]
  %v1739 = vld [vmem:[%s25 + $0x38] sm:$0xf]
  %v1740 = vld [vmem:[%s25 + $0x3c] sm:$0xf]
  %v1757 = vunpack.c.l.b16 %v1725
  %v1758 = vunpack.c.l.b16 %v1726
  %v1759 = vunpack.c.l.b16 %v1727
  %v1760 = vunpack.c.l.b16 %v1728
  %v1761 = vunpack.c.l.b16 %v1729
  %v1762 = vunpack.c.l.b16 %v1730
  %v1763 = vunpack.c.l.b16 %v1731
  %v1764 = vunpack.c.l.b16 %v1732
  %v1765 = vunpack.c.l.b16 %v1733
  %v1766 = vunpack.c.l.b16 %v1734
  %v1767 = vunpack.c.l.b16 %v1735
  %v1768 = vunpack.c.l.b16 %v1736
  %v1769 = vunpack.c.l.b16 %v1737
  %v1770 = vunpack.c.l.b16 %v1738
  %v1771 = vunpack.c.l.b16 %v1739
  %v1772 = vunpack.c.l.b16 %v1740
  %v1773 = vpack.c.b16 %v1758, %v1757
  %v1774 = vpack.c.b16 %v1760, %v1759
  %v1775 = vpack.c.b16 %v1762, %v1761
  %v1776 = vpack.c.b16 %v1764, %v1763
  %v1777 = vpack.c.b16 %v1766, %v1765
  %v1778 = vpack.c.b16 %v1768, %v1767
  %v1779 = vpack.c.b16 %v1770, %v1769
  %v1780 = vpack.c.b16 %v1772, %v1771
  %1789 = vmatprep.subr.bf16.mxu0 0
  %1790 = vmatpush1.bf16.msra.mxu0 %v1773
  %1791 = vmatprep.subr.bf16.mxu0 0
  %1792 = vmatpush1.bf16.msra.mxu0 %v1774
  %1793 = vmatprep.subr.bf16.mxu0 0
  %1794 = vmatpush1.bf16.msra.mxu0 %v1775
  %1795 = vmatprep.subr.bf16.mxu0 0
  %1796 = vmatpush1.bf16.msra.mxu0 %v1776
  %1797 = vmatprep.subr.bf16.mxu0 0
  %1798 = vmatpush1.bf16.msra.mxu0 %v1777
  %1799 = vmatprep.subr.bf16.mxu0 0
  %1800 = vmatpush1.bf16.msra.mxu0 %v1778
  %1801 = vmatprep.subr.bf16.mxu0 0
  %1802 = vmatpush1.bf16.msra.mxu0 %v1779
  %1803 = vmatprep.subr.bf16.mxu0 0
  %1804 = vmatpush1.bf16.msra.mxu0 %v1780
  %1805 = vmatprep.subr.bf16.mxu0 0
  %1806 = vmatpush1.bf16.msra.mxu0 0
  %1807 = vmatprep.subr.bf16.mxu0 0
  %1808 = vmatpush1.bf16.msra.mxu0 0
  %1809 = vmatprep.subr.bf16.mxu0 0
  %1810 = vmatpush1.bf16.msra.mxu0 0
  %1811 = vmatprep.subr.bf16.mxu0 0
  %1812 = vmatpush1.bf16.msra.mxu0 0
  %1813 = vmatprep.subr.bf16.mxu0 0
  %1814 = vmatpush1.bf16.msra.mxu0 0
  %1815 = vmatprep.subr.bf16.mxu0 0
  %1816 = vmatpush1.bf16.msra.mxu0 0
  %1817 = vmatprep.subr.bf16.mxu0 0
  %1818 = vmatpush1.bf16.msra.mxu0 0
  %1819 = vmatprep.subr.bf16.mxu0 0
  %1820 = vmatpush1.bf16.msra.mxu0 0
  %1821 = vmatprep.mubr.bf16.mxu0 0
  %1822 = vmatmul.mubr.bf16.gmra.mrb[0].mxu0 %v1724
  %v1823 = vpop.f32.mrb[0].mxu0
  %v1824 = vadd.f32 0.0, %v1823
  %v1825 = vpop.f32.mrb[0].mxu0
  %v1826 = vpop.f32.mrb[0].mxu0
  %v1827 = vpop.f32.mrb[0].mxu0
  %1828 = vdwg.mxu0
  %s1829 = scalar_lea.vmem %s23, 4
  %v1830 = vld [vmem:[%s1829] sm:$0xf]
  %v1832 = vsel %vm1676, %v1830, 0
  %1834 = vmatprep.subr.bf16.mxu0 0
  %1835 = vmatpush1.bf16.msra.mxu0 %v1682
  %1836 = vmatprep.subr.bf16.mxu0 0
  %1837 = vmatpush1.bf16.msra.mxu0 0
  %1838 = vmatprep.subr.bf16.mxu0 0
  %1839 = vmatpush1.bf16.msra.mxu0 0
  %1840 = vmatprep.subr.bf16.mxu0 0
  %1841 = vmatpush1.bf16.msra.mxu0 0
  %1842 = vmatprep.subr.bf16.mxu0 0
  %1843 = vmatpush1.bf16.msra.mxu0 0
  %1844 = vmatprep.subr.bf16.mxu0 0
  %1845 = vmatpush1.bf16.msra.mxu0 0
  %1846 = vmatprep.subr.bf16.mxu0 0
  %1847 = vmatpush1.bf16.msra.mxu0 0
  %1848 = vmatprep.subr.bf16.mxu0 0
  %1849 = vmatpush1.bf16.msra.mxu0 0
  %1850 = vmatprep.subr.bf16.mxu0 0
  %1851 = vmatpush1.bf16.msra.mxu0 0
  %1852 = vmatprep.subr.bf16.mxu0 0
  %1853 = vmatpush1.bf16.msra.mxu0 0
  %1854 = vmatprep.subr.bf16.mxu0 0
  %1855 = vmatpush1.bf16.msra.mxu0 0
  %1856 = vmatprep.subr.bf16.mxu0 0
  %1857 = vmatpush1.bf16.msra.mxu0 0
  %1858 = vmatprep.subr.bf16.mxu0 0
  %1859 = vmatpush1.bf16.msra.mxu0 0
  %1860 = vmatprep.subr.bf16.mxu0 0
  %1861 = vmatpush1.bf16.msra.mxu0 0
  %1862 = vmatprep.subr.bf16.mxu0 0
  %1863 = vmatpush1.bf16.msra.mxu0 0
  %1864 = vmatprep.subr.bf16.mxu0 0
  %1865 = vmatpush1.bf16.msra.mxu0 0
  %1866 = vmatprep.mubr.bf16.mxu0 0
  %1867 = vmatmul.mubr.bf16.gmra.mrb[0].mxu0 %v1832
  %v1868 = vpop.f32.mrb[0].mxu0
  %v1869 = vadd.f32 0.0, %v1868
  %v1870 = vpop.f32.mrb[0].mxu0
  %v1871 = vpop.f32.mrb[0].mxu0
  %v1872 = vpop.f32.mrb[0].mxu0
  %1873 = vdwg.mxu0
  %v1874 = vpack.c.bf16 %v1869, %v1869
  %s1875 = scalar_lea.vmem %s25, 64
  %v1876 = vld [vmem:[%s1875] sm:$0xf]
  %v1877 = vld [vmem:[%s1875 + $0x4] sm:$0xf]
  %v1878 = vld [vmem:[%s1875 + $0x8] sm:$0xf]
  %v1879 = vld [vmem:[%s1875 + $0xc] sm:$0xf]
  %v1880 = vld [vmem:[%s1875 + $0x10] sm:$0xf]
  %v1881 = vld [vmem:[%s1875 + $0x14] sm:$0xf]
  %v1882 = vld [vmem:[%s1875 + $0x18] sm:$0xf]
  %v1883 = vld [vmem:[%s1875 + $0x1c] sm:$0xf]
  %v1884 = vld [vmem:[%s1875 + $0x20] sm:$0xf]
  %v1885 = vld [vmem:[%s1875 + $0x24] sm:$0xf]
  %v1886 = vld [vmem:[%s1875 + $0x28] sm:$0xf]
  %v1887 = vld [vmem:[%s1875 + $0x2c] sm:$0xf]
  %v1888 = vld [vmem:[%s1875 + $0x30] sm:$0xf]
  %v1889 = vld [vmem:[%s1875 + $0x34] sm:$0xf]
  %v1890 = vld [vmem:[%s1875 + $0x38] sm:$0xf]
  %v1891 = vld [vmem:[%s1875 + $0x3c] sm:$0xf]
  %s1892 = scalar_lea.vmem %s23, 8
  %v1893 = vld [vmem:[%s1892] sm:$0xf]
  %v1895 = vsel %vm1676, %v1893, 0
  %1897 = vmatprep.subr.bf16.mxu0 0
  %1898 = vmatpush1.bf16.msra.mxu0 %v1682
  %1899 = vmatprep.subr.bf16.mxu0 0
  %1900 = vmatpush1.bf16.msra.mxu0 0
  %1901 = vmatprep.subr.bf16.mxu0 0
  %1902 = vmatpush1.bf16.msra.mxu0 0
  %1903 = vmatprep.subr.bf16.mxu0 0
  %1904 = vmatpush1.bf16.msra.mxu0 0
  %1905 = vmatprep.subr.bf16.mxu0 0
  %1906 = vmatpush1.bf16.msra.mxu0 0
  %1907 = vmatprep.subr.bf16.mxu0 0
  %1908 = vmatpush1.bf16.msra.mxu0 0
  %1909 = vmatprep.subr.bf16.mxu0 0
  %1910 = vmatpush1.bf16.msra.mxu0 0
  %1911 = vmatprep.subr.bf16.mxu0 0
  %1912 = vmatpush1.bf16.msra.mxu0 0
  %1913 = vmatprep.subr.bf16.mxu0 0
  %1914 = vmatpush1.bf16.msra.mxu0 0
  %1915 = vmatprep.subr.bf16.mxu0 0
  %1916 = vmatpush1.bf16.msra.mxu0 0
  %1917 = vmatprep.subr.bf16.mxu0 0
  %1918 = vmatpush1.bf16.msra.mxu0 0
  %1919 = vmatprep.subr.bf16.mxu0 0
  %1920 = vmatpush1.bf16.msra.mxu0 0
  %1921 = vmatprep.subr.bf16.mxu0 0
  %1922 = vmatpush1.bf16.msra.mxu0 0
  %1923 = vmatprep.subr.bf16.mxu0 0
  %1924 = vmatpush1.bf16.msra.mxu0 0
  %1925 = vmatprep.subr.bf16.mxu0 0
  %1926 = vmatpush1.bf16.msra.mxu0 0
  %1927 = vmatprep.subr.bf16.mxu0 0
  %1928 = vmatpush1.bf16.msra.mxu0 0
  %1929 = vmatprep.mubr.bf16.mxu0 0
  %1930 = vmatmul.mubr.bf16.gmra.mrb[0].mxu0 %v1895
  %v1931 = vpop.f32.mrb[0].mxu0
  %v1932 = vadd.f32 0.0, %v1931
  %v1933 = vpop.f32.mrb[0].mxu0
  %v1934 = vpop.f32.mrb[0].mxu0
  %v1935 = vpop.f32.mrb[0].mxu0
  %1936 = vdwg.mxu0
  %v1937 = vpack.c.bf16 %v1932, %v1932
  %s1938 = scalar_lea.vmem %s25, 128
  %v1939 = vld [vmem:[%s1938] sm:$0xf]
  %v1940 = vld [vmem:[%s1938 + $0x4] sm:$0xf]
  %v1941 = vld [vmem:[%s1938 + $0x8] sm:$0xf]
  %v1942 = vld [vmem:[%s1938 + $0xc] sm:$0xf]
  %v1943 = vld [vmem:[%s1938 + $0x10] sm:$0xf]
  %v1944 = vld [vmem:[%s1938 + $0x14] sm:$0xf]
  %v1945 = vld [vmem:[%s1938 + $0x18] sm:$0xf]
  %v1946 = vld [vmem:[%s1938 + $0x1c] sm:$0xf]
  %v1947 = vld [vmem:[%s1938 + $0x20] sm:$0xf]
  %v1948 = vld [vmem:[%s1938 + $0x24] sm:$0xf]
  %v1949 = vld [vmem:[%s1938 + $0x28] sm:$0xf]
  %v1950 = vld [vmem:[%s1938 + $0x2c] sm:$0xf]
  %v1951 = vld [vmem:[%s1938 + $0x30] sm:$0xf]
  %v1952 = vld [vmem:[%s1938 + $0x34] sm:$0xf]
  %v1953 = vld [vmem:[%s1938 + $0x38] sm:$0xf]
  %v1954 = vld [vmem:[%s1938 + $0x3c] sm:$0xf]
  %v1971 = vunpack.c.l.b16 %v1939
  %v1972 = vunpack.c.l.b16 %v1940
  %v1973 = vunpack.c.l.b16 %v1941
  %v1974 = vunpack.c.l.b16 %v1942
  %v1975 = vunpack.c.l.b16 %v1943
  %v1976 = vunpack.c.l.b16 %v1944
  %v1977 = vunpack.c.l.b16 %v1945
  %v1978 = vunpack.c.l.b16 %v1946
  %v1979 = vunpack.c.l.b16 %v1947
  %v1980 = vunpack.c.l.b16 %v1948
  %v1981 = vunpack.c.l.b16 %v1949
  %v1982 = vunpack.c.l.b16 %v1950
  %v1983 = vunpack.c.l.b16 %v1951
  %v1984 = vunpack.c.l.b16 %v1952
  %v1985 = vunpack.c.l.b16 %v1953
  %v1986 = vunpack.c.l.b16 %v1954
  %v1987 = vpack.c.b16 %v1972, %v1971
  %v1988 = vpack.c.b16 %v1974, %v1973
  %v1989 = vpack.c.b16 %v1976, %v1975
  %v1990 = vpack.c.b16 %v1978, %v1977
  %v1991 = vpack.c.b16 %v1980, %v1979
  %v1992 = vpack.c.b16 %v1982, %v1981
  %v1993 = vpack.c.b16 %v1984, %v1983
  %v1994 = vpack.c.b16 %v1986, %v1985
  %2003 = vmatprep.subr.bf16.mxu0 0
  %2004 = vmatpush1.bf16.msra.mxu0 %v1987
  %2005 = vmatprep.subr.bf16.mxu0 0
  %2006 = vmatpush1.bf16.msra.mxu0 %v1988
  %2007 = vmatprep.subr.bf16.mxu0 0
  %2008 = vmatpush1.bf16.msra.mxu0 %v1989
  %2009 = vmatprep.subr.bf16.mxu0 0
  %2010 = vmatpush1.bf16.msra.mxu0 %v1990
  %2011 = vmatprep.subr.bf16.mxu0 0
  %2012 = vmatpush1.bf16.msra.mxu0 %v1991
  %2013 = vmatprep.subr.bf16.mxu0 0
  %2014 = vmatpush1.bf16.msra.mxu0 %v1992
  %2015 = vmatprep.subr.bf16.mxu0 0
  %2016 = vmatpush1.bf16.msra.mxu0 %v1993
  %2017 = vmatprep.subr.bf16.mxu0 0
  %2018 = vmatpush1.bf16.msra.mxu0 %v1994
  %2019 = vmatprep.subr.bf16.mxu0 0
  %2020 = vmatpush1.bf16.msra.mxu0 0
  %2021 = vmatprep.subr.bf16.mxu0 0
  %2022 = vmatpush1.bf16.msra.mxu0 0
  %2023 = vmatprep.subr.bf16.mxu0 0
  %2024 = vmatpush1.bf16.msra.mxu0 0
  %2025 = vmatprep.subr.bf16.mxu0 0
  %2026 = vmatpush1.bf16.msra.mxu0 0
  %2027 = vmatprep.subr.bf16.mxu0 0
  %2028 = vmatpush1.bf16.msra.mxu0 0
  %2029 = vmatprep.subr.bf16.mxu0 0
  %2030 = vmatpush1.bf16.msra.mxu0 0
  %2031 = vmatprep.subr.bf16.mxu0 0
  %2032 = vmatpush1.bf16.msra.mxu0 0
  %2033 = vmatprep.subr.bf16.mxu0 0
  %2034 = vmatpush1.bf16.msra.mxu0 0
  %2035 = vmatprep.mubr.bf16.mxu0 0
  %2036 = vmatmul.mubr.bf16.gmra.mrb[0].mxu0 %v1937
  %v2037 = vpop.f32.mrb[0].mxu0
  %v2038 = vadd.f32 0.0, %v2037
  %v2039 = vpop.f32.mrb[0].mxu0
  %v2040 = vpop.f32.mrb[0].mxu0
  %v2041 = vpop.f32.mrb[0].mxu0
  %2042 = vdwg.mxu0
  %v2043 = vadd.f32 %v1674, %v1824
  %v2060 = vunpack.c.l.b16 %v1876
  %v2061 = vunpack.c.l.b16 %v1877
  %v2062 = vunpack.c.l.b16 %v1878
  %v2063 = vunpack.c.l.b16 %v1879
  %v2064 = vunpack.c.l.b16 %v1880
  %v2065 = vunpack.c.l.b16 %v1881
  %v2066 = vunpack.c.l.b16 %v1882
  %v2067 = vunpack.c.l.b16 %v1883
  %v2068 = vunpack.c.l.b16 %v1884
  %v2069 = vunpack.c.l.b16 %v1885
  %v2070 = vunpack.c.l.b16 %v1886
  %v2071 = vunpack.c.l.b16 %v1887
  %v2072 = vunpack.c.l.b16 %v1888
  %v2073 = vunpack.c.l.b16 %v1889
  %v2074 = vunpack.c.l.b16 %v1890
  %v2075 = vunpack.c.l.b16 %v1891
  %v2076 = vpack.c.b16 %v2061, %v2060
  %v2077 = vpack.c.b16 %v2063, %v2062
  %v2078 = vpack.c.b16 %v2065, %v2064
  %v2079 = vpack.c.b16 %v2067, %v2066
  %v2080 = vpack.c.b16 %v2069, %v2068
  %v2081 = vpack.c.b16 %v2071, %v2070
  %v2082 = vpack.c.b16 %v2073, %v2072
  %v2083 = vpack.c.b16 %v2075, %v2074
  %2092 = vmatprep.subr.bf16.mxu0 0
  %2093 = vmatpush1.bf16.msra.mxu0 %v2076
  %2094 = vmatprep.subr.bf16.mxu0 0
  %2095 = vmatpush1.bf16.msra.mxu0 %v2077
  %2096 = vmatprep.subr.bf16.mxu0 0
  %2097 = vmatpush1.bf16.msra.mxu0 %v2078
  %2098 = vmatprep.subr.bf16.mxu0 0
  %2099 = vmatpush1.bf16.msra.mxu0 %v2079
  %2100 = vmatprep.subr.bf16.mxu0 0
  %2101 = vmatpush1.bf16.msra.mxu0 %v2080
  %2102 = vmatprep.subr.bf16.mxu0 0
  %2103 = vmatpush1.bf16.msra.mxu0 %v2081
  %2104 = vmatprep.subr.bf16.mxu0 0
  %2105 = vmatpush1.bf16.msra.mxu0 %v2082
  %2106 = vmatprep.subr.bf16.mxu0 0
  %2107 = vmatpush1.bf16.msra.mxu0 %v2083
  %2108 = vmatprep.subr.bf16.mxu0 0
  %2109 = vmatpush1.bf16.msra.mxu0 0
  %2110 = vmatprep.subr.bf16.mxu0 0
  %2111 = vmatpush1.bf16.msra.mxu0 0
  %2112 = vmatprep.subr.bf16.mxu0 0
  %2113 = vmatpush1.bf16.msra.mxu0 0
  %2114 = vmatprep.subr.bf16.mxu0 0
  %2115 = vmatpush1.bf16.msra.mxu0 0
  %2116 = vmatprep.subr.bf16.mxu0 0
  %2117 = vmatpush1.bf16.msra.mxu0 0
  %2118 = vmatprep.subr.bf16.mxu0 0
  %2119 = vmatpush1.bf16.msra.mxu0 0
  %2120 = vmatprep.subr.bf16.mxu0 0
  %2121 = vmatpush1.bf16.msra.mxu0 0
  %2122 = vmatprep.subr.bf16.mxu0 0
  %2123 = vmatpush1.bf16.msra.mxu0 0
  %2124 = vmatprep.mubr.bf16.mxu0 0
  %2125 = vmatmul.mubr.bf16.gmra.mrb[0].mxu0 %v1874
  %v2126 = vpop.f32.mrb[0].mxu0
  %v2127 = vadd.f32 %v2038, %v2126
  %v2128 = vpop.f32.mrb[0].mxu0
  %v2129 = vpop.f32.mrb[0].mxu0
  %v2130 = vpop.f32.mrb[0].mxu0
  %2131 = vdwg.mxu0
  %v2132 = vadd.f32 %v2043, %v2127
  %vm2133 = vcmp.ge.f32.partialorder %v2132, 0.0
  %v2134 = vmul.f32 %v2132, 0.01
  %v2135 = vsel %vm2133, %v2132, %v2134
  %v2136 = vpack.c.bf16 %v2135, %v2135
  %v2137 = vld [vmem:[%s33] sm:$0xff]
  %v2138 = vld [vmem:[%s33 + $0x8] sm:$0xff]
  %v2139 = vld [vmem:[%s29] sm:$0xf]
  %v2141 = vsel %vm1676, %v2139, 0
  %v2144 = vsel %vm1680, %v2136, 0
  %2146 = vmatprep.subr.bf16.mxu0 0
  %2147 = vmatpush1.bf16.msra.mxu0 %v2144
  %2148 = vmatprep.subr.bf16.mxu0 0
  %2149 = vmatpush1.bf16.msra.mxu0 0
  %2150 = vmatprep.subr.bf16.mxu0 0
  %2151 = vmatpush1.bf16.msra.mxu0 0
  %2152 = vmatprep.subr.bf16.mxu0 0
  %2153 = vmatpush1.bf16.msra.mxu0 0
  %2154 = vmatprep.subr.bf16.mxu0 0
  %2155 = vmatpush1.bf16.msra.mxu0 0
  %2156 = vmatprep.subr.bf16.mxu0 0
  %2157 = vmatpush1.bf16.msra.mxu0 0
  %2158 = vmatprep.subr.bf16.mxu0 0
  %2159 = vmatpush1.bf16.msra.mxu0 0
  %2160 = vmatprep.subr.bf16.mxu0 0
  %2161 = vmatpush1.bf16.msra.mxu0 0
  %2162 = vmatprep.subr.bf16.mxu0 0
  %2163 = vmatpush1.bf16.msra.mxu0 0
  %2164 = vmatprep.subr.bf16.mxu0 0
  %2165 = vmatpush1.bf16.msra.mxu0 0
  %2166 = vmatprep.subr.bf16.mxu0 0
  %2167 = vmatpush1.bf16.msra.mxu0 0
  %2168 = vmatprep.subr.bf16.mxu0 0
  %2169 = vmatpush1.bf16.msra.mxu0 0
  %2170 = vmatprep.subr.bf16.mxu0 0
  %2171 = vmatpush1.bf16.msra.mxu0 0
  %2172 = vmatprep.subr.bf16.mxu0 0
  %2173 = vmatpush1.bf16.msra.mxu0 0
  %2174 = vmatprep.subr.bf16.mxu0 0
  %2175 = vmatpush1.bf16.msra.mxu0 0
  %2176 = vmatprep.subr.bf16.mxu0 0
  %2177 = vmatpush1.bf16.msra.mxu0 0
  %2178 = vmatprep.mubr.bf16.mxu0 0
  %2179 = vmatmul.mubr.bf16.gmra.mrb[0].mxu0 %v2141
  %v2180 = vpop.f32.mrb[0].mxu0
  %v2181 = vadd.f32 0.0, %v2180
  %v2182 = vpop.f32.mrb[0].mxu0
  %v2183 = vpop.f32.mrb[0].mxu0
  %v2184 = vpop.f32.mrb[0].mxu0
  %2185 = vdwg.mxu0
  %v2186 = vpack.c.bf16 %v2181, %v2181
  %v2187 = vld [vmem:[%s31] sm:$0xff]
  %v2188 = vld [vmem:[%s31 + $0x8] sm:$0xff]
  %v2189 = vld [vmem:[%s31 + $0x10] sm:$0xff]
  %v2190 = vld [vmem:[%s31 + $0x18] sm:$0xff]
  %v2191 = vld [vmem:[%s31 + $0x20] sm:$0xff]
  %v2192 = vld [vmem:[%s31 + $0x28] sm:$0xff]
  %v2193 = vld [vmem:[%s31 + $0x30] sm:$0xff]
  %v2194 = vld [vmem:[%s31 + $0x38] sm:$0xff]
  %v2195 = vld [vmem:[%s31 + $0x40] sm:$0xff]
  %v2196 = vld [vmem:[%s31 + $0x48] sm:$0xff]
  %v2197 = vld [vmem:[%s31 + $0x50] sm:$0xff]
  %v2198 = vld [vmem:[%s31 + $0x58] sm:$0xff]
  %v2199 = vld [vmem:[%s31 + $0x60] sm:$0xff]
  %v2200 = vld [vmem:[%s31 + $0x68] sm:$0xff]
  %v2201 = vld [vmem:[%s31 + $0x70] sm:$0xff]
  %v2202 = vld [vmem:[%s31 + $0x78] sm:$0xff]
  %v2219 = vunpack.c.l.b16 %v2187
  %v2220 = vunpack.c.h.b16 %v2187
  %v2221 = vunpack.c.l.b16 %v2188
  %v2222 = vunpack.c.h.b16 %v2188
  %v2223 = vunpack.c.l.b16 %v2189
  %v2224 = vunpack.c.h.b16 %v2189
  %v2225 = vunpack.c.l.b16 %v2190
  %v2226 = vunpack.c.h.b16 %v2190
  %v2227 = vunpack.c.l.b16 %v2191
  %v2228 = vunpack.c.h.b16 %v2191
  %v2229 = vunpack.c.l.b16 %v2192
  %v2230 = vunpack.c.h.b16 %v2192
  %v2231 = vunpack.c.l.b16 %v2193
  %v2232 = vunpack.c.h.b16 %v2193
  %v2233 = vunpack.c.l.b16 %v2194
  %v2234 = vunpack.c.h.b16 %v2194
  %v2235 = vunpack.c.l.b16 %v2195
  %v2236 = vunpack.c.h.b16 %v2195
  %v2237 = vunpack.c.l.b16 %v2196
  %v2238 = vunpack.c.h.b16 %v2196
  %v2239 = vunpack.c.l.b16 %v2197
  %v2240 = vunpack.c.h.b16 %v2197
  %v2241 = vunpack.c.l.b16 %v2198
  %v2242 = vunpack.c.h.b16 %v2198
  %v2243 = vunpack.c.l.b16 %v2199
  %v2244 = vunpack.c.h.b16 %v2199
  %v2245 = vunpack.c.l.b16 %v2200
  %v2246 = vunpack.c.h.b16 %v2200
  %v2247 = vunpack.c.l.b16 %v2201
  %v2248 = vunpack.c.h.b16 %v2201
  %v2249 = vunpack.c.l.b16 %v2202
  %v2250 = vunpack.c.h.b16 %v2202
  %v2251 = vpack.c.b16 %v2221, %v2219
  %v2252 = vpack.c.b16 %v2222, %v2220
  %v2253 = vpack.c.b16 %v2225, %v2223
  %v2254 = vpack.c.b16 %v2226, %v2224
  %v2255 = vpack.c.b16 %v2229, %v2227
  %v2256 = vpack.c.b16 %v2230, %v2228
  %v2257 = vpack.c.b16 %v2233, %v2231
  %v2258 = vpack.c.b16 %v2234, %v2232
  %v2259 = vpack.c.b16 %v2237, %v2235
  %v2260 = vpack.c.b16 %v2238, %v2236
  %v2261 = vpack.c.b16 %v2241, %v2239
  %v2262 = vpack.c.b16 %v2242, %v2240
  %v2263 = vpack.c.b16 %v2245, %v2243
  %v2264 = vpack.c.b16 %v2246, %v2244
  %v2265 = vpack.c.b16 %v2249, %v2247
  %v2266 = vpack.c.b16 %v2250, %v2248
  %2283 = vmatprep.subr.bf16.mxu0 %v2252
  %2284 = vmatpush1.bf16.msra.mxu0 %v2251
  %2285 = vmatprep.subr.bf16.mxu0 %v2254
  %2286 = vmatpush1.bf16.msra.mxu0 %v2253
  %2287 = vmatprep.subr.bf16.mxu0 %v2256
  %2288 = vmatpush1.bf16.msra.mxu0 %v2255
  %2289 = vmatprep.subr.bf16.mxu0 %v2258
  %2290 = vmatpush1.bf16.msra.mxu0 %v2257
  %2291 = vmatprep.subr.bf16.mxu0 %v2260
  %2292 = vmatpush1.bf16.msra.mxu0 %v2259
  %2293 = vmatprep.subr.bf16.mxu0 %v2262
  %2294 = vmatpush1.bf16.msra.mxu0 %v2261
  %2295 = vmatprep.subr.bf16.mxu0 %v2264
  %2296 = vmatpush1.bf16.msra.mxu0 %v2263
  %2297 = vmatprep.subr.bf16.mxu0 %v2266
  %2298 = vmatpush1.bf16.msra.mxu0 %v2265
  %2299 = vmatprep.subr.bf16.mxu0 0
  %2300 = vmatpush1.bf16.msra.mxu0 0
  %2301 = vmatprep.subr.bf16.mxu0 0
  %2302 = vmatpush1.bf16.msra.mxu0 0
  %2303 = vmatprep.subr.bf16.mxu0 0
  %2304 = vmatpush1.bf16.msra.mxu0 0
  %2305 = vmatprep.subr.bf16.mxu0 0
  %2306 = vmatpush1.bf16.msra.mxu0 0
  %2307 = vmatprep.subr.bf16.mxu0 0
  %2308 = vmatpush1.bf16.msra.mxu0 0
  %2309 = vmatprep.subr.bf16.mxu0 0
  %2310 = vmatpush1.bf16.msra.mxu0 0
  %2311 = vmatprep.subr.bf16.mxu0 0
  %2312 = vmatpush1.bf16.msra.mxu0 0
  %2313 = vmatprep.subr.bf16.mxu0 0
  %2314 = vmatpush1.bf16.msra.mxu0 0
  %2315 = vmatprep.mubr.bf16.mxu0 0
  %2316 = vmatmul.mubr.bf16.gmra.mrb[0].mxu0 %v2186
  %v2317 = vpop.f32.mrb[0].mxu0
  %v2318 = vadd.f32 0.0, %v2317
  %v2319 = vpop.f32.mrb[0].mxu0
  %v2320 = vadd.f32 0.0, %v2319
  %v2321 = vpop.f32.mrb[0].mxu0
  %v2322 = vpop.f32.mrb[0].mxu0
  %2323 = vdwg.mxu0
  %s2324 = scalar_lea.vmem %s29, 4
  %v2325 = vld [vmem:[%s2324] sm:$0xf]
  %v2327 = vsel %vm1676, %v2325, 0
  %2329 = vmatprep.subr.bf16.mxu0 0
  %2330 = vmatpush1.bf16.msra.mxu0 %v2144
  %2331 = vmatprep.subr.bf16.mxu0 0
  %2332 = vmatpush1.bf16.msra.mxu0 0
  %2333 = vmatprep.subr.bf16.mxu0 0
  %2334 = vmatpush1.bf16.msra.mxu0 0
  %2335 = vmatprep.subr.bf16.mxu0 0
  %2336 = vmatpush1.bf16.msra.mxu0 0
  %2337 = vmatprep.subr.bf16.mxu0 0
  %2338 = vmatpush1.bf16.msra.mxu0 0
  %2339 = vmatprep.subr.bf16.mxu0 0
  %2340 = vmatpush1.bf16.msra.mxu0 0
  %2341 = vmatprep.subr.bf16.mxu0 0
  %2342 = vmatpush1.bf16.msra.mxu0 0
  %2343 = vmatprep.subr.bf16.mxu0 0
  %2344 = vmatpush1.bf16.msra.mxu0 0
  %2345 = vmatprep.subr.bf16.mxu0 0
  %2346 = vmatpush1.bf16.msra.mxu0 0
  %2347 = vmatprep.subr.bf16.mxu0 0
  %2348 = vmatpush1.bf16.msra.mxu0 0
  %2349 = vmatprep.subr.bf16.mxu0 0
  %2350 = vmatpush1.bf16.msra.mxu0 0
  %2351 = vmatprep.subr.bf16.mxu0 0
  %2352 = vmatpush1.bf16.msra.mxu0 0
  %2353 = vmatprep.subr.bf16.mxu0 0
  %2354 = vmatpush1.bf16.msra.mxu0 0
  %2355 = vmatprep.subr.bf16.mxu0 0
  %2356 = vmatpush1.bf16.msra.mxu0 0
  %2357 = vmatprep.subr.bf16.mxu0 0
  %2358 = vmatpush1.bf16.msra.mxu0 0
  %2359 = vmatprep.subr.bf16.mxu0 0
  %2360 = vmatpush1.bf16.msra.mxu0 0
  %2361 = vmatprep.mubr.bf16.mxu0 0
  %2362 = vmatmul.mubr.bf16.gmra.mrb[0].mxu0 %v2327
  %v2363 = vpop.f32.mrb[0].mxu0
  %v2364 = vadd.f32 0.0, %v2363
  %v2365 = vpop.f32.mrb[0].mxu0
  %v2366 = vpop.f32.mrb[0].mxu0
  %v2367 = vpop.f32.mrb[0].mxu0
  %2368 = vdwg.mxu0
  %v2369 = vpack.c.bf16 %v2364, %v2364
  %s2370 = scalar_lea.vmem %s31, 128
  %v2371 = vld [vmem:[%s2370] sm:$0xff]
  %v2372 = vld [vmem:[%s2370 + $0x8] sm:$0xff]
  %v2373 = vld [vmem:[%s2370 + $0x10] sm:$0xff]
  %v2374 = vld [vmem:[%s2370 + $0x18] sm:$0xff]
  %v2375 = vld [vmem:[%s2370 + $0x20] sm:$0xff]
  %v2376 = vld [vmem:[%s2370 + $0x28] sm:$0xff]
  %v2377 = vld [vmem:[%s2370 + $0x30] sm:$0xff]
  %v2378 = vld [vmem:[%s2370 + $0x38] sm:$0xff]
  %v2379 = vld [vmem:[%s2370 + $0x40] sm:$0xff]
  %v2380 = vld [vmem:[%s2370 + $0x48] sm:$0xff]
  %v2381 = vld [vmem:[%s2370 + $0x50] sm:$0xff]
  %v2382 = vld [vmem:[%s2370 + $0x58] sm:$0xff]
  %v2383 = vld [vmem:[%s2370 + $0x60] sm:$0xff]
  %v2384 = vld [vmem:[%s2370 + $0x68] sm:$0xff]
  %v2385 = vld [vmem:[%s2370 + $0x70] sm:$0xff]
  %v2386 = vld [vmem:[%s2370 + $0x78] sm:$0xff]
  %s2387 = scalar_lea.vmem %s29, 8
  %v2388 = vld [vmem:[%s2387] sm:$0xf]
  %v2390 = vsel %vm1676, %v2388, 0
  %2392 = vmatprep.subr.bf16.mxu0 0
  %2393 = vmatpush1.bf16.msra.mxu0 %v2144
  %2394 = vmatprep.subr.bf16.mxu0 0
  %2395 = vmatpush1.bf16.msra.mxu0 0
  %2396 = vmatprep.subr.bf16.mxu0 0
  %2397 = vmatpush1.bf16.msra.mxu0 0
  %2398 = vmatprep.subr.bf16.mxu0 0
  %2399 = vmatpush1.bf16.msra.mxu0 0
  %2400 = vmatprep.subr.bf16.mxu0 0
  %2401 = vmatpush1.bf16.msra.mxu0 0
  %2402 = vmatprep.subr.bf16.mxu0 0
  %2403 = vmatpush1.bf16.msra.mxu0 0
  %2404 = vmatprep.subr.bf16.mxu0 0
  %2405 = vmatpush1.bf16.msra.mxu0 0
  %2406 = vmatprep.subr.bf16.mxu0 0
  %2407 = vmatpush1.bf16.msra.mxu0 0
  %2408 = vmatprep.subr.bf16.mxu0 0
  %2409 = vmatpush1.bf16.msra.mxu0 0
  %2410 = vmatprep.subr.bf16.mxu0 0
  %2411 = vmatpush1.bf16.msra.mxu0 0
  %2412 = vmatprep.subr.bf16.mxu0 0
  %2413 = vmatpush1.bf16.msra.mxu0 0
  %2414 = vmatprep.subr.bf16.mxu0 0
  %2415 = vmatpush1.bf16.msra.mxu0 0
  %2416 = vmatprep.subr.bf16.mxu0 0
  %2417 = vmatpush1.bf16.msra.mxu0 0
  %2418 = vmatprep.subr.bf16.mxu0 0
  %2419 = vmatpush1.bf16.msra.mxu0 0
  %2420 = vmatprep.subr.bf16.mxu0 0
  %2421 = vmatpush1.bf16.msra.mxu0 0
  %2422 = vmatprep.subr.bf16.mxu0 0
  %2423 = vmatpush1.bf16.msra.mxu0 0
  %2424 = vmatprep.mubr.bf16.mxu0 0
  %2425 = vmatmul.mubr.bf16.gmra.mrb[0].mxu0 %v2390
  %v2426 = vpop.f32.mrb[0].mxu0
  %v2427 = vadd.f32 0.0, %v2426
  %v2428 = vpop.f32.mrb[0].mxu0
  %v2429 = vpop.f32.mrb[0].mxu0
  %v2430 = vpop.f32.mrb[0].mxu0
  %2431 = vdwg.mxu0
  %v2432 = vpack.c.bf16 %v2427, %v2427
  %s2433 = scalar_lea.vmem %s31, 256
  %v2434 = vld [vmem:[%s2433] sm:$0xff]
  %v2435 = vld [vmem:[%s2433 + $0x8] sm:$0xff]
  %v2436 = vld [vmem:[%s2433 + $0x10] sm:$0xff]
  %v2437 = vld [vmem:[%s2433 + $0x18] sm:$0xff]
  %v2438 = vld [vmem:[%s2433 + $0x20] sm:$0xff]
  %v2439 = vld [vmem:[%s2433 + $0x28] sm:$0xff]
  %v2440 = vld [vmem:[%s2433 + $0x30] sm:$0xff]
  %v2441 = vld [vmem:[%s2433 + $0x38] sm:$0xff]
  %v2442 = vld [vmem:[%s2433 + $0x40] sm:$0xff]
  %v2443 = vld [vmem:[%s2433 + $0x48] sm:$0xff]
  %v2444 = vld [vmem:[%s2433 + $0x50] sm:$0xff]
  %v2445 = vld [vmem:[%s2433 + $0x58] sm:$0xff]
  %v2446 = vld [vmem:[%s2433 + $0x60] sm:$0xff]
  %v2447 = vld [vmem:[%s2433 + $0x68] sm:$0xff]
  %v2448 = vld [vmem:[%s2433 + $0x70] sm:$0xff]
  %v2449 = vld [vmem:[%s2433 + $0x78] sm:$0xff]
  %v2466 = vunpack.c.l.b16 %v2434
  %v2467 = vunpack.c.h.b16 %v2434
  %v2468 = vunpack.c.l.b16 %v2435
  %v2469 = vunpack.c.h.b16 %v2435
  %v2470 = vunpack.c.l.b16 %v2436
  %v2471 = vunpack.c.h.b16 %v2436
  %v2472 = vunpack.c.l.b16 %v2437
  %v2473 = vunpack.c.h.b16 %v2437
  %v2474 = vunpack.c.l.b16 %v2438
  %v2475 = vunpack.c.h.b16 %v2438
  %v2476 = vunpack.c.l.b16 %v2439
  %v2477 = vunpack.c.h.b16 %v2439
  %v2478 = vunpack.c.l.b16 %v2440
  %v2479 = vunpack.c.h.b16 %v2440
  %v2480 = vunpack.c.l.b16 %v2441
  %v2481 = vunpack.c.h.b16 %v2441
  %v2482 = vunpack.c.l.b16 %v2442
  %v2483 = vunpack.c.h.b16 %v2442
  %v2484 = vunpack.c.l.b16 %v2443
  %v2485 = vunpack.c.h.b16 %v2443
  %v2486 = vunpack.c.l.b16 %v2444
  %v2487 = vunpack.c.h.b16 %v2444
  %v2488 = vunpack.c.l.b16 %v2445
  %v2489 = vunpack.c.h.b16 %v2445
  %v2490 = vunpack.c.l.b16 %v2446
  %v2491 = vunpack.c.h.b16 %v2446
  %v2492 = vunpack.c.l.b16 %v2447
  %v2493 = vunpack.c.h.b16 %v2447
  %v2494 = vunpack.c.l.b16 %v2448
  %v2495 = vunpack.c.h.b16 %v2448
  %v2496 = vunpack.c.l.b16 %v2449
  %v2497 = vunpack.c.h.b16 %v2449
  %v2498 = vpack.c.b16 %v2468, %v2466
  %v2499 = vpack.c.b16 %v2469, %v2467
  %v2500 = vpack.c.b16 %v2472, %v2470
  %v2501 = vpack.c.b16 %v2473, %v2471
  %v2502 = vpack.c.b16 %v2476, %v2474
  %v2503 = vpack.c.b16 %v2477, %v2475
  %v2504 = vpack.c.b16 %v2480, %v2478
  %v2505 = vpack.c.b16 %v2481, %v2479
  %v2506 = vpack.c.b16 %v2484, %v2482
  %v2507 = vpack.c.b16 %v2485, %v2483
  %v2508 = vpack.c.b16 %v2488, %v2486
  %v2509 = vpack.c.b16 %v2489, %v2487
  %v2510 = vpack.c.b16 %v2492, %v2490
  %v2511 = vpack.c.b16 %v2493, %v2491
  %v2512 = vpack.c.b16 %v2496, %v2494
  %v2513 = vpack.c.b16 %v2497, %v2495
  %2530 = vmatprep.subr.bf16.mxu0 %v2499
  %2531 = vmatpush1.bf16.msra.mxu0 %v2498
  %2532 = vmatprep.subr.bf16.mxu0 %v2501
  %2533 = vmatpush1.bf16.msra.mxu0 %v2500
  %2534 = vmatprep.subr.bf16.mxu0 %v2503
  %2535 = vmatpush1.bf16.msra.mxu0 %v2502
  %2536 = vmatprep.subr.bf16.mxu0 %v2505
  %2537 = vmatpush1.bf16.msra.mxu0 %v2504
  %2538 = vmatprep.subr.bf16.mxu0 %v2507
  %2539 = vmatpush1.bf16.msra.mxu0 %v2506
  %2540 = vmatprep.subr.bf16.mxu0 %v2509
  %2541 = vmatpush1.bf16.msra.mxu0 %v2508
  %2542 = vmatprep.subr.bf16.mxu0 %v2511
  %2543 = vmatpush1.bf16.msra.mxu0 %v2510
  %2544 = vmatprep.subr.bf16.mxu0 %v2513
  %2545 = vmatpush1.bf16.msra.mxu0 %v2512
  %2546 = vmatprep.subr.bf16.mxu0 0
  %2547 = vmatpush1.bf16.msra.mxu0 0
  %2548 = vmatprep.subr.bf16.mxu0 0
  %2549 = vmatpush1.bf16.msra.mxu0 0
  %2550 = vmatprep.subr.bf16.mxu0 0
  %2551 = vmatpush1.bf16.msra.mxu0 0
  %2552 = vmatprep.subr.bf16.mxu0 0
  %2553 = vmatpush1.bf16.msra.mxu0 0
  %2554 = vmatprep.subr.bf16.mxu0 0
  %2555 = vmatpush1.bf16.msra.mxu0 0
  %2556 = vmatprep.subr.bf16.mxu0 0
  %2557 = vmatpush1.bf16.msra.mxu0 0
  %2558 = vmatprep.subr.bf16.mxu0 0
  %2559 = vmatpush1.bf16.msra.mxu0 0
  %2560 = vmatprep.subr.bf16.mxu0 0
  %2561 = vmatpush1.bf16.msra.mxu0 0
  %2562 = vmatprep.mubr.bf16.mxu0 0
  %2563 = vmatmul.mubr.bf16.gmra.mrb[0].mxu0 %v2432
  %v2564 = vpop.f32.mrb[0].mxu0
  %v2565 = vadd.f32 0.0, %v2564
  %v2566 = vpop.f32.mrb[0].mxu0
  %v2567 = vadd.f32 0.0, %v2566
  %v2568 = vpop.f32.mrb[0].mxu0
  %v2569 = vpop.f32.mrb[0].mxu0
  %2570 = vdwg.mxu0
  %s2571 = scalar_lea.vmem %s29, 12
  %v2572 = vld [vmem:[%s2571] sm:$0xf]
  %v2574 = vsel %vm1676, %v2572, 0
  %2576 = vmatprep.subr.bf16.mxu0 0
  %2577 = vmatpush1.bf16.msra.mxu0 %v2144
  %2578 = vmatprep.subr.bf16.mxu0 0
  %2579 = vmatpush1.bf16.msra.mxu0 0
  %2580 = vmatprep.subr.bf16.mxu0 0
  %2581 = vmatpush1.bf16.msra.mxu0 0
  %2582 = vmatprep.subr.bf16.mxu0 0
  %2583 = vmatpush1.bf16.msra.mxu0 0
  %2584 = vmatprep.subr.bf16.mxu0 0
  %2585 = vmatpush1.bf16.msra.mxu0 0
  %2586 = vmatprep.subr.bf16.mxu0 0
  %2587 = vmatpush1.bf16.msra.mxu0 0
  %2588 = vmatprep.subr.bf16.mxu0 0
  %2589 = vmatpush1.bf16.msra.mxu0 0
  %2590 = vmatprep.subr.bf16.mxu0 0
  %2591 = vmatpush1.bf16.msra.mxu0 0
  %2592 = vmatprep.subr.bf16.mxu0 0
  %2593 = vmatpush1.bf16.msra.mxu0 0
  %2594 = vmatprep.subr.bf16.mxu0 0
  %2595 = vmatpush1.bf16.msra.mxu0 0
  %2596 = vmatprep.subr.bf16.mxu0 0
  %2597 = vmatpush1.bf16.msra.mxu0 0
  %2598 = vmatprep.subr.bf16.mxu0 0
  %2599 = vmatpush1.bf16.msra.mxu0 0
  %2600 = vmatprep.subr.bf16.mxu0 0
  %2601 = vmatpush1.bf16.msra.mxu0 0
  %2602 = vmatprep.subr.bf16.mxu0 0
  %2603 = vmatpush1.bf16.msra.mxu0 0
  %2604 = vmatprep.subr.bf16.mxu0 0
  %2605 = vmatpush1.bf16.msra.mxu0 0
  %2606 = vmatprep.subr.bf16.mxu0 0
  %2607 = vmatpush1.bf16.msra.mxu0 0
  %2608 = vmatprep.mubr.bf16.mxu0 0
  %2609 = vmatmul.mubr.bf16.gmra.mrb[0].mxu0 %v2574
  %v2610 = vpop.f32.mrb[0].mxu0
  %v2611 = vadd.f32 0.0, %v2610
  %v2612 = vpop.f32.mrb[0].mxu0
  %v2613 = vpop.f32.mrb[0].mxu0
  %v2614 = vpop.f32.mrb[0].mxu0
  %2615 = vdwg.mxu0
  %v2616 = vpack.c.bf16 %v2611, %v2611
  %s2617 = scalar_lea.vmem %s31, 384
  %v2618 = vld [vmem:[%s2617] sm:$0xff]
  %v2619 = vld [vmem:[%s2617 + $0x8] sm:$0xff]
  %v2620 = vld [vmem:[%s2617 + $0x10] sm:$0xff]
  %v2621 = vld [vmem:[%s2617 + $0x18] sm:$0xff]
  %v2622 = vld [vmem:[%s2617 + $0x20] sm:$0xff]
  %v2623 = vld [vmem:[%s2617 + $0x28] sm:$0xff]
  %v2624 = vld [vmem:[%s2617 + $0x30] sm:$0xff]
  %v2625 = vld [vmem:[%s2617 + $0x38] sm:$0xff]
  %v2626 = vld [vmem:[%s2617 + $0x40] sm:$0xff]
  %v2627 = vld [vmem:[%s2617 + $0x48] sm:$0xff]
  %v2628 = vld [vmem:[%s2617 + $0x50] sm:$0xff]
  %v2629 = vld [vmem:[%s2617 + $0x58] sm:$0xff]
  %v2630 = vld [vmem:[%s2617 + $0x60] sm:$0xff]
  %v2631 = vld [vmem:[%s2617 + $0x68] sm:$0xff]
  %v2632 = vld [vmem:[%s2617 + $0x70] sm:$0xff]
  %v2633 = vld [vmem:[%s2617 + $0x78] sm:$0xff]
  %v2650 = vunpack.c.l.b16 %v2618
  %v2651 = vunpack.c.h.b16 %v2618
  %v2652 = vunpack.c.l.b16 %v2619
  %v2653 = vunpack.c.h.b16 %v2619
  %v2654 = vunpack.c.l.b16 %v2620
  %v2655 = vunpack.c.h.b16 %v2620
  %v2656 = vunpack.c.l.b16 %v2621
  %v2657 = vunpack.c.h.b16 %v2621
  %v2658 = vunpack.c.l.b16 %v2622
  %v2659 = vunpack.c.h.b16 %v2622
  %v2660 = vunpack.c.l.b16 %v2623
  %v2661 = vunpack.c.h.b16 %v2623
  %v2662 = vunpack.c.l.b16 %v2624
  %v2663 = vunpack.c.h.b16 %v2624
  %v2664 = vunpack.c.l.b16 %v2625
  %v2665 = vunpack.c.h.b16 %v2625
  %v2666 = vunpack.c.l.b16 %v2626
  %v2667 = vunpack.c.h.b16 %v2626
  %v2668 = vunpack.c.l.b16 %v2627
  %v2669 = vunpack.c.h.b16 %v2627
  %v2670 = vunpack.c.l.b16 %v2628
  %v2671 = vunpack.c.h.b16 %v2628
  %v2672 = vunpack.c.l.b16 %v2629
  %v2673 = vunpack.c.h.b16 %v2629
  %v2674 = vunpack.c.l.b16 %v2630
  %v2675 = vunpack.c.h.b16 %v2630
  %v2676 = vunpack.c.l.b16 %v2631
  %v2677 = vunpack.c.h.b16 %v2631
  %v2678 = vunpack.c.l.b16 %v2632
  %v2679 = vunpack.c.h.b16 %v2632
  %v2680 = vunpack.c.l.b16 %v2633
  %v2681 = vunpack.c.h.b16 %v2633
  %v2682 = vpack.c.b16 %v2652, %v2650
  %v2683 = vpack.c.b16 %v2653, %v2651
  %v2684 = vpack.c.b16 %v2656, %v2654
  %v2685 = vpack.c.b16 %v2657, %v2655
  %v2686 = vpack.c.b16 %v2660, %v2658
  %v2687 = vpack.c.b16 %v2661, %v2659
  %v2688 = vpack.c.b16 %v2664, %v2662
  %v2689 = vpack.c.b16 %v2665, %v2663
  %v2690 = vpack.c.b16 %v2668, %v2666
  %v2691 = vpack.c.b16 %v2669, %v2667
  %v2692 = vpack.c.b16 %v2672, %v2670
  %v2693 = vpack.c.b16 %v2673, %v2671
  %v2694 = vpack.c.b16 %v2676, %v2674
  %v2695 = vpack.c.b16 %v2677, %v2675
  %v2696 = vpack.c.b16 %v2680, %v2678
  %v2697 = vpack.c.b16 %v2681, %v2679
  %2714 = vmatprep.subr.bf16.mxu0 %v2683
  %2715 = vmatpush1.bf16.msra.mxu0 %v2682
  %2716 = vmatprep.subr.bf16.mxu0 %v2685
  %2717 = vmatpush1.bf16.msra.mxu0 %v2684
  %2718 = vmatprep.subr.bf16.mxu0 %v2687
  %2719 = vmatpush1.bf16.msra.mxu0 %v2686
  %2720 = vmatprep.subr.bf16.mxu0 %v2689
  %2721 = vmatpush1.bf16.msra.mxu0 %v2688
  %2722 = vmatprep.subr.bf16.mxu0 %v2691
  %2723 = vmatpush1.bf16.msra.mxu0 %v2690
  %2724 = vmatprep.subr.bf16.mxu0 %v2693
  %2725 = vmatpush1.bf16.msra.mxu0 %v2692
  %2726 = vmatprep.subr.bf16.mxu0 %v2695
  %2727 = vmatpush1.bf16.msra.mxu0 %v2694
  %2728 = vmatprep.subr.bf16.mxu0 %v2697
  %2729 = vmatpush1.bf16.msra.mxu0 %v2696
  %2730 = vmatprep.subr.bf16.mxu0 0
  %2731 = vmatpush1.bf16.msra.mxu0 0
  %2732 = vmatprep.subr.bf16.mxu0 0
  %2733 = vmatpush1.bf16.msra.mxu0 0
  %2734 = vmatprep.subr.bf16.mxu0 0
  %2735 = vmatpush1.bf16.msra.mxu0 0
  %2736 = vmatprep.subr.bf16.mxu0 0
  %2737 = vmatpush1.bf16.msra.mxu0 0
  %2738 = vmatprep.subr.bf16.mxu0 0
  %2739 = vmatpush1.bf16.msra.mxu0 0
  %2740 = vmatprep.subr.bf16.mxu0 0
  %2741 = vmatpush1.bf16.msra.mxu0 0
  %2742 = vmatprep.subr.bf16.mxu0 0
  %2743 = vmatpush1.bf16.msra.mxu0 0
  %2744 = vmatprep.subr.bf16.mxu0 0
  %2745 = vmatpush1.bf16.msra.mxu0 0
  %2746 = vmatprep.mubr.bf16.mxu0 0
  %2747 = vmatmul.mubr.bf16.gmra.mrb[0].mxu0 %v2616
  %v2748 = vpop.f32.mrb[0].mxu0
  %v2749 = vadd.f32 0.0, %v2748
  %v2750 = vpop.f32.mrb[0].mxu0
  %v2751 = vadd.f32 0.0, %v2750
  %v2752 = vpop.f32.mrb[0].mxu0
  %v2753 = vpop.f32.mrb[0].mxu0
  %2754 = vdwg.mxu0
  %v2755 = vadd.f32 %v2137, %v2318
  %v2756 = vadd.f32 %v2138, %v2320
  %v2773 = vunpack.c.l.b16 %v2371
  %v2774 = vunpack.c.h.b16 %v2371
  %v2775 = vunpack.c.l.b16 %v2372
  %v2776 = vunpack.c.h.b16 %v2372
  %v2777 = vunpack.c.l.b16 %v2373
  %v2778 = vunpack.c.h.b16 %v2373
  %v2779 = vunpack.c.l.b16 %v2374
  %v2780 = vunpack.c.h.b16 %v2374
  %v2781 = vunpack.c.l.b16 %v2375
  %v2782 = vunpack.c.h.b16 %v2375
  %v2783 = vunpack.c.l.b16 %v2376
  %v2784 = vunpack.c.h.b16 %v2376
  %v2785 = vunpack.c.l.b16 %v2377
  %v2786 = vunpack.c.h.b16 %v2377
  %v2787 = vunpack.c.l.b16 %v2378
  %v2788 = vunpack.c.h.b16 %v2378
  %v2789 = vunpack.c.l.b16 %v2379
  %v2790 = vunpack.c.h.b16 %v2379
  %v2791 = vunpack.c.l.b16 %v2380
  %v2792 = vunpack.c.h.b16 %v2380
  %v2793 = vunpack.c.l.b16 %v2381
  %v2794 = vunpack.c.h.b16 %v2381
  %v2795 = vunpack.c.l.b16 %v2382
  %v2796 = vunpack.c.h.b16 %v2382
  %v2797 = vunpack.c.l.b16 %v2383
  %v2798 = vunpack.c.h.b16 %v2383
  %v2799 = vunpack.c.l.b16 %v2384
  %v2800 = vunpack.c.h.b16 %v2384
  %v2801 = vunpack.c.l.b16 %v2385
  %v2802 = vunpack.c.h.b16 %v2385
  %v2803 = vunpack.c.l.b16 %v2386
  %v2804 = vunpack.c.h.b16 %v2386
  %v2805 = vpack.c.b16 %v2775, %v2773
  %v2806 = vpack.c.b16 %v2776, %v2774
  %v2807 = vpack.c.b16 %v2779, %v2777
  %v2808 = vpack.c.b16 %v2780, %v2778
  %v2809 = vpack.c.b16 %v2783, %v2781
  %v2810 = vpack.c.b16 %v2784, %v2782
  %v2811 = vpack.c.b16 %v2787, %v2785
  %v2812 = vpack.c.b16 %v2788, %v2786
  %v2813 = vpack.c.b16 %v2791, %v2789
  %v2814 = vpack.c.b16 %v2792, %v2790
  %v2815 = vpack.c.b16 %v2795, %v2793
  %v2816 = vpack.c.b16 %v2796, %v2794
  %v2817 = vpack.c.b16 %v2799, %v2797
  %v2818 = vpack.c.b16 %v2800, %v2798
  %v2819 = vpack.c.b16 %v2803, %v2801
  %v2820 = vpack.c.b16 %v2804, %v2802
  %2837 = vmatprep.subr.bf16.mxu0 %v2806
  %2838 = vmatpush1.bf16.msra.mxu0 %v2805
  %2839 = vmatprep.subr.bf16.mxu0 %v2808
  %2840 = vmatpush1.bf16.msra.mxu0 %v2807
  %2841 = vmatprep.subr.bf16.mxu0 %v2810
  %2842 = vmatpush1.bf16.msra.mxu0 %v2809
  %2843 = vmatprep.subr.bf16.mxu0 %v2812
  %2844 = vmatpush1.bf16.msra.mxu0 %v2811
  %2845 = vmatprep.subr.bf16.mxu0 %v2814
  %2846 = vmatpush1.bf16.msra.mxu0 %v2813
  %2847 = vmatprep.subr.bf16.mxu0 %v2816
  %2848 = vmatpush1.bf16.msra.mxu0 %v2815
  %2849 = vmatprep.subr.bf16.mxu0 %v2818
  %2850 = vmatpush1.bf16.msra.mxu0 %v2817
  %2851 = vmatprep.subr.bf16.mxu0 %v2820
  %2852 = vmatpush1.bf16.msra.mxu0 %v2819
  %2853 = vmatprep.subr.bf16.mxu0 0
  %2854 = vmatpush1.bf16.msra.mxu0 0
  %2855 = vmatprep.subr.bf16.mxu0 0
  %2856 = vmatpush1.bf16.msra.mxu0 0
  %2857 = vmatprep.subr.bf16.mxu0 0
  %2858 = vmatpush1.bf16.msra.mxu0 0
  %2859 = vmatprep.subr.bf16.mxu0 0
  %2860 = vmatpush1.bf16.msra.mxu0 0
  %2861 = vmatprep.subr.bf16.mxu0 0
  %2862 = vmatpush1.bf16.msra.mxu0 0
  %2863 = vmatprep.subr.bf16.mxu0 0
  %2864 = vmatpush1.bf16.msra.mxu0 0
  %2865 = vmatprep.subr.bf16.mxu0 0
  %2866 = vmatpush1.bf16.msra.mxu0 0
  %2867 = vmatprep.subr.bf16.mxu0 0
  %2868 = vmatpush1.bf16.msra.mxu0 0
  %2869 = vmatprep.mubr.bf16.mxu0 0
  %2870 = vmatmul.mubr.bf16.gmra.mrb[0].mxu0 %v2369
  %v2871 = vpop.f32.mrb[0].mxu0
  %v2872 = vadd.f32 %v2565, %v2871
  %v2873 = vpop.f32.mrb[0].mxu0
  %v2874 = vadd.f32 %v2567, %v2873
  %v2875 = vpop.f32.mrb[0].mxu0
  %v2876 = vpop.f32.mrb[0].mxu0
  %2877 = vdwg.mxu0
  %v2878 = vadd.f32 %v2755, %v2872
  %v2879 = vadd.f32 %v2756, %v2874
  %v2880 = vadd.f32 %v2878, %v2749
  %v2881 = vadd.f32 %v2879, %v2751
  %2882 = vst [vmem:[%s67] sm:$0xff] %v2880
  %2883 = vst [vmem:[%s67 + $0x8] sm:$0xff] %v2881
  %v2884 = vld [vmem:[%s3] sm:$0xff]
  %v2885 = vmul.f32 %v2881, 0.5
  %v2886 = vmul.f32 %v2885, 1.442695
  %v2887 = vpow.pop %v2886
  %v2888 = vmul.f32 %v2884, %v2887
  %v2889 = vadd.f32 %v2880, %v2888
  %v2890 = vpack.c.bf16 %v2889, %v2889
  %v2891 = vld [vmem:[%s39] sm:$0xff]
  %v2892 = vld [vmem:[%s35] sm:$0xf]
  %v2894 = vsel %vm1676, %v2892, 0
  %v2897 = vsel %vm1680, %v2890, 0
  %2899 = vmatprep.subr.bf16.mxu0 0
  %2900 = vmatpush1.bf16.msra.mxu0 %v2897
  %2901 = vmatprep.subr.bf16.mxu0 0
  %2902 = vmatpush1.bf16.msra.mxu0 0
  %2903 = vmatprep.subr.bf16.mxu0 0
  %2904 = vmatpush1.bf16.msra.mxu0 0
  %2905 = vmatprep.subr.bf16.mxu0 0
  %2906 = vmatpush1.bf16.msra.mxu0 0
  %2907 = vmatprep.subr.bf16.mxu0 0
  %2908 = vmatpush1.bf16.msra.mxu0 0
  %2909 = vmatprep.subr.bf16.mxu0 0
  %2910 = vmatpush1.bf16.msra.mxu0 0
  %2911 = vmatprep.subr.bf16.mxu0 0
  %2912 = vmatpush1.bf16.msra.mxu0 0
  %2913 = vmatprep.subr.bf16.mxu0 0
  %2914 = vmatpush1.bf16.msra.mxu0 0
  %2915 = vmatprep.subr.bf16.mxu0 0
  %2916 = vmatpush1.bf16.msra.mxu0 0
  %2917 = vmatprep.subr.bf16.mxu0 0
  %2918 = vmatpush1.bf16.msra.mxu0 0
  %2919 = vmatprep.subr.bf16.mxu0 0
  %2920 = vmatpush1.bf16.msra.mxu0 0
  %2921 = vmatprep.subr.bf16.mxu0 0
  %2922 = vmatpush1.bf16.msra.mxu0 0
  %2923 = vmatprep.subr.bf16.mxu0 0
  %2924 = vmatpush1.bf16.msra.mxu0 0
  %2925 = vmatprep.subr.bf16.mxu0 0
  %2926 = vmatpush1.bf16.msra.mxu0 0
  %2927 = vmatprep.subr.bf16.mxu0 0
  %2928 = vmatpush1.bf16.msra.mxu0 0
  %2929 = vmatprep.subr.bf16.mxu0 0
  %2930 = vmatpush1.bf16.msra.mxu0 0
  %2931 = vmatprep.mubr.bf16.mxu0 0
  %2932 = vmatmul.mubr.bf16.gmra.mrb[0].mxu0 %v2894
  %v2933 = vpop.f32.mrb[0].mxu0
  %v2934 = vadd.f32 0.0, %v2933
  %v2935 = vpop.f32.mrb[0].mxu0
  %v2936 = vpop.f32.mrb[0].mxu0
  %v2937 = vpop.f32.mrb[0].mxu0
  %2938 = vdwg.mxu0
  %v2939 = vpack.c.bf16 %v2934, %v2934
  %v2940 = vld [vmem:[%s37] sm:$0xf]
  %v2941 = vld [vmem:[%s37 + $0x4] sm:$0xf]
  %v2942 = vld [vmem:[%s37 + $0x8] sm:$0xf]
  %v2943 = vld [vmem:[%s37 + $0xc] sm:$0xf]
  %v2944 = vld [vmem:[%s37 + $0x10] sm:$0xf]
  %v2945 = vld [vmem:[%s37 + $0x14] sm:$0xf]
  %v2946 = vld [vmem:[%s37 + $0x18] sm:$0xf]
  %v2947 = vld [vmem:[%s37 + $0x1c] sm:$0xf]
  %v2948 = vld [vmem:[%s37 + $0x20] sm:$0xf]
  %v2949 = vld [vmem:[%s37 + $0x24] sm:$0xf]
  %v2950 = vld [vmem:[%s37 + $0x28] sm:$0xf]
  %v2951 = vld [vmem:[%s37 + $0x2c] sm:$0xf]
  %v2952 = vld [vmem:[%s37 + $0x30] sm:$0xf]
  %v2953 = vld [vmem:[%s37 + $0x34] sm:$0xf]
  %v2954 = vld [vmem:[%s37 + $0x38] sm:$0xf]
  %v2955 = vld [vmem:[%s37 + $0x3c] sm:$0xf]
  %v2972 = vunpack.c.l.b16 %v2940
  %v2973 = vunpack.c.l.b16 %v2941
  %v2974 = vunpack.c.l.b16 %v2942
  %v2975 = vunpack.c.l.b16 %v2943
  %v2976 = vunpack.c.l.b16 %v2944
  %v2977 = vunpack.c.l.b16 %v2945
  %v2978 = vunpack.c.l.b16 %v2946
  %v2979 = vunpack.c.l.b16 %v2947
  %v2980 = vunpack.c.l.b16 %v2948
  %v2981 = vunpack.c.l.b16 %v2949
  %v2982 = vunpack.c.l.b16 %v2950
  %v2983 = vunpack.c.l.b16 %v2951
  %v2984 = vunpack.c.l.b16 %v2952
  %v2985 = vunpack.c.l.b16 %v2953
  %v2986 = vunpack.c.l.b16 %v2954
  %v2987 = vunpack.c.l.b16 %v2955
  %v2988 = vpack.c.b16 %v2973, %v2972
  %v2989 = vpack.c.b16 %v2975, %v2974
  %v2990 = vpack.c.b16 %v2977, %v2976
  %v2991 = vpack.c.b16 %v2979, %v2978
  %v2992 = vpack.c.b16 %v2981, %v2980
  %v2993 = vpack.c.b16 %v2983, %v2982
  %v2994 = vpack.c.b16 %v2985, %v2984
  %v2995 = vpack.c.b16 %v2987, %v2986
  %3004 = vmatprep.subr.bf16.mxu0 0
  %3005 = vmatpush1.bf16.msra.mxu0 %v2988
  %3006 = vmatprep.subr.bf16.mxu0 0
  %3007 = vmatpush1.bf16.msra.mxu0 %v2989
  %3008 = vmatprep.subr.bf16.mxu0 0
  %3009 = vmatpush1.bf16.msra.mxu0 %v2990
  %3010 = vmatprep.subr.bf16.mxu0 0
  %3011 = vmatpush1.bf16.msra.mxu0 %v2991
  %3012 = vmatprep.subr.bf16.mxu0 0
  %3013 = vmatpush1.bf16.msra.mxu0 %v2992
  %3014 = vmatprep.subr.bf16.mxu0 0
  %3015 = vmatpush1.bf16.msra.mxu0 %v2993
  %3016 = vmatprep.subr.bf16.mxu0 0
  %3017 = vmatpush1.bf16.msra.mxu0 %v2994
  %3018 = vmatprep.subr.bf16.mxu0 0
  %3019 = vmatpush1.bf16.msra.mxu0 %v2995
  %3020 = vmatprep.subr.bf16.mxu0 0
  %3021 = vmatpush1.bf16.msra.mxu0 0
  %3022 = vmatprep.subr.bf16.mxu0 0
  %3023 = vmatpush1.bf16.msra.mxu0 0
  %3024 = vmatprep.subr.bf16.mxu0 0
  %3025 = vmatpush1.bf16.msra.mxu0 0
  %3026 = vmatprep.subr.bf16.mxu0 0
  %3027 = vmatpush1.bf16.msra.mxu0 0
  %3028 = vmatprep.subr.bf16.mxu0 0
  %3029 = vmatpush1.bf16.msra.mxu0 0
  %3030 = vmatprep.subr.bf16.mxu0 0
  %3031 = vmatpush1.bf16.msra.mxu0 0
  %3032 = vmatprep.subr.bf16.mxu0 0
  %3033 = vmatpush1.bf16.msra.mxu0 0
  %3034 = vmatprep.subr.bf16.mxu0 0
  %3035 = vmatpush1.bf16.msra.mxu0 0
  %3036 = vmatprep.mubr.bf16.mxu0 0
  %3037 = vmatmul.mubr.bf16.gmra.mrb[0].mxu0 %v2939
  %v3038 = vpop.f32.mrb[0].mxu0
  %v3039 = vadd.f32 0.0, %v3038
  %v3040 = vpop.f32.mrb[0].mxu0
  %v3041 = vpop.f32.mrb[0].mxu0
  %v3042 = vpop.f32.mrb[0].mxu0
  %3043 = vdwg.mxu0
  %s3044 = scalar_lea.vmem %s35, 4
  %v3045 = vld [vmem:[%s3044] sm:$0xf]
  %v3047 = vsel %vm1676, %v3045, 0
  %3049 = vmatprep.subr.bf16.mxu0 0
  %3050 = vmatpush1.bf16.msra.mxu0 %v2897
  %3051 = vmatprep.subr.bf16.mxu0 0
  %3052 = vmatpush1.bf16.msra.mxu0 0
  %3053 = vmatprep.subr.bf16.mxu0 0
  %3054 = vmatpush1.bf16.msra.mxu0 0
  %3055 = vmatprep.subr.bf16.mxu0 0
  %3056 = vmatpush1.bf16.msra.mxu0 0
  %3057 = vmatprep.subr.bf16.mxu0 0
  %3058 = vmatpush1.bf16.msra.mxu0 0
  %3059 = vmatprep.subr.bf16.mxu0 0
  %3060 = vmatpush1.bf16.msra.mxu0 0
  %3061 = vmatprep.subr.bf16.mxu0 0
  %3062 = vmatpush1.bf16.msra.mxu0 0
  %3063 = vmatprep.subr.bf16.mxu0 0
  %3064 = vmatpush1.bf16.msra.mxu0 0
  %3065 = vmatprep.subr.bf16.mxu0 0
  %3066 = vmatpush1.bf16.msra.mxu0 0
  %3067 = vmatprep.subr.bf16.mxu0 0
  %3068 = vmatpush1.bf16.msra.mxu0 0
  %3069 = vmatprep.subr.bf16.mxu0 0
  %3070 = vmatpush1.bf16.msra.mxu0 0
  %3071 = vmatprep.subr.bf16.mxu0 0
  %3072 = vmatpush1.bf16.msra.mxu0 0
  %3073 = vmatprep.subr.bf16.mxu0 0
  %3074 = vmatpush1.bf16.msra.mxu0 0
  %3075 = vmatprep.subr.bf16.mxu0 0
  %3076 = vmatpush1.bf16.msra.mxu0 0
  %3077 = vmatprep.subr.bf16.mxu0 0
  %3078 = vmatpush1.bf16.msra.mxu0 0
  %3079 = vmatprep.subr.bf16.mxu0 0
  %3080 = vmatpush1.bf16.msra.mxu0 0
  %3081 = vmatprep.mubr.bf16.mxu0 0
  %3082 = vmatmul.mubr.bf16.gmra.mrb[0].mxu0 %v3047
  %v3083 = vpop.f32.mrb[0].mxu0
  %v3084 = vadd.f32 0.0, %v3083
  %v3085 = vpop.f32.mrb[0].mxu0
  %v3086 = vpop.f32.mrb[0].mxu0
  %v3087 = vpop.f32.mrb[0].mxu0
  %3088 = vdwg.mxu0
  %v3089 = vpack.c.bf16 %v3084, %v3084
  %s3090 = scalar_lea.vmem %s37, 64
  %v3091 = vld [vmem:[%s3090] sm:$0xf]
  %v3092 = vld [vmem:[%s3090 + $0x4] sm:$0xf]
  %v3093 = vld [vmem:[%s3090 + $0x8] sm:$0xf]
  %v3094 = vld [vmem:[%s3090 + $0xc] sm:$0xf]
  %v3095 = vld [vmem:[%s3090 + $0x10] sm:$0xf]
  %v3096 = vld [vmem:[%s3090 + $0x14] sm:$0xf]
  %v3097 = vld [vmem:[%s3090 + $0x18] sm:$0xf]
  %v3098 = vld [vmem:[%s3090 + $0x1c] sm:$0xf]
  %v3099 = vld [vmem:[%s3090 + $0x20] sm:$0xf]
  %v3100 = vld [vmem:[%s3090 + $0x24] sm:$0xf]
  %v3101 = vld [vmem:[%s3090 + $0x28] sm:$0xf]
  %v3102 = vld [vmem:[%s3090 + $0x2c] sm:$0xf]
  %v3103 = vld [vmem:[%s3090 + $0x30] sm:$0xf]
  %v3104 = vld [vmem:[%s3090 + $0x34] sm:$0xf]
  %v3105 = vld [vmem:[%s3090 + $0x38] sm:$0xf]
  %v3106 = vld [vmem:[%s3090 + $0x3c] sm:$0xf]
  %s3107 = scalar_lea.vmem %s35, 8
  %v3108 = vld [vmem:[%s3107] sm:$0xf]
  %v3110 = vsel %vm1676, %v3108, 0
  %3112 = vmatprep.subr.bf16.mxu0 0
  %3113 = vmatpush1.bf16.msra.mxu0 %v2897
  %3114 = vmatprep.subr.bf16.mxu0 0
  %3115 = vmatpush1.bf16.msra.mxu0 0
  %3116 = vmatprep.subr.bf16.mxu0 0
  %3117 = vmatpush1.bf16.msra.mxu0 0
  %3118 = vmatprep.subr.bf16.mxu0 0
  %3119 = vmatpush1.bf16.msra.mxu0 0
  %3120 = vmatprep.subr.bf16.mxu0 0
  %3121 = vmatpush1.bf16.msra.mxu0 0
  %3122 = vmatprep.subr.bf16.mxu0 0
  %3123 = vmatpush1.bf16.msra.mxu0 0
  %3124 = vmatprep.subr.bf16.mxu0 0
  %3125 = vmatpush1.bf16.msra.mxu0 0
  %3126 = vmatprep.subr.bf16.mxu0 0
  %3127 = vmatpush1.bf16.msra.mxu0 0
  %3128 = vmatprep.subr.bf16.mxu0 0
  %3129 = vmatpush1.bf16.msra.mxu0 0
  %3130 = vmatprep.subr.bf16.mxu0 0
  %3131 = vmatpush1.bf16.msra.mxu0 0
  %3132 = vmatprep.subr.bf16.mxu0 0
  %3133 = vmatpush1.bf16.msra.mxu0 0
  %3134 = vmatprep.subr.bf16.mxu0 0
  %3135 = vmatpush1.bf16.msra.mxu0 0
  %3136 = vmatprep.subr.bf16.mxu0 0
  %3137 = vmatpush1.bf16.msra.mxu0 0
  %3138 = vmatprep.subr.bf16.mxu0 0
  %3139 = vmatpush1.bf16.msra.mxu0 0
  %3140 = vmatprep.subr.bf16.mxu0 0
  %3141 = vmatpush1.bf16.msra.mxu0 0
  %3142 = vmatprep.subr.bf16.mxu0 0
  %3143 = vmatpush1.bf16.msra.mxu0 0
  %3144 = vmatprep.mubr.bf16.mxu0 0
  %3145 = vmatmul.mubr.bf16.gmra.mrb[0].mxu0 %v3110
  %v3146 = vpop.f32.mrb[0].mxu0
  %v3147 = vadd.f32 0.0, %v3146
  %v3148 = vpop.f32.mrb[0].mxu0
  %v3149 = vpop.f32.mrb[0].mxu0
  %v3150 = vpop.f32.mrb[0].mxu0
  %3151 = vdwg.mxu0
  %v3152 = vpack.c.bf16 %v3147, %v3147
  %s3153 = scalar_lea.vmem %s37, 128
  %v3154 = vld [vmem:[%s3153] sm:$0xf]
  %v3155 = vld [vmem:[%s3153 + $0x4] sm:$0xf]
  %v3156 = vld [vmem:[%s3153 + $0x8] sm:$0xf]
  %v3157 = vld [vmem:[%s3153 + $0xc] sm:$0xf]
  %v3158 = vld [vmem:[%s3153 + $0x10] sm:$0xf]
  %v3159 = vld [vmem:[%s3153 + $0x14] sm:$0xf]
  %v3160 = vld [vmem:[%s3153 + $0x18] sm:$0xf]
  %v3161 = vld [vmem:[%s3153 + $0x1c] sm:$0xf]
  %v3162 = vld [vmem:[%s3153 + $0x20] sm:$0xf]
  %v3163 = vld [vmem:[%s3153 + $0x24] sm:$0xf]
  %v3164 = vld [vmem:[%s3153 + $0x28] sm:$0xf]
  %v3165 = vld [vmem:[%s3153 + $0x2c] sm:$0xf]
  %v3166 = vld [vmem:[%s3153 + $0x30] sm:$0xf]
  %v3167 = vld [vmem:[%s3153 + $0x34] sm:$0xf]
  %v3168 = vld [vmem:[%s3153 + $0x38] sm:$0xf]
  %v3169 = vld [vmem:[%s3153 + $0x3c] sm:$0xf]
  %v3186 = vunpack.c.l.b16 %v3154
  %v3187 = vunpack.c.l.b16 %v3155
  %v3188 = vunpack.c.l.b16 %v3156
  %v3189 = vunpack.c.l.b16 %v3157
  %v3190 = vunpack.c.l.b16 %v3158
  %v3191 = vunpack.c.l.b16 %v3159
  %v3192 = vunpack.c.l.b16 %v3160
  %v3193 = vunpack.c.l.b16 %v3161
  %v3194 = vunpack.c.l.b16 %v3162
  %v3195 = vunpack.c.l.b16 %v3163
  %v3196 = vunpack.c.l.b16 %v3164
  %v3197 = vunpack.c.l.b16 %v3165
  %v3198 = vunpack.c.l.b16 %v3166
  %v3199 = vunpack.c.l.b16 %v3167
  %v3200 = vunpack.c.l.b16 %v3168
  %v3201 = vunpack.c.l.b16 %v3169
  %v3202 = vpack.c.b16 %v3187, %v3186
  %v3203 = vpack.c.b16 %v3189, %v3188
  %v3204 = vpack.c.b16 %v3191, %v3190
  %v3205 = vpack.c.b16 %v3193, %v3192
  %v3206 = vpack.c.b16 %v3195, %v3194
  %v3207 = vpack.c.b16 %v3197, %v3196
  %v3208 = vpack.c.b16 %v3199, %v3198
  %v3209 = vpack.c.b16 %v3201, %v3200
  %3218 = vmatprep.subr.bf16.mxu0 0
  %3219 = vmatpush1.bf16.msra.mxu0 %v3202
  %3220 = vmatprep.subr.bf16.mxu0 0
  %3221 = vmatpush1.bf16.msra.mxu0 %v3203
  %3222 = vmatprep.subr.bf16.mxu0 0
  %3223 = vmatpush1.bf16.msra.mxu0 %v3204
  %3224 = vmatprep.subr.bf16.mxu0 0
  %3225 = vmatpush1.bf16.msra.mxu0 %v3205
  %3226 = vmatprep.subr.bf16.mxu0 0
  %3227 = vmatpush1.bf16.msra.mxu0 %v3206
  %3228 = vmatprep.subr.bf16.mxu0 0
  %3229 = vmatpush1.bf16.msra.mxu0 %v3207
  %3230 = vmatprep.subr.bf16.mxu0 0
  %3231 = vmatpush1.bf16.msra.mxu0 %v3208
  %3232 = vmatprep.subr.bf16.mxu0 0
  %3233 = vmatpush1.bf16.msra.mxu0 %v3209
  %3234 = vmatprep.subr.bf16.mxu0 0
  %3235 = vmatpush1.bf16.msra.mxu0 0
  %3236 = vmatprep.subr.bf16.mxu0 0
  %3237 = vmatpush1.bf16.msra.mxu0 0
  %3238 = vmatprep.subr.bf16.mxu0 0
  %3239 = vmatpush1.bf16.msra.mxu0 0
  %3240 = vmatprep.subr.bf16.mxu0 0
  %3241 = vmatpush1.bf16.msra.mxu0 0
  %3242 = vmatprep.subr.bf16.mxu0 0
  %3243 = vmatpush1.bf16.msra.mxu0 0
  %3244 = vmatprep.subr.bf16.mxu0 0
  %3245 = vmatpush1.bf16.msra.mxu0 0
  %3246 = vmatprep.subr.bf16.mxu0 0
  %3247 = vmatpush1.bf16.msra.mxu0 0
  %3248 = vmatprep.subr.bf16.mxu0 0
  %3249 = vmatpush1.bf16.msra.mxu0 0
  %3250 = vmatprep.mubr.bf16.mxu0 0
  %3251 = vmatmul.mubr.bf16.gmra.mrb[0].mxu0 %v3152
  %v3252 = vpop.f32.mrb[0].mxu0
  %v3253 = vadd.f32 0.0, %v3252
  %v3254 = vpop.f32.mrb[0].mxu0
  %v3255 = vpop.f32.mrb[0].mxu0
  %v3256 = vpop.f32.mrb[0].mxu0
  %3257 = vdwg.mxu0
  %s3258 = scalar_lea.vmem %s35, 12
  %v3259 = vld [vmem:[%s3258] sm:$0xf]
  %v3261 = vsel %vm1676, %v3259, 0
  %3263 = vmatprep.subr.bf16.mxu0 0
  %3264 = vmatpush1.bf16.msra.mxu0 %v2897
  %3265 = vmatprep.subr.bf16.mxu0 0
  %3266 = vmatpush1.bf16.msra.mxu0 0
  %3267 = vmatprep.subr.bf16.mxu0 0
  %3268 = vmatpush1.bf16.msra.mxu0 0
  %3269 = vmatprep.subr.bf16.mxu0 0
  %3270 = vmatpush1.bf16.msra.mxu0 0
  %3271 = vmatprep.subr.bf16.mxu0 0
  %3272 = vmatpush1.bf16.msra.mxu0 0
  %3273 = vmatprep.subr.bf16.mxu0 0
  %3274 = vmatpush1.bf16.msra.mxu0 0
  %3275 = vmatprep.subr.bf16.mxu0 0
  %3276 = vmatpush1.bf16.msra.mxu0 0
  %3277 = vmatprep.subr.bf16.mxu0 0
  %3278 = vmatpush1.bf16.msra.mxu0 0
  %3279 = vmatprep.subr.bf16.mxu0 0
  %3280 = vmatpush1.bf16.msra.mxu0 0
  %3281 = vmatprep.subr.bf16.mxu0 0
  %3282 = vmatpush1.bf16.msra.mxu0 0
  %3283 = vmatprep.subr.bf16.mxu0 0
  %3284 = vmatpush1.bf16.msra.mxu0 0
  %3285 = vmatprep.subr.bf16.mxu0 0
  %3286 = vmatpush1.bf16.msra.mxu0 0
  %3287 = vmatprep.subr.bf16.mxu0 0
  %3288 = vmatpush1.bf16.msra.mxu0 0
  %3289 = vmatprep.subr.bf16.mxu0 0
  %3290 = vmatpush1.bf16.msra.mxu0 0
  %3291 = vmatprep.subr.bf16.mxu0 0
  %3292 = vmatpush1.bf16.msra.mxu0 0
  %3293 = vmatprep.subr.bf16.mxu0 0
  %3294 = vmatpush1.bf16.msra.mxu0 0
  %3295 = vmatprep.mubr.bf16.mxu0 0
  %3296 = vmatmul.mubr.bf16.gmra.mrb[0].mxu0 %v3261
  %v3297 = vpop.f32.mrb[0].mxu0
  %v3298 = vadd.f32 0.0, %v3297
  %v3299 = vpop.f32.mrb[0].mxu0
  %v3300 = vpop.f32.mrb[0].mxu0
  %v3301 = vpop.f32.mrb[0].mxu0
  %3302 = vdwg.mxu0
  %v3303 = vpack.c.bf16 %v3298, %v3298
  %s3304 = scalar_lea.vmem %s37, 192
  %v3305 = vld [vmem:[%s3304] sm:$0xf]
  %v3306 = vld [vmem:[%s3304 + $0x4] sm:$0xf]
  %v3307 = vld [vmem:[%s3304 + $0x8] sm:$0xf]
  %v3308 = vld [vmem:[%s3304 + $0xc] sm:$0xf]
  %v3309 = vld [vmem:[%s3304 + $0x10] sm:$0xf]
  %v3310 = vld [vmem:[%s3304 + $0x14] sm:$0xf]
  %v3311 = vld [vmem:[%s3304 + $0x18] sm:$0xf]
  %v3312 = vld [vmem:[%s3304 + $0x1c] sm:$0xf]
  %v3313 = vld [vmem:[%s3304 + $0x20] sm:$0xf]
  %v3314 = vld [vmem:[%s3304 + $0x24] sm:$0xf]
  %v3315 = vld [vmem:[%s3304 + $0x28] sm:$0xf]
  %v3316 = vld [vmem:[%s3304 + $0x2c] sm:$0xf]
  %v3317 = vld [vmem:[%s3304 + $0x30] sm:$0xf]
  %v3318 = vld [vmem:[%s3304 + $0x34] sm:$0xf]
  %v3319 = vld [vmem:[%s3304 + $0x38] sm:$0xf]
  %v3320 = vld [vmem:[%s3304 + $0x3c] sm:$0xf]
  %v3337 = vunpack.c.l.b16 %v3305
  %v3338 = vunpack.c.l.b16 %v3306
  %v3339 = vunpack.c.l.b16 %v3307
  %v3340 = vunpack.c.l.b16 %v3308
  %v3341 = vunpack.c.l.b16 %v3309
  %v3342 = vunpack.c.l.b16 %v3310
  %v3343 = vunpack.c.l.b16 %v3311
  %v3344 = vunpack.c.l.b16 %v3312
  %v3345 = vunpack.c.l.b16 %v3313
  %v3346 = vunpack.c.l.b16 %v3314
  %v3347 = vunpack.c.l.b16 %v3315
  %v3348 = vunpack.c.l.b16 %v3316
  %v3349 = vunpack.c.l.b16 %v3317
  %v3350 = vunpack.c.l.b16 %v3318
  %v3351 = vunpack.c.l.b16 %v3319
  %v3352 = vunpack.c.l.b16 %v3320
  %v3353 = vpack.c.b16 %v3338, %v3337
  %v3354 = vpack.c.b16 %v3340, %v3339
  %v3355 = vpack.c.b16 %v3342, %v3341
  %v3356 = vpack.c.b16 %v3344, %v3343
  %v3357 = vpack.c.b16 %v3346, %v3345
  %v3358 = vpack.c.b16 %v3348, %v3347
  %v3359 = vpack.c.b16 %v3350, %v3349
  %v3360 = vpack.c.b16 %v3352, %v3351
  %3369 = vmatprep.subr.bf16.mxu0 0
  %3370 = vmatpush1.bf16.msra.mxu0 %v3353
  %3371 = vmatprep.subr.bf16.mxu0 0
  %3372 = vmatpush1.bf16.msra.mxu0 %v3354
  %3373 = vmatprep.subr.bf16.mxu0 0
  %3374 = vmatpush1.bf16.msra.mxu0 %v3355
  %3375 = vmatprep.subr.bf16.mxu0 0
  %3376 = vmatpush1.bf16.msra.mxu0 %v3356
  %3377 = vmatprep.subr.bf16.mxu0 0
  %3378 = vmatpush1.bf16.msra.mxu0 %v3357
  %3379 = vmatprep.subr.bf16.mxu0 0
  %3380 = vmatpush1.bf16.msra.mxu0 %v3358
  %3381 = vmatprep.subr.bf16.mxu0 0
  %3382 = vmatpush1.bf16.msra.mxu0 %v3359
  %3383 = vmatprep.subr.bf16.mxu0 0
  %3384 = vmatpush1.bf16.msra.mxu0 %v3360
  %3385 = vmatprep.subr.bf16.mxu0 0
  %3386 = vmatpush1.bf16.msra.mxu0 0
  %3387 = vmatprep.subr.bf16.mxu0 0
  %3388 = vmatpush1.bf16.msra.mxu0 0
  %3389 = vmatprep.subr.bf16.mxu0 0
  %3390 = vmatpush1.bf16.msra.mxu0 0
  %3391 = vmatprep.subr.bf16.mxu0 0
  %3392 = vmatpush1.bf16.msra.mxu0 0
  %3393 = vmatprep.subr.bf16.mxu0 0
  %3394 = vmatpush1.bf16.msra.mxu0 0
  %3395 = vmatprep.subr.bf16.mxu0 0
  %3396 = vmatpush1.bf16.msra.mxu0 0
  %3397 = vmatprep.subr.bf16.mxu0 0
  %3398 = vmatpush1.bf16.msra.mxu0 0
  %3399 = vmatprep.subr.bf16.mxu0 0
  %3400 = vmatpush1.bf16.msra.mxu0 0
  %3401 = vmatprep.mubr.bf16.mxu0 0
  %3402 = vmatmul.mubr.bf16.gmra.mrb[0].mxu0 %v3303
  %v3403 = vpop.f32.mrb[0].mxu0
  %v3404 = vadd.f32 0.0, %v3403
  %v3405 = vpop.f32.mrb[0].mxu0
  %v3406 = vpop.f32.mrb[0].mxu0
  %v3407 = vpop.f32.mrb[0].mxu0
  %3408 = vdwg.mxu0
  %v3409 = vadd.f32 %v2891, %v3039
  %v3426 = vunpack.c.l.b16 %v3091
  %v3427 = vunpack.c.l.b16 %v3092
  %v3428 = vunpack.c.l.b16 %v3093
  %v3429 = vunpack.c.l.b16 %v3094
  %v3430 = vunpack.c.l.b16 %v3095
  %v3431 = vunpack.c.l.b16 %v3096
  %v3432 = vunpack.c.l.b16 %v3097
  %v3433 = vunpack.c.l.b16 %v3098
  %v3434 = vunpack.c.l.b16 %v3099
  %v3435 = vunpack.c.l.b16 %v3100
  %v3436 = vunpack.c.l.b16 %v3101
  %v3437 = vunpack.c.l.b16 %v3102
  %v3438 = vunpack.c.l.b16 %v3103
  %v3439 = vunpack.c.l.b16 %v3104
  %v3440 = vunpack.c.l.b16 %v3105
  %v3441 = vunpack.c.l.b16 %v3106
  %v3442 = vpack.c.b16 %v3427, %v3426
  %v3443 = vpack.c.b16 %v3429, %v3428
  %v3444 = vpack.c.b16 %v3431, %v3430
  %v3445 = vpack.c.b16 %v3433, %v3432
  %v3446 = vpack.c.b16 %v3435, %v3434
  %v3447 = vpack.c.b16 %v3437, %v3436
  %v3448 = vpack.c.b16 %v3439, %v3438
  %v3449 = vpack.c.b16 %v3441, %v3440
  %3458 = vmatprep.subr.bf16.mxu0 0
  %3459 = vmatpush1.bf16.msra.mxu0 %v3442
  %3460 = vmatprep.subr.bf16.mxu0 0
  %3461 = vmatpush1.bf16.msra.mxu0 %v3443
  %3462 = vmatprep.subr.bf16.mxu0 0
  %3463 = vmatpush1.bf16.msra.mxu0 %v3444
  %3464 = vmatprep.subr.bf16.mxu0 0
  %3465 = vmatpush1.bf16.msra.mxu0 %v3445
  %3466 = vmatprep.subr.bf16.mxu0 0
  %3467 = vmatpush1.bf16.msra.mxu0 %v3446
  %3468 = vmatprep.subr.bf16.mxu0 0
  %3469 = vmatpush1.bf16.msra.mxu0 %v3447
  %3470 = vmatprep.subr.bf16.mxu0 0
  %3471 = vmatpush1.bf16.msra.mxu0 %v3448
  %3472 = vmatprep.subr.bf16.mxu0 0
  %3473 = vmatpush1.bf16.msra.mxu0 %v3449
  %3474 = vmatprep.subr.bf16.mxu0 0
  %3475 = vmatpush1.bf16.msra.mxu0 0
  %3476 = vmatprep.subr.bf16.mxu0 0
  %3477 = vmatpush1.bf16.msra.mxu0 0
  %3478 = vmatprep.subr.bf16.mxu0 0
  %3479 = vmatpush1.bf16.msra.mxu0 0
  %3480 = vmatprep.subr.bf16.mxu0 0
  %3481 = vmatpush1.bf16.msra.mxu0 0
  %3482 = vmatprep.subr.bf16.mxu0 0
  %3483 = vmatpush1.bf16.msra.mxu0 0
  %3484 = vmatprep.subr.bf16.mxu0 0
  %3485 = vmatpush1.bf16.msra.mxu0 0
  %3486 = vmatprep.subr.bf16.mxu0 0
  %3487 = vmatpush1.bf16.msra.mxu0 0
  %3488 = vmatprep.subr.bf16.mxu0 0
  %3489 = vmatpush1.bf16.msra.mxu0 0
  %3490 = vmatprep.mubr.bf16.mxu0 0
  %3491 = vmatmul.mubr.bf16.gmra.mrb[0].mxu0 %v3089
  %v3492 = vpop.f32.mrb[0].mxu0
  %v3493 = vadd.f32 %v3253, %v3492
  %v3494 = vpop.f32.mrb[0].mxu0
  %v3495 = vpop.f32.mrb[0].mxu0
  %v3496 = vpop.f32.mrb[0].mxu0
  %3497 = vdwg.mxu0
  %v3498 = vadd.f32 %v3409, %v3493
  %v3499 = vadd.f32 %v3498, %v3404
  %v3500 = vpack.c.bf16 %v3499, %v3499
  %v3501 = vld [vmem:[%s45] sm:$0xff]
  %v3502 = vld [vmem:[%s41] sm:$0xf]
  %v3504 = vsel %vm1676, %v3502, 0
  %v3507 = vsel %vm1680, %v3500, 0
  %3509 = vmatprep.subr.bf16.mxu0 0
  %3510 = vmatpush1.bf16.msra.mxu0 %v3507
  %3511 = vmatprep.subr.bf16.mxu0 0
  %3512 = vmatpush1.bf16.msra.mxu0 0
  %3513 = vmatprep.subr.bf16.mxu0 0
  %3514 = vmatpush1.bf16.msra.mxu0 0
  %3515 = vmatprep.subr.bf16.mxu0 0
  %3516 = vmatpush1.bf16.msra.mxu0 0
  %3517 = vmatprep.subr.bf16.mxu0 0
  %3518 = vmatpush1.bf16.msra.mxu0 0
  %3519 = vmatprep.subr.bf16.mxu0 0
  %3520 = vmatpush1.bf16.msra.mxu0 0
  %3521 = vmatprep.subr.bf16.mxu0 0
  %3522 = vmatpush1.bf16.msra.mxu0 0
  %3523 = vmatprep.subr.bf16.mxu0 0
  %3524 = vmatpush1.bf16.msra.mxu0 0
  %3525 = vmatprep.subr.bf16.mxu0 0
  %3526 = vmatpush1.bf16.msra.mxu0 0
  %3527 = vmatprep.subr.bf16.mxu0 0
  %3528 = vmatpush1.bf16.msra.mxu0 0
  %3529 = vmatprep.subr.bf16.mxu0 0
  %3530 = vmatpush1.bf16.msra.mxu0 0
  %3531 = vmatprep.subr.bf16.mxu0 0
  %3532 = vmatpush1.bf16.msra.mxu0 0
  %3533 = vmatprep.subr.bf16.mxu0 0
  %3534 = vmatpush1.bf16.msra.mxu0 0
  %3535 = vmatprep.subr.bf16.mxu0 0
  %3536 = vmatpush1.bf16.msra.mxu0 0
  %3537 = vmatprep.subr.bf16.mxu0 0
  %3538 = vmatpush1.bf16.msra.mxu0 0
  %3539 = vmatprep.subr.bf16.mxu0 0
  %3540 = vmatpush1.bf16.msra.mxu0 0
  %3541 = vmatprep.mubr.bf16.mxu0 0
  %3542 = vmatmul.mubr.bf16.gmra.mrb[0].mxu0 %v3504
  %v3543 = vpop.f32.mrb[0].mxu0
  %v3544 = vadd.f32 0.0, %v3543
  %v3545 = vpop.f32.mrb[0].mxu0
  %v3546 = vpop.f32.mrb[0].mxu0
  %v3547 = vpop.f32.mrb[0].mxu0
  %3548 = vdwg.mxu0
  %v3549 = vpack.c.bf16 %v3544, %v3544
  %v3550 = vld [vmem:[%s43] sm:$0xf]
  %v3551 = vld [vmem:[%s43 + $0x4] sm:$0xf]
  %v3552 = vld [vmem:[%s43 + $0x8] sm:$0xf]
  %v3553 = vld [vmem:[%s43 + $0xc] sm:$0xf]
  %v3554 = vld [vmem:[%s43 + $0x10] sm:$0xf]
  %v3555 = vld [vmem:[%s43 + $0x14] sm:$0xf]
  %v3556 = vld [vmem:[%s43 + $0x18] sm:$0xf]
  %v3557 = vld [vmem:[%s43 + $0x1c] sm:$0xf]
  %v3558 = vld [vmem:[%s43 + $0x20] sm:$0xf]
  %v3559 = vld [vmem:[%s43 + $0x24] sm:$0xf]
  %v3560 = vld [vmem:[%s43 + $0x28] sm:$0xf]
  %v3561 = vld [vmem:[%s43 + $0x2c] sm:$0xf]
  %v3562 = vld [vmem:[%s43 + $0x30] sm:$0xf]
  %v3563 = vld [vmem:[%s43 + $0x34] sm:$0xf]
  %v3564 = vld [vmem:[%s43 + $0x38] sm:$0xf]
  %v3565 = vld [vmem:[%s43 + $0x3c] sm:$0xf]
  %v3582 = vunpack.c.l.b16 %v3550
  %v3583 = vunpack.c.l.b16 %v3551
  %v3584 = vunpack.c.l.b16 %v3552
  %v3585 = vunpack.c.l.b16 %v3553
  %v3586 = vunpack.c.l.b16 %v3554
  %v3587 = vunpack.c.l.b16 %v3555
  %v3588 = vunpack.c.l.b16 %v3556
  %v3589 = vunpack.c.l.b16 %v3557
  %v3590 = vunpack.c.l.b16 %v3558
  %v3591 = vunpack.c.l.b16 %v3559
  %v3592 = vunpack.c.l.b16 %v3560
  %v3593 = vunpack.c.l.b16 %v3561
  %v3594 = vunpack.c.l.b16 %v3562
  %v3595 = vunpack.c.l.b16 %v3563
  %v3596 = vunpack.c.l.b16 %v3564
  %v3597 = vunpack.c.l.b16 %v3565
  %v3598 = vpack.c.b16 %v3583, %v3582
  %v3599 = vpack.c.b16 %v3585, %v3584
  %v3600 = vpack.c.b16 %v3587, %v3586
  %v3601 = vpack.c.b16 %v3589, %v3588
  %v3602 = vpack.c.b16 %v3591, %v3590
  %v3603 = vpack.c.b16 %v3593, %v3592
  %v3604 = vpack.c.b16 %v3595, %v3594
  %v3605 = vpack.c.b16 %v3597, %v3596
  %3614 = vmatprep.subr.bf16.mxu0 0
  %3615 = vmatpush1.bf16.msra.mxu0 %v3598
  %3616 = vmatprep.subr.bf16.mxu0 0
  %3617 = vmatpush1.bf16.msra.mxu0 %v3599
  %3618 = vmatprep.subr.bf16.mxu0 0
  %3619 = vmatpush1.bf16.msra.mxu0 %v3600
  %3620 = vmatprep.subr.bf16.mxu0 0
  %3621 = vmatpush1.bf16.msra.mxu0 %v3601
  %3622 = vmatprep.subr.bf16.mxu0 0
  %3623 = vmatpush1.bf16.msra.mxu0 %v3602
  %3624 = vmatprep.subr.bf16.mxu0 0
  %3625 = vmatpush1.bf16.msra.mxu0 %v3603
  %3626 = vmatprep.subr.bf16.mxu0 0
  %3627 = vmatpush1.bf16.msra.mxu0 %v3604
  %3628 = vmatprep.subr.bf16.mxu0 0
  %3629 = vmatpush1.bf16.msra.mxu0 %v3605
  %3630 = vmatprep.subr.bf16.mxu0 0
  %3631 = vmatpush1.bf16.msra.mxu0 0
  %3632 = vmatprep.subr.bf16.mxu0 0
  %3633 = vmatpush1.bf16.msra.mxu0 0
  %3634 = vmatprep.subr.bf16.mxu0 0
  %3635 = vmatpush1.bf16.msra.mxu0 0
  %3636 = vmatprep.subr.bf16.mxu0 0
  %3637 = vmatpush1.bf16.msra.mxu0 0
  %3638 = vmatprep.subr.bf16.mxu0 0
  %3639 = vmatpush1.bf16.msra.mxu0 0
  %3640 = vmatprep.subr.bf16.mxu0 0
  %3641 = vmatpush1.bf16.msra.mxu0 0
  %3642 = vmatprep.subr.bf16.mxu0 0
  %3643 = vmatpush1.bf16.msra.mxu0 0
  %3644 = vmatprep.subr.bf16.mxu0 0
  %3645 = vmatpush1.bf16.msra.mxu0 0
  %3646 = vmatprep.mubr.bf16.mxu0 0
  %3647 = vmatmul.mubr.bf16.gmra.mrb[0].mxu0 %v3549
  %v3648 = vpop.f32.mrb[0].mxu0
  %v3649 = vadd.f32 0.0, %v3648
  %v3650 = vpop.f32.mrb[0].mxu0
  %v3651 = vpop.f32.mrb[0].mxu0
  %v3652 = vpop.f32.mrb[0].mxu0
  %3653 = vdwg.mxu0
  %s3654 = scalar_lea.vmem %s41, 4
  %v3655 = vld [vmem:[%s3654] sm:$0xf]
  %v3657 = vsel %vm1676, %v3655, 0
  %3659 = vmatprep.subr.bf16.mxu0 0
  %3660 = vmatpush1.bf16.msra.mxu0 %v3507
  %3661 = vmatprep.subr.bf16.mxu0 0
  %3662 = vmatpush1.bf16.msra.mxu0 0
  %3663 = vmatprep.subr.bf16.mxu0 0
  %3664 = vmatpush1.bf16.msra.mxu0 0
  %3665 = vmatprep.subr.bf16.mxu0 0
  %3666 = vmatpush1.bf16.msra.mxu0 0
  %3667 = vmatprep.subr.bf16.mxu0 0
  %3668 = vmatpush1.bf16.msra.mxu0 0
  %3669 = vmatprep.subr.bf16.mxu0 0
  %3670 = vmatpush1.bf16.msra.mxu0 0
  %3671 = vmatprep.subr.bf16.mxu0 0
  %3672 = vmatpush1.bf16.msra.mxu0 0
  %3673 = vmatprep.subr.bf16.mxu0 0
  %3674 = vmatpush1.bf16.msra.mxu0 0
  %3675 = vmatprep.subr.bf16.mxu0 0
  %3676 = vmatpush1.bf16.msra.mxu0 0
  %3677 = vmatprep.subr.bf16.mxu0 0
  %3678 = vmatpush1.bf16.msra.mxu0 0
  %3679 = vmatprep.subr.bf16.mxu0 0
  %3680 = vmatpush1.bf16.msra.mxu0 0
  %3681 = vmatprep.subr.bf16.mxu0 0
  %3682 = vmatpush1.bf16.msra.mxu0 0
  %3683 = vmatprep.subr.bf16.mxu0 0
  %3684 = vmatpush1.bf16.msra.mxu0 0
  %3685 = vmatprep.subr.bf16.mxu0 0
  %3686 = vmatpush1.bf16.msra.mxu0 0
  %3687 = vmatprep.subr.bf16.mxu0 0
  %3688 = vmatpush1.bf16.msra.mxu0 0
  %3689 = vmatprep.subr.bf16.mxu0 0
  %3690 = vmatpush1.bf16.msra.mxu0 0
  %3691 = vmatprep.mubr.bf16.mxu0 0
  %3692 = vmatmul.mubr.bf16.gmra.mrb[0].mxu0 %v3657
  %v3693 = vpop.f32.mrb[0].mxu0
  %v3694 = vadd.f32 0.0, %v3693
  %v3695 = vpop.f32.mrb[0].mxu0
  %v3696 = vpop.f32.mrb[0].mxu0
  %v3697 = vpop.f32.mrb[0].mxu0
  %3698 = vdwg.mxu0
  %v3699 = vpack.c.bf16 %v3694, %v3694
  %s3700 = scalar_lea.vmem %s43, 64
  %v3701 = vld [vmem:[%s3700] sm:$0xf]
  %v3702 = vld [vmem:[%s3700 + $0x4] sm:$0xf]
  %v3703 = vld [vmem:[%s3700 + $0x8] sm:$0xf]
  %v3704 = vld [vmem:[%s3700 + $0xc] sm:$0xf]
  %v3705 = vld [vmem:[%s3700 + $0x10] sm:$0xf]
  %v3706 = vld [vmem:[%s3700 + $0x14] sm:$0xf]
  %v3707 = vld [vmem:[%s3700 + $0x18] sm:$0xf]
  %v3708 = vld [vmem:[%s3700 + $0x1c] sm:$0xf]
  %v3709 = vld [vmem:[%s3700 + $0x20] sm:$0xf]
  %v3710 = vld [vmem:[%s3700 + $0x24] sm:$0xf]
  %v3711 = vld [vmem:[%s3700 + $0x28] sm:$0xf]
  %v3712 = vld [vmem:[%s3700 + $0x2c] sm:$0xf]
  %v3713 = vld [vmem:[%s3700 + $0x30] sm:$0xf]
  %v3714 = vld [vmem:[%s3700 + $0x34] sm:$0xf]
  %v3715 = vld [vmem:[%s3700 + $0x38] sm:$0xf]
  %v3716 = vld [vmem:[%s3700 + $0x3c] sm:$0xf]
  %s3717 = scalar_lea.vmem %s41, 8
  %v3718 = vld [vmem:[%s3717] sm:$0xf]
  %v3720 = vsel %vm1676, %v3718, 0
  %3722 = vmatprep.subr.bf16.mxu0 0
  %3723 = vmatpush1.bf16.msra.mxu0 %v3507
  %3724 = vmatprep.subr.bf16.mxu0 0
  %3725 = vmatpush1.bf16.msra.mxu0 0
  %3726 = vmatprep.subr.bf16.mxu0 0
  %3727 = vmatpush1.bf16.msra.mxu0 0
  %3728 = vmatprep.subr.bf16.mxu0 0
  %3729 = vmatpush1.bf16.msra.mxu0 0
  %3730 = vmatprep.subr.bf16.mxu0 0
  %3731 = vmatpush1.bf16.msra.mxu0 0
  %3732 = vmatprep.subr.bf16.mxu0 0
  %3733 = vmatpush1.bf16.msra.mxu0 0
  %3734 = vmatprep.subr.bf16.mxu0 0
  %3735 = vmatpush1.bf16.msra.mxu0 0
  %3736 = vmatprep.subr.bf16.mxu0 0
  %3737 = vmatpush1.bf16.msra.mxu0 0
  %3738 = vmatprep.subr.bf16.mxu0 0
  %3739 = vmatpush1.bf16.msra.mxu0 0
  %3740 = vmatprep.subr.bf16.mxu0 0
  %3741 = vmatpush1.bf16.msra.mxu0 0
  %3742 = vmatprep.subr.bf16.mxu0 0
  %3743 = vmatpush1.bf16.msra.mxu0 0
  %3744 = vmatprep.subr.bf16.mxu0 0
  %3745 = vmatpush1.bf16.msra.mxu0 0
  %3746 = vmatprep.subr.bf16.mxu0 0
  %3747 = vmatpush1.bf16.msra.mxu0 0
  %3748 = vmatprep.subr.bf16.mxu0 0
  %3749 = vmatpush1.bf16.msra.mxu0 0
  %3750 = vmatprep.subr.bf16.mxu0 0
  %3751 = vmatpush1.bf16.msra.mxu0 0
  %3752 = vmatprep.subr.bf16.mxu0 0
  %3753 = vmatpush1.bf16.msra.mxu0 0
  %3754 = vmatprep.mubr.bf16.mxu0 0
  %3755 = vmatmul.mubr.bf16.gmra.mrb[0].mxu0 %v3720
  %v3756 = vpop.f32.mrb[0].mxu0
  %v3757 = vadd.f32 0.0, %v3756
  %v3758 = vpop.f32.mrb[0].mxu0
  %v3759 = vpop.f32.mrb[0].mxu0
  %v3760 = vpop.f32.mrb[0].mxu0
  %3761 = vdwg.mxu0
  %v3762 = vpack.c.bf16 %v3757, %v3757
  %s3763 = scalar_lea.vmem %s43, 128
  %v3764 = vld [vmem:[%s3763] sm:$0xf]
  %v3765 = vld [vmem:[%s3763 + $0x4] sm:$0xf]
  %v3766 = vld [vmem:[%s3763 + $0x8] sm:$0xf]
  %v3767 = vld [vmem:[%s3763 + $0xc] sm:$0xf]
  %v3768 = vld [vmem:[%s3763 + $0x10] sm:$0xf]
  %v3769 = vld [vmem:[%s3763 + $0x14] sm:$0xf]
  %v3770 = vld [vmem:[%s3763 + $0x18] sm:$0xf]
  %v3771 = vld [vmem:[%s3763 + $0x1c] sm:$0xf]
  %v3772 = vld [vmem:[%s3763 + $0x20] sm:$0xf]
  %v3773 = vld [vmem:[%s3763 + $0x24] sm:$0xf]
  %v3774 = vld [vmem:[%s3763 + $0x28] sm:$0xf]
  %v3775 = vld [vmem:[%s3763 + $0x2c] sm:$0xf]
  %v3776 = vld [vmem:[%s3763 + $0x30] sm:$0xf]
  %v3777 = vld [vmem:[%s3763 + $0x34] sm:$0xf]
  %v3778 = vld [vmem:[%s3763 + $0x38] sm:$0xf]
  %v3779 = vld [vmem:[%s3763 + $0x3c] sm:$0xf]
  %v3796 = vunpack.c.l.b16 %v3764
  %v3797 = vunpack.c.l.b16 %v3765
  %v3798 = vunpack.c.l.b16 %v3766
  %v3799 = vunpack.c.l.b16 %v3767
  %v3800 = vunpack.c.l.b16 %v3768
  %v3801 = vunpack.c.l.b16 %v3769
  %v3802 = vunpack.c.l.b16 %v3770
  %v3803 = vunpack.c.l.b16 %v3771
  %v3804 = vunpack.c.l.b16 %v3772
  %v3805 = vunpack.c.l.b16 %v3773
  %v3806 = vunpack.c.l.b16 %v3774
  %v3807 = vunpack.c.l.b16 %v3775
  %v3808 = vunpack.c.l.b16 %v3776
  %v3809 = vunpack.c.l.b16 %v3777
  %v3810 = vunpack.c.l.b16 %v3778
  %v3811 = vunpack.c.l.b16 %v3779
  %v3812 = vpack.c.b16 %v3797, %v3796
  %v3813 = vpack.c.b16 %v3799, %v3798
  %v3814 = vpack.c.b16 %v3801, %v3800
  %v3815 = vpack.c.b16 %v3803, %v3802
  %v3816 = vpack.c.b16 %v3805, %v3804
  %v3817 = vpack.c.b16 %v3807, %v3806
  %v3818 = vpack.c.b16 %v3809, %v3808
  %v3819 = vpack.c.b16 %v3811, %v3810
  %3828 = vmatprep.subr.bf16.mxu0 0
  %3829 = vmatpush1.bf16.msra.mxu0 %v3812
  %3830 = vmatprep.subr.bf16.mxu0 0
  %3831 = vmatpush1.bf16.msra.mxu0 %v3813
  %3832 = vmatprep.subr.bf16.mxu0 0
  %3833 = vmatpush1.bf16.msra.mxu0 %v3814
  %3834 = vmatprep.subr.bf16.mxu0 0
  %3835 = vmatpush1.bf16.msra.mxu0 %v3815
  %3836 = vmatprep.subr.bf16.mxu0 0
  %3837 = vmatpush1.bf16.msra.mxu0 %v3816
  %3838 = vmatprep.subr.bf16.mxu0 0
  %3839 = vmatpush1.bf16.msra.mxu0 %v3817
  %3840 = vmatprep.subr.bf16.mxu0 0
  %3841 = vmatpush1.bf16.msra.mxu0 %v3818
  %3842 = vmatprep.subr.bf16.mxu0 0
  %3843 = vmatpush1.bf16.msra.mxu0 %v3819
  %3844 = vmatprep.subr.bf16.mxu0 0
  %3845 = vmatpush1.bf16.msra.mxu0 0
  %3846 = vmatprep.subr.bf16.mxu0 0
  %3847 = vmatpush1.bf16.msra.mxu0 0
  %3848 = vmatprep.subr.bf16.mxu0 0
  %3849 = vmatpush1.bf16.msra.mxu0 0
  %3850 = vmatprep.subr.bf16.mxu0 0
  %3851 = vmatpush1.bf16.msra.mxu0 0
  %3852 = vmatprep.subr.bf16.mxu0 0
  %3853 = vmatpush1.bf16.msra.mxu0 0
  %3854 = vmatprep.subr.bf16.mxu0 0
  %3855 = vmatpush1.bf16.msra.mxu0 0
  %3856 = vmatprep.subr.bf16.mxu0 0
  %3857 = vmatpush1.bf16.msra.mxu0 0
  %3858 = vmatprep.subr.bf16.mxu0 0
  %3859 = vmatpush1.bf16.msra.mxu0 0
  %3860 = vmatprep.mubr.bf16.mxu0 0
  %3861 = vmatmul.mubr.bf16.gmra.mrb[0].mxu0 %v3762
  %v3862 = vpop.f32.mrb[0].mxu0
  %v3863 = vadd.f32 0.0, %v3862
  %v3864 = vpop.f32.mrb[0].mxu0
  %v3865 = vpop.f32.mrb[0].mxu0
  %v3866 = vpop.f32.mrb[0].mxu0
  %3867 = vdwg.mxu0
  %v3868 = vadd.f32 %v3501, %v3649
  %v3885 = vunpack.c.l.b16 %v3701
  %v3886 = vunpack.c.l.b16 %v3702
  %v3887 = vunpack.c.l.b16 %v3703
  %v3888 = vunpack.c.l.b16 %v3704
  %v3889 = vunpack.c.l.b16 %v3705
  %v3890 = vunpack.c.l.b16 %v3706
  %v3891 = vunpack.c.l.b16 %v3707
  %v3892 = vunpack.c.l.b16 %v3708
  %v3893 = vunpack.c.l.b16 %v3709
  %v3894 = vunpack.c.l.b16 %v3710
  %v3895 = vunpack.c.l.b16 %v3711
  %v3896 = vunpack.c.l.b16 %v3712
  %v3897 = vunpack.c.l.b16 %v3713
  %v3898 = vunpack.c.l.b16 %v3714
  %v3899 = vunpack.c.l.b16 %v3715
  %v3900 = vunpack.c.l.b16 %v3716
  %v3901 = vpack.c.b16 %v3886, %v3885
  %v3902 = vpack.c.b16 %v3888, %v3887
  %v3903 = vpack.c.b16 %v3890, %v3889
  %v3904 = vpack.c.b16 %v3892, %v3891
  %v3905 = vpack.c.b16 %v3894, %v3893
  %v3906 = vpack.c.b16 %v3896, %v3895
  %v3907 = vpack.c.b16 %v3898, %v3897
  %v3908 = vpack.c.b16 %v3900, %v3899
  %3917 = vmatprep.subr.bf16.mxu0 0
  %3918 = vmatpush1.bf16.msra.mxu0 %v3901
  %3919 = vmatprep.subr.bf16.mxu0 0
  %3920 = vmatpush1.bf16.msra.mxu0 %v3902
  %3921 = vmatprep.subr.bf16.mxu0 0
  %3922 = vmatpush1.bf16.msra.mxu0 %v3903
  %3923 = vmatprep.subr.bf16.mxu0 0
  %3924 = vmatpush1.bf16.msra.mxu0 %v3904
  %3925 = vmatprep.subr.bf16.mxu0 0
  %3926 = vmatpush1.bf16.msra.mxu0 %v3905
  %3927 = vmatprep.subr.bf16.mxu0 0
  %3928 = vmatpush1.bf16.msra.mxu0 %v3906
  %3929 = vmatprep.subr.bf16.mxu0 0
  %3930 = vmatpush1.bf16.msra.mxu0 %v3907
  %3931 = vmatprep.subr.bf16.mxu0 0
  %3932 = vmatpush1.bf16.msra.mxu0 %v3908
  %3933 = vmatprep.subr.bf16.mxu0 0
  %3934 = vmatpush1.bf16.msra.mxu0 0
  %3935 = vmatprep.subr.bf16.mxu0 0
  %3936 = vmatpush1.bf16.msra.mxu0 0
  %3937 = vmatprep.subr.bf16.mxu0 0
  %3938 = vmatpush1.bf16.msra.mxu0 0
  %3939 = vmatprep.subr.bf16.mxu0 0
  %3940 = vmatpush1.bf16.msra.mxu0 0
  %3941 = vmatprep.subr.bf16.mxu0 0
  %3942 = vmatpush1.bf16.msra.mxu0 0
  %3943 = vmatprep.subr.bf16.mxu0 0
  %3944 = vmatpush1.bf16.msra.mxu0 0
  %3945 = vmatprep.subr.bf16.mxu0 0
  %3946 = vmatpush1.bf16.msra.mxu0 0
  %3947 = vmatprep.subr.bf16.mxu0 0
  %3948 = vmatpush1.bf16.msra.mxu0 0
  %3949 = vmatprep.mubr.bf16.mxu0 0
  %3950 = vmatmul.mubr.bf16.gmra.mrb[0].mxu0 %v3699
  %v3951 = vpop.f32.mrb[0].mxu0
  %v3952 = vadd.f32 %v3863, %v3951
  %v3953 = vpop.f32.mrb[0].mxu0
  %v3954 = vpop.f32.mrb[0].mxu0
  %v3955 = vpop.f32.mrb[0].mxu0
  %3956 = vdwg.mxu0
  %v3957 = vadd.f32 %v3868, %v3952
  %vm3958 = vcmp.ge.f32.partialorder %v3957, 0.0
  %v3959 = vmul.f32 %v3957, 0.01
  %v3960 = vsel %vm3958, %v3957, %v3959
  %v3961 = vpack.c.bf16 %v3960, %v3960
  %v3962 = vld [vmem:[%s51] sm:$0xff]
  %v3963 = vld [vmem:[%s51 + $0x8] sm:$0xff]
  %v3964 = vld [vmem:[%s51 + $0x10] sm:$0xff]
  %v3965 = vld [vmem:[%s51 + $0x18] sm:$0xff]
  %v3966 = vld [vmem:[%s51 + $0x20] sm:$0xff]
  %v3967 = vld [vmem:[%s51 + $0x28] sm:$0xff]
  %v3968 = vld [vmem:[%s49] sm:$0xff]
  %v3969 = vld [vmem:[%s49 + $0x8] sm:$0xff]
  %v3970 = vld [vmem:[%s49 + $0x10] sm:$0xff]
  %v3971 = vld [vmem:[%s49 + $0x18] sm:$0xff]
  %v3972 = vld [vmem:[%s49 + $0x20] sm:$0xff]
  %v3973 = vld [vmem:[%s49 + $0x28] sm:$0xff]
  %v3974 = vld [vmem:[%s49 + $0x30] sm:$0xff]
  %v3975 = vld [vmem:[%s49 + $0x38] sm:$0xff]
  %v3976 = vld [vmem:[%s49 + $0x40] sm:$0xff]
  %v3977 = vld [vmem:[%s49 + $0x48] sm:$0xff]
  %v3978 = vld [vmem:[%s49 + $0x50] sm:$0xff]
  %v3979 = vld [vmem:[%s49 + $0x58] sm:$0xff]
  %v3980 = vld [vmem:[%s49 + $0x60] sm:$0xff]
  %v3981 = vld [vmem:[%s49 + $0x68] sm:$0xff]
  %v3982 = vld [vmem:[%s49 + $0x70] sm:$0xff]
  %v3983 = vld [vmem:[%s49 + $0x78] sm:$0xff]
  %v4000 = vunpack.c.l.b16 %v3968
  %v4001 = vunpack.c.h.b16 %v3968
  %v4002 = vunpack.c.l.b16 %v3969
  %v4003 = vunpack.c.h.b16 %v3969
  %v4004 = vunpack.c.l.b16 %v3970
  %v4005 = vunpack.c.h.b16 %v3970
  %v4006 = vunpack.c.l.b16 %v3971
  %v4007 = vunpack.c.h.b16 %v3971
  %v4008 = vunpack.c.l.b16 %v3972
  %v4009 = vunpack.c.h.b16 %v3972
  %v4010 = vunpack.c.l.b16 %v3973
  %v4011 = vunpack.c.h.b16 %v3973
  %v4012 = vunpack.c.l.b16 %v3974
  %v4013 = vunpack.c.h.b16 %v3974
  %v4014 = vunpack.c.l.b16 %v3975
  %v4015 = vunpack.c.h.b16 %v3975
  %v4016 = vunpack.c.l.b16 %v3976
  %v4017 = vunpack.c.h.b16 %v3976
  %v4018 = vunpack.c.l.b16 %v3977
  %v4019 = vunpack.c.h.b16 %v3977
  %v4020 = vunpack.c.l.b16 %v3978
  %v4021 = vunpack.c.h.b16 %v3978
  %v4022 = vunpack.c.l.b16 %v3979
  %v4023 = vunpack.c.h.b16 %v3979
  %v4024 = vunpack.c.l.b16 %v3980
  %v4025 = vunpack.c.h.b16 %v3980
  %v4026 = vunpack.c.l.b16 %v3981
  %v4027 = vunpack.c.h.b16 %v3981
  %v4028 = vunpack.c.l.b16 %v3982
  %v4029 = vunpack.c.h.b16 %v3982
  %v4030 = vunpack.c.l.b16 %v3983
  %v4031 = vunpack.c.h.b16 %v3983
  %v4032 = vpack.c.b16 %v4002, %v4000
  %v4033 = vpack.c.b16 %v4003, %v4001
  %v4034 = vpack.c.b16 %v4006, %v4004
  %v4035 = vpack.c.b16 %v4007, %v4005
  %v4036 = vpack.c.b16 %v4010, %v4008
  %v4037 = vpack.c.b16 %v4011, %v4009
  %v4038 = vpack.c.b16 %v4014, %v4012
  %v4039 = vpack.c.b16 %v4015, %v4013
  %v4040 = vpack.c.b16 %v4018, %v4016
  %v4041 = vpack.c.b16 %v4019, %v4017
  %v4042 = vpack.c.b16 %v4022, %v4020
  %v4043 = vpack.c.b16 %v4023, %v4021
  %v4044 = vpack.c.b16 %v4026, %v4024
  %v4045 = vpack.c.b16 %v4027, %v4025
  %v4046 = vpack.c.b16 %v4030, %v4028
  %v4047 = vpack.c.b16 %v4031, %v4029
  %4064 = vmatprep.subr.bf16.mxu0 %v4033
  %4065 = vmatpush1.bf16.msra.mxu0 %v4032
  %4066 = vmatprep.subr.bf16.mxu0 %v4035
  %4067 = vmatpush1.bf16.msra.mxu0 %v4034
  %4068 = vmatprep.subr.bf16.mxu0 %v4037
  %4069 = vmatpush1.bf16.msra.mxu0 %v4036
  %4070 = vmatprep.subr.bf16.mxu0 %v4039
  %4071 = vmatpush1.bf16.msra.mxu0 %v4038
  %4072 = vmatprep.subr.bf16.mxu0 %v4041
  %4073 = vmatpush1.bf16.msra.mxu0 %v4040
  %4074 = vmatprep.subr.bf16.mxu0 %v4043
  %4075 = vmatpush1.bf16.msra.mxu0 %v4042
  %4076 = vmatprep.subr.bf16.mxu0 %v4045
  %4077 = vmatpush1.bf16.msra.mxu0 %v4044
  %4078 = vmatprep.subr.bf16.mxu0 %v4047
  %4079 = vmatpush1.bf16.msra.mxu0 %v4046
  %4080 = vmatprep.subr.bf16.mxu0 0
  %4081 = vmatpush1.bf16.msra.mxu0 0
  %4082 = vmatprep.subr.bf16.mxu0 0
  %4083 = vmatpush1.bf16.msra.mxu0 0
  %4084 = vmatprep.subr.bf16.mxu0 0
  %4085 = vmatpush1.bf16.msra.mxu0 0
  %4086 = vmatprep.subr.bf16.mxu0 0
  %4087 = vmatpush1.bf16.msra.mxu0 0
  %4088 = vmatprep.subr.bf16.mxu0 0
  %4089 = vmatpush1.bf16.msra.mxu0 0
  %4090 = vmatprep.subr.bf16.mxu0 0
  %4091 = vmatpush1.bf16.msra.mxu0 0
  %4092 = vmatprep.subr.bf16.mxu0 0
  %4093 = vmatpush1.bf16.msra.mxu0 0
  %4094 = vmatprep.subr.bf16.mxu0 0
  %4095 = vmatpush1.bf16.msra.mxu0 0
  %4096 = vmatprep.mubr.bf16.mxu0 0
  %4097 = vmatmul.mubr.bf16.gmra.mrb[0].mxu0 %v3961
  %v4098 = vpop.f32.mrb[0].mxu0
  %v4099 = vadd.f32 0.0, %v4098
  %v4100 = vpop.f32.mrb[0].mxu0
  %v4101 = vadd.f32 0.0, %v4100
  %v4102 = vpop.f32.mrb[0].mxu0
  %v4103 = vpop.f32.mrb[0].mxu0
  %4104 = vdwg.mxu0
  %v4105 = vld [vmem:[%s47] sm:$0xf]
  %v4106 = vld [vmem:[%s47 + $0x4] sm:$0xf]
  %v4107 = vld [vmem:[%s47 + $0x8] sm:$0xf]
  %v4108 = vpack.c.bf16 %v4099, %v4099
  %v4109 = vpack.c.bf16 %v4101, %v4101
  %v4113 = vunpack.c.l.b16 %v4105
  %v4114 = vunpack.c.l.b16 %v4106
  %v4115 = vunpack.c.l.b16 %v4107
  %v4116 = vpack.c.b16 %v4114, %v4113
  %v4117 = vpack.c.b16 %v4115, %v4115
  %v4119 = vsel %vm1676, %v4116, 0
  %v4122 = vsel %vm1676, %v4117, 0
  %v4125 = vsel %vm1680, %v4108, 0
  %v4128 = vsel %vm1680, %v4109, 0
  %4130 = vmatprep.subr.bf16.mxu0 %v4128
  %4131 = vmatpush1.bf16.msra.mxu0 %v4125
  %4132 = vmatprep.subr.bf16.mxu0 0
  %4133 = vmatpush1.bf16.msra.mxu0 0
  %4134 = vmatprep.subr.bf16.mxu0 0
  %4135 = vmatpush1.bf16.msra.mxu0 0
  %4136 = vmatprep.subr.bf16.mxu0 0
  %4137 = vmatpush1.bf16.msra.mxu0 0
  %4138 = vmatprep.subr.bf16.mxu0 0
  %4139 = vmatpush1.bf16.msra.mxu0 0
  %4140 = vmatprep.subr.bf16.mxu0 0
  %4141 = vmatpush1.bf16.msra.mxu0 0
  %4142 = vmatprep.subr.bf16.mxu0 0
  %4143 = vmatpush1.bf16.msra.mxu0 0
  %4144 = vmatprep.subr.bf16.mxu0 0
  %4145 = vmatpush1.bf16.msra.mxu0 0
  %4146 = vmatprep.subr.bf16.mxu0 0
  %4147 = vmatpush1.bf16.msra.mxu0 0
  %4148 = vmatprep.subr.bf16.mxu0 0
  %4149 = vmatpush1.bf16.msra.mxu0 0
  %4150 = vmatprep.subr.bf16.mxu0 0
  %4151 = vmatpush1.bf16.msra.mxu0 0
  %4152 = vmatprep.subr.bf16.mxu0 0
  %4153 = vmatpush1.bf16.msra.mxu0 0
  %4154 = vmatprep.subr.bf16.mxu0 0
  %4155 = vmatpush1.bf16.msra.mxu0 0
  %4156 = vmatprep.subr.bf16.mxu0 0
  %4157 = vmatpush1.bf16.msra.mxu0 0
  %4158 = vmatprep.subr.bf16.mxu0 0
  %4159 = vmatpush1.bf16.msra.mxu0 0
  %4160 = vmatprep.subr.bf16.mxu0 0
  %4161 = vmatpush1.bf16.msra.mxu0 0
  %4162 = vmatprep.mubr.bf16.mxu0 0
  %4163 = vmatmul.mubr.bf16.gmra.mrb[0].mxu0 %v4119
  %v4164 = vpop.f32.mrb[0].mxu0
  %v4165 = vadd.f32 0.0, %v4164
  %v4166 = vpop.f32.mrb[0].mxu0
  %v4167 = vadd.f32 0.0, %v4166
  %v4168 = vpop.f32.mrb[0].mxu0
  %v4169 = vadd.f32 0.0, %v4168
  %v4170 = vpop.f32.mrb[0].mxu0
  %v4171 = vadd.f32 0.0, %v4170
  %4172 = vmatprep.mubr.bf16.mxu0 0
  %4173 = vmatmul.mubr.bf16.gmra.mrb[0].mxu0 %v4122
  %v4174 = vpop.f32.mrb[0].mxu0
  %v4175 = vadd.f32 0.0, %v4174
  %v4176 = vpop.f32.mrb[0].mxu0
  %v4177 = vadd.f32 0.0, %v4176
  %v4178 = vpop.f32.mrb[0].mxu0
  %v4179 = vpop.f32.mrb[0].mxu0
  %4180 = vdwg.mxu0
  %s4181 = scalar_lea.vmem %s49, 128
  %v4182 = vld [vmem:[%s4181] sm:$0xff]
  %v4183 = vld [vmem:[%s4181 + $0x8] sm:$0xff]
  %v4184 = vld [vmem:[%s4181 + $0x10] sm:$0xff]
  %v4185 = vld [vmem:[%s4181 + $0x18] sm:$0xff]
  %v4186 = vld [vmem:[%s4181 + $0x20] sm:$0xff]
  %v4187 = vld [vmem:[%s4181 + $0x28] sm:$0xff]
  %v4188 = vld [vmem:[%s4181 + $0x30] sm:$0xff]
  %v4189 = vld [vmem:[%s4181 + $0x38] sm:$0xff]
  %v4190 = vld [vmem:[%s4181 + $0x40] sm:$0xff]
  %v4191 = vld [vmem:[%s4181 + $0x48] sm:$0xff]
  %v4192 = vld [vmem:[%s4181 + $0x50] sm:$0xff]
  %v4193 = vld [vmem:[%s4181 + $0x58] sm:$0xff]
  %v4194 = vld [vmem:[%s4181 + $0x60] sm:$0xff]
  %v4195 = vld [vmem:[%s4181 + $0x68] sm:$0xff]
  %v4196 = vld [vmem:[%s4181 + $0x70] sm:$0xff]
  %v4197 = vld [vmem:[%s4181 + $0x78] sm:$0xff]
  %v4214 = vunpack.c.l.b16 %v4182
  %v4215 = vunpack.c.h.b16 %v4182
  %v4216 = vunpack.c.l.b16 %v4183
  %v4217 = vunpack.c.h.b16 %v4183
  %v4218 = vunpack.c.l.b16 %v4184
  %v4219 = vunpack.c.h.b16 %v4184
  %v4220 = vunpack.c.l.b16 %v4185
  %v4221 = vunpack.c.h.b16 %v4185
  %v4222 = vunpack.c.l.b16 %v4186
  %v4223 = vunpack.c.h.b16 %v4186
  %v4224 = vunpack.c.l.b16 %v4187
  %v4225 = vunpack.c.h.b16 %v4187
  %v4226 = vunpack.c.l.b16 %v4188
  %v4227 = vunpack.c.h.b16 %v4188
  %v4228 = vunpack.c.l.b16 %v4189
  %v4229 = vunpack.c.h.b16 %v4189
  %v4230 = vunpack.c.l.b16 %v4190
  %v4231 = vunpack.c.h.b16 %v4190
  %v4232 = vunpack.c.l.b16 %v4191
  %v4233 = vunpack.c.h.b16 %v4191
  %v4234 = vunpack.c.l.b16 %v4192
  %v4235 = vunpack.c.h.b16 %v4192
  %v4236 = vunpack.c.l.b16 %v4193
  %v4237 = vunpack.c.h.b16 %v4193
  %v4238 = vunpack.c.l.b16 %v4194
  %v4239 = vunpack.c.h.b16 %v4194
  %v4240 = vunpack.c.l.b16 %v4195
  %v4241 = vunpack.c.h.b16 %v4195
  %v4242 = vunpack.c.l.b16 %v4196
  %v4243 = vunpack.c.h.b16 %v4196
  %v4244 = vunpack.c.l.b16 %v4197
  %v4245 = vunpack.c.h.b16 %v4197
  %v4246 = vpack.c.b16 %v4216, %v4214
  %v4247 = vpack.c.b16 %v4217, %v4215
  %v4248 = vpack.c.b16 %v4220, %v4218
  %v4249 = vpack.c.b16 %v4221, %v4219
  %v4250 = vpack.c.b16 %v4224, %v4222
  %v4251 = vpack.c.b16 %v4225, %v4223
  %v4252 = vpack.c.b16 %v4228, %v4226
  %v4253 = vpack.c.b16 %v4229, %v4227
  %v4254 = vpack.c.b16 %v4232, %v4230
  %v4255 = vpack.c.b16 %v4233, %v4231
  %v4256 = vpack.c.b16 %v4236, %v4234
  %v4257 = vpack.c.b16 %v4237, %v4235
  %v4258 = vpack.c.b16 %v4240, %v4238
  %v4259 = vpack.c.b16 %v4241, %v4239
  %v4260 = vpack.c.b16 %v4244, %v4242
  %v4261 = vpack.c.b16 %v4245, %v4243
  %4278 = vmatprep.subr.bf16.mxu0 %v4247
  %4279 = vmatpush1.bf16.msra.mxu0 %v4246
  %4280 = vmatprep.subr.bf16.mxu0 %v4249
  %4281 = vmatpush1.bf16.msra.mxu0 %v4248
  %4282 = vmatprep.subr.bf16.mxu0 %v4251
  %4283 = vmatpush1.bf16.msra.mxu0 %v4250
  %4284 = vmatprep.subr.bf16.mxu0 %v4253
  %4285 = vmatpush1.bf16.msra.mxu0 %v4252
  %4286 = vmatprep.subr.bf16.mxu0 %v4255
  %4287 = vmatpush1.bf16.msra.mxu0 %v4254
  %4288 = vmatprep.subr.bf16.mxu0 %v4257
  %4289 = vmatpush1.bf16.msra.mxu0 %v4256
  %4290 = vmatprep.subr.bf16.mxu0 %v4259
  %4291 = vmatpush1.bf16.msra.mxu0 %v4258
  %4292 = vmatprep.subr.bf16.mxu0 %v4261
  %4293 = vmatpush1.bf16.msra.mxu0 %v4260
  %4294 = vmatprep.subr.bf16.mxu0 0
  %4295 = vmatpush1.bf16.msra.mxu0 0
  %4296 = vmatprep.subr.bf16.mxu0 0
  %4297 = vmatpush1.bf16.msra.mxu0 0
  %4298 = vmatprep.subr.bf16.mxu0 0
  %4299 = vmatpush1.bf16.msra.mxu0 0
  %4300 = vmatprep.subr.bf16.mxu0 0
  %4301 = vmatpush1.bf16.msra.mxu0 0
  %4302 = vmatprep.subr.bf16.mxu0 0
  %4303 = vmatpush1.bf16.msra.mxu0 0
  %4304 = vmatprep.subr.bf16.mxu0 0
  %4305 = vmatpush1.bf16.msra.mxu0 0
  %4306 = vmatprep.subr.bf16.mxu0 0
  %4307 = vmatpush1.bf16.msra.mxu0 0
  %4308 = vmatprep.subr.bf16.mxu0 0
  %4309 = vmatpush1.bf16.msra.mxu0 0
  %4310 = vmatprep.mubr.bf16.mxu0 0
  %4311 = vmatmul.mubr.bf16.gmra.mrb[0].mxu0 %v3961
  %v4312 = vpop.f32.mrb[0].mxu0
  %v4313 = vadd.f32 0.0, %v4312
  %v4314 = vpop.f32.mrb[0].mxu0
  %v4315 = vadd.f32 0.0, %v4314
  %v4316 = vpop.f32.mrb[0].mxu0
  %v4317 = vpop.f32.mrb[0].mxu0
  %4318 = vdwg.mxu0
  %s4319 = scalar_lea.vmem %s47, 12
  %v4320 = vld [vmem:[%s4319] sm:$0xf]
  %v4321 = vld [vmem:[%s4319 + $0x4] sm:$0xf]
  %v4322 = vld [vmem:[%s4319 + $0x8] sm:$0xf]
  %v4323 = vpack.c.bf16 %v4313, %v4313
  %v4324 = vpack.c.bf16 %v4315, %v4315
  %s4325 = scalar_lea.vmem %s49, 256
  %v4326 = vld [vmem:[%s4325] sm:$0xff]
  %v4327 = vld [vmem:[%s4325 + $0x8] sm:$0xff]
  %v4328 = vld [vmem:[%s4325 + $0x10] sm:$0xff]
  %v4329 = vld [vmem:[%s4325 + $0x18] sm:$0xff]
  %v4330 = vld [vmem:[%s4325 + $0x20] sm:$0xff]
  %v4331 = vld [vmem:[%s4325 + $0x28] sm:$0xff]
  %v4332 = vld [vmem:[%s4325 + $0x30] sm:$0xff]
  %v4333 = vld [vmem:[%s4325 + $0x38] sm:$0xff]
  %v4334 = vld [vmem:[%s4325 + $0x40] sm:$0xff]
  %v4335 = vld [vmem:[%s4325 + $0x48] sm:$0xff]
  %v4336 = vld [vmem:[%s4325 + $0x50] sm:$0xff]
  %v4337 = vld [vmem:[%s4325 + $0x58] sm:$0xff]
  %v4338 = vld [vmem:[%s4325 + $0x60] sm:$0xff]
  %v4339 = vld [vmem:[%s4325 + $0x68] sm:$0xff]
  %v4340 = vld [vmem:[%s4325 + $0x70] sm:$0xff]
  %v4341 = vld [vmem:[%s4325 + $0x78] sm:$0xff]
  %v4358 = vunpack.c.l.b16 %v4326
  %v4359 = vunpack.c.h.b16 %v4326
  %v4360 = vunpack.c.l.b16 %v4327
  %v4361 = vunpack.c.h.b16 %v4327
  %v4362 = vunpack.c.l.b16 %v4328
  %v4363 = vunpack.c.h.b16 %v4328
  %v4364 = vunpack.c.l.b16 %v4329
  %v4365 = vunpack.c.h.b16 %v4329
  %v4366 = vunpack.c.l.b16 %v4330
  %v4367 = vunpack.c.h.b16 %v4330
  %v4368 = vunpack.c.l.b16 %v4331
  %v4369 = vunpack.c.h.b16 %v4331
  %v4370 = vunpack.c.l.b16 %v4332
  %v4371 = vunpack.c.h.b16 %v4332
  %v4372 = vunpack.c.l.b16 %v4333
  %v4373 = vunpack.c.h.b16 %v4333
  %v4374 = vunpack.c.l.b16 %v4334
  %v4375 = vunpack.c.h.b16 %v4334
  %v4376 = vunpack.c.l.b16 %v4335
  %v4377 = vunpack.c.h.b16 %v4335
  %v4378 = vunpack.c.l.b16 %v4336
  %v4379 = vunpack.c.h.b16 %v4336
  %v4380 = vunpack.c.l.b16 %v4337
  %v4381 = vunpack.c.h.b16 %v4337
  %v4382 = vunpack.c.l.b16 %v4338
  %v4383 = vunpack.c.h.b16 %v4338
  %v4384 = vunpack.c.l.b16 %v4339
  %v4385 = vunpack.c.h.b16 %v4339
  %v4386 = vunpack.c.l.b16 %v4340
  %v4387 = vunpack.c.h.b16 %v4340
  %v4388 = vunpack.c.l.b16 %v4341
  %v4389 = vunpack.c.h.b16 %v4341
  %v4390 = vpack.c.b16 %v4360, %v4358
  %v4391 = vpack.c.b16 %v4361, %v4359
  %v4392 = vpack.c.b16 %v4364, %v4362
  %v4393 = vpack.c.b16 %v4365, %v4363
  %v4394 = vpack.c.b16 %v4368, %v4366
  %v4395 = vpack.c.b16 %v4369, %v4367
  %v4396 = vpack.c.b16 %v4372, %v4370
  %v4397 = vpack.c.b16 %v4373, %v4371
  %v4398 = vpack.c.b16 %v4376, %v4374
  %v4399 = vpack.c.b16 %v4377, %v4375
  %v4400 = vpack.c.b16 %v4380, %v4378
  %v4401 = vpack.c.b16 %v4381, %v4379
  %v4402 = vpack.c.b16 %v4384, %v4382
  %v4403 = vpack.c.b16 %v4385, %v4383
  %v4404 = vpack.c.b16 %v4388, %v4386
  %v4405 = vpack.c.b16 %v4389, %v4387
  %4422 = vmatprep.subr.bf16.mxu0 %v4391
  %4423 = vmatpush1.bf16.msra.mxu0 %v4390
  %4424 = vmatprep.subr.bf16.mxu0 %v4393
  %4425 = vmatpush1.bf16.msra.mxu0 %v4392
  %4426 = vmatprep.subr.bf16.mxu0 %v4395
  %4427 = vmatpush1.bf16.msra.mxu0 %v4394
  %4428 = vmatprep.subr.bf16.mxu0 %v4397
  %4429 = vmatpush1.bf16.msra.mxu0 %v4396
  %4430 = vmatprep.subr.bf16.mxu0 %v4399
  %4431 = vmatpush1.bf16.msra.mxu0 %v4398
  %4432 = vmatprep.subr.bf16.mxu0 %v4401
  %4433 = vmatpush1.bf16.msra.mxu0 %v4400
  %4434 = vmatprep.subr.bf16.mxu0 %v4403
  %4435 = vmatpush1.bf16.msra.mxu0 %v4402
  %4436 = vmatprep.subr.bf16.mxu0 %v4405
  %4437 = vmatpush1.bf16.msra.mxu0 %v4404
  %4438 = vmatprep.subr.bf16.mxu0 0
  %4439 = vmatpush1.bf16.msra.mxu0 0
  %4440 = vmatprep.subr.bf16.mxu0 0
  %4441 = vmatpush1.bf16.msra.mxu0 0
  %4442 = vmatprep.subr.bf16.mxu0 0
  %4443 = vmatpush1.bf16.msra.mxu0 0
  %4444 = vmatprep.subr.bf16.mxu0 0
  %4445 = vmatpush1.bf16.msra.mxu0 0
  %4446 = vmatprep.subr.bf16.mxu0 0
  %4447 = vmatpush1.bf16.msra.mxu0 0
  %4448 = vmatprep.subr.bf16.mxu0 0
  %4449 = vmatpush1.bf16.msra.mxu0 0
  %4450 = vmatprep.subr.bf16.mxu0 0
  %4451 = vmatpush1.bf16.msra.mxu0 0
  %4452 = vmatprep.subr.bf16.mxu0 0
  %4453 = vmatpush1.bf16.msra.mxu0 0
  %4454 = vmatprep.mubr.bf16.mxu0 0
  %4455 = vmatmul.mubr.bf16.gmra.mrb[0].mxu0 %v3961
  %v4456 = vpop.f32.mrb[0].mxu0
  %v4457 = vadd.f32 0.0, %v4456
  %v4458 = vpop.f32.mrb[0].mxu0
  %v4459 = vadd.f32 0.0, %v4458
  %v4460 = vpop.f32.mrb[0].mxu0
  %v4461 = vpop.f32.mrb[0].mxu0
  %4462 = vdwg.mxu0
  %s4463 = scalar_lea.vmem %s47, 24
  %v4464 = vld [vmem:[%s4463] sm:$0xf]
  %v4465 = vld [vmem:[%s4463 + $0x4] sm:$0xf]
  %v4466 = vld [vmem:[%s4463 + $0x8] sm:$0xf]
  %v4467 = vpack.c.bf16 %v4457, %v4457
  %v4468 = vpack.c.bf16 %v4459, %v4459
  %v4472 = vunpack.c.l.b16 %v4464
  %v4473 = vunpack.c.l.b16 %v4465
  %v4474 = vunpack.c.l.b16 %v4466
  %v4475 = vpack.c.b16 %v4473, %v4472
  %v4476 = vpack.c.b16 %v4474, %v4474
  %v4478 = vsel %vm1676, %v4475, 0
  %v4481 = vsel %vm1676, %v4476, 0
  %v4484 = vsel %vm1680, %v4467, 0
  %v4487 = vsel %vm1680, %v4468, 0
  %4489 = vmatprep.subr.bf16.mxu0 %v4487
  %4490 = vmatpush1.bf16.msra.mxu0 %v4484
  %4491 = vmatprep.subr.bf16.mxu0 0
  %4492 = vmatpush1.bf16.msra.mxu0 0
  %4493 = vmatprep.subr.bf16.mxu0 0
  %4494 = vmatpush1.bf16.msra.mxu0 0
  %4495 = vmatprep.subr.bf16.mxu0 0
  %4496 = vmatpush1.bf16.msra.mxu0 0
  %4497 = vmatprep.subr.bf16.mxu0 0
  %4498 = vmatpush1.bf16.msra.mxu0 0
  %4499 = vmatprep.subr.bf16.mxu0 0
  %4500 = vmatpush1.bf16.msra.mxu0 0
  %4501 = vmatprep.subr.bf16.mxu0 0
  %4502 = vmatpush1.bf16.msra.mxu0 0
  %4503 = vmatprep.subr.bf16.mxu0 0
  %4504 = vmatpush1.bf16.msra.mxu0 0
  %4505 = vmatprep.subr.bf16.mxu0 0
  %4506 = vmatpush1.bf16.msra.mxu0 0
  %4507 = vmatprep.subr.bf16.mxu0 0
  %4508 = vmatpush1.bf16.msra.mxu0 0
  %4509 = vmatprep.subr.bf16.mxu0 0
  %4510 = vmatpush1.bf16.msra.mxu0 0
  %4511 = vmatprep.subr.bf16.mxu0 0
  %4512 = vmatpush1.bf16.msra.mxu0 0
  %4513 = vmatprep.subr.bf16.mxu0 0
  %4514 = vmatpush1.bf16.msra.mxu0 0
  %4515 = vmatprep.subr.bf16.mxu0 0
  %4516 = vmatpush1.bf16.msra.mxu0 0
  %4517 = vmatprep.subr.bf16.mxu0 0
  %4518 = vmatpush1.bf16.msra.mxu0 0
  %4519 = vmatprep.subr.bf16.mxu0 0
  %4520 = vmatpush1.bf16.msra.mxu0 0
  %4521 = vmatprep.mubr.bf16.mxu0 0
  %4522 = vmatmul.mubr.bf16.gmra.mrb[0].mxu0 %v4478
  %v4523 = vpop.f32.mrb[0].mxu0
  %v4524 = vadd.f32 0.0, %v4523
  %v4525 = vpop.f32.mrb[0].mxu0
  %v4526 = vadd.f32 0.0, %v4525
  %v4527 = vpop.f32.mrb[0].mxu0
  %v4528 = vadd.f32 0.0, %v4527
  %v4529 = vpop.f32.mrb[0].mxu0
  %v4530 = vadd.f32 0.0, %v4529
  %4531 = vmatprep.mubr.bf16.mxu0 0
  %4532 = vmatmul.mubr.bf16.gmra.mrb[0].mxu0 %v4481
  %v4533 = vpop.f32.mrb[0].mxu0
  %v4534 = vadd.f32 0.0, %v4533
  %v4535 = vpop.f32.mrb[0].mxu0
  %v4536 = vadd.f32 0.0, %v4535
  %v4537 = vpop.f32.mrb[0].mxu0
  %v4538 = vpop.f32.mrb[0].mxu0
  %4539 = vdwg.mxu0
  %v4540 = vadd.f32 %v3962, %v4165
  %v4541 = vadd.f32 %v3963, %v4167
  %v4542 = vadd.f32 %v3964, %v4169
  %v4543 = vadd.f32 %v3965, %v4171
  %v4544 = vadd.f32 %v3966, %v4175
  %v4545 = vadd.f32 %v3967, %v4177
  %v4549 = vunpack.c.l.b16 %v4320
  %v4550 = vunpack.c.l.b16 %v4321
  %v4551 = vunpack.c.l.b16 %v4322
  %v4552 = vpack.c.b16 %v4550, %v4549
  %v4553 = vpack.c.b16 %v4551, %v4551
  %v4555 = vsel %vm1676, %v4552, 0
  %v4558 = vsel %vm1676, %v4553, 0
  %v4561 = vsel %vm1680, %v4323, 0
  %v4564 = vsel %vm1680, %v4324, 0
  %4566 = vmatprep.subr.bf16.mxu0 %v4564
  %4567 = vmatpush1.bf16.msra.mxu0 %v4561
  %4568 = vmatprep.subr.bf16.mxu0 0
  %4569 = vmatpush1.bf16.msra.mxu0 0
  %4570 = vmatprep.subr.bf16.mxu0 0
  %4571 = vmatpush1.bf16.msra.mxu0 0
  %4572 = vmatprep.subr.bf16.mxu0 0
  %4573 = vmatpush1.bf16.msra.mxu0 0
  %4574 = vmatprep.subr.bf16.mxu0 0
  %4575 = vmatpush1.bf16.msra.mxu0 0
  %4576 = vmatprep.subr.bf16.mxu0 0
  %4577 = vmatpush1.bf16.msra.mxu0 0
  %4578 = vmatprep.subr.bf16.mxu0 0
  %4579 = vmatpush1.bf16.msra.mxu0 0
  %4580 = vmatprep.subr.bf16.mxu0 0
  %4581 = vmatpush1.bf16.msra.mxu0 0
  %4582 = vmatprep.subr.bf16.mxu0 0
  %4583 = vmatpush1.bf16.msra.mxu0 0
  %4584 = vmatprep.subr.bf16.mxu0 0
  %4585 = vmatpush1.bf16.msra.mxu0 0
  %4586 = vmatprep.subr.bf16.mxu0 0
  %4587 = vmatpush1.bf16.msra.mxu0 0
  %4588 = vmatprep.subr.bf16.mxu0 0
  %4589 = vmatpush1.bf16.msra.mxu0 0
  %4590 = vmatprep.subr.bf16.mxu0 0
  %4591 = vmatpush1.bf16.msra.mxu0 0
  %4592 = vmatprep.subr.bf16.mxu0 0
  %4593 = vmatpush1.bf16.msra.mxu0 0
  %4594 = vmatprep.subr.bf16.mxu0 0
  %4595 = vmatpush1.bf16.msra.mxu0 0
  %4596 = vmatprep.subr.bf16.mxu0 0
  %4597 = vmatpush1.bf16.msra.mxu0 0
  %4598 = vmatprep.mubr.bf16.mxu0 0
  %4599 = vmatmul.mubr.bf16.gmra.mrb[0].mxu0 %v4555
  %v4600 = vpop.f32.mrb[0].mxu0
  %v4601 = vadd.f32 %v4524, %v4600
  %v4602 = vpop.f32.mrb[0].mxu0
  %v4603 = vadd.f32 %v4526, %v4602
  %v4604 = vpop.f32.mrb[0].mxu0
  %v4605 = vadd.f32 %v4528, %v4604
  %v4606 = vpop.f32.mrb[0].mxu0
  %v4607 = vadd.f32 %v4530, %v4606
  %4608 = vmatprep.mubr.bf16.mxu0 0
  %4609 = vmatmul.mubr.bf16.gmra.mrb[0].mxu0 %v4558
  %v4610 = vpop.f32.mrb[0].mxu0
  %v4611 = vadd.f32 %v4534, %v4610
  %v4612 = vpop.f32.mrb[0].mxu0
  %v4613 = vadd.f32 %v4536, %v4612
  %v4614 = vpop.f32.mrb[0].mxu0
  %v4615 = vpop.f32.mrb[0].mxu0
  %4616 = vdwg.mxu0
  %v4617 = vadd.f32 %v4540, %v4601
  %v4618 = vadd.f32 %v4541, %v4603
  %v4619 = vadd.f32 %v4542, %v4605
  %v4620 = vadd.f32 %v4543, %v4607
  %v4621 = vadd.f32 %v4544, %v4611
  %v4622 = vadd.f32 %v4545, %v4613
  %vm4623 = vcmp.ge.f32.partialorder %v4617, 0.0
  %vm4624 = vcmp.ge.f32.partialorder %v4618, 0.0
  %vm4625 = vcmp.ge.f32.partialorder %v4619, 0.0
  %vm4626 = vcmp.ge.f32.partialorder %v4620, 0.0
  %vm4627 = vcmp.ge.f32.partialorder %v4621, 0.0
  %vm4628 = vcmp.ge.f32.partialorder %v4622, 0.0
  %v4629 = vmul.f32 %v4617, 0.01
  %v4630 = vmul.f32 %v4618, 0.01
  %v4631 = vmul.f32 %v4619, 0.01
  %v4632 = vmul.f32 %v4620, 0.01
  %v4633 = vmul.f32 %v4621, 0.01
  %v4634 = vmul.f32 %v4622, 0.01
  %v4635 = vsel %vm4623, %v4617, %v4629
  %v4636 = vsel %vm4624, %v4618, %v4630
  %v4637 = vsel %vm4625, %v4619, %v4631
  %v4638 = vsel %vm4626, %v4620, %v4632
  %v4639 = vsel %vm4627, %v4621, %v4633
  %v4640 = vsel %vm4628, %v4622, %v4634
  %v4641 = vpack.c.bf16 %v4637, %v4635
  %v4642 = vpack.c.bf16 %v4638, %v4636
  %v4643 = vpack.c.bf16 %v4639, %v4639
  %v4644 = vpack.c.bf16 %v4640, %v4640
  %v4645 = vld [vmem:[%s57] sm:$0xff]
  %v4646 = vld [vmem:[%s57 + $0x8] sm:$0xff]
  %v4647 = vld [vmem:[%s57 + $0x10] sm:$0xff]
  %v4648 = vld [vmem:[%s57 + $0x18] sm:$0xff]
  %v4649 = vld [vmem:[%s57 + $0x20] sm:$0xff]
  %v4650 = vld [vmem:[%s57 + $0x28] sm:$0xff]
  %v4651 = vld [vmem:[%s57 + $0x30] sm:$0xff]
  %v4652 = vld [vmem:[%s57 + $0x38] sm:$0xff]
  %v4653 = vld [vmem:[%s57 + $0x40] sm:$0xff]
  %v4654 = vld [vmem:[%s57 + $0x48] sm:$0xff]
  %v4655 = vld [vmem:[%s55] sm:$0xff]
  %v4656 = vld [vmem:[%s55 + $0x8] sm:$0xff]
  %v4657 = vld [vmem:[%s55 + $0x10] sm:$0xff]
  %v4658 = vld [vmem:[%s55 + $0x18] sm:$0xff]
  %v4659 = vld [vmem:[%s55 + $0x20] sm:$0xff]
  %v4660 = vld [vmem:[%s55 + $0x28] sm:$0xff]
  %v4661 = vld [vmem:[%s55 + $0x30] sm:$0xff]
  %v4662 = vld [vmem:[%s55 + $0x38] sm:$0xff]
  %v4663 = vld [vmem:[%s55 + $0x40] sm:$0xff]
  %v4664 = vld [vmem:[%s55 + $0x48] sm:$0xff]
  %v4665 = vld [vmem:[%s55 + $0x50] sm:$0xff]
  %v4666 = vld [vmem:[%s55 + $0x58] sm:$0xff]
  %v4667 = vld [vmem:[%s55 + $0x60] sm:$0xff]
  %v4668 = vld [vmem:[%s55 + $0x68] sm:$0xff]
  %v4669 = vld [vmem:[%s55 + $0x70] sm:$0xff]
  %v4670 = vld [vmem:[%s55 + $0x78] sm:$0xff]
  %v4671 = vld [vmem:[%s55 + $0x80] sm:$0xff]
  %v4672 = vld [vmem:[%s55 + $0x88] sm:$0xff]
  %v4673 = vld [vmem:[%s55 + $0x90] sm:$0xff]
  %v4674 = vld [vmem:[%s55 + $0x98] sm:$0xff]
  %v4675 = vld [vmem:[%s55 + $0xa0] sm:$0xff]
  %v4676 = vld [vmem:[%s55 + $0xa8] sm:$0xff]
  %v4677 = vld [vmem:[%s55 + $0xb0] sm:$0xff]
  %v4678 = vld [vmem:[%s55 + $0xb8] sm:$0xff]
  %v4679 = vld [vmem:[%s55 + $0xc0] sm:$0xff]
  %v4680 = vld [vmem:[%s55 + $0xc8] sm:$0xff]
  %v4681 = vld [vmem:[%s55 + $0xd0] sm:$0xff]
  %v4682 = vld [vmem:[%s55 + $0xd8] sm:$0xff]
  %v4683 = vld [vmem:[%s55 + $0xe0] sm:$0xff]
  %v4684 = vld [vmem:[%s55 + $0xe8] sm:$0xff]
  %v4685 = vld [vmem:[%s55 + $0xf0] sm:$0xff]
  %v4686 = vld [vmem:[%s55 + $0xf8] sm:$0xff]
  %v4719 = vunpack.c.l.b16 %v4655
  %v4720 = vunpack.c.h.b16 %v4655
  %v4721 = vunpack.c.l.b16 %v4656
  %v4722 = vunpack.c.h.b16 %v4656
  %v4723 = vunpack.c.l.b16 %v4657
  %v4724 = vunpack.c.h.b16 %v4657
  %v4725 = vunpack.c.l.b16 %v4658
  %v4726 = vunpack.c.h.b16 %v4658
  %v4727 = vunpack.c.l.b16 %v4659
  %v4728 = vunpack.c.h.b16 %v4659
  %v4729 = vunpack.c.l.b16 %v4660
  %v4730 = vunpack.c.h.b16 %v4660
  %v4731 = vunpack.c.l.b16 %v4661
  %v4732 = vunpack.c.h.b16 %v4661
  %v4733 = vunpack.c.l.b16 %v4662
  %v4734 = vunpack.c.h.b16 %v4662
  %v4735 = vunpack.c.l.b16 %v4663
  %v4736 = vunpack.c.h.b16 %v4663
  %v4737 = vunpack.c.l.b16 %v4664
  %v4738 = vunpack.c.h.b16 %v4664
  %v4739 = vunpack.c.l.b16 %v4665
  %v4740 = vunpack.c.h.b16 %v4665
  %v4741 = vunpack.c.l.b16 %v4666
  %v4742 = vunpack.c.h.b16 %v4666
  %v4743 = vunpack.c.l.b16 %v4667
  %v4744 = vunpack.c.h.b16 %v4667
  %v4745 = vunpack.c.l.b16 %v4668
  %v4746 = vunpack.c.h.b16 %v4668
  %v4747 = vunpack.c.l.b16 %v4669
  %v4748 = vunpack.c.h.b16 %v4669
  %v4749 = vunpack.c.l.b16 %v4670
  %v4750 = vunpack.c.h.b16 %v4670
  %v4751 = vunpack.c.l.b16 %v4671
  %v4752 = vunpack.c.h.b16 %v4671
  %v4753 = vunpack.c.l.b16 %v4672
  %v4754 = vunpack.c.h.b16 %v4672
  %v4755 = vunpack.c.l.b16 %v4673
  %v4756 = vunpack.c.h.b16 %v4673
  %v4757 = vunpack.c.l.b16 %v4674
  %v4758 = vunpack.c.h.b16 %v4674
  %v4759 = vunpack.c.l.b16 %v4675
  %v4760 = vunpack.c.h.b16 %v4675
  %v4761 = vunpack.c.l.b16 %v4676
  %v4762 = vunpack.c.h.b16 %v4676
  %v4763 = vunpack.c.l.b16 %v4677
  %v4764 = vunpack.c.h.b16 %v4677
  %v4765 = vunpack.c.l.b16 %v4678
  %v4766 = vunpack.c.h.b16 %v4678
  %v4767 = vunpack.c.l.b16 %v4679
  %v4768 = vunpack.c.h.b16 %v4679
  %v4769 = vunpack.c.l.b16 %v4680
  %v4770 = vunpack.c.h.b16 %v4680
  %v4771 = vunpack.c.l.b16 %v4681
  %v4772 = vunpack.c.h.b16 %v4681
  %v4773 = vunpack.c.l.b16 %v4682
  %v4774 = vunpack.c.h.b16 %v4682
  %v4775 = vunpack.c.l.b16 %v4683
  %v4776 = vunpack.c.h.b16 %v4683
  %v4777 = vunpack.c.l.b16 %v4684
  %v4778 = vunpack.c.h.b16 %v4684
  %v4779 = vunpack.c.l.b16 %v4685
  %v4780 = vunpack.c.h.b16 %v4685
  %v4781 = vunpack.c.l.b16 %v4686
  %v4782 = vunpack.c.h.b16 %v4686
  %v4783 = vpack.c.b16 %v4721, %v4719
  %v4784 = vpack.c.b16 %v4722, %v4720
  %v4785 = vpack.c.b16 %v4725, %v4723
  %v4786 = vpack.c.b16 %v4726, %v4724
  %v4787 = vpack.c.b16 %v4729, %v4727
  %v4788 = vpack.c.b16 %v4730, %v4728
  %v4789 = vpack.c.b16 %v4733, %v4731
  %v4790 = vpack.c.b16 %v4734, %v4732
  %v4791 = vpack.c.b16 %v4737, %v4735
  %v4792 = vpack.c.b16 %v4738, %v4736
  %v4793 = vpack.c.b16 %v4741, %v4739
  %v4794 = vpack.c.b16 %v4742, %v4740
  %v4795 = vpack.c.b16 %v4745, %v4743
  %v4796 = vpack.c.b16 %v4746, %v4744
  %v4797 = vpack.c.b16 %v4749, %v4747
  %v4798 = vpack.c.b16 %v4750, %v4748
  %v4799 = vpack.c.b16 %v4753, %v4751
  %v4800 = vpack.c.b16 %v4754, %v4752
  %v4801 = vpack.c.b16 %v4757, %v4755
  %v4802 = vpack.c.b16 %v4758, %v4756
  %v4803 = vpack.c.b16 %v4761, %v4759
  %v4804 = vpack.c.b16 %v4762, %v4760
  %v4805 = vpack.c.b16 %v4765, %v4763
  %v4806 = vpack.c.b16 %v4766, %v4764
  %v4807 = vpack.c.b16 %v4769, %v4767
  %v4808 = vpack.c.b16 %v4770, %v4768
  %v4809 = vpack.c.b16 %v4773, %v4771
  %v4810 = vpack.c.b16 %v4774, %v4772
  %v4811 = vpack.c.b16 %v4777, %v4775
  %v4812 = vpack.c.b16 %v4778, %v4776
  %v4813 = vpack.c.b16 %v4781, %v4779
  %v4814 = vpack.c.b16 %v4782, %v4780
  %4847 = vmatprep.subr.bf16.mxu0 %v4784
  %4848 = vmatpush1.bf16.msra.mxu0 %v4783
  %4849 = vmatprep.subr.bf16.mxu0 %v4786
  %4850 = vmatpush1.bf16.msra.mxu0 %v4785
  %4851 = vmatprep.subr.bf16.mxu0 %v4788
  %4852 = vmatpush1.bf16.msra.mxu0 %v4787
  %4853 = vmatprep.subr.bf16.mxu0 %v4790
  %4854 = vmatpush1.bf16.msra.mxu0 %v4789
  %4855 = vmatprep.subr.bf16.mxu0 %v4792
  %4856 = vmatpush1.bf16.msra.mxu0 %v4791
  %4857 = vmatprep.subr.bf16.mxu0 %v4794
  %4858 = vmatpush1.bf16.msra.mxu0 %v4793
  %4859 = vmatprep.subr.bf16.mxu0 %v4796
  %4860 = vmatpush1.bf16.msra.mxu0 %v4795
  %4861 = vmatprep.subr.bf16.mxu0 %v4798
  %4862 = vmatpush1.bf16.msra.mxu0 %v4797
  %4863 = vmatprep.subr.bf16.mxu0 %v4800
  %4864 = vmatpush1.bf16.msra.mxu0 %v4799
  %4865 = vmatprep.subr.bf16.mxu0 %v4802
  %4866 = vmatpush1.bf16.msra.mxu0 %v4801
  %4867 = vmatprep.subr.bf16.mxu0 %v4804
  %4868 = vmatpush1.bf16.msra.mxu0 %v4803
  %4869 = vmatprep.subr.bf16.mxu0 %v4806
  %4870 = vmatpush1.bf16.msra.mxu0 %v4805
  %4871 = vmatprep.subr.bf16.mxu0 %v4808
  %4872 = vmatpush1.bf16.msra.mxu0 %v4807
  %4873 = vmatprep.subr.bf16.mxu0 %v4810
  %4874 = vmatpush1.bf16.msra.mxu0 %v4809
  %4875 = vmatprep.subr.bf16.mxu0 %v4812
  %4876 = vmatpush1.bf16.msra.mxu0 %v4811
  %4877 = vmatprep.subr.bf16.mxu0 %v4814
  %4878 = vmatpush1.bf16.msra.mxu0 %v4813
  %4879 = vmatprep.mubr.bf16.mxu0 %v4642
  %4880 = vmatmul.mubr.bf16.gmra.mrb[0].mxu0 %v4641
  %v4881 = vpop.f32.mrb[0].mxu0
  %v4882 = vadd.f32 0.0, %v4881
  %v4883 = vpop.f32.mrb[0].mxu0
  %v4884 = vadd.f32 0.0, %v4883
  %v4885 = vpop.f32.mrb[0].mxu0
  %v4886 = vadd.f32 0.0, %v4885
  %v4887 = vpop.f32.mrb[0].mxu0
  %v4888 = vadd.f32 0.0, %v4887
  %4889 = vmatprep.mubr.bf16.mxu0 %v4644
  %4890 = vmatmul.mubr.bf16.gmra.mrb[0].mxu0 %v4643
  %v4891 = vpop.f32.mrb[0].mxu0
  %v4892 = vadd.f32 0.0, %v4891
  %v4893 = vpop.f32.mrb[0].mxu0
  %v4894 = vadd.f32 0.0, %v4893
  %v4895 = vpop.f32.mrb[0].mxu0
  %v4896 = vpop.f32.mrb[0].mxu0
  %4897 = vdwg.mxu0
  %v4898 = vld [vmem:[%s53] sm:$0xf]
  %v4899 = vld [vmem:[%s53 + $0x4] sm:$0xf]
  %v4900 = vld [vmem:[%s53 + $0x8] sm:$0xf]
  %v4901 = vld [vmem:[%s53 + $0xc] sm:$0xf]
  %v4902 = vld [vmem:[%s53 + $0x10] sm:$0xf]
  %v4903 = vpack.c.bf16 %v4886, %v4882
  %v4904 = vpack.c.bf16 %v4888, %v4884
  %v4905 = vpack.c.bf16 %v4892, %v4892
  %v4906 = vpack.c.bf16 %v4894, %v4894
  %v4912 = vunpack.c.l.b16 %v4898
  %v4913 = vunpack.c.l.b16 %v4899
  %v4914 = vunpack.c.l.b16 %v4900
  %v4915 = vunpack.c.l.b16 %v4901
  %v4916 = vunpack.c.l.b16 %v4902
  %v4917 = vpack.c.b16 %v4913, %v4912
  %v4918 = vpack.c.b16 %v4915, %v4914
  %v4919 = vpack.c.b16 %v4916, %v4916
  %vm4920 = vcmask 195584
  %v4922 = vsel %vm4920, %v4917, 0
  %v4925 = vsel %vm4920, %v4918, 0
  %v4928 = vsel %vm4920, %v4919, 0
  %v4931 = vsel %vm1680, %v4905, 0
  %v4934 = vsel %vm1680, %v4906, 0
  %4936 = vmatprep.subr.bf16.mxu0 %v4904
  %4937 = vmatpush1.bf16.msra.mxu0 %v4903
  %4938 = vmatprep.subr.bf16.mxu0 %v4934
  %4939 = vmatpush1.bf16.msra.mxu0 %v4931
  %4940 = vmatprep.subr.bf16.mxu0 0
  %4941 = vmatpush1.bf16.msra.mxu0 0
  %4942 = vmatprep.subr.bf16.mxu0 0
  %4943 = vmatpush1.bf16.msra.mxu0 0
  %4944 = vmatprep.subr.bf16.mxu0 0
  %4945 = vmatpush1.bf16.msra.mxu0 0
  %4946 = vmatprep.subr.bf16.mxu0 0
  %4947 = vmatpush1.bf16.msra.mxu0 0
  %4948 = vmatprep.subr.bf16.mxu0 0
  %4949 = vmatpush1.bf16.msra.mxu0 0
  %4950 = vmatprep.subr.bf16.mxu0 0
  %4951 = vmatpush1.bf16.msra.mxu0 0
  %4952 = vmatprep.subr.bf16.mxu0 0
  %4953 = vmatpush1.bf16.msra.mxu0 0
  %4954 = vmatprep.subr.bf16.mxu0 0
  %4955 = vmatpush1.bf16.msra.mxu0 0
  %4956 = vmatprep.subr.bf16.mxu0 0
  %4957 = vmatpush1.bf16.msra.mxu0 0
  %4958 = vmatprep.subr.bf16.mxu0 0
  %4959 = vmatpush1.bf16.msra.mxu0 0
  %4960 = vmatprep.subr.bf16.mxu0 0
  %4961 = vmatpush1.bf16.msra.mxu0 0
  %4962 = vmatprep.subr.bf16.mxu0 0
  %4963 = vmatpush1.bf16.msra.mxu0 0
  %4964 = vmatprep.subr.bf16.mxu0 0
  %4965 = vmatpush1.bf16.msra.mxu0 0
  %4966 = vmatprep.subr.bf16.mxu0 0
  %4967 = vmatpush1.bf16.msra.mxu0 0
  %4968 = vmatprep.mubr.bf16.mxu0 0
  %4969 = vmatmul.mubr.bf16.gmra.mrb[0].mxu0 %v4922
  %v4970 = vpop.f32.mrb[0].mxu0
  %v4971 = vadd.f32 0.0, %v4970
  %v4972 = vpop.f32.mrb[0].mxu0
  %v4973 = vadd.f32 0.0, %v4972
  %v4974 = vpop.f32.mrb[0].mxu0
  %v4975 = vadd.f32 0.0, %v4974
  %v4976 = vpop.f32.mrb[0].mxu0
  %v4977 = vadd.f32 0.0, %v4976
  %4978 = vmatprep.mubr.bf16.mxu0 0
  %4979 = vmatmul.mubr.bf16.gmra.mrb[0].mxu0 %v4925
  %v4980 = vpop.f32.mrb[0].mxu0
  %v4981 = vadd.f32 0.0, %v4980
  %v4982 = vpop.f32.mrb[0].mxu0
  %v4983 = vadd.f32 0.0, %v4982
  %v4984 = vpop.f32.mrb[0].mxu0
  %v4985 = vadd.f32 0.0, %v4984
  %v4986 = vpop.f32.mrb[0].mxu0
  %v4987 = vadd.f32 0.0, %v4986
  %4988 = vmatprep.mubr.bf16.mxu0 0
  %4989 = vmatmul.mubr.bf16.gmra.mrb[0].mxu0 %v4928
  %v4990 = vpop.f32.mrb[0].mxu0
  %v4991 = vadd.f32 0.0, %v4990
  %v4992 = vpop.f32.mrb[0].mxu0
  %v4993 = vadd.f32 0.0, %v4992
  %v4994 = vpop.f32.mrb[0].mxu0
  %v4995 = vpop.f32.mrb[0].mxu0
  %4996 = vdwg.mxu0
  %s4997 = scalar_lea.vmem %s55, 256
  %v4998 = vld [vmem:[%s4997] sm:$0xff]
  %v4999 = vld [vmem:[%s4997 + $0x8] sm:$0xff]
  %v5000 = vld [vmem:[%s4997 + $0x10] sm:$0xff]
  %v5001 = vld [vmem:[%s4997 + $0x18] sm:$0xff]
  %v5002 = vld [vmem:[%s4997 + $0x20] sm:$0xff]
  %v5003 = vld [vmem:[%s4997 + $0x28] sm:$0xff]
  %v5004 = vld [vmem:[%s4997 + $0x30] sm:$0xff]
  %v5005 = vld [vmem:[%s4997 + $0x38] sm:$0xff]
  %v5006 = vld [vmem:[%s4997 + $0x40] sm:$0xff]
  %v5007 = vld [vmem:[%s4997 + $0x48] sm:$0xff]
  %v5008 = vld [vmem:[%s4997 + $0x50] sm:$0xff]
  %v5009 = vld [vmem:[%s4997 + $0x58] sm:$0xff]
  %v5010 = vld [vmem:[%s4997 + $0x60] sm:$0xff]
  %v5011 = vld [vmem:[%s4997 + $0x68] sm:$0xff]
  %v5012 = vld [vmem:[%s4997 + $0x70] sm:$0xff]
  %v5013 = vld [vmem:[%s4997 + $0x78] sm:$0xff]
  %v5014 = vld [vmem:[%s4997 + $0x80] sm:$0xff]
  %v5015 = vld [vmem:[%s4997 + $0x88] sm:$0xff]
  %v5016 = vld [vmem:[%s4997 + $0x90] sm:$0xff]
  %v5017 = vld [vmem:[%s4997 + $0x98] sm:$0xff]
  %v5018 = vld [vmem:[%s4997 + $0xa0] sm:$0xff]
  %v5019 = vld [vmem:[%s4997 + $0xa8] sm:$0xff]
  %v5020 = vld [vmem:[%s4997 + $0xb0] sm:$0xff]
  %v5021 = vld [vmem:[%s4997 + $0xb8] sm:$0xff]
  %v5022 = vld [vmem:[%s4997 + $0xc0] sm:$0xff]
  %v5023 = vld [vmem:[%s4997 + $0xc8] sm:$0xff]
  %v5024 = vld [vmem:[%s4997 + $0xd0] sm:$0xff]
  %v5025 = vld [vmem:[%s4997 + $0xd8] sm:$0xff]
  %v5026 = vld [vmem:[%s4997 + $0xe0] sm:$0xff]
  %v5027 = vld [vmem:[%s4997 + $0xe8] sm:$0xff]
  %v5028 = vld [vmem:[%s4997 + $0xf0] sm:$0xff]
  %v5029 = vld [vmem:[%s4997 + $0xf8] sm:$0xff]
  %v5062 = vunpack.c.l.b16 %v4998
  %v5063 = vunpack.c.h.b16 %v4998
  %v5064 = vunpack.c.l.b16 %v4999
  %v5065 = vunpack.c.h.b16 %v4999
  %v5066 = vunpack.c.l.b16 %v5000
  %v5067 = vunpack.c.h.b16 %v5000
  %v5068 = vunpack.c.l.b16 %v5001
  %v5069 = vunpack.c.h.b16 %v5001
  %v5070 = vunpack.c.l.b16 %v5002
  %v5071 = vunpack.c.h.b16 %v5002
  %v5072 = vunpack.c.l.b16 %v5003
  %v5073 = vunpack.c.h.b16 %v5003
  %v5074 = vunpack.c.l.b16 %v5004
  %v5075 = vunpack.c.h.b16 %v5004
  %v5076 = vunpack.c.l.b16 %v5005
  %v5077 = vunpack.c.h.b16 %v5005
  %v5078 = vunpack.c.l.b16 %v5006
  %v5079 = vunpack.c.h.b16 %v5006
  %v5080 = vunpack.c.l.b16 %v5007
  %v5081 = vunpack.c.h.b16 %v5007
  %v5082 = vunpack.c.l.b16 %v5008
  %v5083 = vunpack.c.h.b16 %v5008
  %v5084 = vunpack.c.l.b16 %v5009
  %v5085 = vunpack.c.h.b16 %v5009
  %v5086 = vunpack.c.l.b16 %v5010
  %v5087 = vunpack.c.h.b16 %v5010
  %v5088 = vunpack.c.l.b16 %v5011
  %v5089 = vunpack.c.h.b16 %v5011
  %v5090 = vunpack.c.l.b16 %v5012
  %v5091 = vunpack.c.h.b16 %v5012
  %v5092 = vunpack.c.l.b16 %v5013
  %v5093 = vunpack.c.h.b16 %v5013
  %v5094 = vunpack.c.l.b16 %v5014
  %v5095 = vunpack.c.h.b16 %v5014
  %v5096 = vunpack.c.l.b16 %v5015
  %v5097 = vunpack.c.h.b16 %v5015
  %v5098 = vunpack.c.l.b16 %v5016
  %v5099 = vunpack.c.h.b16 %v5016
  %v5100 = vunpack.c.l.b16 %v5017
  %v5101 = vunpack.c.h.b16 %v5017
  %v5102 = vunpack.c.l.b16 %v5018
  %v5103 = vunpack.c.h.b16 %v5018
  %v5104 = vunpack.c.l.b16 %v5019
  %v5105 = vunpack.c.h.b16 %v5019
  %v5106 = vunpack.c.l.b16 %v5020
  %v5107 = vunpack.c.h.b16 %v5020
  %v5108 = vunpack.c.l.b16 %v5021
  %v5109 = vunpack.c.h.b16 %v5021
  %v5110 = vunpack.c.l.b16 %v5022
  %v5111 = vunpack.c.h.b16 %v5022
  %v5112 = vunpack.c.l.b16 %v5023
  %v5113 = vunpack.c.h.b16 %v5023
  %v5114 = vunpack.c.l.b16 %v5024
  %v5115 = vunpack.c.h.b16 %v5024
  %v5116 = vunpack.c.l.b16 %v5025
  %v5117 = vunpack.c.h.b16 %v5025
  %v5118 = vunpack.c.l.b16 %v5026
  %v5119 = vunpack.c.h.b16 %v5026
  %v5120 = vunpack.c.l.b16 %v5027
  %v5121 = vunpack.c.h.b16 %v5027
  %v5122 = vunpack.c.l.b16 %v5028
  %v5123 = vunpack.c.h.b16 %v5028
  %v5124 = vunpack.c.l.b16 %v5029
  %v5125 = vunpack.c.h.b16 %v5029
  %v5126 = vpack.c.b16 %v5064, %v5062
  %v5127 = vpack.c.b16 %v5065, %v5063
  %v5128 = vpack.c.b16 %v5068, %v5066
  %v5129 = vpack.c.b16 %v5069, %v5067
  %v5130 = vpack.c.b16 %v5072, %v5070
  %v5131 = vpack.c.b16 %v5073, %v5071
  %v5132 = vpack.c.b16 %v5076, %v5074
  %v5133 = vpack.c.b16 %v5077, %v5075
  %v5134 = vpack.c.b16 %v5080, %v5078
  %v5135 = vpack.c.b16 %v5081, %v5079
  %v5136 = vpack.c.b16 %v5084, %v5082
  %v5137 = vpack.c.b16 %v5085, %v5083
  %v5138 = vpack.c.b16 %v5088, %v5086
  %v5139 = vpack.c.b16 %v5089, %v5087
  %v5140 = vpack.c.b16 %v5092, %v5090
  %v5141 = vpack.c.b16 %v5093, %v5091
  %v5142 = vpack.c.b16 %v5096, %v5094
  %v5143 = vpack.c.b16 %v5097, %v5095
  %v5144 = vpack.c.b16 %v5100, %v5098
  %v5145 = vpack.c.b16 %v5101, %v5099
  %v5146 = vpack.c.b16 %v5104, %v5102
  %v5147 = vpack.c.b16 %v5105, %v5103
  %v5148 = vpack.c.b16 %v5108, %v5106
  %v5149 = vpack.c.b16 %v5109, %v5107
  %v5150 = vpack.c.b16 %v5112, %v5110
  %v5151 = vpack.c.b16 %v5113, %v5111
  %v5152 = vpack.c.b16 %v5116, %v5114
  %v5153 = vpack.c.b16 %v5117, %v5115
  %v5154 = vpack.c.b16 %v5120, %v5118
  %v5155 = vpack.c.b16 %v5121, %v5119
  %v5156 = vpack.c.b16 %v5124, %v5122
  %v5157 = vpack.c.b16 %v5125, %v5123
  %5190 = vmatprep.subr.bf16.mxu0 %v5127
  %5191 = vmatpush1.bf16.msra.mxu0 %v5126
  %5192 = vmatprep.subr.bf16.mxu0 %v5129
  %5193 = vmatpush1.bf16.msra.mxu0 %v5128
  %5194 = vmatprep.subr.bf16.mxu0 %v5131
  %5195 = vmatpush1.bf16.msra.mxu0 %v5130
  %5196 = vmatprep.subr.bf16.mxu0 %v5133
  %5197 = vmatpush1.bf16.msra.mxu0 %v5132
  %5198 = vmatprep.subr.bf16.mxu0 %v5135
  %5199 = vmatpush1.bf16.msra.mxu0 %v5134
  %5200 = vmatprep.subr.bf16.mxu0 %v5137
  %5201 = vmatpush1.bf16.msra.mxu0 %v5136
  %5202 = vmatprep.subr.bf16.mxu0 %v5139
  %5203 = vmatpush1.bf16.msra.mxu0 %v5138
  %5204 = vmatprep.subr.bf16.mxu0 %v5141
  %5205 = vmatpush1.bf16.msra.mxu0 %v5140
  %5206 = vmatprep.subr.bf16.mxu0 %v5143
  %5207 = vmatpush1.bf16.msra.mxu0 %v5142
  %5208 = vmatprep.subr.bf16.mxu0 %v5145
  %5209 = vmatpush1.bf16.msra.mxu0 %v5144
  %5210 = vmatprep.subr.bf16.mxu0 %v5147
  %5211 = vmatpush1.bf16.msra.mxu0 %v5146
  %5212 = vmatprep.subr.bf16.mxu0 %v5149
  %5213 = vmatpush1.bf16.msra.mxu0 %v5148
  %5214 = vmatprep.subr.bf16.mxu0 %v5151
  %5215 = vmatpush1.bf16.msra.mxu0 %v5150
  %5216 = vmatprep.subr.bf16.mxu0 %v5153
  %5217 = vmatpush1.bf16.msra.mxu0 %v5152
  %5218 = vmatprep.subr.bf16.mxu0 %v5155
  %5219 = vmatpush1.bf16.msra.mxu0 %v5154
  %5220 = vmatprep.subr.bf16.mxu0 %v5157
  %5221 = vmatpush1.bf16.msra.mxu0 %v5156
  %5222 = vmatprep.mubr.bf16.mxu0 %v4642
  %5223 = vmatmul.mubr.bf16.gmra.mrb[0].mxu0 %v4641
  %v5224 = vpop.f32.mrb[0].mxu0
  %v5225 = vadd.f32 0.0, %v5224
  %v5226 = vpop.f32.mrb[0].mxu0
  %v5227 = vadd.f32 0.0, %v5226
  %v5228 = vpop.f32.mrb[0].mxu0
  %v5229 = vadd.f32 0.0, %v5228
  %v5230 = vpop.f32.mrb[0].mxu0
  %v5231 = vadd.f32 0.0, %v5230
  %5232 = vmatprep.mubr.bf16.mxu0 %v4644
  %5233 = vmatmul.mubr.bf16.gmra.mrb[0].mxu0 %v4643
  %v5234 = vpop.f32.mrb[0].mxu0
  %v5235 = vadd.f32 0.0, %v5234
  %v5236 = vpop.f32.mrb[0].mxu0
  %v5237 = vadd.f32 0.0, %v5236
  %v5238 = vpop.f32.mrb[0].mxu0
  %v5239 = vpop.f32.mrb[0].mxu0
  %5240 = vdwg.mxu0
  %s5241 = scalar_lea.vmem %s53, 20
  %v5242 = vld [vmem:[%s5241] sm:$0xf]
  %v5243 = vld [vmem:[%s5241 + $0x4] sm:$0xf]
  %v5244 = vld [vmem:[%s5241 + $0x8] sm:$0xf]
  %v5245 = vld [vmem:[%s5241 + $0xc] sm:$0xf]
  %v5246 = vld [vmem:[%s5241 + $0x10] sm:$0xf]
  %v5247 = vpack.c.bf16 %v5229, %v5225
  %v5248 = vpack.c.bf16 %v5231, %v5227
  %v5249 = vpack.c.bf16 %v5235, %v5235
  %v5250 = vpack.c.bf16 %v5237, %v5237
  %s5251 = scalar_lea.vmem %s55, 512
  %v5252 = vld [vmem:[%s5251] sm:$0xff]
  %v5253 = vld [vmem:[%s5251 + $0x8] sm:$0xff]
  %v5254 = vld [vmem:[%s5251 + $0x10] sm:$0xff]
  %v5255 = vld [vmem:[%s5251 + $0x18] sm:$0xff]
  %v5256 = vld [vmem:[%s5251 + $0x20] sm:$0xff]
  %v5257 = vld [vmem:[%s5251 + $0x28] sm:$0xff]
  %v5258 = vld [vmem:[%s5251 + $0x30] sm:$0xff]
  %v5259 = vld [vmem:[%s5251 + $0x38] sm:$0xff]
  %v5260 = vld [vmem:[%s5251 + $0x40] sm:$0xff]
  %v5261 = vld [vmem:[%s5251 + $0x48] sm:$0xff]
  %v5262 = vld [vmem:[%s5251 + $0x50] sm:$0xff]
  %v5263 = vld [vmem:[%s5251 + $0x58] sm:$0xff]
  %v5264 = vld [vmem:[%s5251 + $0x60] sm:$0xff]
  %v5265 = vld [vmem:[%s5251 + $0x68] sm:$0xff]
  %v5266 = vld [vmem:[%s5251 + $0x70] sm:$0xff]
  %v5267 = vld [vmem:[%s5251 + $0x78] sm:$0xff]
  %v5268 = vld [vmem:[%s5251 + $0x80] sm:$0xff]
  %v5269 = vld [vmem:[%s5251 + $0x88] sm:$0xff]
  %v5270 = vld [vmem:[%s5251 + $0x90] sm:$0xff]
  %v5271 = vld [vmem:[%s5251 + $0x98] sm:$0xff]
  %v5272 = vld [vmem:[%s5251 + $0xa0] sm:$0xff]
  %v5273 = vld [vmem:[%s5251 + $0xa8] sm:$0xff]
  %v5274 = vld [vmem:[%s5251 + $0xb0] sm:$0xff]
  %v5275 = vld [vmem:[%s5251 + $0xb8] sm:$0xff]
  %v5276 = vld [vmem:[%s5251 + $0xc0] sm:$0xff]
  %v5277 = vld [vmem:[%s5251 + $0xc8] sm:$0xff]
  %v5278 = vld [vmem:[%s5251 + $0xd0] sm:$0xff]
  %v5279 = vld [vmem:[%s5251 + $0xd8] sm:$0xff]
  %v5280 = vld [vmem:[%s5251 + $0xe0] sm:$0xff]
  %v5281 = vld [vmem:[%s5251 + $0xe8] sm:$0xff]
  %v5282 = vld [vmem:[%s5251 + $0xf0] sm:$0xff]
  %v5283 = vld [vmem:[%s5251 + $0xf8] sm:$0xff]
  %v5316 = vunpack.c.l.b16 %v5252
  %v5317 = vunpack.c.h.b16 %v5252
  %v5318 = vunpack.c.l.b16 %v5253
  %v5319 = vunpack.c.h.b16 %v5253
  %v5320 = vunpack.c.l.b16 %v5254
  %v5321 = vunpack.c.h.b16 %v5254
  %v5322 = vunpack.c.l.b16 %v5255
  %v5323 = vunpack.c.h.b16 %v5255
  %v5324 = vunpack.c.l.b16 %v5256
  %v5325 = vunpack.c.h.b16 %v5256
  %v5326 = vunpack.c.l.b16 %v5257
  %v5327 = vunpack.c.h.b16 %v5257
  %v5328 = vunpack.c.l.b16 %v5258
  %v5329 = vunpack.c.h.b16 %v5258
  %v5330 = vunpack.c.l.b16 %v5259
  %v5331 = vunpack.c.h.b16 %v5259
  %v5332 = vunpack.c.l.b16 %v5260
  %v5333 = vunpack.c.h.b16 %v5260
  %v5334 = vunpack.c.l.b16 %v5261
  %v5335 = vunpack.c.h.b16 %v5261
  %v5336 = vunpack.c.l.b16 %v5262
  %v5337 = vunpack.c.h.b16 %v5262
  %v5338 = vunpack.c.l.b16 %v5263
  %v5339 = vunpack.c.h.b16 %v5263
  %v5340 = vunpack.c.l.b16 %v5264
  %v5341 = vunpack.c.h.b16 %v5264
  %v5342 = vunpack.c.l.b16 %v5265
  %v5343 = vunpack.c.h.b16 %v5265
  %v5344 = vunpack.c.l.b16 %v5266
  %v5345 = vunpack.c.h.b16 %v5266
  %v5346 = vunpack.c.l.b16 %v5267
  %v5347 = vunpack.c.h.b16 %v5267
  %v5348 = vunpack.c.l.b16 %v5268
  %v5349 = vunpack.c.h.b16 %v5268
  %v5350 = vunpack.c.l.b16 %v5269
  %v5351 = vunpack.c.h.b16 %v5269
  %v5352 = vunpack.c.l.b16 %v5270
  %v5353 = vunpack.c.h.b16 %v5270
  %v5354 = vunpack.c.l.b16 %v5271
  %v5355 = vunpack.c.h.b16 %v5271
  %v5356 = vunpack.c.l.b16 %v5272
  %v5357 = vunpack.c.h.b16 %v5272
  %v5358 = vunpack.c.l.b16 %v5273
  %v5359 = vunpack.c.h.b16 %v5273
  %v5360 = vunpack.c.l.b16 %v5274
  %v5361 = vunpack.c.h.b16 %v5274
  %v5362 = vunpack.c.l.b16 %v5275
  %v5363 = vunpack.c.h.b16 %v5275
  %v5364 = vunpack.c.l.b16 %v5276
  %v5365 = vunpack.c.h.b16 %v5276
  %v5366 = vunpack.c.l.b16 %v5277
  %v5367 = vunpack.c.h.b16 %v5277
  %v5368 = vunpack.c.l.b16 %v5278
  %v5369 = vunpack.c.h.b16 %v5278
  %v5370 = vunpack.c.l.b16 %v5279
  %v5371 = vunpack.c.h.b16 %v5279
  %v5372 = vunpack.c.l.b16 %v5280
  %v5373 = vunpack.c.h.b16 %v5280
  %v5374 = vunpack.c.l.b16 %v5281
  %v5375 = vunpack.c.h.b16 %v5281
  %v5376 = vunpack.c.l.b16 %v5282
  %v5377 = vunpack.c.h.b16 %v5282
  %v5378 = vunpack.c.l.b16 %v5283
  %v5379 = vunpack.c.h.b16 %v5283
  %v5380 = vpack.c.b16 %v5318, %v5316
  %v5381 = vpack.c.b16 %v5319, %v5317
  %v5382 = vpack.c.b16 %v5322, %v5320
  %v5383 = vpack.c.b16 %v5323, %v5321
  %v5384 = vpack.c.b16 %v5326, %v5324
  %v5385 = vpack.c.b16 %v5327, %v5325
  %v5386 = vpack.c.b16 %v5330, %v5328
  %v5387 = vpack.c.b16 %v5331, %v5329
  %v5388 = vpack.c.b16 %v5334, %v5332
  %v5389 = vpack.c.b16 %v5335, %v5333
  %v5390 = vpack.c.b16 %v5338, %v5336
  %v5391 = vpack.c.b16 %v5339, %v5337
  %v5392 = vpack.c.b16 %v5342, %v5340
  %v5393 = vpack.c.b16 %v5343, %v5341
  %v5394 = vpack.c.b16 %v5346, %v5344
  %v5395 = vpack.c.b16 %v5347, %v5345
  %v5396 = vpack.c.b16 %v5350, %v5348
  %v5397 = vpack.c.b16 %v5351, %v5349
  %v5398 = vpack.c.b16 %v5354, %v5352
  %v5399 = vpack.c.b16 %v5355, %v5353
  %v5400 = vpack.c.b16 %v5358, %v5356
  %v5401 = vpack.c.b16 %v5359, %v5357
  %v5402 = vpack.c.b16 %v5362, %v5360
  %v5403 = vpack.c.b16 %v5363, %v5361
  %v5404 = vpack.c.b16 %v5366, %v5364
  %v5405 = vpack.c.b16 %v5367, %v5365
  %v5406 = vpack.c.b16 %v5370, %v5368
  %v5407 = vpack.c.b16 %v5371, %v5369
  %v5408 = vpack.c.b16 %v5374, %v5372
  %v5409 = vpack.c.b16 %v5375, %v5373
  %v5410 = vpack.c.b16 %v5378, %v5376
  %v5411 = vpack.c.b16 %v5379, %v5377
  %5444 = vmatprep.subr.bf16.mxu0 %v5381
  %5445 = vmatpush1.bf16.msra.mxu0 %v5380
  %5446 = vmatprep.subr.bf16.mxu0 %v5383
  %5447 = vmatpush1.bf16.msra.mxu0 %v5382
  %5448 = vmatprep.subr.bf16.mxu0 %v5385
  %5449 = vmatpush1.bf16.msra.mxu0 %v5384
  %5450 = vmatprep.subr.bf16.mxu0 %v5387
  %5451 = vmatpush1.bf16.msra.mxu0 %v5386
  %5452 = vmatprep.subr.bf16.mxu0 %v5389
  %5453 = vmatpush1.bf16.msra.mxu0 %v5388
  %5454 = vmatprep.subr.bf16.mxu0 %v5391
  %5455 = vmatpush1.bf16.msra.mxu0 %v5390
  %5456 = vmatprep.subr.bf16.mxu0 %v5393
  %5457 = vmatpush1.bf16.msra.mxu0 %v5392
  %5458 = vmatprep.subr.bf16.mxu0 %v5395
  %5459 = vmatpush1.bf16.msra.mxu0 %v5394
  %5460 = vmatprep.subr.bf16.mxu0 %v5397
  %5461 = vmatpush1.bf16.msra.mxu0 %v5396
  %5462 = vmatprep.subr.bf16.mxu0 %v5399
  %5463 = vmatpush1.bf16.msra.mxu0 %v5398
  %5464 = vmatprep.subr.bf16.mxu0 %v5401
  %5465 = vmatpush1.bf16.msra.mxu0 %v5400
  %5466 = vmatprep.subr.bf16.mxu0 %v5403
  %5467 = vmatpush1.bf16.msra.mxu0 %v5402
  %5468 = vmatprep.subr.bf16.mxu0 %v5405
  %5469 = vmatpush1.bf16.msra.mxu0 %v5404
  %5470 = vmatprep.subr.bf16.mxu0 %v5407
  %5471 = vmatpush1.bf16.msra.mxu0 %v5406
  %5472 = vmatprep.subr.bf16.mxu0 %v5409
  %5473 = vmatpush1.bf16.msra.mxu0 %v5408
  %5474 = vmatprep.subr.bf16.mxu0 %v5411
  %5475 = vmatpush1.bf16.msra.mxu0 %v5410
  %5476 = vmatprep.mubr.bf16.mxu0 %v4642
  %5477 = vmatmul.mubr.bf16.gmra.mrb[0].mxu0 %v4641
  %v5478 = vpop.f32.mrb[0].mxu0
  %v5479 = vadd.f32 0.0, %v5478
  %v5480 = vpop.f32.mrb[0].mxu0
  %v5481 = vadd.f32 0.0, %v5480
  %v5482 = vpop.f32.mrb[0].mxu0
  %v5483 = vadd.f32 0.0, %v5482
  %v5484 = vpop.f32.mrb[0].mxu0
  %v5485 = vadd.f32 0.0, %v5484
  %5486 = vmatprep.mubr.bf16.mxu0 %v4644
  %5487 = vmatmul.mubr.bf16.gmra.mrb[0].mxu0 %v4643
  %v5488 = vpop.f32.mrb[0].mxu0
  %v5489 = vadd.f32 0.0, %v5488
  %v5490 = vpop.f32.mrb[0].mxu0
  %v5491 = vadd.f32 0.0, %v5490
  %v5492 = vpop.f32.mrb[0].mxu0
  %v5493 = vpop.f32.mrb[0].mxu0
  %5494 = vdwg.mxu0
  %s5495 = scalar_lea.vmem %s53, 40
  %v5496 = vld [vmem:[%s5495] sm:$0xf]
  %v5497 = vld [vmem:[%s5495 + $0x4] sm:$0xf]
  %v5498 = vld [vmem:[%s5495 + $0x8] sm:$0xf]
  %v5499 = vld [vmem:[%s5495 + $0xc] sm:$0xf]
  %v5500 = vld [vmem:[%s5495 + $0x10] sm:$0xf]
  %v5501 = vpack.c.bf16 %v5483, %v5479
  %v5502 = vpack.c.bf16 %v5485, %v5481
  %v5503 = vpack.c.bf16 %v5489, %v5489
  %v5504 = vpack.c.bf16 %v5491, %v5491
  %v5510 = vunpack.c.l.b16 %v5496
  %v5511 = vunpack.c.l.b16 %v5497
  %v5512 = vunpack.c.l.b16 %v5498
  %v5513 = vunpack.c.l.b16 %v5499
  %v5514 = vunpack.c.l.b16 %v5500
  %v5515 = vpack.c.b16 %v5511, %v5510
  %v5516 = vpack.c.b16 %v5513, %v5512
  %v5517 = vpack.c.b16 %v5514, %v5514
  %v5519 = vsel %vm4920, %v5515, 0
  %v5522 = vsel %vm4920, %v5516, 0
  %v5525 = vsel %vm4920, %v5517, 0
  %v5528 = vsel %vm1680, %v5503, 0
  %v5531 = vsel %vm1680, %v5504, 0
  %5533 = vmatprep.subr.bf16.mxu0 %v5502
  %5534 = vmatpush1.bf16.msra.mxu0 %v5501
  %5535 = vmatprep.subr.bf16.mxu0 %v5531
  %5536 = vmatpush1.bf16.msra.mxu0 %v5528
  %5537 = vmatprep.subr.bf16.mxu0 0
  %5538 = vmatpush1.bf16.msra.mxu0 0
  %5539 = vmatprep.subr.bf16.mxu0 0
  %5540 = vmatpush1.bf16.msra.mxu0 0
  %5541 = vmatprep.subr.bf16.mxu0 0
  %5542 = vmatpush1.bf16.msra.mxu0 0
  %5543 = vmatprep.subr.bf16.mxu0 0
  %5544 = vmatpush1.bf16.msra.mxu0 0
  %5545 = vmatprep.subr.bf16.mxu0 0
  %5546 = vmatpush1.bf16.msra.mxu0 0
  %5547 = vmatprep.subr.bf16.mxu0 0
  %5548 = vmatpush1.bf16.msra.mxu0 0
  %5549 = vmatprep.subr.bf16.mxu0 0
  %5550 = vmatpush1.bf16.msra.mxu0 0
  %5551 = vmatprep.subr.bf16.mxu0 0
  %5552 = vmatpush1.bf16.msra.mxu0 0
  %5553 = vmatprep.subr.bf16.mxu0 0
  %5554 = vmatpush1.bf16.msra.mxu0 0
  %5555 = vmatprep.subr.bf16.mxu0 0
  %5556 = vmatpush1.bf16.msra.mxu0 0
  %5557 = vmatprep.subr.bf16.mxu0 0
  %5558 = vmatpush1.bf16.msra.mxu0 0
  %5559 = vmatprep.subr.bf16.mxu0 0
  %5560 = vmatpush1.bf16.msra.mxu0 0
  %5561 = vmatprep.subr.bf16.mxu0 0
  %5562 = vmatpush1.bf16.msra.mxu0 0
  %5563 = vmatprep.subr.bf16.mxu0 0
  %5564 = vmatpush1.bf16.msra.mxu0 0
  %5565 = vmatprep.mubr.bf16.mxu0 0
  %5566 = vmatmul.mubr.bf16.gmra.mrb[0].mxu0 %v5519
  %v5567 = vpop.f32.mrb[0].mxu0
  %v5568 = vadd.f32 0.0, %v5567
  %v5569 = vpop.f32.mrb[0].mxu0
  %v5570 = vadd.f32 0.0, %v5569
  %v5571 = vpop.f32.mrb[0].mxu0
  %v5572 = vadd.f32 0.0, %v5571
  %v5573 = vpop.f32.mrb[0].mxu0
  %v5574 = vadd.f32 0.0, %v5573
  %5575 = vmatprep.mubr.bf16.mxu0 0
  %5576 = vmatmul.mubr.bf16.gmra.mrb[0].mxu0 %v5522
  %v5577 = vpop.f32.mrb[0].mxu0
  %v5578 = vadd.f32 0.0, %v5577
  %v5579 = vpop.f32.mrb[0].mxu0
  %v5580 = vadd.f32 0.0, %v5579
  %v5581 = vpop.f32.mrb[0].mxu0
  %v5582 = vadd.f32 0.0, %v5581
  %v5583 = vpop.f32.mrb[0].mxu0
  %v5584 = vadd.f32 0.0, %v5583
  %5585 = vmatprep.mubr.bf16.mxu0 0
  %5586 = vmatmul.mubr.bf16.gmra.mrb[0].mxu0 %v5525
  %v5587 = vpop.f32.mrb[0].mxu0
  %v5588 = vadd.f32 0.0, %v5587
  %v5589 = vpop.f32.mrb[0].mxu0
  %v5590 = vadd.f32 0.0, %v5589
  %v5591 = vpop.f32.mrb[0].mxu0
  %v5592 = vpop.f32.mrb[0].mxu0
  %5593 = vdwg.mxu0
  %v5594 = vadd.f32 %v4645, %v4971
  %v5595 = vadd.f32 %v4646, %v4973
  %v5596 = vadd.f32 %v4647, %v4975
  %v5597 = vadd.f32 %v4648, %v4977
  %v5598 = vadd.f32 %v4649, %v4981
  %v5599 = vadd.f32 %v4650, %v4983
  %v5600 = vadd.f32 %v4651, %v4985
  %v5601 = vadd.f32 %v4652, %v4987
  %v5602 = vadd.f32 %v4653, %v4991
  %v5603 = vadd.f32 %v4654, %v4993
  %v5609 = vunpack.c.l.b16 %v5242
  %v5610 = vunpack.c.l.b16 %v5243
  %v5611 = vunpack.c.l.b16 %v5244
  %v5612 = vunpack.c.l.b16 %v5245
  %v5613 = vunpack.c.l.b16 %v5246
  %v5614 = vpack.c.b16 %v5610, %v5609
  %v5615 = vpack.c.b16 %v5612, %v5611
  %v5616 = vpack.c.b16 %v5613, %v5613
  %v5618 = vsel %vm4920, %v5614, 0
  %v5621 = vsel %vm4920, %v5615, 0
  %v5624 = vsel %vm4920, %v5616, 0
  %v5627 = vsel %vm1680, %v5249, 0
  %v5630 = vsel %vm1680, %v5250, 0
  %5632 = vmatprep.subr.bf16.mxu0 %v5248
  %5633 = vmatpush1.bf16.msra.mxu0 %v5247
  %5634 = vmatprep.subr.bf16.mxu0 %v5630
  %5635 = vmatpush1.bf16.msra.mxu0 %v5627
  %5636 = vmatprep.subr.bf16.mxu0 0
  %5637 = vmatpush1.bf16.msra.mxu0 0
  %5638 = vmatprep.subr.bf16.mxu0 0
  %5639 = vmatpush1.bf16.msra.mxu0 0
  %5640 = vmatprep.subr.bf16.mxu0 0
  %5641 = vmatpush1.bf16.msra.mxu0 0
  %5642 = vmatprep.subr.bf16.mxu0 0
  %5643 = vmatpush1.bf16.msra.mxu0 0
  %5644 = vmatprep.subr.bf16.mxu0 0
  %5645 = vmatpush1.bf16.msra.mxu0 0
  %5646 = vmatprep.subr.bf16.mxu0 0
  %5647 = vmatpush1.bf16.msra.mxu0 0
  %5648 = vmatprep.subr.bf16.mxu0 0
  %5649 = vmatpush1.bf16.msra.mxu0 0
  %5650 = vmatprep.subr.bf16.mxu0 0
  %5651 = vmatpush1.bf16.msra.mxu0 0
  %5652 = vmatprep.subr.bf16.mxu0 0
  %5653 = vmatpush1.bf16.msra.mxu0 0
  %5654 = vmatprep.subr.bf16.mxu0 0
  %5655 = vmatpush1.bf16.msra.mxu0 0
  %5656 = vmatprep.subr.bf16.mxu0 0
  %5657 = vmatpush1.bf16.msra.mxu0 0
  %5658 = vmatprep.subr.bf16.mxu0 0
  %5659 = vmatpush1.bf16.msra.mxu0 0
  %5660 = vmatprep.subr.bf16.mxu0 0
  %5661 = vmatpush1.bf16.msra.mxu0 0
  %5662 = vmatprep.subr.bf16.mxu0 0
  %5663 = vmatpush1.bf16.msra.mxu0 0
  %5664 = vmatprep.mubr.bf16.mxu0 0
  %5665 = vmatmul.mubr.bf16.gmra.mrb[0].mxu0 %v5618
  %v5666 = vpop.f32.mrb[0].mxu0
  %v5667 = vadd.f32 %v5568, %v5666
  %v5668 = vpop.f32.mrb[0].mxu0
  %v5669 = vadd.f32 %v5570, %v5668
  %v5670 = vpop.f32.mrb[0].mxu0
  %v5671 = vadd.f32 %v5572, %v5670
  %v5672 = vpop.f32.mrb[0].mxu0
  %v5673 = vadd.f32 %v5574, %v5672
  %5674 = vmatprep.mubr.bf16.mxu0 0
  %5675 = vmatmul.mubr.bf16.gmra.mrb[0].mxu0 %v5621
  %v5676 = vpop.f32.mrb[0].mxu0
  %v5677 = vadd.f32 %v5578, %v5676
  %v5678 = vpop.f32.mrb[0].mxu0
  %v5679 = vadd.f32 %v5580, %v5678
  %v5680 = vpop.f32.mrb[0].mxu0
  %v5681 = vadd.f32 %v5582, %v5680
  %v5682 = vpop.f32.mrb[0].mxu0
  %v5683 = vadd.f32 %v5584, %v5682
  %5684 = vmatprep.mubr.bf16.mxu0 0
  %5685 = vmatmul.mubr.bf16.gmra.mrb[0].mxu0 %v5624
  %v5686 = vpop.f32.mrb[0].mxu0
  %v5687 = vadd.f32 %v5588, %v5686
  %v5688 = vpop.f32.mrb[0].mxu0
  %v5689 = vadd.f32 %v5590, %v5688
  %v5690 = vpop.f32.mrb[0].mxu0
  %v5691 = vpop.f32.mrb[0].mxu0
  %5692 = vdwg.mxu0
  %v5693 = vadd.f32 %v5594, %v5667
  %v5694 = vadd.f32 %v5595, %v5669
  %v5695 = vadd.f32 %v5596, %v5671
  %v5696 = vadd.f32 %v5597, %v5673
  %v5697 = vadd.f32 %v5598, %v5677
  %v5698 = vadd.f32 %v5599, %v5679
  %v5699 = vadd.f32 %v5600, %v5681
  %v5700 = vadd.f32 %v5601, %v5683
  %v5701 = vadd.f32 %v5602, %v5687
  %v5702 = vadd.f32 %v5603, %v5689
  %vm5703 = vcmp.ge.f32.partialorder %v5693, 0.0
  %vm5704 = vcmp.ge.f32.partialorder %v5694, 0.0
  %vm5705 = vcmp.ge.f32.partialorder %v5695, 0.0
  %vm5706 = vcmp.ge.f32.partialorder %v5696, 0.0
  %vm5707 = vcmp.ge.f32.partialorder %v5697, 0.0
  %vm5708 = vcmp.ge.f32.partialorder %v5698, 0.0
  %vm5709 = vcmp.ge.f32.partialorder %v5699, 0.0
  %vm5710 = vcmp.ge.f32.partialorder %v5700, 0.0
  %vm5711 = vcmp.ge.f32.partialorder %v5701, 0.0
  %vm5712 = vcmp.ge.f32.partialorder %v5702, 0.0
  %v5713 = vmul.f32 %v5693, 0.01
  %v5714 = vmul.f32 %v5694, 0.01
  %v5715 = vmul.f32 %v5695, 0.01
  %v5716 = vmul.f32 %v5696, 0.01
  %v5717 = vmul.f32 %v5697, 0.01
  %v5718 = vmul.f32 %v5698, 0.01
  %v5719 = vmul.f32 %v5699, 0.01
  %v5720 = vmul.f32 %v5700, 0.01
  %v5721 = vmul.f32 %v5701, 0.01
  %v5722 = vmul.f32 %v5702, 0.01
  %v5723 = vsel %vm5703, %v5693, %v5713
  %v5724 = vsel %vm5704, %v5694, %v5714
  %v5725 = vsel %vm5705, %v5695, %v5715
  %v5726 = vsel %vm5706, %v5696, %v5716
  %v5727 = vsel %vm5707, %v5697, %v5717
  %v5728 = vsel %vm5708, %v5698, %v5718
  %v5729 = vsel %vm5709, %v5699, %v5719
  %v5730 = vsel %vm5710, %v5700, %v5720
  %v5731 = vsel %vm5711, %v5701, %v5721
  %v5732 = vsel %vm5712, %v5702, %v5722
  %v5733 = vpack.c.bf16 %v5725, %v5723
  %v5734 = vpack.c.bf16 %v5726, %v5724
  %v5735 = vpack.c.bf16 %v5729, %v5727
  %v5736 = vpack.c.bf16 %v5730, %v5728
  %v5737 = vpack.c.bf16 %v5731, %v5731
  %v5738 = vpack.c.bf16 %v5732, %v5732
  %v5739 = vld [vmem:[%s63] sm:$0xff]
  %v5740 = vld [vmem:[%s63 + $0x8] sm:$0xff]
  %v5741 = vld [vmem:[%s63 + $0x10] sm:$0xff]
  %v5742 = vld [vmem:[%s63 + $0x18] sm:$0xff]
  %v5743 = vld [vmem:[%s63 + $0x20] sm:$0xff]
  %v5744 = vld [vmem:[%s61] sm:$0xf]
  %v5745 = vld [vmem:[%s61 + $0x4] sm:$0xf]
  %v5746 = vld [vmem:[%s61 + $0x8] sm:$0xf]
  %v5747 = vld [vmem:[%s61 + $0xc] sm:$0xf]
  %v5748 = vld [vmem:[%s61 + $0x10] sm:$0xf]
  %v5749 = vld [vmem:[%s61 + $0x14] sm:$0xf]
  %v5750 = vld [vmem:[%s61 + $0x18] sm:$0xf]
  %v5751 = vld [vmem:[%s61 + $0x1c] sm:$0xf]
  %v5752 = vld [vmem:[%s61 + $0x20] sm:$0xf]
  %v5753 = vld [vmem:[%s61 + $0x24] sm:$0xf]
  %v5754 = vld [vmem:[%s61 + $0x28] sm:$0xf]
  %v5755 = vld [vmem:[%s61 + $0x2c] sm:$0xf]
  %v5756 = vld [vmem:[%s61 + $0x30] sm:$0xf]
  %v5757 = vld [vmem:[%s61 + $0x34] sm:$0xf]
  %v5758 = vld [vmem:[%s61 + $0x38] sm:$0xf]
  %v5759 = vld [vmem:[%s61 + $0x3c] sm:$0xf]
  %v5760 = vld [vmem:[%s61 + $0x40] sm:$0xf]
  %v5761 = vld [vmem:[%s61 + $0x44] sm:$0xf]
  %v5762 = vld [vmem:[%s61 + $0x48] sm:$0xf]
  %v5763 = vld [vmem:[%s61 + $0x4c] sm:$0xf]
  %v5764 = vld [vmem:[%s61 + $0x50] sm:$0xf]
  %v5765 = vld [vmem:[%s61 + $0x54] sm:$0xf]
  %v5766 = vld [vmem:[%s61 + $0x58] sm:$0xf]
  %v5767 = vld [vmem:[%s61 + $0x5c] sm:$0xf]
  %v5768 = vld [vmem:[%s61 + $0x60] sm:$0xf]
  %v5769 = vld [vmem:[%s61 + $0x64] sm:$0xf]
  %v5770 = vld [vmem:[%s61 + $0x68] sm:$0xf]
  %v5771 = vld [vmem:[%s61 + $0x6c] sm:$0xf]
  %v5772 = vld [vmem:[%s61 + $0x70] sm:$0xf]
  %v5773 = vld [vmem:[%s61 + $0x74] sm:$0xf]
  %v5774 = vld [vmem:[%s61 + $0x78] sm:$0xf]
  %v5775 = vld [vmem:[%s61 + $0x7c] sm:$0xf]
  %v5808 = vunpack.c.l.b16 %v5744
  %v5809 = vunpack.c.l.b16 %v5745
  %v5810 = vunpack.c.l.b16 %v5746
  %v5811 = vunpack.c.l.b16 %v5747
  %v5812 = vunpack.c.l.b16 %v5748
  %v5813 = vunpack.c.l.b16 %v5749
  %v5814 = vunpack.c.l.b16 %v5750
  %v5815 = vunpack.c.l.b16 %v5751
  %v5816 = vunpack.c.l.b16 %v5752
  %v5817 = vunpack.c.l.b16 %v5753
  %v5818 = vunpack.c.l.b16 %v5754
  %v5819 = vunpack.c.l.b16 %v5755
  %v5820 = vunpack.c.l.b16 %v5756
  %v5821 = vunpack.c.l.b16 %v5757
  %v5822 = vunpack.c.l.b16 %v5758
  %v5823 = vunpack.c.l.b16 %v5759
  %v5824 = vunpack.c.l.b16 %v5760
  %v5825 = vunpack.c.l.b16 %v5761
  %v5826 = vunpack.c.l.b16 %v5762
  %v5827 = vunpack.c.l.b16 %v5763
  %v5828 = vunpack.c.l.b16 %v5764
  %v5829 = vunpack.c.l.b16 %v5765
  %v5830 = vunpack.c.l.b16 %v5766
  %v5831 = vunpack.c.l.b16 %v5767
  %v5832 = vunpack.c.l.b16 %v5768
  %v5833 = vunpack.c.l.b16 %v5769
  %v5834 = vunpack.c.l.b16 %v5770
  %v5835 = vunpack.c.l.b16 %v5771
  %v5836 = vunpack.c.l.b16 %v5772
  %v5837 = vunpack.c.l.b16 %v5773
  %v5838 = vunpack.c.l.b16 %v5774
  %v5839 = vunpack.c.l.b16 %v5775
  %v5840 = vpack.c.b16 %v5809, %v5808
  %v5841 = vpack.c.b16 %v5811, %v5810
  %v5842 = vpack.c.b16 %v5813, %v5812
  %v5843 = vpack.c.b16 %v5815, %v5814
  %v5844 = vpack.c.b16 %v5817, %v5816
  %v5845 = vpack.c.b16 %v5819, %v5818
  %v5846 = vpack.c.b16 %v5821, %v5820
  %v5847 = vpack.c.b16 %v5823, %v5822
  %v5848 = vpack.c.b16 %v5825, %v5824
  %v5849 = vpack.c.b16 %v5827, %v5826
  %v5850 = vpack.c.b16 %v5829, %v5828
  %v5851 = vpack.c.b16 %v5831, %v5830
  %v5852 = vpack.c.b16 %v5833, %v5832
  %v5853 = vpack.c.b16 %v5835, %v5834
  %v5854 = vpack.c.b16 %v5837, %v5836
  %v5855 = vpack.c.b16 %v5839, %v5838
  %5872 = vmatprep.subr.bf16.mxu0 0
  %5873 = vmatpush1.bf16.msra.mxu0 %v5840
  %5874 = vmatprep.subr.bf16.mxu0 0
  %5875 = vmatpush1.bf16.msra.mxu0 %v5841
  %5876 = vmatprep.subr.bf16.mxu0 0
  %5877 = vmatpush1.bf16.msra.mxu0 %v5842
  %5878 = vmatprep.subr.bf16.mxu0 0
  %5879 = vmatpush1.bf16.msra.mxu0 %v5843
  %5880 = vmatprep.subr.bf16.mxu0 0
  %5881 = vmatpush1.bf16.msra.mxu0 %v5844
  %5882 = vmatprep.subr.bf16.mxu0 0
  %5883 = vmatpush1.bf16.msra.mxu0 %v5845
  %5884 = vmatprep.subr.bf16.mxu0 0
  %5885 = vmatpush1.bf16.msra.mxu0 %v5846
  %5886 = vmatprep.subr.bf16.mxu0 0
  %5887 = vmatpush1.bf16.msra.mxu0 %v5847
  %5888 = vmatprep.subr.bf16.mxu0 0
  %5889 = vmatpush1.bf16.msra.mxu0 %v5848
  %5890 = vmatprep.subr.bf16.mxu0 0
  %5891 = vmatpush1.bf16.msra.mxu0 %v5849
  %5892 = vmatprep.subr.bf16.mxu0 0
  %5893 = vmatpush1.bf16.msra.mxu0 %v5850
  %5894 = vmatprep.subr.bf16.mxu0 0
  %5895 = vmatpush1.bf16.msra.mxu0 %v5851
  %5896 = vmatprep.subr.bf16.mxu0 0
  %5897 = vmatpush1.bf16.msra.mxu0 %v5852
  %5898 = vmatprep.subr.bf16.mxu0 0
  %5899 = vmatpush1.bf16.msra.mxu0 %v5853
  %5900 = vmatprep.subr.bf16.mxu0 0
  %5901 = vmatpush1.bf16.msra.mxu0 %v5854
  %5902 = vmatprep.subr.bf16.mxu0 0
  %5903 = vmatpush1.bf16.msra.mxu0 %v5855
  %5904 = vmatprep.mubr.bf16.mxu0 %v5734
  %5905 = vmatmul.mubr.bf16.gmra.mrb[0].mxu0 %v5733
  %v5906 = vpop.f32.mrb[0].mxu0
  %v5907 = vadd.f32 0.0, %v5906
  %v5908 = vpop.f32.mrb[0].mxu0
  %v5909 = vpop.f32.mrb[0].mxu0
  %v5910 = vadd.f32 0.0, %v5909
  %v5911 = vpop.f32.mrb[0].mxu0
  %5912 = vmatprep.mubr.bf16.mxu0 %v5736
  %5913 = vmatmul.mubr.bf16.gmra.mrb[0].mxu0 %v5735
  %v5914 = vpop.f32.mrb[0].mxu0
  %v5915 = vadd.f32 0.0, %v5914
  %v5916 = vpop.f32.mrb[0].mxu0
  %v5917 = vpop.f32.mrb[0].mxu0
  %v5918 = vadd.f32 0.0, %v5917
  %v5919 = vpop.f32.mrb[0].mxu0
  %5920 = vmatprep.mubr.bf16.mxu0 %v5738
  %5921 = vmatmul.mubr.bf16.gmra.mrb[0].mxu0 %v5737
  %v5922 = vpop.f32.mrb[0].mxu0
  %v5923 = vadd.f32 0.0, %v5922
  %v5924 = vpop.f32.mrb[0].mxu0
  %v5925 = vpop.f32.mrb[0].mxu0
  %v5926 = vpop.f32.mrb[0].mxu0
  %5927 = vdwg.mxu0
  %v5928 = vld [vmem:[%s59] sm:$0xf]
  %v5929 = vld [vmem:[%s59 + $0x4] sm:$0xf]
  %v5930 = vld [vmem:[%s59 + $0x8] sm:$0xf]
  %v5931 = vld [vmem:[%s59 + $0xc] sm:$0xf]
  %v5932 = vld [vmem:[%s59 + $0x10] sm:$0xf]
  %v5933 = vpack.c.bf16 %v5910, %v5907
  %v5934 = vpack.c.bf16 %v5918, %v5915
  %v5935 = vpack.c.bf16 %v5923, %v5923
  %v5941 = vunpack.c.l.b16 %v5928
  %v5942 = vunpack.c.l.b16 %v5929
  %v5943 = vunpack.c.l.b16 %v5930
  %v5944 = vunpack.c.l.b16 %v5931
  %v5945 = vunpack.c.l.b16 %v5932
  %v5946 = vpack.c.b16 %v5942, %v5941
  %v5947 = vpack.c.b16 %v5944, %v5943
  %v5948 = vpack.c.b16 %v5945, %v5945
  %vm5949 = vcmask 326656
  %v5951 = vsel %vm5949, %v5946, 0
  %v5954 = vsel %vm5949, %v5947, 0
  %v5957 = vsel %vm5949, %v5948, 0
  %v5960 = vsel %vm1680, %v5935, 0
  %5962 = vmatprep.subr.bf16.mxu0 0
  %5963 = vmatpush1.bf16.msra.mxu0 %v5933
  %5964 = vmatprep.subr.bf16.mxu0 0
  %5965 = vmatpush1.bf16.msra.mxu0 %v5934
  %5966 = vmatprep.subr.bf16.mxu0 0
  %5967 = vmatpush1.bf16.msra.mxu0 %v5960
  %5968 = vmatprep.subr.bf16.mxu0 0
  %5969 = vmatpush1.bf16.msra.mxu0 0
  %5970 = vmatprep.subr.bf16.mxu0 0
  %5971 = vmatpush1.bf16.msra.mxu0 0
  %5972 = vmatprep.subr.bf16.mxu0 0
  %5973 = vmatpush1.bf16.msra.mxu0 0
  %5974 = vmatprep.subr.bf16.mxu0 0
  %5975 = vmatpush1.bf16.msra.mxu0 0
  %5976 = vmatprep.subr.bf16.mxu0 0
  %5977 = vmatpush1.bf16.msra.mxu0 0
  %5978 = vmatprep.subr.bf16.mxu0 0
  %5979 = vmatpush1.bf16.msra.mxu0 0
  %5980 = vmatprep.subr.bf16.mxu0 0
  %5981 = vmatpush1.bf16.msra.mxu0 0
  %5982 = vmatprep.subr.bf16.mxu0 0
  %5983 = vmatpush1.bf16.msra.mxu0 0
  %5984 = vmatprep.subr.bf16.mxu0 0
  %5985 = vmatpush1.bf16.msra.mxu0 0
  %5986 = vmatprep.subr.bf16.mxu0 0
  %5987 = vmatpush1.bf16.msra.mxu0 0
  %5988 = vmatprep.subr.bf16.mxu0 0
  %5989 = vmatpush1.bf16.msra.mxu0 0
  %5990 = vmatprep.subr.bf16.mxu0 0
  %5991 = vmatpush1.bf16.msra.mxu0 0
  %5992 = vmatprep.subr.bf16.mxu0 0
  %5993 = vmatpush1.bf16.msra.mxu0 0
  %5994 = vmatprep.mubr.bf16.mxu0 0
  %5995 = vmatmul.mubr.bf16.gmra.mrb[0].mxu0 %v5951
  %v5996 = vpop.f32.mrb[0].mxu0
  %v5997 = vadd.f32 0.0, %v5996
  %v5998 = vpop.f32.mrb[0].mxu0
  %v5999 = vpop.f32.mrb[0].mxu0
  %v6000 = vadd.f32 0.0, %v5999
  %v6001 = vpop.f32.mrb[0].mxu0
  %6002 = vmatprep.mubr.bf16.mxu0 0
  %6003 = vmatmul.mubr.bf16.gmra.mrb[0].mxu0 %v5954
  %v6004 = vpop.f32.mrb[0].mxu0
  %v6005 = vadd.f32 0.0, %v6004
  %v6006 = vpop.f32.mrb[0].mxu0
  %v6007 = vpop.f32.mrb[0].mxu0
  %v6008 = vadd.f32 0.0, %v6007
  %v6009 = vpop.f32.mrb[0].mxu0
  %6010 = vmatprep.mubr.bf16.mxu0 0
  %6011 = vmatmul.mubr.bf16.gmra.mrb[0].mxu0 %v5957
  %v6012 = vpop.f32.mrb[0].mxu0
  %v6013 = vadd.f32 0.0, %v6012
  %v6014 = vpop.f32.mrb[0].mxu0
  %v6015 = vpop.f32.mrb[0].mxu0
  %v6016 = vpop.f32.mrb[0].mxu0
  %6017 = vdwg.mxu0
  %s6018 = scalar_lea.vmem %s61, 128
  %v6019 = vld [vmem:[%s6018] sm:$0xf]
  %v6020 = vld [vmem:[%s6018 + $0x4] sm:$0xf]
  %v6021 = vld [vmem:[%s6018 + $0x8] sm:$0xf]
  %v6022 = vld [vmem:[%s6018 + $0xc] sm:$0xf]
  %v6023 = vld [vmem:[%s6018 + $0x10] sm:$0xf]
  %v6024 = vld [vmem:[%s6018 + $0x14] sm:$0xf]
  %v6025 = vld [vmem:[%s6018 + $0x18] sm:$0xf]
  %v6026 = vld [vmem:[%s6018 + $0x1c] sm:$0xf]
  %v6027 = vld [vmem:[%s6018 + $0x20] sm:$0xf]
  %v6028 = vld [vmem:[%s6018 + $0x24] sm:$0xf]
  %v6029 = vld [vmem:[%s6018 + $0x28] sm:$0xf]
  %v6030 = vld [vmem:[%s6018 + $0x2c] sm:$0xf]
  %v6031 = vld [vmem:[%s6018 + $0x30] sm:$0xf]
  %v6032 = vld [vmem:[%s6018 + $0x34] sm:$0xf]
  %v6033 = vld [vmem:[%s6018 + $0x38] sm:$0xf]
  %v6034 = vld [vmem:[%s6018 + $0x3c] sm:$0xf]
  %v6035 = vld [vmem:[%s6018 + $0x40] sm:$0xf]
  %v6036 = vld [vmem:[%s6018 + $0x44] sm:$0xf]
  %v6037 = vld [vmem:[%s6018 + $0x48] sm:$0xf]
  %v6038 = vld [vmem:[%s6018 + $0x4c] sm:$0xf]
  %v6039 = vld [vmem:[%s6018 + $0x50] sm:$0xf]
  %v6040 = vld [vmem:[%s6018 + $0x54] sm:$0xf]
  %v6041 = vld [vmem:[%s6018 + $0x58] sm:$0xf]
  %v6042 = vld [vmem:[%s6018 + $0x5c] sm:$0xf]
  %v6043 = vld [vmem:[%s6018 + $0x60] sm:$0xf]
  %v6044 = vld [vmem:[%s6018 + $0x64] sm:$0xf]
  %v6045 = vld [vmem:[%s6018 + $0x68] sm:$0xf]
  %v6046 = vld [vmem:[%s6018 + $0x6c] sm:$0xf]
  %v6047 = vld [vmem:[%s6018 + $0x70] sm:$0xf]
  %v6048 = vld [vmem:[%s6018 + $0x74] sm:$0xf]
  %v6049 = vld [vmem:[%s6018 + $0x78] sm:$0xf]
  %v6050 = vld [vmem:[%s6018 + $0x7c] sm:$0xf]
  %v6083 = vunpack.c.l.b16 %v6019
  %v6084 = vunpack.c.l.b16 %v6020
  %v6085 = vunpack.c.l.b16 %v6021
  %v6086 = vunpack.c.l.b16 %v6022
  %v6087 = vunpack.c.l.b16 %v6023
  %v6088 = vunpack.c.l.b16 %v6024
  %v6089 = vunpack.c.l.b16 %v6025
  %v6090 = vunpack.c.l.b16 %v6026
  %v6091 = vunpack.c.l.b16 %v6027
  %v6092 = vunpack.c.l.b16 %v6028
  %v6093 = vunpack.c.l.b16 %v6029
  %v6094 = vunpack.c.l.b16 %v6030
  %v6095 = vunpack.c.l.b16 %v6031
  %v6096 = vunpack.c.l.b16 %v6032
  %v6097 = vunpack.c.l.b16 %v6033
  %v6098 = vunpack.c.l.b16 %v6034
  %v6099 = vunpack.c.l.b16 %v6035
  %v6100 = vunpack.c.l.b16 %v6036
  %v6101 = vunpack.c.l.b16 %v6037
  %v6102 = vunpack.c.l.b16 %v6038
  %v6103 = vunpack.c.l.b16 %v6039
  %v6104 = vunpack.c.l.b16 %v6040
  %v6105 = vunpack.c.l.b16 %v6041
  %v6106 = vunpack.c.l.b16 %v6042
  %v6107 = vunpack.c.l.b16 %v6043
  %v6108 = vunpack.c.l.b16 %v6044
  %v6109 = vunpack.c.l.b16 %v6045
  %v6110 = vunpack.c.l.b16 %v6046
  %v6111 = vunpack.c.l.b16 %v6047
  %v6112 = vunpack.c.l.b16 %v6048
  %v6113 = vunpack.c.l.b16 %v6049
  %v6114 = vunpack.c.l.b16 %v6050
  %v6115 = vpack.c.b16 %v6084, %v6083
  %v6116 = vpack.c.b16 %v6086, %v6085
  %v6117 = vpack.c.b16 %v6088, %v6087
  %v6118 = vpack.c.b16 %v6090, %v6089
  %v6119 = vpack.c.b16 %v6092, %v6091
  %v6120 = vpack.c.b16 %v6094, %v6093
  %v6121 = vpack.c.b16 %v6096, %v6095
  %v6122 = vpack.c.b16 %v6098, %v6097
  %v6123 = vpack.c.b16 %v6100, %v6099
  %v6124 = vpack.c.b16 %v6102, %v6101
  %v6125 = vpack.c.b16 %v6104, %v6103
  %v6126 = vpack.c.b16 %v6106, %v6105
  %v6127 = vpack.c.b16 %v6108, %v6107
  %v6128 = vpack.c.b16 %v6110, %v6109
  %v6129 = vpack.c.b16 %v6112, %v6111
  %v6130 = vpack.c.b16 %v6114, %v6113
  %6147 = vmatprep.subr.bf16.mxu0 0
  %6148 = vmatpush1.bf16.msra.mxu0 %v6115
  %6149 = vmatprep.subr.bf16.mxu0 0
  %6150 = vmatpush1.bf16.msra.mxu0 %v6116
  %6151 = vmatprep.subr.bf16.mxu0 0
  %6152 = vmatpush1.bf16.msra.mxu0 %v6117
  %6153 = vmatprep.subr.bf16.mxu0 0
  %6154 = vmatpush1.bf16.msra.mxu0 %v6118
  %6155 = vmatprep.subr.bf16.mxu0 0
  %6156 = vmatpush1.bf16.msra.mxu0 %v6119
  %6157 = vmatprep.subr.bf16.mxu0 0
  %6158 = vmatpush1.bf16.msra.mxu0 %v6120
  %6159 = vmatprep.subr.bf16.mxu0 0
  %6160 = vmatpush1.bf16.msra.mxu0 %v6121
  %6161 = vmatprep.subr.bf16.mxu0 0
  %6162 = vmatpush1.bf16.msra.mxu0 %v6122
  %6163 = vmatprep.subr.bf16.mxu0 0
  %6164 = vmatpush1.bf16.msra.mxu0 %v6123
  %6165 = vmatprep.subr.bf16.mxu0 0
  %6166 = vmatpush1.bf16.msra.mxu0 %v6124
  %6167 = vmatprep.subr.bf16.mxu0 0
  %6168 = vmatpush1.bf16.msra.mxu0 %v6125
  %6169 = vmatprep.subr.bf16.mxu0 0
  %6170 = vmatpush1.bf16.msra.mxu0 %v6126
  %6171 = vmatprep.subr.bf16.mxu0 0
  %6172 = vmatpush1.bf16.msra.mxu0 %v6127
  %6173 = vmatprep.subr.bf16.mxu0 0
  %6174 = vmatpush1.bf16.msra.mxu0 %v6128
  %6175 = vmatprep.subr.bf16.mxu0 0
  %6176 = vmatpush1.bf16.msra.mxu0 %v6129
  %6177 = vmatprep.subr.bf16.mxu0 0
  %6178 = vmatpush1.bf16.msra.mxu0 %v6130
  %6179 = vmatprep.mubr.bf16.mxu0 %v5734
  %6180 = vmatmul.mubr.bf16.gmra.mrb[0].mxu0 %v5733
  %v6181 = vpop.f32.mrb[0].mxu0
  %v6182 = vadd.f32 0.0, %v6181
  %v6183 = vpop.f32.mrb[0].mxu0
  %v6184 = vpop.f32.mrb[0].mxu0
  %v6185 = vadd.f32 0.0, %v6184
  %v6186 = vpop.f32.mrb[0].mxu0
  %6187 = vmatprep.mubr.bf16.mxu0 %v5736
  %6188 = vmatmul.mubr.bf16.gmra.mrb[0].mxu0 %v5735
  %v6189 = vpop.f32.mrb[0].mxu0
  %v6190 = vadd.f32 0.0, %v6189
  %v6191 = vpop.f32.mrb[0].mxu0
  %v6192 = vpop.f32.mrb[0].mxu0
  %v6193 = vadd.f32 0.0, %v6192
  %v6194 = vpop.f32.mrb[0].mxu0
  %6195 = vmatprep.mubr.bf16.mxu0 %v5738
  %6196 = vmatmul.mubr.bf16.gmra.mrb[0].mxu0 %v5737
  %v6197 = vpop.f32.mrb[0].mxu0
  %v6198 = vadd.f32 0.0, %v6197
  %v6199 = vpop.f32.mrb[0].mxu0
  %v6200 = vpop.f32.mrb[0].mxu0
  %v6201 = vpop.f32.mrb[0].mxu0
  %6202 = vdwg.mxu0
  %s6203 = scalar_lea.vmem %s59, 20
  %v6204 = vld [vmem:[%s6203] sm:$0xf]
  %v6205 = vld [vmem:[%s6203 + $0x4] sm:$0xf]
  %v6206 = vld [vmem:[%s6203 + $0x8] sm:$0xf]
  %v6207 = vld [vmem:[%s6203 + $0xc] sm:$0xf]
  %v6208 = vld [vmem:[%s6203 + $0x10] sm:$0xf]
  %v6209 = vpack.c.bf16 %v6185, %v6182
  %v6210 = vpack.c.bf16 %v6193, %v6190
  %v6211 = vpack.c.bf16 %v6198, %v6198
  %s6212 = scalar_lea.vmem %s61, 256
  %v6213 = vld [vmem:[%s6212] sm:$0xf]
  %v6214 = vld [vmem:[%s6212 + $0x4] sm:$0xf]
  %v6215 = vld [vmem:[%s6212 + $0x8] sm:$0xf]
  %v6216 = vld [vmem:[%s6212 + $0xc] sm:$0xf]
  %v6217 = vld [vmem:[%s6212 + $0x10] sm:$0xf]
  %v6218 = vld [vmem:[%s6212 + $0x14] sm:$0xf]
  %v6219 = vld [vmem:[%s6212 + $0x18] sm:$0xf]
  %v6220 = vld [vmem:[%s6212 + $0x1c] sm:$0xf]
  %v6221 = vld [vmem:[%s6212 + $0x20] sm:$0xf]
  %v6222 = vld [vmem:[%s6212 + $0x24] sm:$0xf]
  %v6223 = vld [vmem:[%s6212 + $0x28] sm:$0xf]
  %v6224 = vld [vmem:[%s6212 + $0x2c] sm:$0xf]
  %v6225 = vld [vmem:[%s6212 + $0x30] sm:$0xf]
  %v6226 = vld [vmem:[%s6212 + $0x34] sm:$0xf]
  %v6227 = vld [vmem:[%s6212 + $0x38] sm:$0xf]
  %v6228 = vld [vmem:[%s6212 + $0x3c] sm:$0xf]
  %v6229 = vld [vmem:[%s6212 + $0x40] sm:$0xf]
  %v6230 = vld [vmem:[%s6212 + $0x44] sm:$0xf]
  %v6231 = vld [vmem:[%s6212 + $0x48] sm:$0xf]
  %v6232 = vld [vmem:[%s6212 + $0x4c] sm:$0xf]
  %v6233 = vld [vmem:[%s6212 + $0x50] sm:$0xf]
  %v6234 = vld [vmem:[%s6212 + $0x54] sm:$0xf]
  %v6235 = vld [vmem:[%s6212 + $0x58] sm:$0xf]
  %v6236 = vld [vmem:[%s6212 + $0x5c] sm:$0xf]
  %v6237 = vld [vmem:[%s6212 + $0x60] sm:$0xf]
  %v6238 = vld [vmem:[%s6212 + $0x64] sm:$0xf]
  %v6239 = vld [vmem:[%s6212 + $0x68] sm:$0xf]
  %v6240 = vld [vmem:[%s6212 + $0x6c] sm:$0xf]
  %v6241 = vld [vmem:[%s6212 + $0x70] sm:$0xf]
  %v6242 = vld [vmem:[%s6212 + $0x74] sm:$0xf]
  %v6243 = vld [vmem:[%s6212 + $0x78] sm:$0xf]
  %v6244 = vld [vmem:[%s6212 + $0x7c] sm:$0xf]
  %v6277 = vunpack.c.l.b16 %v6213
  %v6278 = vunpack.c.l.b16 %v6214
  %v6279 = vunpack.c.l.b16 %v6215
  %v6280 = vunpack.c.l.b16 %v6216
  %v6281 = vunpack.c.l.b16 %v6217
  %v6282 = vunpack.c.l.b16 %v6218
  %v6283 = vunpack.c.l.b16 %v6219
  %v6284 = vunpack.c.l.b16 %v6220
  %v6285 = vunpack.c.l.b16 %v6221
  %v6286 = vunpack.c.l.b16 %v6222
  %v6287 = vunpack.c.l.b16 %v6223
  %v6288 = vunpack.c.l.b16 %v6224
  %v6289 = vunpack.c.l.b16 %v6225
  %v6290 = vunpack.c.l.b16 %v6226
  %v6291 = vunpack.c.l.b16 %v6227
  %v6292 = vunpack.c.l.b16 %v6228
  %v6293 = vunpack.c.l.b16 %v6229
  %v6294 = vunpack.c.l.b16 %v6230
  %v6295 = vunpack.c.l.b16 %v6231
  %v6296 = vunpack.c.l.b16 %v6232
  %v6297 = vunpack.c.l.b16 %v6233
  %v6298 = vunpack.c.l.b16 %v6234
  %v6299 = vunpack.c.l.b16 %v6235
  %v6300 = vunpack.c.l.b16 %v6236
  %v6301 = vunpack.c.l.b16 %v6237
  %v6302 = vunpack.c.l.b16 %v6238
  %v6303 = vunpack.c.l.b16 %v6239
  %v6304 = vunpack.c.l.b16 %v6240
  %v6305 = vunpack.c.l.b16 %v6241
  %v6306 = vunpack.c.l.b16 %v6242
  %v6307 = vunpack.c.l.b16 %v6243
  %v6308 = vunpack.c.l.b16 %v6244
  %v6309 = vpack.c.b16 %v6278, %v6277
  %v6310 = vpack.c.b16 %v6280, %v6279
  %v6311 = vpack.c.b16 %v6282, %v6281
  %v6312 = vpack.c.b16 %v6284, %v6283
  %v6313 = vpack.c.b16 %v6286, %v6285
  %v6314 = vpack.c.b16 %v6288, %v6287
  %v6315 = vpack.c.b16 %v6290, %v6289
  %v6316 = vpack.c.b16 %v6292, %v6291
  %v6317 = vpack.c.b16 %v6294, %v6293
  %v6318 = vpack.c.b16 %v6296, %v6295
  %v6319 = vpack.c.b16 %v6298, %v6297
  %v6320 = vpack.c.b16 %v6300, %v6299
  %v6321 = vpack.c.b16 %v6302, %v6301
  %v6322 = vpack.c.b16 %v6304, %v6303
  %v6323 = vpack.c.b16 %v6306, %v6305
  %v6324 = vpack.c.b16 %v6308, %v6307
  %6341 = vmatprep.subr.bf16.mxu0 0
  %6342 = vmatpush1.bf16.msra.mxu0 %v6309
  %6343 = vmatprep.subr.bf16.mxu0 0
  %6344 = vmatpush1.bf16.msra.mxu0 %v6310
  %6345 = vmatprep.subr.bf16.mxu0 0
  %6346 = vmatpush1.bf16.msra.mxu0 %v6311
  %6347 = vmatprep.subr.bf16.mxu0 0
  %6348 = vmatpush1.bf16.msra.mxu0 %v6312
  %6349 = vmatprep.subr.bf16.mxu0 0
  %6350 = vmatpush1.bf16.msra.mxu0 %v6313
  %6351 = vmatprep.subr.bf16.mxu0 0
  %6352 = vmatpush1.bf16.msra.mxu0 %v6314
  %6353 = vmatprep.subr.bf16.mxu0 0
  %6354 = vmatpush1.bf16.msra.mxu0 %v6315
  %6355 = vmatprep.subr.bf16.mxu0 0
  %6356 = vmatpush1.bf16.msra.mxu0 %v6316
  %6357 = vmatprep.subr.bf16.mxu0 0
  %6358 = vmatpush1.bf16.msra.mxu0 %v6317
  %6359 = vmatprep.subr.bf16.mxu0 0
  %6360 = vmatpush1.bf16.msra.mxu0 %v6318
  %6361 = vmatprep.subr.bf16.mxu0 0
  %6362 = vmatpush1.bf16.msra.mxu0 %v6319
  %6363 = vmatprep.subr.bf16.mxu0 0
  %6364 = vmatpush1.bf16.msra.mxu0 %v6320
  %6365 = vmatprep.subr.bf16.mxu0 0
  %6366 = vmatpush1.bf16.msra.mxu0 %v6321
  %6367 = vmatprep.subr.bf16.mxu0 0
  %6368 = vmatpush1.bf16.msra.mxu0 %v6322
  %6369 = vmatprep.subr.bf16.mxu0 0
  %6370 = vmatpush1.bf16.msra.mxu0 %v6323
  %6371 = vmatprep.subr.bf16.mxu0 0
  %6372 = vmatpush1.bf16.msra.mxu0 %v6324
  %6373 = vmatprep.mubr.bf16.mxu0 %v5734
  %6374 = vmatmul.mubr.bf16.gmra.mrb[0].mxu0 %v5733
  %v6375 = vpop.f32.mrb[0].mxu0
  %v6376 = vadd.f32 0.0, %v6375
  %v6377 = vpop.f32.mrb[0].mxu0
  %v6378 = vpop.f32.mrb[0].mxu0
  %v6379 = vadd.f32 0.0, %v6378
  %v6380 = vpop.f32.mrb[0].mxu0
  %6381 = vmatprep.mubr.bf16.mxu0 %v5736
  %6382 = vmatmul.mubr.bf16.gmra.mrb[0].mxu0 %v5735
  %v6383 = vpop.f32.mrb[0].mxu0
  %v6384 = vadd.f32 0.0, %v6383
  %v6385 = vpop.f32.mrb[0].mxu0
  %v6386 = vpop.f32.mrb[0].mxu0
  %v6387 = vadd.f32 0.0, %v6386
  %v6388 = vpop.f32.mrb[0].mxu0
  %6389 = vmatprep.mubr.bf16.mxu0 %v5738
  %6390 = vmatmul.mubr.bf16.gmra.mrb[0].mxu0 %v5737
  %v6391 = vpop.f32.mrb[0].mxu0
  %v6392 = vadd.f32 0.0, %v6391
  %v6393 = vpop.f32.mrb[0].mxu0
  %v6394 = vpop.f32.mrb[0].mxu0
  %v6395 = vpop.f32.mrb[0].mxu0
  %6396 = vdwg.mxu0
  %s6397 = scalar_lea.vmem %s59, 40
  %v6398 = vld [vmem:[%s6397] sm:$0xf]
  %v6399 = vld [vmem:[%s6397 + $0x4] sm:$0xf]
  %v6400 = vld [vmem:[%s6397 + $0x8] sm:$0xf]
  %v6401 = vld [vmem:[%s6397 + $0xc] sm:$0xf]
  %v6402 = vld [vmem:[%s6397 + $0x10] sm:$0xf]
  %v6403 = vpack.c.bf16 %v6379, %v6376
  %v6404 = vpack.c.bf16 %v6387, %v6384
  %v6405 = vpack.c.bf16 %v6392, %v6392
  %v6411 = vunpack.c.l.b16 %v6398
  %v6412 = vunpack.c.l.b16 %v6399
  %v6413 = vunpack.c.l.b16 %v6400
  %v6414 = vunpack.c.l.b16 %v6401
  %v6415 = vunpack.c.l.b16 %v6402
  %v6416 = vpack.c.b16 %v6412, %v6411
  %v6417 = vpack.c.b16 %v6414, %v6413
  %v6418 = vpack.c.b16 %v6415, %v6415
  %v6420 = vsel %vm5949, %v6416, 0
  %v6423 = vsel %vm5949, %v6417, 0
  %v6426 = vsel %vm5949, %v6418, 0
  %v6429 = vsel %vm1680, %v6405, 0
  %6431 = vmatprep.subr.bf16.mxu0 0
  %6432 = vmatpush1.bf16.msra.mxu0 %v6403
  %6433 = vmatprep.subr.bf16.mxu0 0
  %6434 = vmatpush1.bf16.msra.mxu0 %v6404
  %6435 = vmatprep.subr.bf16.mxu0 0
  %6436 = vmatpush1.bf16.msra.mxu0 %v6429
  %6437 = vmatprep.subr.bf16.mxu0 0
  %6438 = vmatpush1.bf16.msra.mxu0 0
  %6439 = vmatprep.subr.bf16.mxu0 0
  %6440 = vmatpush1.bf16.msra.mxu0 0
  %6441 = vmatprep.subr.bf16.mxu0 0
  %6442 = vmatpush1.bf16.msra.mxu0 0
  %6443 = vmatprep.subr.bf16.mxu0 0
  %6444 = vmatpush1.bf16.msra.mxu0 0
  %6445 = vmatprep.subr.bf16.mxu0 0
  %6446 = vmatpush1.bf16.msra.mxu0 0
  %6447 = vmatprep.subr.bf16.mxu0 0
  %6448 = vmatpush1.bf16.msra.mxu0 0
  %6449 = vmatprep.subr.bf16.mxu0 0
  %6450 = vmatpush1.bf16.msra.mxu0 0
  %6451 = vmatprep.subr.bf16.mxu0 0
  %6452 = vmatpush1.bf16.msra.mxu0 0
  %6453 = vmatprep.subr.bf16.mxu0 0
  %6454 = vmatpush1.bf16.msra.mxu0 0
  %6455 = vmatprep.subr.bf16.mxu0 0
  %6456 = vmatpush1.bf16.msra.mxu0 0
  %6457 = vmatprep.subr.bf16.mxu0 0
  %6458 = vmatpush1.bf16.msra.mxu0 0
  %6459 = vmatprep.subr.bf16.mxu0 0
  %6460 = vmatpush1.bf16.msra.mxu0 0
  %6461 = vmatprep.subr.bf16.mxu0 0
  %6462 = vmatpush1.bf16.msra.mxu0 0
  %6463 = vmatprep.mubr.bf16.mxu0 0
  %6464 = vmatmul.mubr.bf16.gmra.mrb[0].mxu0 %v6420
  %v6465 = vpop.f32.mrb[0].mxu0
  %v6466 = vadd.f32 0.0, %v6465
  %v6467 = vpop.f32.mrb[0].mxu0
  %v6468 = vpop.f32.mrb[0].mxu0
  %v6469 = vadd.f32 0.0, %v6468
  %v6470 = vpop.f32.mrb[0].mxu0
  %6471 = vmatprep.mubr.bf16.mxu0 0
  %6472 = vmatmul.mubr.bf16.gmra.mrb[0].mxu0 %v6423
  %v6473 = vpop.f32.mrb[0].mxu0
  %v6474 = vadd.f32 0.0, %v6473
  %v6475 = vpop.f32.mrb[0].mxu0
  %v6476 = vpop.f32.mrb[0].mxu0
  %v6477 = vadd.f32 0.0, %v6476
  %v6478 = vpop.f32.mrb[0].mxu0
  %6479 = vmatprep.mubr.bf16.mxu0 0
  %6480 = vmatmul.mubr.bf16.gmra.mrb[0].mxu0 %v6426
  %v6481 = vpop.f32.mrb[0].mxu0
  %v6482 = vadd.f32 0.0, %v6481
  %v6483 = vpop.f32.mrb[0].mxu0
  %v6484 = vpop.f32.mrb[0].mxu0
  %v6485 = vpop.f32.mrb[0].mxu0
  %6486 = vdwg.mxu0
  %v6487 = vadd.f32 %v5739, %v5997
  %v6488 = vadd.f32 %v5740, %v6000
  %v6489 = vadd.f32 %v5741, %v6005
  %v6490 = vadd.f32 %v5742, %v6008
  %v6491 = vadd.f32 %v5743, %v6013
  %v6497 = vunpack.c.l.b16 %v6204
  %v6498 = vunpack.c.l.b16 %v6205
  %v6499 = vunpack.c.l.b16 %v6206
  %v6500 = vunpack.c.l.b16 %v6207
  %v6501 = vunpack.c.l.b16 %v6208
  %v6502 = vpack.c.b16 %v6498, %v6497
  %v6503 = vpack.c.b16 %v6500, %v6499
  %v6504 = vpack.c.b16 %v6501, %v6501
  %v6506 = vsel %vm5949, %v6502, 0
  %v6509 = vsel %vm5949, %v6503, 0
  %v6512 = vsel %vm5949, %v6504, 0
  %v6515 = vsel %vm1680, %v6211, 0
  %6517 = vmatprep.subr.bf16.mxu0 0
  %6518 = vmatpush1.bf16.msra.mxu0 %v6209
  %6519 = vmatprep.subr.bf16.mxu0 0
  %6520 = vmatpush1.bf16.msra.mxu0 %v6210
  %6521 = vmatprep.subr.bf16.mxu0 0
  %6522 = vmatpush1.bf16.msra.mxu0 %v6515
  %6523 = vmatprep.subr.bf16.mxu0 0
  %6524 = vmatpush1.bf16.msra.mxu0 0
  %6525 = vmatprep.subr.bf16.mxu0 0
  %6526 = vmatpush1.bf16.msra.mxu0 0
  %6527 = vmatprep.subr.bf16.mxu0 0
  %6528 = vmatpush1.bf16.msra.mxu0 0
  %6529 = vmatprep.subr.bf16.mxu0 0
  %6530 = vmatpush1.bf16.msra.mxu0 0
  %6531 = vmatprep.subr.bf16.mxu0 0
  %6532 = vmatpush1.bf16.msra.mxu0 0
  %6533 = vmatprep.subr.bf16.mxu0 0
  %6534 = vmatpush1.bf16.msra.mxu0 0
  %6535 = vmatprep.subr.bf16.mxu0 0
  %6536 = vmatpush1.bf16.msra.mxu0 0
  %6537 = vmatprep.subr.bf16.mxu0 0
  %6538 = vmatpush1.bf16.msra.mxu0 0
  %6539 = vmatprep.subr.bf16.mxu0 0
  %6540 = vmatpush1.bf16.msra.mxu0 0
  %6541 = vmatprep.subr.bf16.mxu0 0
  %6542 = vmatpush1.bf16.msra.mxu0 0
  %6543 = vmatprep.subr.bf16.mxu0 0
  %6544 = vmatpush1.bf16.msra.mxu0 0
  %6545 = vmatprep.subr.bf16.mxu0 0
  %6546 = vmatpush1.bf16.msra.mxu0 0
  %6547 = vmatprep.subr.bf16.mxu0 0
  %6548 = vmatpush1.bf16.msra.mxu0 0
  %6549 = vmatprep.mubr.bf16.mxu0 0
  %6550 = vmatmul.mubr.bf16.gmra.mrb[0].mxu0 %v6506
  %v6551 = vpop.f32.mrb[0].mxu0
  %v6552 = vadd.f32 %v6466, %v6551
  %v6553 = vpop.f32.mrb[0].mxu0
  %v6554 = vpop.f32.mrb[0].mxu0
  %v6555 = vadd.f32 %v6469, %v6554
  %v6556 = vpop.f32.mrb[0].mxu0
  %6557 = vmatprep.mubr.bf16.mxu0 0
  %6558 = vmatmul.mubr.bf16.gmra.mrb[0].mxu0 %v6509
  %v6559 = vpop.f32.mrb[0].mxu0
  %v6560 = vadd.f32 %v6474, %v6559
  %v6561 = vpop.f32.mrb[0].mxu0
  %v6562 = vpop.f32.mrb[0].mxu0
  %v6563 = vadd.f32 %v6477, %v6562
  %v6564 = vpop.f32.mrb[0].mxu0
  %6565 = vmatprep.mubr.bf16.mxu0 0
  %6566 = vmatmul.mubr.bf16.gmra.mrb[0].mxu0 %v6512
  %v6567 = vpop.f32.mrb[0].mxu0
  %v6568 = vadd.f32 %v6482, %v6567
  %v6569 = vpop.f32.mrb[0].mxu0
  %v6570 = vpop.f32.mrb[0].mxu0
  %v6571 = vpop.f32.mrb[0].mxu0
  %6572 = vdwg.mxu0
  %v6573 = vadd.f32 %v6487, %v6552
  %v6574 = vadd.f32 %v6488, %v6555
  %v6575 = vadd.f32 %v6489, %v6560
  %v6576 = vadd.f32 %v6490, %v6563
  %v6577 = vadd.f32 %v6491, %v6568
  %vm6578 = vcmp.ge.f32.partialorder %v6573, 0.0
  %vm6579 = vcmp.ge.f32.partialorder %v6574, 0.0
  %vm6580 = vcmp.ge.f32.partialorder %v6575, 0.0
  %vm6581 = vcmp.ge.f32.partialorder %v6576, 0.0
  %vm6582 = vcmp.ge.f32.partialorder %v6577, 0.0
  %v6583 = vmul.f32 %v6573, 0.01
  %v6584 = vmul.f32 %v6574, 0.01
  %v6585 = vmul.f32 %v6575, 0.01
  %v6586 = vmul.f32 %v6576, 0.01
  %v6587 = vmul.f32 %v6577, 0.01
  %v6588 = vsel %vm6578, %v6573, %v6583
  %v6589 = vsel %vm6579, %v6574, %v6584
  %v6590 = vsel %vm6580, %v6575, %v6585
  %v6591 = vsel %vm6581, %v6576, %v6586
  %v6592 = vsel %vm6582, %v6577, %v6587
  %v6593 = vsub.f32 0.0, %v6588
  %v6594 = vsub.f32 0.0, %v6589
  %v6595 = vsub.f32 0.0, %v6590
  %v6596 = vsub.f32 0.0, %v6591
  %v6597 = vsub.f32 0.0, %v6592
  %v6598 = vmul.f32 %v6593, 1.442695
  %v6599 = vpow.pop %v6598
  %v6600 = vmul.f32 %v6594, 1.442695
  %v6601 = vpow.pop %v6600
  %v6602 = vmul.f32 %v6595, 1.442695
  %v6603 = vpow.pop %v6602
  %v6604 = vmul.f32 %v6596, 1.442695
  %v6605 = vpow.pop %v6604
  %v6606 = vmul.f32 %v6597, 1.442695
  %v6607 = vpow.pop %v6606
  %v6608 = vadd.f32 %v6599, 1.0
  %v6609 = vadd.f32 %v6601, 1.0
  %v6610 = vadd.f32 %v6603, 1.0
  %v6611 = vadd.f32 %v6605, 1.0
  %v6612 = vadd.f32 %v6607, 1.0
  %v6613 = vrcp.pop %v6608
  %v6614 = vrcp.pop %v6609
  %v6615 = vrcp.pop %v6610
  %v6616 = vrcp.pop %v6611
  %v6617 = vrcp.pop %v6612
  %6618 = vst [vmem:[%s65] sm:$0xff] %v6613
  %6619 = vst [vmem:[%s65 + $0x8] sm:$0xff] %v6614
  %6620 = vst [vmem:[%s65 + $0x10] sm:$0xff] %v6615
  %6621 = vst [vmem:[%s65 + $0x18] sm:$0xff] %v6616
  %6622 = vst [vmem:[%s65 + $0x20] sm:$0xff] %v6617
  // Predicated region
  $region130: #{forward.1} parent=0 // pred_check
    _
  $region131: #{forward.1} parent=0 // pred_check_branch
    %6624 = sbr.rel (0) target = $region133
  $region132: #{forward.1} parent=0 // pred_region
    _
  $region133: #{forward.1} parent=0 // pred_fallthru
    _
  // Predicated region
  $region134: #{forward.1} parent=0 // pred_check
    _
  $region135: #{forward.1} parent=0 // pred_check_branch
    %6626 = sbr.rel (0) target = $region137
  $region136: #{forward.1} parent=0 // pred_region
    _
  $region137: #{forward.1} parent=0 // pred_fallthru
    _
  // Predicated region
  $region138: #{forward.1} parent=0 // pred_check
    _
  $region139: #{forward.1} parent=0 // pred_check_branch
    %6628 = sbr.rel (0) target = $region141
  $region140: #{forward.1} parent=0 // pred_region
    _
  $region141: #{forward.1} parent=0 // pred_fallthru
    _
  // Predicated region
  $region142: #{forward.1} parent=0 // pred_check
    _
  $region143: #{forward.1} parent=0 // pred_check_branch
    %6630 = sbr.rel (0) target = $region145
  $region144: #{forward.1} parent=0 // pred_region
    _
  $region145: #{forward.1} parent=0 // pred_fallthru
    _

</llo_original>
